<compile_context>
chip_gen: v7x
topology: tpu7x:2x2x1
jax: 0.10.0
libtpu: 0.0.40
codegen_flags: <defaults>
</compile_context>

<pallas_src>
import functools

import jax
import jax.numpy as jnp
from jax.experimental import pallas as pl
from jax.experimental.pallas import tpu as pltpu  # noqa: F401  (TPU backend params if needed)


# ------------------------------ in-kernel helpers ------------------------------

def _layernorm(x, g, b, eps):
    mean = jnp.mean(x, axis=-1, keepdims=True)
    var = jnp.mean((x - mean) ** 2, axis=-1, keepdims=True)
    return (x - mean) * jax.lax.rsqrt(var + eps) * g + b


# Order in which the stacked per-layer weights are passed to the kernel.
_WEIGHT_ORDER = (
    "qkv_s_w", "qkv_s_b", "o_s_w", "o_s_b",
    "n0_g", "n0_b",
    "q_c_w", "q_c_b", "kv_c_w", "kv_c_b", "o_c_w", "o_c_b",
    "n1_g", "n1_b",
    "ff1_w", "ff1_b", "ff2_w", "ff2_b",
    "n2_g", "n2_b",
)


# ------------------------------ fused decoder-stack kernel ------------------------------

def _decoder_stack_kernel(
    x_ref, enc_ref, tmask_ref, smask_ref,
    w_qkv_ref, b_qkv_ref, w_os_ref, b_os_ref,
    g0_ref, beta0_ref,
    w_qc_ref, b_qc_ref, w_kvc_ref, b_kvc_ref, w_oc_ref, b_oc_ref,
    g1_ref, beta1_ref,
    w_f1_ref, b_f1_ref, w_f2_ref, b_f2_ref,
    g2_ref, beta2_ref,
    fc_w_ref, fc_b_ref,
    out_ref,
    *, heads, eps, inv_scale,
):
    """All decoder layers + final vocab projection in one invocation (grid=())."""
    E = x_ref.shape[-1]
    D = E // heads
    N, L, _ = tmask_ref.shape
    Ls = smask_ref.shape[-1]
    num_layers = w_qkv_ref.shape[0]
    neg = jnp.float32(-1e20)

    x = x_ref[...]        # (N*L, E)  -- batch folded into rows
    enc = enc_ref[...]    # (N*Ls, E)

    # Hoisted mask bias: built once per batch element, reused by every layer/head.
    # Additive -1e20 is numerically identical to masked_fill(-1e20) in f32.
    tbias = [jnp.where(tmask_ref[n] == 0.0, neg, 0.0) for n in range(N)]           # (L, L)
    sbias = [jnp.where(jnp.broadcast_to(smask_ref[n], (L, Ls)) == 0.0, neg, 0.0)
             for n in range(N)]                                                     # (L, Ls)

    def split_heads(t2d):
        # (T, E) -> (heads, T, D): static lane slices stacked on a new batch axis.
        # TODO(synk): at larger E/heads use pltpu.einshape("lhd->hld") on a
        # (T, heads, D) reshape to avoid the sub-128 lane slices entirely.
        return jnp.stack([t2d[:, h * D:(h + 1) * D] for h in range(heads)], axis=0)

    def mha(q2d, k2d, v2d, bias):
        """All heads via one batched dot_general pair; returns head-concat (Lq, E)."""
        qh = split_heads(q2d)     # (heads, Lq, D)
        kh = split_heads(k2d)     # (heads, Lk, D)
        vh = split_heads(v2d)     # (heads, Lk, D)
        e = jnp.einsum("hqd,hkd->hqk", qh, kh,
                       preferred_element_type=jnp.float32)        # (heads, Lq, Lk)
        e = (e + bias) * inv_scale                                # mask, then / sqrt(E)
        e = e - jnp.max(e, axis=-1, keepdims=True)
        p = jnp.exp(e)
        p = p * pl.reciprocal(jnp.sum(p, axis=-1, keepdims=True), approx=False)
        o = jnp.einsum("hqk,hkd->hqd", p, vh,
                       preferred_element_type=jnp.float32)        # (heads, Lq, D)
        # Lane-contiguous head merge -> ONE full-E output projection later.
        return jnp.concatenate([o[h] for h in range(heads)], axis=-1)   # (Lq, E)

    for l in range(num_layers):   # static unroll; per-layer weights sliced statically
        # ---- masked self-attention (fused Q|K|V) + residual + LayerNorm ----
        qkv = jnp.dot(x, w_qkv_ref[l], preferred_element_type=jnp.float32) + b_qkv_ref[l]
        sa_parts = []
        for n in range(N):
            qkv_n = qkv[n * L:(n + 1) * L]
            sa_parts.append(
                mha(qkv_n[:, :E], qkv_n[:, E:2 * E], qkv_n[:, 2 * E:], tbias[n]))
        sa = jnp.dot(jnp.concatenate(sa_parts, axis=0), w_os_ref[l],
                     preferred_element_type=jnp.float32) + b_os_ref[l]
        x = _layernorm(sa + x, g0_ref[l], beta0_ref[l], eps)

        # ---- cross-attention on encoder output (fused K|V) + residual + LN ----
        qc = jnp.dot(x, w_qc_ref[l], preferred_element_type=jnp.float32) + b_qc_ref[l]
        kv = jnp.dot(enc, w_kvc_ref[l], preferred_element_type=jnp.float32) + b_kvc_ref[l]
        ca_parts = []
        for n in range(N):
            q_n = qc[n * L:(n + 1) * L]
            kv_n = kv[n * Ls:(n + 1) * Ls]
            ca_parts.append(mha(q_n, kv_n[:, :E], kv_n[:, E:], sbias[n]))
        ca = jnp.dot(jnp.concatenate(ca_parts, axis=0), w_oc_ref[l],
                     preferred_element_type=jnp.float32) + b_oc_ref[l]
        x = _layernorm(ca + x, g1_ref[l], beta1_ref[l], eps)

        # ---- feed-forward (Linear -> ReLU -> Linear) + residual + LayerNorm ----
        hid = jnp.maximum(
            jnp.dot(x, w_f1_ref[l], preferred_element_type=jnp.float32) + b_f1_ref[l],
            0.0)
        ff = jnp.dot(hid, w_f2_ref[l], preferred_element_type=jnp.float32) + b_f2_ref[l]
        x = _layernorm(ff + x, g2_ref[l], beta2_ref[l], eps)

    # ---- final vocab projection (vocab zero-padded to 128 -> lane-dense store) ----
    out_ref[...] = (jnp.dot(x, fc_w_ref[...], preferred_element_type=jnp.float32)
                    + fc_b_ref[...])


def decoder_stack_pallas(x2d, enc2d, tmask, smask, stacked, fc_w_pad, fc_b_pad, *, heads):
    """Whole decoder stack in one pallas_call; every operand whole in VMEM."""
    NL, E = x2d.shape
    vpad = fc_w_pad.shape[1]
    weights = tuple(stacked[name] for name in _WEIGHT_ORDER)
    kernel = functools.partial(
        _decoder_stack_kernel, heads=heads, eps=1e-5,
        inv_scale=1.0 / (float(E) ** 0.5))
    # grid=() -> single launch.  TODO(synk): at realistic E/vocab sizes, tile the
    # (rows, vocab) fc_out and the Lq axis and set vmem_limit_bytes (v7x: 64 MiB VMEM).
    return pl.pallas_call(
        kernel,
        out_shape=jax.ShapeDtypeStruct((NL, vpad), jnp.float32),
    )(x2d, enc2d, tmask, smask, *weights, fc_w_pad, fc_b_pad)


# ------------------------------ decoder forward ------------------------------

def decoder_forward(params, tokens, enc_out, src_mask, trg_mask, *, heads, trg_vocab_size):
    N, L = tokens.shape
    E = params["word_emb"].shape[1]
    Ls = enc_out.shape[1]
    positions = jnp.arange(L)
    # Embedding gathers stay as JAX glue (tiny table lookup; no Pallas win).
    x = params["word_emb"][tokens] + params["pos_emb"][positions][None, :, :]
    # dropout p = 0.0 -> identity
    logits_pad = decoder_stack_pallas(
        x.reshape(N * L, E),
        enc_out.reshape(N * Ls, E),
        trg_mask.reshape(N, L, L),     # drop the broadcast head dim (free reshape)
        src_mask.reshape(N, 1, Ls),
        params["stacked"], params["fc_w_pad"], params["fc_b_pad"],
        heads=heads)
    return logits_pad.reshape(N, L, -1)[:, :, :trg_vocab_size]


# ------------------------------ parameter init ------------------------------

def _init_linear_wt(key, din, dout):
    w = jax.random.normal(key, (dout, din), jnp.float32) * 0.05
    return w.T, jnp.zeros((dout,), jnp.float32)


def _init_layer(key, e, hidden):
    ks = jax.random.split(key, 10)
    q_w, q_b = _init_linear_wt(ks[0], e, e)
    k_w, k_b = _init_linear_wt(ks[1], e, e)
    v_w, v_b = _init_linear_wt(ks[2], e, e)
    o_s_w, o_s_b = _init_linear_wt(ks[3], e, e)
    qc_w, qc_b = _init_linear_wt(ks[4], e, e)
    kc_w, kc_b = _init_linear_wt(ks[5], e, e)
    vc_w, vc_b = _init_linear_wt(ks[6], e, e)
    o_c_w, o_c_b = _init_linear_wt(ks[7], e, e)
    ff1_w, ff1_b = _init_linear_wt(ks[8], e, hidden)
    ff2_w, ff2_b = _init_linear_wt(ks[9], hidden, e)
    ones = jnp.ones((1, e), jnp.float32)
    zeros = jnp.zeros((1, e), jnp.float32)
    return {
        # masked self-attention: fused Q|K|V projection -> one (E, 3E) matmul
        "qkv_s_w": jnp.concatenate([q_w, k_w, v_w], axis=1),
        "qkv_s_b": jnp.concatenate([q_b, k_b, v_b]).reshape(1, 3 * e),
        "o_s_w": o_s_w, "o_s_b": o_s_b.reshape(1, e),
        "n0_g": ones, "n0_b": zeros,
        # cross-attention: Q from decoder state, fused K|V from encoder output
        "q_c_w": qc_w, "q_c_b": qc_b.reshape(1, e),
        "kv_c_w": jnp.concatenate([kc_w, vc_w], axis=1),
        "kv_c_b": jnp.concatenate([kc_b, vc_b]).reshape(1, 2 * e),
        "o_c_w": o_c_w, "o_c_b": o_c_b.reshape(1, e),
        "n1_g": ones, "n1_b": zeros,
        "ff1_w": ff1_w, "ff1_b": ff1_b.reshape(1, hidden),
        "ff2_w": ff2_w, "ff2_b": ff2_b.reshape(1, e),
        "n2_g": ones, "n2_b": zeros,
    }


def init_decoder_params(key, vocab, embed, num_layers, forward_expansion, max_length):
    keys = jax.random.split(key, 3 + num_layers)
    layers = [_init_layer(keys[3 + i], embed, forward_expansion * embed)
              for i in range(num_layers)]
    # Stack every per-layer weight along a leading layer axis -> fewer kernel args,
    # static slicing inside the unrolled layer loop.
    stacked = {name: jnp.stack([lp[name] for lp in layers], axis=0)
               for name in _WEIGHT_ORDER}
    # fc_out: pad the vocab axis to a multiple of 128 for a lane-dense output store.
    fc_w, fc_b = _init_linear_wt(keys[2], embed, vocab)      # (E, vocab), (vocab,)
    vpad = ((vocab + 127) // 128) * 128
    fc_w_pad = jnp.zeros((embed, vpad), jnp.float32).at[:, :vocab].set(fc_w)
    fc_b_pad = jnp.zeros((1, vpad), jnp.float32).at[:, :vocab].set(fc_b)
    return {
        "word_emb": jax.random.normal(keys[0], (vocab, embed), jnp.float32) * 0.05,
        "pos_emb": jax.random.normal(keys[1], (max_length, embed), jnp.float32) * 0.05,
        "stacked": stacked,
        "fc_w_pad": fc_w_pad,
        "fc_b_pad": fc_b_pad,
    }


# ----------------------------------- main ------------------------------------

if __name__ == "__main__":
    # Config (dropout = 0.0 => identity, matching eval semantics exactly)
    trg_vocab_size = 50
    embed_size = 32
    num_layers = 2
    heads = 4
    forward_expansion = 2
    max_length = 16

    N, L_trg, L_src = 2, 8, 8

    root = jax.random.PRNGKey(0)
    k_par, k_tok, k_enc = jax.random.split(root, 3)

    params = init_decoder_params(
        k_par, trg_vocab_size, embed_size, num_layers, forward_expansion, max_length)

    tokens = jax.random.randint(k_tok, (N, L_trg), 0, trg_vocab_size)
    enc_out = jax.random.normal(k_enc, (N, L_src, embed_size), jnp.float32)

    # Masks: causal target mask (N,1,Lq,Lq), all-ones source mask (N,1,1,Lk).
    trg_mask = jnp.broadcast_to(
        jnp.tril(jnp.ones((L_trg, L_trg), jnp.float32))[None, None, :, :],
        (N, 1, L_trg, L_trg))
    src_mask = jnp.ones((N, 1, 1, L_src), jnp.float32)

    fwd = jax.jit(functools.partial(
        decoder_forward, heads=heads, trg_vocab_size=trg_vocab_size))
    out = fwd(params, tokens, enc_out, src_mask, trg_mask)
    jax.block_until_ready(out)
    assert out.shape == (N, L_trg, trg_vocab_size)
    print("KERNEL_OK")
</pallas_src>

<mosaic_0001>
module attributes {stable_mosaic.version = 11 : i64} {
  func.func @_decoder_stack_kernel(%arg0: memref<16x32xf32, #tpu.memory_space<vmem>>, %arg1: memref<16x32xf32, #tpu.memory_space<vmem>>, %arg2: memref<2x8x8xf32, #tpu.memory_space<vmem>>, %arg3: memref<2x1x8xf32, #tpu.memory_space<vmem>>, %arg4: memref<2x32x96xf32, #tpu.memory_space<vmem>>, %arg5: memref<2x1x96xf32, #tpu.memory_space<vmem>>, %arg6: memref<2x32x32xf32, #tpu.memory_space<vmem>>, %arg7: memref<2x1x32xf32, #tpu.memory_space<vmem>>, %arg8: memref<2x1x32xf32, #tpu.memory_space<vmem>>, %arg9: memref<2x1x32xf32, #tpu.memory_space<vmem>>, %arg10: memref<2x32x32xf32, #tpu.memory_space<vmem>>, %arg11: memref<2x1x32xf32, #tpu.memory_space<vmem>>, %arg12: memref<2x32x64xf32, #tpu.memory_space<vmem>>, %arg13: memref<2x1x64xf32, #tpu.memory_space<vmem>>, %arg14: memref<2x32x32xf32, #tpu.memory_space<vmem>>, %arg15: memref<2x1x32xf32, #tpu.memory_space<vmem>>, %arg16: memref<2x1x32xf32, #tpu.memory_space<vmem>>, %arg17: memref<2x1x32xf32, #tpu.memory_space<vmem>>, %arg18: memref<2x32x64xf32, #tpu.memory_space<vmem>>, %arg19: memref<2x1x64xf32, #tpu.memory_space<vmem>>, %arg20: memref<2x64x32xf32, #tpu.memory_space<vmem>>, %arg21: memref<2x1x32xf32, #tpu.memory_space<vmem>>, %arg22: memref<2x1x32xf32, #tpu.memory_space<vmem>>, %arg23: memref<2x1x32xf32, #tpu.memory_space<vmem>>, %arg24: memref<32x128xf32, #tpu.memory_space<vmem>>, %arg25: memref<1x128xf32, #tpu.memory_space<vmem>>, %arg26: memref<16x128xf32, #tpu.memory_space<vmem>>) attributes {dimension_semantics = [], scalar_prefetch = 0 : i64, scratch_operands = 0 : i64, tpu.core_type = #tpu.core_type<tc>} {
    %c0 = arith.constant 0 : index
    %c0_0 = arith.constant 0 : index
    %0 = vector.load %arg0[%c0, %c0_0] : memref<16x32xf32, #tpu.memory_space<vmem>>, vector<16x32xf32>
    %c0_1 = arith.constant 0 : index
    %c0_2 = arith.constant 0 : index
    %1 = vector.load %arg1[%c0_1, %c0_2] : memref<16x32xf32, #tpu.memory_space<vmem>>, vector<16x32xf32>
    %c0_3 = arith.constant 0 : index
    %c0_4 = arith.constant 0 : index
    %c0_5 = arith.constant 0 : index
    %2 = vector.load %arg2[%c0_3, %c0_4, %c0_5] : memref<2x8x8xf32, #tpu.memory_space<vmem>>, vector<1x8x8xf32>
    %3 = vector.shape_cast %2 : vector<1x8x8xf32> to vector<8x8xf32>
    %cst = arith.constant 0.000000e+00 : f32
    %4 = vector.broadcast %cst : f32 to vector<8x8xf32>
    %5 = arith.cmpf oeq, %3, %4 : vector<8x8xf32>
    %cst_6 = arith.constant -1.000000e+20 : f32
    %cst_7 = arith.constant 0.000000e+00 : f32
    %6 = vector.broadcast %cst_6 : f32 to vector<8x8xf32>
    %7 = vector.broadcast %cst_7 : f32 to vector<8x8xf32>
    %8 = arith.select %5, %6, %7 : vector<8x8xi1>, vector<8x8xf32>
    %c1 = arith.constant 1 : index
    %c0_8 = arith.constant 0 : index
    %c0_9 = arith.constant 0 : index
    %9 = vector.load %arg2[%c1, %c0_8, %c0_9] : memref<2x8x8xf32, #tpu.memory_space<vmem>>, vector<1x8x8xf32>
    %10 = vector.shape_cast %9 : vector<1x8x8xf32> to vector<8x8xf32>
    %cst_10 = arith.constant 0.000000e+00 : f32
    %11 = vector.broadcast %cst_10 : f32 to vector<8x8xf32>
    %12 = arith.cmpf oeq, %10, %11 : vector<8x8xf32>
    %cst_11 = arith.constant -1.000000e+20 : f32
    %cst_12 = arith.constant 0.000000e+00 : f32
    %13 = vector.broadcast %cst_11 : f32 to vector<8x8xf32>
    %14 = vector.broadcast %cst_12 : f32 to vector<8x8xf32>
    %15 = arith.select %12, %13, %14 : vector<8x8xi1>, vector<8x8xf32>
    %c0_13 = arith.constant 0 : index
    %c0_14 = arith.constant 0 : index
    %c0_15 = arith.constant 0 : index
    %16 = vector.load %arg3[%c0_13, %c0_14, %c0_15] : memref<2x1x8xf32, #tpu.memory_space<vmem>>, vector<1x1x8xf32>
    %17 = vector.shape_cast %16 : vector<1x1x8xf32> to vector<1x8xf32>
    %18 = vector.shape_cast %17 : vector<1x8xf32> to vector<1x8xf32>
    %19 = vector.broadcast %18 : vector<1x8xf32> to vector<8x8xf32>
    %cst_16 = arith.constant 0.000000e+00 : f32
    %20 = vector.broadcast %cst_16 : f32 to vector<8x8xf32>
    %21 = arith.cmpf oeq, %19, %20 : vector<8x8xf32>
    %cst_17 = arith.constant -1.000000e+20 : f32
    %cst_18 = arith.constant 0.000000e+00 : f32
    %22 = vector.broadcast %cst_17 : f32 to vector<8x8xf32>
    %23 = vector.broadcast %cst_18 : f32 to vector<8x8xf32>
    %24 = arith.select %21, %22, %23 : vector<8x8xi1>, vector<8x8xf32>
    %c1_19 = arith.constant 1 : index
    %c0_20 = arith.constant 0 : index
    %c0_21 = arith.constant 0 : index
    %25 = vector.load %arg3[%c1_19, %c0_20, %c0_21] : memref<2x1x8xf32, #tpu.memory_space<vmem>>, vector<1x1x8xf32>
    %26 = vector.shape_cast %25 : vector<1x1x8xf32> to vector<1x8xf32>
    %27 = vector.shape_cast %26 : vector<1x8xf32> to vector<1x8xf32>
    %28 = vector.broadcast %27 : vector<1x8xf32> to vector<8x8xf32>
    %cst_22 = arith.constant 0.000000e+00 : f32
    %29 = vector.broadcast %cst_22 : f32 to vector<8x8xf32>
    %30 = arith.cmpf oeq, %28, %29 : vector<8x8xf32>
    %cst_23 = arith.constant -1.000000e+20 : f32
    %cst_24 = arith.constant 0.000000e+00 : f32
    %31 = vector.broadcast %cst_23 : f32 to vector<8x8xf32>
    %32 = vector.broadcast %cst_24 : f32 to vector<8x8xf32>
    %33 = arith.select %30, %31, %32 : vector<8x8xi1>, vector<8x8xf32>
    %c0_25 = arith.constant 0 : index
    %c0_26 = arith.constant 0 : index
    %c0_27 = arith.constant 0 : index
    %34 = vector.load %arg4[%c0_25, %c0_26, %c0_27] : memref<2x32x96xf32, #tpu.memory_space<vmem>>, vector<1x32x96xf32>
    %35 = vector.shape_cast %34 : vector<1x32x96xf32> to vector<32x96xf32>
    %cst_28 = arith.constant dense<0.000000e+00> : vector<16x96xf32>
    %36 = tpu.matmul %0, %35, %cst_28 {dimension_numbers = #tpu.dot_dimension_numbers<[1], [0], [0], [1], [0, 0, 1, 1], [], []>} : vector<16x32xf32>, vector<32x96xf32>, vector<16x96xf32> -> vector<16x96xf32>
    %c0_29 = arith.constant 0 : index
    %c0_30 = arith.constant 0 : index
    %c0_31 = arith.constant 0 : index
    %37 = vector.load %arg5[%c0_29, %c0_30, %c0_31] : memref<2x1x96xf32, #tpu.memory_space<vmem>>, vector<1x1x96xf32>
    %38 = vector.shape_cast %37 : vector<1x1x96xf32> to vector<1x96xf32>
    %39 = vector.broadcast %38 : vector<1x96xf32> to vector<16x96xf32>
    %40 = arith.addf %36, %39 : vector<16x96xf32>
    %41 = vector.extract_strided_slice %40 {offsets = [0, 0], sizes = [8, 96], strides = [1, 1]} : vector<16x96xf32> to vector<8x96xf32>
    %42 = vector.extract_strided_slice %41 {offsets = [0, 0], sizes = [8, 32], strides = [1, 1]} : vector<8x96xf32> to vector<8x32xf32>
    %43 = vector.extract_strided_slice %41 {offsets = [0, 32], sizes = [8, 32], strides = [1, 1]} : vector<8x96xf32> to vector<8x32xf32>
    %44 = vector.extract_strided_slice %41 {offsets = [0, 64], sizes = [8, 32], strides = [1, 1]} : vector<8x96xf32> to vector<8x32xf32>
    %45 = vector.extract_strided_slice %42 {offsets = [0, 0], sizes = [8, 8], strides = [1, 1]} : vector<8x32xf32> to vector<8x8xf32>
    %46 = vector.extract_strided_slice %42 {offsets = [0, 8], sizes = [8, 8], strides = [1, 1]} : vector<8x32xf32> to vector<8x8xf32>
    %47 = vector.extract_strided_slice %42 {offsets = [0, 16], sizes = [8, 8], strides = [1, 1]} : vector<8x32xf32> to vector<8x8xf32>
    %48 = vector.extract_strided_slice %42 {offsets = [0, 24], sizes = [8, 8], strides = [1, 1]} : vector<8x32xf32> to vector<8x8xf32>
    %49 = vector.shape_cast %45 : vector<8x8xf32> to vector<1x8x8xf32>
    %50 = vector.shape_cast %46 : vector<8x8xf32> to vector<1x8x8xf32>
    %51 = vector.shape_cast %47 : vector<8x8xf32> to vector<1x8x8xf32>
    %52 = vector.shape_cast %48 : vector<8x8xf32> to vector<1x8x8xf32>
    %53 = tpu.concatenate %49, %50, %51, %52 in 0 : vector<1x8x8xf32>, vector<1x8x8xf32>, vector<1x8x8xf32>, vector<1x8x8xf32> -> vector<4x8x8xf32>
    %54 = vector.extract_strided_slice %43 {offsets = [0, 0], sizes = [8, 8], strides = [1, 1]} : vector<8x32xf32> to vector<8x8xf32>
    %55 = vector.extract_strided_slice %43 {offsets = [0, 8], sizes = [8, 8], strides = [1, 1]} : vector<8x32xf32> to vector<8x8xf32>
    %56 = vector.extract_strided_slice %43 {offsets = [0, 16], sizes = [8, 8], strides = [1, 1]} : vector<8x32xf32> to vector<8x8xf32>
    %57 = vector.extract_strided_slice %43 {offsets = [0, 24], sizes = [8, 8], strides = [1, 1]} : vector<8x32xf32> to vector<8x8xf32>
    %58 = vector.shape_cast %54 : vector<8x8xf32> to vector<1x8x8xf32>
    %59 = vector.shape_cast %55 : vector<8x8xf32> to vector<1x8x8xf32>
    %60 = vector.shape_cast %56 : vector<8x8xf32> to vector<1x8x8xf32>
    %61 = vector.shape_cast %57 : vector<8x8xf32> to vector<1x8x8xf32>
    %62 = tpu.concatenate %58, %59, %60, %61 in 0 : vector<1x8x8xf32>, vector<1x8x8xf32>, vector<1x8x8xf32>, vector<1x8x8xf32> -> vector<4x8x8xf32>
    %63 = vector.extract_strided_slice %44 {offsets = [0, 0], sizes = [8, 8], strides = [1, 1]} : vector<8x32xf32> to vector<8x8xf32>
    %64 = vector.extract_strided_slice %44 {offsets = [0, 8], sizes = [8, 8], strides = [1, 1]} : vector<8x32xf32> to vector<8x8xf32>
    %65 = vector.extract_strided_slice %44 {offsets = [0, 16], sizes = [8, 8], strides = [1, 1]} : vector<8x32xf32> to vector<8x8xf32>
    %66 = vector.extract_strided_slice %44 {offsets = [0, 24], sizes = [8, 8], strides = [1, 1]} : vector<8x32xf32> to vector<8x8xf32>
    %67 = vector.shape_cast %63 : vector<8x8xf32> to vector<1x8x8xf32>
    %68 = vector.shape_cast %64 : vector<8x8xf32> to vector<1x8x8xf32>
    %69 = vector.shape_cast %65 : vector<8x8xf32> to vector<1x8x8xf32>
    %70 = vector.shape_cast %66 : vector<8x8xf32> to vector<1x8x8xf32>
    %71 = tpu.concatenate %67, %68, %69, %70 in 0 : vector<1x8x8xf32>, vector<1x8x8xf32>, vector<1x8x8xf32>, vector<1x8x8xf32> -> vector<4x8x8xf32>
    "tpu.trace_start"() <{level = 10 : i32, message = "hqd,hkd->hqk"}> : () -> ()
    %cst_32 = arith.constant dense<0.000000e+00> : vector<4x8x8xf32>
    %72 = tpu.matmul %53, %62, %cst_32 {dimension_numbers = #tpu.dot_dimension_numbers<[2], [2], [1], [1], [0, 0, 0, 1, 1, 1], [0], [0]>} : vector<4x8x8xf32>, vector<4x8x8xf32>, vector<4x8x8xf32> -> vector<4x8x8xf32>
    "tpu.trace_stop"() : () -> ()
    %73 = vector.shape_cast %8 : vector<8x8xf32> to vector<1x8x8xf32>
    %74 = vector.broadcast %73 : vector<1x8x8xf32> to vector<4x8x8xf32>
    %75 = arith.addf %72, %74 : vector<4x8x8xf32>
    %cst_33 = arith.constant 0.176776692 : f32
    %76 = vector.broadcast %cst_33 : f32 to vector<4x8x8xf32>
    %77 = arith.mulf %75, %76 : vector<4x8x8xf32>
    %cst_34 = arith.constant dense<0xFF800000> : vector<4x8xf32>
    %78 = vector.multi_reduction <maximumf>, %77, %cst_34 [2] : vector<4x8x8xf32> to vector<4x8xf32>
    %79 = vector.shape_cast %78 : vector<4x8xf32> to vector<4x8x1xf32>
    %80 = vector.broadcast %79 : vector<4x8x1xf32> to vector<4x8x8xf32>
    %81 = arith.subf %77, %80 : vector<4x8x8xf32>
    %82 = math.exp %81 : vector<4x8x8xf32>
    %cst_35 = arith.constant dense<0.000000e+00> : vector<4x8xf32>
    %83 = vector.multi_reduction <add>, %82, %cst_35 [2] : vector<4x8x8xf32> to vector<4x8xf32>
    %84 = vector.shape_cast %83 : vector<4x8xf32> to vector<4x8x1xf32>
    %85 = tpu.reciprocal %84 : vector<4x8x1xf32> -> vector<4x8x1xf32>
    %86 = vector.broadcast %85 : vector<4x8x1xf32> to vector<4x8x8xf32>
    %87 = arith.mulf %82, %86 : vector<4x8x8xf32>
    "tpu.trace_start"() <{level = 10 : i32, message = "hqk,hkd->hqd"}> : () -> ()
    %cst_36 = arith.constant dense<0.000000e+00> : vector<4x8x8xf32>
    %88 = tpu.matmul %87, %71, %cst_36 {dimension_numbers = #tpu.dot_dimension_numbers<[2], [1], [1], [2], [0, 0, 0, 1, 1, 2], [0], [0]>} : vector<4x8x8xf32>, vector<4x8x8xf32>, vector<4x8x8xf32> -> vector<4x8x8xf32>
    "tpu.trace_stop"() : () -> ()
    %89 = vector.extract_strided_slice %88 {offsets = [0, 0, 0], sizes = [1, 8, 8], strides = [1, 1, 1]} : vector<4x8x8xf32> to vector<1x8x8xf32>
    %90 = vector.shape_cast %89 : vector<1x8x8xf32> to vector<8x8xf32>
    %91 = vector.extract_strided_slice %88 {offsets = [1, 0, 0], sizes = [1, 8, 8], strides = [1, 1, 1]} : vector<4x8x8xf32> to vector<1x8x8xf32>
    %92 = vector.shape_cast %91 : vector<1x8x8xf32> to vector<8x8xf32>
    %93 = vector.extract_strided_slice %88 {offsets = [2, 0, 0], sizes = [1, 8, 8], strides = [1, 1, 1]} : vector<4x8x8xf32> to vector<1x8x8xf32>
    %94 = vector.shape_cast %93 : vector<1x8x8xf32> to vector<8x8xf32>
    %95 = vector.extract_strided_slice %88 {offsets = [3, 0, 0], sizes = [1, 8, 8], strides = [1, 1, 1]} : vector<4x8x8xf32> to vector<1x8x8xf32>
    %96 = vector.shape_cast %95 : vector<1x8x8xf32> to vector<8x8xf32>
    %97 = tpu.concatenate %90, %92, %94, %96 in 1 : vector<8x8xf32>, vector<8x8xf32>, vector<8x8xf32>, vector<8x8xf32> -> vector<8x32xf32>
    %98 = vector.extract_strided_slice %40 {offsets = [8, 0], sizes = [8, 96], strides = [1, 1]} : vector<16x96xf32> to vector<8x96xf32>
    %99 = vector.extract_strided_slice %98 {offsets = [0, 0], sizes = [8, 32], strides = [1, 1]} : vector<8x96xf32> to vector<8x32xf32>
    %100 = vector.extract_strided_slice %98 {offsets = [0, 32], sizes = [8, 32], strides = [1, 1]} : vector<8x96xf32> to vector<8x32xf32>
    %101 = vector.extract_strided_slice %98 {offsets = [0, 64], sizes = [8, 32], strides = [1, 1]} : vector<8x96xf32> to vector<8x32xf32>
    %102 = vector.extract_strided_slice %99 {offsets = [0, 0], sizes = [8, 8], strides = [1, 1]} : vector<8x32xf32> to vector<8x8xf32>
    %103 = vector.extract_strided_slice %99 {offsets = [0, 8], sizes = [8, 8], strides = [1, 1]} : vector<8x32xf32> to vector<8x8xf32>
    %104 = vector.extract_strided_slice %99 {offsets = [0, 16], sizes = [8, 8], strides = [1, 1]} : vector<8x32xf32> to vector<8x8xf32>
    %105 = vector.extract_strided_slice %99 {offsets = [0, 24], sizes = [8, 8], strides = [1, 1]} : vector<8x32xf32> to vector<8x8xf32>
    %106 = vector.shape_cast %102 : vector<8x8xf32> to vector<1x8x8xf32>
    %107 = vector.shape_cast %103 : vector<8x8xf32> to vector<1x8x8xf32>
    %108 = vector.shape_cast %104 : vector<8x8xf32> to vector<1x8x8xf32>
    %109 = vector.shape_cast %105 : vector<8x8xf32> to vector<1x8x8xf32>
    %110 = tpu.concatenate %106, %107, %108, %109 in 0 : vector<1x8x8xf32>, vector<1x8x8xf32>, vector<1x8x8xf32>, vector<1x8x8xf32> -> vector<4x8x8xf32>
    %111 = vector.extract_strided_slice %100 {offsets = [0, 0], sizes = [8, 8], strides = [1, 1]} : vector<8x32xf32> to vector<8x8xf32>
    %112 = vector.extract_strided_slice %100 {offsets = [0, 8], sizes = [8, 8], strides = [1, 1]} : vector<8x32xf32> to vector<8x8xf32>
    %113 = vector.extract_strided_slice %100 {offsets = [0, 16], sizes = [8, 8], strides = [1, 1]} : vector<8x32xf32> to vector<8x8xf32>
    %114 = vector.extract_strided_slice %100 {offsets = [0, 24], sizes = [8, 8], strides = [1, 1]} : vector<8x32xf32> to vector<8x8xf32>
    %115 = vector.shape_cast %111 : vector<8x8xf32> to vector<1x8x8xf32>
    %116 = vector.shape_cast %112 : vector<8x8xf32> to vector<1x8x8xf32>
    %117 = vector.shape_cast %113 : vector<8x8xf32> to vector<1x8x8xf32>
    %118 = vector.shape_cast %114 : vector<8x8xf32> to vector<1x8x8xf32>
    %119 = tpu.concatenate %115, %116, %117, %118 in 0 : vector<1x8x8xf32>, vector<1x8x8xf32>, vector<1x8x8xf32>, vector<1x8x8xf32> -> vector<4x8x8xf32>
    %120 = vector.extract_strided_slice %101 {offsets = [0, 0], sizes = [8, 8], strides = [1, 1]} : vector<8x32xf32> to vector<8x8xf32>
    %121 = vector.extract_strided_slice %101 {offsets = [0, 8], sizes = [8, 8], strides = [1, 1]} : vector<8x32xf32> to vector<8x8xf32>
    %122 = vector.extract_strided_slice %101 {offsets = [0, 16], sizes = [8, 8], strides = [1, 1]} : vector<8x32xf32> to vector<8x8xf32>
    %123 = vector.extract_strided_slice %101 {offsets = [0, 24], sizes = [8, 8], strides = [1, 1]} : vector<8x32xf32> to vector<8x8xf32>
    %124 = vector.shape_cast %120 : vector<8x8xf32> to vector<1x8x8xf32>
    %125 = vector.shape_cast %121 : vector<8x8xf32> to vector<1x8x8xf32>
    %126 = vector.shape_cast %122 : vector<8x8xf32> to vector<1x8x8xf32>
    %127 = vector.shape_cast %123 : vector<8x8xf32> to vector<1x8x8xf32>
    %128 = tpu.concatenate %124, %125, %126, %127 in 0 : vector<1x8x8xf32>, vector<1x8x8xf32>, vector<1x8x8xf32>, vector<1x8x8xf32> -> vector<4x8x8xf32>
    "tpu.trace_start"() <{level = 10 : i32, message = "hqd,hkd->hqk"}> : () -> ()
    %cst_37 = arith.constant dense<0.000000e+00> : vector<4x8x8xf32>
    %129 = tpu.matmul %110, %119, %cst_37 {dimension_numbers = #tpu.dot_dimension_numbers<[2], [2], [1], [1], [0, 0, 0, 1, 1, 1], [0], [0]>} : vector<4x8x8xf32>, vector<4x8x8xf32>, vector<4x8x8xf32> -> vector<4x8x8xf32>
    "tpu.trace_stop"() : () -> ()
    %130 = vector.shape_cast %15 : vector<8x8xf32> to vector<1x8x8xf32>
    %131 = vector.broadcast %130 : vector<1x8x8xf32> to vector<4x8x8xf32>
    %132 = arith.addf %129, %131 : vector<4x8x8xf32>
    %cst_38 = arith.constant 0.176776692 : f32
    %133 = vector.broadcast %cst_38 : f32 to vector<4x8x8xf32>
    %134 = arith.mulf %132, %133 : vector<4x8x8xf32>
    %cst_39 = arith.constant dense<0xFF800000> : vector<4x8xf32>
    %135 = vector.multi_reduction <maximumf>, %134, %cst_39 [2] : vector<4x8x8xf32> to vector<4x8xf32>
    %136 = vector.shape_cast %135 : vector<4x8xf32> to vector<4x8x1xf32>
    %137 = vector.broadcast %136 : vector<4x8x1xf32> to vector<4x8x8xf32>
    %138 = arith.subf %134, %137 : vector<4x8x8xf32>
    %139 = math.exp %138 : vector<4x8x8xf32>
    %cst_40 = arith.constant dense<0.000000e+00> : vector<4x8xf32>
    %140 = vector.multi_reduction <add>, %139, %cst_40 [2] : vector<4x8x8xf32> to vector<4x8xf32>
    %141 = vector.shape_cast %140 : vector<4x8xf32> to vector<4x8x1xf32>
    %142 = tpu.reciprocal %141 : vector<4x8x1xf32> -> vector<4x8x1xf32>
    %143 = vector.broadcast %142 : vector<4x8x1xf32> to vector<4x8x8xf32>
    %144 = arith.mulf %139, %143 : vector<4x8x8xf32>
    "tpu.trace_start"() <{level = 10 : i32, message = "hqk,hkd->hqd"}> : () -> ()
    %cst_41 = arith.constant dense<0.000000e+00> : vector<4x8x8xf32>
    %145 = tpu.matmul %144, %128, %cst_41 {dimension_numbers = #tpu.dot_dimension_numbers<[2], [1], [1], [2], [0, 0, 0, 1, 1, 2], [0], [0]>} : vector<4x8x8xf32>, vector<4x8x8xf32>, vector<4x8x8xf32> -> vector<4x8x8xf32>
    "tpu.trace_stop"() : () -> ()
    %146 = vector.extract_strided_slice %145 {offsets = [0, 0, 0], sizes = [1, 8, 8], strides = [1, 1, 1]} : vector<4x8x8xf32> to vector<1x8x8xf32>
    %147 = vector.shape_cast %146 : vector<1x8x8xf32> to vector<8x8xf32>
    %148 = vector.extract_strided_slice %145 {offsets = [1, 0, 0], sizes = [1, 8, 8], strides = [1, 1, 1]} : vector<4x8x8xf32> to vector<1x8x8xf32>
    %149 = vector.shape_cast %148 : vector<1x8x8xf32> to vector<8x8xf32>
    %150 = vector.extract_strided_slice %145 {offsets = [2, 0, 0], sizes = [1, 8, 8], strides = [1, 1, 1]} : vector<4x8x8xf32> to vector<1x8x8xf32>
    %151 = vector.shape_cast %150 : vector<1x8x8xf32> to vector<8x8xf32>
    %152 = vector.extract_strided_slice %145 {offsets = [3, 0, 0], sizes = [1, 8, 8], strides = [1, 1, 1]} : vector<4x8x8xf32> to vector<1x8x8xf32>
    %153 = vector.shape_cast %152 : vector<1x8x8xf32> to vector<8x8xf32>
    %154 = tpu.concatenate %147, %149, %151, %153 in 1 : vector<8x8xf32>, vector<8x8xf32>, vector<8x8xf32>, vector<8x8xf32> -> vector<8x32xf32>
    %155 = tpu.concatenate %97, %154 in 0 : vector<8x32xf32>, vector<8x32xf32> -> vector<16x32xf32>
    %c0_42 = arith.constant 0 : index
    %c0_43 = arith.constant 0 : index
    %c0_44 = arith.constant 0 : index
    %156 = vector.load %arg6[%c0_42, %c0_43, %c0_44] : memref<2x32x32xf32, #tpu.memory_space<vmem>>, vector<1x32x32xf32>
    %157 = vector.shape_cast %156 : vector<1x32x32xf32> to vector<32x32xf32>
    %cst_45 = arith.constant dense<0.000000e+00> : vector<16x32xf32>
    %158 = tpu.matmul %155, %157, %cst_45 {dimension_numbers = #tpu.dot_dimension_numbers<[1], [0], [0], [1], [0, 0, 1, 1], [], []>} : vector<16x32xf32>, vector<32x32xf32>, vector<16x32xf32> -> vector<16x32xf32>
    %c0_46 = arith.constant 0 : index
    %c0_47 = arith.constant 0 : index
    %c0_48 = arith.constant 0 : index
    %159 = vector.load %arg7[%c0_46, %c0_47, %c0_48] : memref<2x1x32xf32, #tpu.memory_space<vmem>>, vector<1x1x32xf32>
    %160 = vector.shape_cast %159 : vector<1x1x32xf32> to vector<1x32xf32>
    %161 = vector.broadcast %160 : vector<1x32xf32> to vector<16x32xf32>
    %162 = arith.addf %158, %161 : vector<16x32xf32>
    %163 = arith.addf %162, %0 : vector<16x32xf32>
    %c0_49 = arith.constant 0 : index
    %c0_50 = arith.constant 0 : index
    %c0_51 = arith.constant 0 : index
    %164 = vector.load %arg8[%c0_49, %c0_50, %c0_51] : memref<2x1x32xf32, #tpu.memory_space<vmem>>, vector<1x1x32xf32>
    %165 = vector.shape_cast %164 : vector<1x1x32xf32> to vector<1x32xf32>
    %c0_52 = arith.constant 0 : index
    %c0_53 = arith.constant 0 : index
    %c0_54 = arith.constant 0 : index
    %166 = vector.load %arg9[%c0_52, %c0_53, %c0_54] : memref<2x1x32xf32, #tpu.memory_space<vmem>>, vector<1x1x32xf32>
    %167 = vector.shape_cast %166 : vector<1x1x32xf32> to vector<1x32xf32>
    %cst_55 = arith.constant dense<0.000000e+00> : vector<16xf32>
    %168 = vector.multi_reduction <add>, %163, %cst_55 [1] : vector<16x32xf32> to vector<16xf32>
    %169 = vector.shape_cast %168 : vector<16xf32> to vector<16x1xf32>
    %cst_56 = arith.constant 3.200000e+01 : f32
    %170 = vector.broadcast %cst_56 : f32 to vector<16x1xf32>
    %171 = arith.divf %169, %170 : vector<16x1xf32>
    %172 = vector.broadcast %171 : vector<16x1xf32> to vector<16x32xf32>
    %173 = arith.subf %163, %172 : vector<16x32xf32>
    %174 = arith.mulf %173, %173 : vector<16x32xf32>
    %cst_57 = arith.constant dense<0.000000e+00> : vector<16xf32>
    %175 = vector.multi_reduction <add>, %174, %cst_57 [1] : vector<16x32xf32> to vector<16xf32>
    %176 = vector.shape_cast %175 : vector<16xf32> to vector<16x1xf32>
    %cst_58 = arith.constant 3.200000e+01 : f32
    %177 = vector.broadcast %cst_58 : f32 to vector<16x1xf32>
    %178 = arith.divf %176, %177 : vector<16x1xf32>
    %179 = vector.broadcast %171 : vector<16x1xf32> to vector<16x32xf32>
    %180 = arith.subf %163, %179 : vector<16x32xf32>
    %cst_59 = arith.constant 9.99999974E-6 : f32
    %181 = vector.broadcast %cst_59 : f32 to vector<16x1xf32>
    %182 = arith.addf %178, %181 : vector<16x1xf32>
    %183 = math.rsqrt %182 : vector<16x1xf32>
    %184 = vector.broadcast %183 : vector<16x1xf32> to vector<16x32xf32>
    %185 = arith.mulf %180, %184 : vector<16x32xf32>
    %186 = vector.broadcast %165 : vector<1x32xf32> to vector<16x32xf32>
    %187 = arith.mulf %185, %186 : vector<16x32xf32>
    %188 = vector.broadcast %167 : vector<1x32xf32> to vector<16x32xf32>
    %189 = arith.addf %187, %188 : vector<16x32xf32>
    %c0_60 = arith.constant 0 : index
    %c0_61 = arith.constant 0 : index
    %c0_62 = arith.constant 0 : index
    %190 = vector.load %arg10[%c0_60, %c0_61, %c0_62] : memref<2x32x32xf32, #tpu.memory_space<vmem>>, vector<1x32x32xf32>
    %191 = vector.shape_cast %190 : vector<1x32x32xf32> to vector<32x32xf32>
    %cst_63 = arith.constant dense<0.000000e+00> : vector<16x32xf32>
    %192 = tpu.matmul %189, %191, %cst_63 {dimension_numbers = #tpu.dot_dimension_numbers<[1], [0], [0], [1], [0, 0, 1, 1], [], []>} : vector<16x32xf32>, vector<32x32xf32>, vector<16x32xf32> -> vector<16x32xf32>
    %c0_64 = arith.constant 0 : index
    %c0_65 = arith.constant 0 : index
    %c0_66 = arith.constant 0 : index
    %193 = vector.load %arg11[%c0_64, %c0_65, %c0_66] : memref<2x1x32xf32, #tpu.memory_space<vmem>>, vector<1x1x32xf32>
    %194 = vector.shape_cast %193 : vector<1x1x32xf32> to vector<1x32xf32>
    %195 = vector.broadcast %194 : vector<1x32xf32> to vector<16x32xf32>
    %196 = arith.addf %192, %195 : vector<16x32xf32>
    %c0_67 = arith.constant 0 : index
    %c0_68 = arith.constant 0 : index
    %c0_69 = arith.constant 0 : index
    %197 = vector.load %arg12[%c0_67, %c0_68, %c0_69] : memref<2x32x64xf32, #tpu.memory_space<vmem>>, vector<1x32x64xf32>
    %198 = vector.shape_cast %197 : vector<1x32x64xf32> to vector<32x64xf32>
    %cst_70 = arith.constant dense<0.000000e+00> : vector<16x64xf32>
    %199 = tpu.matmul %1, %198, %cst_70 {dimension_numbers = #tpu.dot_dimension_numbers<[1], [0], [0], [1], [0, 0, 1, 1], [], []>} : vector<16x32xf32>, vector<32x64xf32>, vector<16x64xf32> -> vector<16x64xf32>
    %c0_71 = arith.constant 0 : index
    %c0_72 = arith.constant 0 : index
    %c0_73 = arith.constant 0 : index
    %200 = vector.load %arg13[%c0_71, %c0_72, %c0_73] : memref<2x1x64xf32, #tpu.memory_space<vmem>>, vector<1x1x64xf32>
    %201 = vector.shape_cast %200 : vector<1x1x64xf32> to vector<1x64xf32>
    %202 = vector.broadcast %201 : vector<1x64xf32> to vector<16x64xf32>
    %203 = arith.addf %199, %202 : vector<16x64xf32>
    %204 = vector.extract_strided_slice %196 {offsets = [0, 0], sizes = [8, 32], strides = [1, 1]} : vector<16x32xf32> to vector<8x32xf32>
    %205 = vector.extract_strided_slice %203 {offsets = [0, 0], sizes = [8, 64], strides = [1, 1]} : vector<16x64xf32> to vector<8x64xf32>
    %206 = vector.extract_strided_slice %205 {offsets = [0, 0], sizes = [8, 32], strides = [1, 1]} : vector<8x64xf32> to vector<8x32xf32>
    %207 = vector.extract_strided_slice %205 {offsets = [0, 32], sizes = [8, 32], strides = [1, 1]} : vector<8x64xf32> to vector<8x32xf32>
    %208 = vector.extract_strided_slice %204 {offsets = [0, 0], sizes = [8, 8], strides = [1, 1]} : vector<8x32xf32> to vector<8x8xf32>
    %209 = vector.extract_strided_slice %204 {offsets = [0, 8], sizes = [8, 8], strides = [1, 1]} : vector<8x32xf32> to vector<8x8xf32>
    %210 = vector.extract_strided_slice %204 {offsets = [0, 16], sizes = [8, 8], strides = [1, 1]} : vector<8x32xf32> to vector<8x8xf32>
    %211 = vector.extract_strided_slice %204 {offsets = [0, 24], sizes = [8, 8], strides = [1, 1]} : vector<8x32xf32> to vector<8x8xf32>
    %212 = vector.shape_cast %208 : vector<8x8xf32> to vector<1x8x8xf32>
    %213 = vector.shape_cast %209 : vector<8x8xf32> to vector<1x8x8xf32>
    %214 = vector.shape_cast %210 : vector<8x8xf32> to vector<1x8x8xf32>
    %215 = vector.shape_cast %211 : vector<8x8xf32> to vector<1x8x8xf32>
    %216 = tpu.concatenate %212, %213, %214, %215 in 0 : vector<1x8x8xf32>, vector<1x8x8xf32>, vector<1x8x8xf32>, vector<1x8x8xf32> -> vector<4x8x8xf32>
    %217 = vector.extract_strided_slice %206 {offsets = [0, 0], sizes = [8, 8], strides = [1, 1]} : vector<8x32xf32> to vector<8x8xf32>
    %218 = vector.extract_strided_slice %206 {offsets = [0, 8], sizes = [8, 8], strides = [1, 1]} : vector<8x32xf32> to vector<8x8xf32>
    %219 = vector.extract_strided_slice %206 {offsets = [0, 16], sizes = [8, 8], strides = [1, 1]} : vector<8x32xf32> to vector<8x8xf32>
    %220 = vector.extract_strided_slice %206 {offsets = [0, 24], sizes = [8, 8], strides = [1, 1]} : vector<8x32xf32> to vector<8x8xf32>
    %221 = vector.shape_cast %217 : vector<8x8xf32> to vector<1x8x8xf32>
    %222 = vector.shape_cast %218 : vector<8x8xf32> to vector<1x8x8xf32>
    %223 = vector.shape_cast %219 : vector<8x8xf32> to vector<1x8x8xf32>
    %224 = vector.shape_cast %220 : vector<8x8xf32> to vector<1x8x8xf32>
    %225 = tpu.concatenate %221, %222, %223, %224 in 0 : vector<1x8x8xf32>, vector<1x8x8xf32>, vector<1x8x8xf32>, vector<1x8x8xf32> -> vector<4x8x8xf32>
    %226 = vector.extract_strided_slice %207 {offsets = [0, 0], sizes = [8, 8], strides = [1, 1]} : vector<8x32xf32> to vector<8x8xf32>
    %227 = vector.extract_strided_slice %207 {offsets = [0, 8], sizes = [8, 8], strides = [1, 1]} : vector<8x32xf32> to vector<8x8xf32>
    %228 = vector.extract_strided_slice %207 {offsets = [0, 16], sizes = [8, 8], strides = [1, 1]} : vector<8x32xf32> to vector<8x8xf32>
    %229 = vector.extract_strided_slice %207 {offsets = [0, 24], sizes = [8, 8], strides = [1, 1]} : vector<8x32xf32> to vector<8x8xf32>
    %230 = vector.shape_cast %226 : vector<8x8xf32> to vector<1x8x8xf32>
    %231 = vector.shape_cast %227 : vector<8x8xf32> to vector<1x8x8xf32>
    %232 = vector.shape_cast %228 : vector<8x8xf32> to vector<1x8x8xf32>
    %233 = vector.shape_cast %229 : vector<8x8xf32> to vector<1x8x8xf32>
    %234 = tpu.concatenate %230, %231, %232, %233 in 0 : vector<1x8x8xf32>, vector<1x8x8xf32>, vector<1x8x8xf32>, vector<1x8x8xf32> -> vector<4x8x8xf32>
    "tpu.trace_start"() <{level = 10 : i32, message = "hqd,hkd->hqk"}> : () -> ()
    %cst_74 = arith.constant dense<0.000000e+00> : vector<4x8x8xf32>
    %235 = tpu.matmul %216, %225, %cst_74 {dimension_numbers = #tpu.dot_dimension_numbers<[2], [2], [1], [1], [0, 0, 0, 1, 1, 1], [0], [0]>} : vector<4x8x8xf32>, vector<4x8x8xf32>, vector<4x8x8xf32> -> vector<4x8x8xf32>
    "tpu.trace_stop"() : () -> ()
    %236 = vector.shape_cast %24 : vector<8x8xf32> to vector<1x8x8xf32>
    %237 = vector.broadcast %236 : vector<1x8x8xf32> to vector<4x8x8xf32>
    %238 = arith.addf %235, %237 : vector<4x8x8xf32>
    %cst_75 = arith.constant 0.176776692 : f32
    %239 = vector.broadcast %cst_75 : f32 to vector<4x8x8xf32>
    %240 = arith.mulf %238, %239 : vector<4x8x8xf32>
    %cst_76 = arith.constant dense<0xFF800000> : vector<4x8xf32>
    %241 = vector.multi_reduction <maximumf>, %240, %cst_76 [2] : vector<4x8x8xf32> to vector<4x8xf32>
    %242 = vector.shape_cast %241 : vector<4x8xf32> to vector<4x8x1xf32>
    %243 = vector.broadcast %242 : vector<4x8x1xf32> to vector<4x8x8xf32>
    %244 = arith.subf %240, %243 : vector<4x8x8xf32>
    %245 = math.exp %244 : vector<4x8x8xf32>
    %cst_77 = arith.constant dense<0.000000e+00> : vector<4x8xf32>
    %246 = vector.multi_reduction <add>, %245, %cst_77 [2] : vector<4x8x8xf32> to vector<4x8xf32>
    %247 = vector.shape_cast %246 : vector<4x8xf32> to vector<4x8x1xf32>
    %248 = tpu.reciprocal %247 : vector<4x8x1xf32> -> vector<4x8x1xf32>
    %249 = vector.broadcast %248 : vector<4x8x1xf32> to vector<4x8x8xf32>
    %250 = arith.mulf %245, %249 : vector<4x8x8xf32>
    "tpu.trace_start"() <{level = 10 : i32, message = "hqk,hkd->hqd"}> : () -> ()
    %cst_78 = arith.constant dense<0.000000e+00> : vector<4x8x8xf32>
    %251 = tpu.matmul %250, %234, %cst_78 {dimension_numbers = #tpu.dot_dimension_numbers<[2], [1], [1], [2], [0, 0, 0, 1, 1, 2], [0], [0]>} : vector<4x8x8xf32>, vector<4x8x8xf32>, vector<4x8x8xf32> -> vector<4x8x8xf32>
    "tpu.trace_stop"() : () -> ()
    %252 = vector.extract_strided_slice %251 {offsets = [0, 0, 0], sizes = [1, 8, 8], strides = [1, 1, 1]} : vector<4x8x8xf32> to vector<1x8x8xf32>
    %253 = vector.shape_cast %252 : vector<1x8x8xf32> to vector<8x8xf32>
    %254 = vector.extract_strided_slice %251 {offsets = [1, 0, 0], sizes = [1, 8, 8], strides = [1, 1, 1]} : vector<4x8x8xf32> to vector<1x8x8xf32>
    %255 = vector.shape_cast %254 : vector<1x8x8xf32> to vector<8x8xf32>
    %256 = vector.extract_strided_slice %251 {offsets = [2, 0, 0], sizes = [1, 8, 8], strides = [1, 1, 1]} : vector<4x8x8xf32> to vector<1x8x8xf32>
    %257 = vector.shape_cast %256 : vector<1x8x8xf32> to vector<8x8xf32>
    %258 = vector.extract_strided_slice %251 {offsets = [3, 0, 0], sizes = [1, 8, 8], strides = [1, 1, 1]} : vector<4x8x8xf32> to vector<1x8x8xf32>
    %259 = vector.shape_cast %258 : vector<1x8x8xf32> to vector<8x8xf32>
    %260 = tpu.concatenate %253, %255, %257, %259 in 1 : vector<8x8xf32>, vector<8x8xf32>, vector<8x8xf32>, vector<8x8xf32> -> vector<8x32xf32>
    %261 = vector.extract_strided_slice %196 {offsets = [8, 0], sizes = [8, 32], strides = [1, 1]} : vector<16x32xf32> to vector<8x32xf32>
    %262 = vector.extract_strided_slice %203 {offsets = [8, 0], sizes = [8, 64], strides = [1, 1]} : vector<16x64xf32> to vector<8x64xf32>
    %263 = vector.extract_strided_slice %262 {offsets = [0, 0], sizes = [8, 32], strides = [1, 1]} : vector<8x64xf32> to vector<8x32xf32>
    %264 = vector.extract_strided_slice %262 {offsets = [0, 32], sizes = [8, 32], strides = [1, 1]} : vector<8x64xf32> to vector<8x32xf32>
    %265 = vector.extract_strided_slice %261 {offsets = [0, 0], sizes = [8, 8], strides = [1, 1]} : vector<8x32xf32> to vector<8x8xf32>
    %266 = vector.extract_strided_slice %261 {offsets = [0, 8], sizes = [8, 8], strides = [1, 1]} : vector<8x32xf32> to vector<8x8xf32>
    %267 = vector.extract_strided_slice %261 {offsets = [0, 16], sizes = [8, 8], strides = [1, 1]} : vector<8x32xf32> to vector<8x8xf32>
    %268 = vector.extract_strided_slice %261 {offsets = [0, 24], sizes = [8, 8], strides = [1, 1]} : vector<8x32xf32> to vector<8x8xf32>
    %269 = vector.shape_cast %265 : vector<8x8xf32> to vector<1x8x8xf32>
    %270 = vector.shape_cast %266 : vector<8x8xf32> to vector<1x8x8xf32>
    %271 = vector.shape_cast %267 : vector<8x8xf32> to vector<1x8x8xf32>
    %272 = vector.shape_cast %268 : vector<8x8xf32> to vector<1x8x8xf32>
    %273 = tpu.concatenate %269, %270, %271, %272 in 0 : vector<1x8x8xf32>, vector<1x8x8xf32>, vector<1x8x8xf32>, vector<1x8x8xf32> -> vector<4x8x8xf32>
    %274 = vector.extract_strided_slice %263 {offsets = [0, 0], sizes = [8, 8], strides = [1, 1]} : vector<8x32xf32> to vector<8x8xf32>
    %275 = vector.extract_strided_slice %263 {offsets = [0, 8], sizes = [8, 8], strides = [1, 1]} : vector<8x32xf32> to vector<8x8xf32>
    %276 = vector.extract_strided_slice %263 {offsets = [0, 16], sizes = [8, 8], strides = [1, 1]} : vector<8x32xf32> to vector<8x8xf32>
    %277 = vector.extract_strided_slice %263 {offsets = [0, 24], sizes = [8, 8], strides = [1, 1]} : vector<8x32xf32> to vector<8x8xf32>
    %278 = vector.shape_cast %274 : vector<8x8xf32> to vector<1x8x8xf32>
    %279 = vector.shape_cast %275 : vector<8x8xf32> to vector<1x8x8xf32>
    %280 = vector.shape_cast %276 : vector<8x8xf32> to vector<1x8x8xf32>
    %281 = vector.shape_cast %277 : vector<8x8xf32> to vector<1x8x8xf32>
    %282 = tpu.concatenate %278, %279, %280, %281 in 0 : vector<1x8x8xf32>, vector<1x8x8xf32>, vector<1x8x8xf32>, vector<1x8x8xf32> -> vector<4x8x8xf32>
    %283 = vector.extract_strided_slice %264 {offsets = [0, 0], sizes = [8, 8], strides = [1, 1]} : vector<8x32xf32> to vector<8x8xf32>
    %284 = vector.extract_strided_slice %264 {offsets = [0, 8], sizes = [8, 8], strides = [1, 1]} : vector<8x32xf32> to vector<8x8xf32>
    %285 = vector.extract_strided_slice %264 {offsets = [0, 16], sizes = [8, 8], strides = [1, 1]} : vector<8x32xf32> to vector<8x8xf32>
    %286 = vector.extract_strided_slice %264 {offsets = [0, 24], sizes = [8, 8], strides = [1, 1]} : vector<8x32xf32> to vector<8x8xf32>
    %287 = vector.shape_cast %283 : vector<8x8xf32> to vector<1x8x8xf32>
    %288 = vector.shape_cast %284 : vector<8x8xf32> to vector<1x8x8xf32>
    %289 = vector.shape_cast %285 : vector<8x8xf32> to vector<1x8x8xf32>
    %290 = vector.shape_cast %286 : vector<8x8xf32> to vector<1x8x8xf32>
    %291 = tpu.concatenate %287, %288, %289, %290 in 0 : vector<1x8x8xf32>, vector<1x8x8xf32>, vector<1x8x8xf32>, vector<1x8x8xf32> -> vector<4x8x8xf32>
    "tpu.trace_start"() <{level = 10 : i32, message = "hqd,hkd->hqk"}> : () -> ()
    %cst_79 = arith.constant dense<0.000000e+00> : vector<4x8x8xf32>
    %292 = tpu.matmul %273, %282, %cst_79 {dimension_numbers = #tpu.dot_dimension_numbers<[2], [2], [1], [1], [0, 0, 0, 1, 1, 1], [0], [0]>} : vector<4x8x8xf32>, vector<4x8x8xf32>, vector<4x8x8xf32> -> vector<4x8x8xf32>
    "tpu.trace_stop"() : () -> ()
    %293 = vector.shape_cast %33 : vector<8x8xf32> to vector<1x8x8xf32>
    %294 = vector.broadcast %293 : vector<1x8x8xf32> to vector<4x8x8xf32>
    %295 = arith.addf %292, %294 : vector<4x8x8xf32>
    %cst_80 = arith.constant 0.176776692 : f32
    %296 = vector.broadcast %cst_80 : f32 to vector<4x8x8xf32>
    %297 = arith.mulf %295, %296 : vector<4x8x8xf32>
    %cst_81 = arith.constant dense<0xFF800000> : vector<4x8xf32>
    %298 = vector.multi_reduction <maximumf>, %297, %cst_81 [2] : vector<4x8x8xf32> to vector<4x8xf32>
    %299 = vector.shape_cast %298 : vector<4x8xf32> to vector<4x8x1xf32>
    %300 = vector.broadcast %299 : vector<4x8x1xf32> to vector<4x8x8xf32>
    %301 = arith.subf %297, %300 : vector<4x8x8xf32>
    %302 = math.exp %301 : vector<4x8x8xf32>
    %cst_82 = arith.constant dense<0.000000e+00> : vector<4x8xf32>
    %303 = vector.multi_reduction <add>, %302, %cst_82 [2] : vector<4x8x8xf32> to vector<4x8xf32>
    %304 = vector.shape_cast %303 : vector<4x8xf32> to vector<4x8x1xf32>
    %305 = tpu.reciprocal %304 : vector<4x8x1xf32> -> vector<4x8x1xf32>
    %306 = vector.broadcast %305 : vector<4x8x1xf32> to vector<4x8x8xf32>
    %307 = arith.mulf %302, %306 : vector<4x8x8xf32>
    "tpu.trace_start"() <{level = 10 : i32, message = "hqk,hkd->hqd"}> : () -> ()
    %cst_83 = arith.constant dense<0.000000e+00> : vector<4x8x8xf32>
    %308 = tpu.matmul %307, %291, %cst_83 {dimension_numbers = #tpu.dot_dimension_numbers<[2], [1], [1], [2], [0, 0, 0, 1, 1, 2], [0], [0]>} : vector<4x8x8xf32>, vector<4x8x8xf32>, vector<4x8x8xf32> -> vector<4x8x8xf32>
    "tpu.trace_stop"() : () -> ()
    %309 = vector.extract_strided_slice %308 {offsets = [0, 0, 0], sizes = [1, 8, 8], strides = [1, 1, 1]} : vector<4x8x8xf32> to vector<1x8x8xf32>
    %310 = vector.shape_cast %309 : vector<1x8x8xf32> to vector<8x8xf32>
    %311 = vector.extract_strided_slice %308 {offsets = [1, 0, 0], sizes = [1, 8, 8], strides = [1, 1, 1]} : vector<4x8x8xf32> to vector<1x8x8xf32>
    %312 = vector.shape_cast %311 : vector<1x8x8xf32> to vector<8x8xf32>
    %313 = vector.extract_strided_slice %308 {offsets = [2, 0, 0], sizes = [1, 8, 8], strides = [1, 1, 1]} : vector<4x8x8xf32> to vector<1x8x8xf32>
    %314 = vector.shape_cast %313 : vector<1x8x8xf32> to vector<8x8xf32>
    %315 = vector.extract_strided_slice %308 {offsets = [3, 0, 0], sizes = [1, 8, 8], strides = [1, 1, 1]} : vector<4x8x8xf32> to vector<1x8x8xf32>
    %316 = vector.shape_cast %315 : vector<1x8x8xf32> to vector<8x8xf32>
    %317 = tpu.concatenate %310, %312, %314, %316 in 1 : vector<8x8xf32>, vector<8x8xf32>, vector<8x8xf32>, vector<8x8xf32> -> vector<8x32xf32>
    %318 = tpu.concatenate %260, %317 in 0 : vector<8x32xf32>, vector<8x32xf32> -> vector<16x32xf32>
    %c0_84 = arith.constant 0 : index
    %c0_85 = arith.constant 0 : index
    %c0_86 = arith.constant 0 : index
    %319 = vector.load %arg14[%c0_84, %c0_85, %c0_86] : memref<2x32x32xf32, #tpu.memory_space<vmem>>, vector<1x32x32xf32>
    %320 = vector.shape_cast %319 : vector<1x32x32xf32> to vector<32x32xf32>
    %cst_87 = arith.constant dense<0.000000e+00> : vector<16x32xf32>
    %321 = tpu.matmul %318, %320, %cst_87 {dimension_numbers = #tpu.dot_dimension_numbers<[1], [0], [0], [1], [0, 0, 1, 1], [], []>} : vector<16x32xf32>, vector<32x32xf32>, vector<16x32xf32> -> vector<16x32xf32>
    %c0_88 = arith.constant 0 : index
    %c0_89 = arith.constant 0 : index
    %c0_90 = arith.constant 0 : index
    %322 = vector.load %arg15[%c0_88, %c0_89, %c0_90] : memref<2x1x32xf32, #tpu.memory_space<vmem>>, vector<1x1x32xf32>
    %323 = vector.shape_cast %322 : vector<1x1x32xf32> to vector<1x32xf32>
    %324 = vector.broadcast %323 : vector<1x32xf32> to vector<16x32xf32>
    %325 = arith.addf %321, %324 : vector<16x32xf32>
    %326 = arith.addf %325, %189 : vector<16x32xf32>
    %c0_91 = arith.constant 0 : index
    %c0_92 = arith.constant 0 : index
    %c0_93 = arith.constant 0 : index
    %327 = vector.load %arg16[%c0_91, %c0_92, %c0_93] : memref<2x1x32xf32, #tpu.memory_space<vmem>>, vector<1x1x32xf32>
    %328 = vector.shape_cast %327 : vector<1x1x32xf32> to vector<1x32xf32>
    %c0_94 = arith.constant 0 : index
    %c0_95 = arith.constant 0 : index
    %c0_96 = arith.constant 0 : index
    %329 = vector.load %arg17[%c0_94, %c0_95, %c0_96] : memref<2x1x32xf32, #tpu.memory_space<vmem>>, vector<1x1x32xf32>
    %330 = vector.shape_cast %329 : vector<1x1x32xf32> to vector<1x32xf32>
    %cst_97 = arith.constant dense<0.000000e+00> : vector<16xf32>
    %331 = vector.multi_reduction <add>, %326, %cst_97 [1] : vector<16x32xf32> to vector<16xf32>
    %332 = vector.shape_cast %331 : vector<16xf32> to vector<16x1xf32>
    %cst_98 = arith.constant 3.200000e+01 : f32
    %333 = vector.broadcast %cst_98 : f32 to vector<16x1xf32>
    %334 = arith.divf %332, %333 : vector<16x1xf32>
    %335 = vector.broadcast %334 : vector<16x1xf32> to vector<16x32xf32>
    %336 = arith.subf %326, %335 : vector<16x32xf32>
    %337 = arith.mulf %336, %336 : vector<16x32xf32>
    %cst_99 = arith.constant dense<0.000000e+00> : vector<16xf32>
    %338 = vector.multi_reduction <add>, %337, %cst_99 [1] : vector<16x32xf32> to vector<16xf32>
    %339 = vector.shape_cast %338 : vector<16xf32> to vector<16x1xf32>
    %cst_100 = arith.constant 3.200000e+01 : f32
    %340 = vector.broadcast %cst_100 : f32 to vector<16x1xf32>
    %341 = arith.divf %339, %340 : vector<16x1xf32>
    %342 = vector.broadcast %334 : vector<16x1xf32> to vector<16x32xf32>
    %343 = arith.subf %326, %342 : vector<16x32xf32>
    %cst_101 = arith.constant 9.99999974E-6 : f32
    %344 = vector.broadcast %cst_101 : f32 to vector<16x1xf32>
    %345 = arith.addf %341, %344 : vector<16x1xf32>
    %346 = math.rsqrt %345 : vector<16x1xf32>
    %347 = vector.broadcast %346 : vector<16x1xf32> to vector<16x32xf32>
    %348 = arith.mulf %343, %347 : vector<16x32xf32>
    %349 = vector.broadcast %328 : vector<1x32xf32> to vector<16x32xf32>
    %350 = arith.mulf %348, %349 : vector<16x32xf32>
    %351 = vector.broadcast %330 : vector<1x32xf32> to vector<16x32xf32>
    %352 = arith.addf %350, %351 : vector<16x32xf32>
    %c0_102 = arith.constant 0 : index
    %c0_103 = arith.constant 0 : index
    %c0_104 = arith.constant 0 : index
    %353 = vector.load %arg18[%c0_102, %c0_103, %c0_104] : memref<2x32x64xf32, #tpu.memory_space<vmem>>, vector<1x32x64xf32>
    %354 = vector.shape_cast %353 : vector<1x32x64xf32> to vector<32x64xf32>
    %cst_105 = arith.constant dense<0.000000e+00> : vector<16x64xf32>
    %355 = tpu.matmul %352, %354, %cst_105 {dimension_numbers = #tpu.dot_dimension_numbers<[1], [0], [0], [1], [0, 0, 1, 1], [], []>} : vector<16x32xf32>, vector<32x64xf32>, vector<16x64xf32> -> vector<16x64xf32>
    %c0_106 = arith.constant 0 : index
    %c0_107 = arith.constant 0 : index
    %c0_108 = arith.constant 0 : index
    %356 = vector.load %arg19[%c0_106, %c0_107, %c0_108] : memref<2x1x64xf32, #tpu.memory_space<vmem>>, vector<1x1x64xf32>
    %357 = vector.shape_cast %356 : vector<1x1x64xf32> to vector<1x64xf32>
    %358 = vector.broadcast %357 : vector<1x64xf32> to vector<16x64xf32>
    %359 = arith.addf %355, %358 : vector<16x64xf32>
    %cst_109 = arith.constant 0.000000e+00 : f32
    %360 = vector.broadcast %cst_109 : f32 to vector<16x64xf32>
    %361 = arith.maximumf %359, %360 : vector<16x64xf32>
    %c0_110 = arith.constant 0 : index
    %c0_111 = arith.constant 0 : index
    %c0_112 = arith.constant 0 : index
    %362 = vector.load %arg20[%c0_110, %c0_111, %c0_112] : memref<2x64x32xf32, #tpu.memory_space<vmem>>, vector<1x64x32xf32>
    %363 = vector.shape_cast %362 : vector<1x64x32xf32> to vector<64x32xf32>
    %cst_113 = arith.constant dense<0.000000e+00> : vector<16x32xf32>
    %364 = tpu.matmul %361, %363, %cst_113 {dimension_numbers = #tpu.dot_dimension_numbers<[1], [0], [0], [1], [0, 0, 1, 1], [], []>} : vector<16x64xf32>, vector<64x32xf32>, vector<16x32xf32> -> vector<16x32xf32>
    %c0_114 = arith.constant 0 : index
    %c0_115 = arith.constant 0 : index
    %c0_116 = arith.constant 0 : index
    %365 = vector.load %arg21[%c0_114, %c0_115, %c0_116] : memref<2x1x32xf32, #tpu.memory_space<vmem>>, vector<1x1x32xf32>
    %366 = vector.shape_cast %365 : vector<1x1x32xf32> to vector<1x32xf32>
    %367 = vector.broadcast %366 : vector<1x32xf32> to vector<16x32xf32>
    %368 = arith.addf %364, %367 : vector<16x32xf32>
    %369 = arith.addf %368, %352 : vector<16x32xf32>
    %c0_117 = arith.constant 0 : index
    %c0_118 = arith.constant 0 : index
    %c0_119 = arith.constant 0 : index
    %370 = vector.load %arg22[%c0_117, %c0_118, %c0_119] : memref<2x1x32xf32, #tpu.memory_space<vmem>>, vector<1x1x32xf32>
    %371 = vector.shape_cast %370 : vector<1x1x32xf32> to vector<1x32xf32>
    %c0_120 = arith.constant 0 : index
    %c0_121 = arith.constant 0 : index
    %c0_122 = arith.constant 0 : index
    %372 = vector.load %arg23[%c0_120, %c0_121, %c0_122] : memref<2x1x32xf32, #tpu.memory_space<vmem>>, vector<1x1x32xf32>
    %373 = vector.shape_cast %372 : vector<1x1x32xf32> to vector<1x32xf32>
    %cst_123 = arith.constant dense<0.000000e+00> : vector<16xf32>
    %374 = vector.multi_reduction <add>, %369, %cst_123 [1] : vector<16x32xf32> to vector<16xf32>
    %375 = vector.shape_cast %374 : vector<16xf32> to vector<16x1xf32>
    %cst_124 = arith.constant 3.200000e+01 : f32
    %376 = vector.broadcast %cst_124 : f32 to vector<16x1xf32>
    %377 = arith.divf %375, %376 : vector<16x1xf32>
    %378 = vector.broadcast %377 : vector<16x1xf32> to vector<16x32xf32>
    %379 = arith.subf %369, %378 : vector<16x32xf32>
    %380 = arith.mulf %379, %379 : vector<16x32xf32>
    %cst_125 = arith.constant dense<0.000000e+00> : vector<16xf32>
    %381 = vector.multi_reduction <add>, %380, %cst_125 [1] : vector<16x32xf32> to vector<16xf32>
    %382 = vector.shape_cast %381 : vector<16xf32> to vector<16x1xf32>
    %cst_126 = arith.constant 3.200000e+01 : f32
    %383 = vector.broadcast %cst_126 : f32 to vector<16x1xf32>
    %384 = arith.divf %382, %383 : vector<16x1xf32>
    %385 = vector.broadcast %377 : vector<16x1xf32> to vector<16x32xf32>
    %386 = arith.subf %369, %385 : vector<16x32xf32>
    %cst_127 = arith.constant 9.99999974E-6 : f32
    %387 = vector.broadcast %cst_127 : f32 to vector<16x1xf32>
    %388 = arith.addf %384, %387 : vector<16x1xf32>
    %389 = math.rsqrt %388 : vector<16x1xf32>
    %390 = vector.broadcast %389 : vector<16x1xf32> to vector<16x32xf32>
    %391 = arith.mulf %386, %390 : vector<16x32xf32>
    %392 = vector.broadcast %371 : vector<1x32xf32> to vector<16x32xf32>
    %393 = arith.mulf %391, %392 : vector<16x32xf32>
    %394 = vector.broadcast %373 : vector<1x32xf32> to vector<16x32xf32>
    %395 = arith.addf %393, %394 : vector<16x32xf32>
    %c1_128 = arith.constant 1 : index
    %c0_129 = arith.constant 0 : index
    %c0_130 = arith.constant 0 : index
    %396 = vector.load %arg4[%c1_128, %c0_129, %c0_130] : memref<2x32x96xf32, #tpu.memory_space<vmem>>, vector<1x32x96xf32>
    %397 = vector.shape_cast %396 : vector<1x32x96xf32> to vector<32x96xf32>
    %cst_131 = arith.constant dense<0.000000e+00> : vector<16x96xf32>
    %398 = tpu.matmul %395, %397, %cst_131 {dimension_numbers = #tpu.dot_dimension_numbers<[1], [0], [0], [1], [0, 0, 1, 1], [], []>} : vector<16x32xf32>, vector<32x96xf32>, vector<16x96xf32> -> vector<16x96xf32>
    %c1_132 = arith.constant 1 : index
    %c0_133 = arith.constant 0 : index
    %c0_134 = arith.constant 0 : index
    %399 = vector.load %arg5[%c1_132, %c0_133, %c0_134] : memref<2x1x96xf32, #tpu.memory_space<vmem>>, vector<1x1x96xf32>
    %400 = vector.shape_cast %399 : vector<1x1x96xf32> to vector<1x96xf32>
    %401 = vector.broadcast %400 : vector<1x96xf32> to vector<16x96xf32>
    %402 = arith.addf %398, %401 : vector<16x96xf32>
    %403 = vector.extract_strided_slice %402 {offsets = [0, 0], sizes = [8, 96], strides = [1, 1]} : vector<16x96xf32> to vector<8x96xf32>
    %404 = vector.extract_strided_slice %403 {offsets = [0, 0], sizes = [8, 32], strides = [1, 1]} : vector<8x96xf32> to vector<8x32xf32>
    %405 = vector.extract_strided_slice %403 {offsets = [0, 32], sizes = [8, 32], strides = [1, 1]} : vector<8x96xf32> to vector<8x32xf32>
    %406 = vector.extract_strided_slice %403 {offsets = [0, 64], sizes = [8, 32], strides = [1, 1]} : vector<8x96xf32> to vector<8x32xf32>
    %407 = vector.extract_strided_slice %404 {offsets = [0, 0], sizes = [8, 8], strides = [1, 1]} : vector<8x32xf32> to vector<8x8xf32>
    %408 = vector.extract_strided_slice %404 {offsets = [0, 8], sizes = [8, 8], strides = [1, 1]} : vector<8x32xf32> to vector<8x8xf32>
    %409 = vector.extract_strided_slice %404 {offsets = [0, 16], sizes = [8, 8], strides = [1, 1]} : vector<8x32xf32> to vector<8x8xf32>
    %410 = vector.extract_strided_slice %404 {offsets = [0, 24], sizes = [8, 8], strides = [1, 1]} : vector<8x32xf32> to vector<8x8xf32>
    %411 = vector.shape_cast %407 : vector<8x8xf32> to vector<1x8x8xf32>
    %412 = vector.shape_cast %408 : vector<8x8xf32> to vector<1x8x8xf32>
    %413 = vector.shape_cast %409 : vector<8x8xf32> to vector<1x8x8xf32>
    %414 = vector.shape_cast %410 : vector<8x8xf32> to vector<1x8x8xf32>
    %415 = tpu.concatenate %411, %412, %413, %414 in 0 : vector<1x8x8xf32>, vector<1x8x8xf32>, vector<1x8x8xf32>, vector<1x8x8xf32> -> vector<4x8x8xf32>
    %416 = vector.extract_strided_slice %405 {offsets = [0, 0], sizes = [8, 8], strides = [1, 1]} : vector<8x32xf32> to vector<8x8xf32>
    %417 = vector.extract_strided_slice %405 {offsets = [0, 8], sizes = [8, 8], strides = [1, 1]} : vector<8x32xf32> to vector<8x8xf32>
    %418 = vector.extract_strided_slice %405 {offsets = [0, 16], sizes = [8, 8], strides = [1, 1]} : vector<8x32xf32> to vector<8x8xf32>
    %419 = vector.extract_strided_slice %405 {offsets = [0, 24], sizes = [8, 8], strides = [1, 1]} : vector<8x32xf32> to vector<8x8xf32>
    %420 = vector.shape_cast %416 : vector<8x8xf32> to vector<1x8x8xf32>
    %421 = vector.shape_cast %417 : vector<8x8xf32> to vector<1x8x8xf32>
    %422 = vector.shape_cast %418 : vector<8x8xf32> to vector<1x8x8xf32>
    %423 = vector.shape_cast %419 : vector<8x8xf32> to vector<1x8x8xf32>
    %424 = tpu.concatenate %420, %421, %422, %423 in 0 : vector<1x8x8xf32>, vector<1x8x8xf32>, vector<1x8x8xf32>, vector<1x8x8xf32> -> vector<4x8x8xf32>
    %425 = vector.extract_strided_slice %406 {offsets = [0, 0], sizes = [8, 8], strides = [1, 1]} : vector<8x32xf32> to vector<8x8xf32>
    %426 = vector.extract_strided_slice %406 {offsets = [0, 8], sizes = [8, 8], strides = [1, 1]} : vector<8x32xf32> to vector<8x8xf32>
    %427 = vector.extract_strided_slice %406 {offsets = [0, 16], sizes = [8, 8], strides = [1, 1]} : vector<8x32xf32> to vector<8x8xf32>
    %428 = vector.extract_strided_slice %406 {offsets = [0, 24], sizes = [8, 8], strides = [1, 1]} : vector<8x32xf32> to vector<8x8xf32>
    %429 = vector.shape_cast %425 : vector<8x8xf32> to vector<1x8x8xf32>
    %430 = vector.shape_cast %426 : vector<8x8xf32> to vector<1x8x8xf32>
    %431 = vector.shape_cast %427 : vector<8x8xf32> to vector<1x8x8xf32>
    %432 = vector.shape_cast %428 : vector<8x8xf32> to vector<1x8x8xf32>
    %433 = tpu.concatenate %429, %430, %431, %432 in 0 : vector<1x8x8xf32>, vector<1x8x8xf32>, vector<1x8x8xf32>, vector<1x8x8xf32> -> vector<4x8x8xf32>
    "tpu.trace_start"() <{level = 10 : i32, message = "hqd,hkd->hqk"}> : () -> ()
    %cst_135 = arith.constant dense<0.000000e+00> : vector<4x8x8xf32>
    %434 = tpu.matmul %415, %424, %cst_135 {dimension_numbers = #tpu.dot_dimension_numbers<[2], [2], [1], [1], [0, 0, 0, 1, 1, 1], [0], [0]>} : vector<4x8x8xf32>, vector<4x8x8xf32>, vector<4x8x8xf32> -> vector<4x8x8xf32>
    "tpu.trace_stop"() : () -> ()
    %435 = vector.shape_cast %8 : vector<8x8xf32> to vector<1x8x8xf32>
    %436 = vector.broadcast %435 : vector<1x8x8xf32> to vector<4x8x8xf32>
    %437 = arith.addf %434, %436 : vector<4x8x8xf32>
    %cst_136 = arith.constant 0.176776692 : f32
    %438 = vector.broadcast %cst_136 : f32 to vector<4x8x8xf32>
    %439 = arith.mulf %437, %438 : vector<4x8x8xf32>
    %cst_137 = arith.constant dense<0xFF800000> : vector<4x8xf32>
    %440 = vector.multi_reduction <maximumf>, %439, %cst_137 [2] : vector<4x8x8xf32> to vector<4x8xf32>
    %441 = vector.shape_cast %440 : vector<4x8xf32> to vector<4x8x1xf32>
    %442 = vector.broadcast %441 : vector<4x8x1xf32> to vector<4x8x8xf32>
    %443 = arith.subf %439, %442 : vector<4x8x8xf32>
    %444 = math.exp %443 : vector<4x8x8xf32>
    %cst_138 = arith.constant dense<0.000000e+00> : vector<4x8xf32>
    %445 = vector.multi_reduction <add>, %444, %cst_138 [2] : vector<4x8x8xf32> to vector<4x8xf32>
    %446 = vector.shape_cast %445 : vector<4x8xf32> to vector<4x8x1xf32>
    %447 = tpu.reciprocal %446 : vector<4x8x1xf32> -> vector<4x8x1xf32>
    %448 = vector.broadcast %447 : vector<4x8x1xf32> to vector<4x8x8xf32>
    %449 = arith.mulf %444, %448 : vector<4x8x8xf32>
    "tpu.trace_start"() <{level = 10 : i32, message = "hqk,hkd->hqd"}> : () -> ()
    %cst_139 = arith.constant dense<0.000000e+00> : vector<4x8x8xf32>
    %450 = tpu.matmul %449, %433, %cst_139 {dimension_numbers = #tpu.dot_dimension_numbers<[2], [1], [1], [2], [0, 0, 0, 1, 1, 2], [0], [0]>} : vector<4x8x8xf32>, vector<4x8x8xf32>, vector<4x8x8xf32> -> vector<4x8x8xf32>
    "tpu.trace_stop"() : () -> ()
    %451 = vector.extract_strided_slice %450 {offsets = [0, 0, 0], sizes = [1, 8, 8], strides = [1, 1, 1]} : vector<4x8x8xf32> to vector<1x8x8xf32>
    %452 = vector.shape_cast %451 : vector<1x8x8xf32> to vector<8x8xf32>
    %453 = vector.extract_strided_slice %450 {offsets = [1, 0, 0], sizes = [1, 8, 8], strides = [1, 1, 1]} : vector<4x8x8xf32> to vector<1x8x8xf32>
    %454 = vector.shape_cast %453 : vector<1x8x8xf32> to vector<8x8xf32>
    %455 = vector.extract_strided_slice %450 {offsets = [2, 0, 0], sizes = [1, 8, 8], strides = [1, 1, 1]} : vector<4x8x8xf32> to vector<1x8x8xf32>
    %456 = vector.shape_cast %455 : vector<1x8x8xf32> to vector<8x8xf32>
    %457 = vector.extract_strided_slice %450 {offsets = [3, 0, 0], sizes = [1, 8, 8], strides = [1, 1, 1]} : vector<4x8x8xf32> to vector<1x8x8xf32>
    %458 = vector.shape_cast %457 : vector<1x8x8xf32> to vector<8x8xf32>
    %459 = tpu.concatenate %452, %454, %456, %458 in 1 : vector<8x8xf32>, vector<8x8xf32>, vector<8x8xf32>, vector<8x8xf32> -> vector<8x32xf32>
    %460 = vector.extract_strided_slice %402 {offsets = [8, 0], sizes = [8, 96], strides = [1, 1]} : vector<16x96xf32> to vector<8x96xf32>
    %461 = vector.extract_strided_slice %460 {offsets = [0, 0], sizes = [8, 32], strides = [1, 1]} : vector<8x96xf32> to vector<8x32xf32>
    %462 = vector.extract_strided_slice %460 {offsets = [0, 32], sizes = [8, 32], strides = [1, 1]} : vector<8x96xf32> to vector<8x32xf32>
    %463 = vector.extract_strided_slice %460 {offsets = [0, 64], sizes = [8, 32], strides = [1, 1]} : vector<8x96xf32> to vector<8x32xf32>
    %464 = vector.extract_strided_slice %461 {offsets = [0, 0], sizes = [8, 8], strides = [1, 1]} : vector<8x32xf32> to vector<8x8xf32>
    %465 = vector.extract_strided_slice %461 {offsets = [0, 8], sizes = [8, 8], strides = [1, 1]} : vector<8x32xf32> to vector<8x8xf32>
    %466 = vector.extract_strided_slice %461 {offsets = [0, 16], sizes = [8, 8], strides = [1, 1]} : vector<8x32xf32> to vector<8x8xf32>
    %467 = vector.extract_strided_slice %461 {offsets = [0, 24], sizes = [8, 8], strides = [1, 1]} : vector<8x32xf32> to vector<8x8xf32>
    %468 = vector.shape_cast %464 : vector<8x8xf32> to vector<1x8x8xf32>
    %469 = vector.shape_cast %465 : vector<8x8xf32> to vector<1x8x8xf32>
    %470 = vector.shape_cast %466 : vector<8x8xf32> to vector<1x8x8xf32>
    %471 = vector.shape_cast %467 : vector<8x8xf32> to vector<1x8x8xf32>
    %472 = tpu.concatenate %468, %469, %470, %471 in 0 : vector<1x8x8xf32>, vector<1x8x8xf32>, vector<1x8x8xf32>, vector<1x8x8xf32> -> vector<4x8x8xf32>
    %473 = vector.extract_strided_slice %462 {offsets = [0, 0], sizes = [8, 8], strides = [1, 1]} : vector<8x32xf32> to vector<8x8xf32>
    %474 = vector.extract_strided_slice %462 {offsets = [0, 8], sizes = [8, 8], strides = [1, 1]} : vector<8x32xf32> to vector<8x8xf32>
    %475 = vector.extract_strided_slice %462 {offsets = [0, 16], sizes = [8, 8], strides = [1, 1]} : vector<8x32xf32> to vector<8x8xf32>
    %476 = vector.extract_strided_slice %462 {offsets = [0, 24], sizes = [8, 8], strides = [1, 1]} : vector<8x32xf32> to vector<8x8xf32>
    %477 = vector.shape_cast %473 : vector<8x8xf32> to vector<1x8x8xf32>
    %478 = vector.shape_cast %474 : vector<8x8xf32> to vector<1x8x8xf32>
    %479 = vector.shape_cast %475 : vector<8x8xf32> to vector<1x8x8xf32>
    %480 = vector.shape_cast %476 : vector<8x8xf32> to vector<1x8x8xf32>
    %481 = tpu.concatenate %477, %478, %479, %480 in 0 : vector<1x8x8xf32>, vector<1x8x8xf32>, vector<1x8x8xf32>, vector<1x8x8xf32> -> vector<4x8x8xf32>
    %482 = vector.extract_strided_slice %463 {offsets = [0, 0], sizes = [8, 8], strides = [1, 1]} : vector<8x32xf32> to vector<8x8xf32>
    %483 = vector.extract_strided_slice %463 {offsets = [0, 8], sizes = [8, 8], strides = [1, 1]} : vector<8x32xf32> to vector<8x8xf32>
    %484 = vector.extract_strided_slice %463 {offsets = [0, 16], sizes = [8, 8], strides = [1, 1]} : vector<8x32xf32> to vector<8x8xf32>
    %485 = vector.extract_strided_slice %463 {offsets = [0, 24], sizes = [8, 8], strides = [1, 1]} : vector<8x32xf32> to vector<8x8xf32>
    %486 = vector.shape_cast %482 : vector<8x8xf32> to vector<1x8x8xf32>
    %487 = vector.shape_cast %483 : vector<8x8xf32> to vector<1x8x8xf32>
    %488 = vector.shape_cast %484 : vector<8x8xf32> to vector<1x8x8xf32>
    %489 = vector.shape_cast %485 : vector<8x8xf32> to vector<1x8x8xf32>
    %490 = tpu.concatenate %486, %487, %488, %489 in 0 : vector<1x8x8xf32>, vector<1x8x8xf32>, vector<1x8x8xf32>, vector<1x8x8xf32> -> vector<4x8x8xf32>
    "tpu.trace_start"() <{level = 10 : i32, message = "hqd,hkd->hqk"}> : () -> ()
    %cst_140 = arith.constant dense<0.000000e+00> : vector<4x8x8xf32>
    %491 = tpu.matmul %472, %481, %cst_140 {dimension_numbers = #tpu.dot_dimension_numbers<[2], [2], [1], [1], [0, 0, 0, 1, 1, 1], [0], [0]>} : vector<4x8x8xf32>, vector<4x8x8xf32>, vector<4x8x8xf32> -> vector<4x8x8xf32>
    "tpu.trace_stop"() : () -> ()
    %492 = vector.shape_cast %15 : vector<8x8xf32> to vector<1x8x8xf32>
    %493 = vector.broadcast %492 : vector<1x8x8xf32> to vector<4x8x8xf32>
    %494 = arith.addf %491, %493 : vector<4x8x8xf32>
    %cst_141 = arith.constant 0.176776692 : f32
    %495 = vector.broadcast %cst_141 : f32 to vector<4x8x8xf32>
    %496 = arith.mulf %494, %495 : vector<4x8x8xf32>
    %cst_142 = arith.constant dense<0xFF800000> : vector<4x8xf32>
    %497 = vector.multi_reduction <maximumf>, %496, %cst_142 [2] : vector<4x8x8xf32> to vector<4x8xf32>
    %498 = vector.shape_cast %497 : vector<4x8xf32> to vector<4x8x1xf32>
    %499 = vector.broadcast %498 : vector<4x8x1xf32> to vector<4x8x8xf32>
    %500 = arith.subf %496, %499 : vector<4x8x8xf32>
    %501 = math.exp %500 : vector<4x8x8xf32>
    %cst_143 = arith.constant dense<0.000000e+00> : vector<4x8xf32>
    %502 = vector.multi_reduction <add>, %501, %cst_143 [2] : vector<4x8x8xf32> to vector<4x8xf32>
    %503 = vector.shape_cast %502 : vector<4x8xf32> to vector<4x8x1xf32>
    %504 = tpu.reciprocal %503 : vector<4x8x1xf32> -> vector<4x8x1xf32>
    %505 = vector.broadcast %504 : vector<4x8x1xf32> to vector<4x8x8xf32>
    %506 = arith.mulf %501, %505 : vector<4x8x8xf32>
    "tpu.trace_start"() <{level = 10 : i32, message = "hqk,hkd->hqd"}> : () -> ()
    %cst_144 = arith.constant dense<0.000000e+00> : vector<4x8x8xf32>
    %507 = tpu.matmul %506, %490, %cst_144 {dimension_numbers = #tpu.dot_dimension_numbers<[2], [1], [1], [2], [0, 0, 0, 1, 1, 2], [0], [0]>} : vector<4x8x8xf32>, vector<4x8x8xf32>, vector<4x8x8xf32> -> vector<4x8x8xf32>
    "tpu.trace_stop"() : () -> ()
    %508 = vector.extract_strided_slice %507 {offsets = [0, 0, 0], sizes = [1, 8, 8], strides = [1, 1, 1]} : vector<4x8x8xf32> to vector<1x8x8xf32>
    %509 = vector.shape_cast %508 : vector<1x8x8xf32> to vector<8x8xf32>
    %510 = vector.extract_strided_slice %507 {offsets = [1, 0, 0], sizes = [1, 8, 8], strides = [1, 1, 1]} : vector<4x8x8xf32> to vector<1x8x8xf32>
    %511 = vector.shape_cast %510 : vector<1x8x8xf32> to vector<8x8xf32>
    %512 = vector.extract_strided_slice %507 {offsets = [2, 0, 0], sizes = [1, 8, 8], strides = [1, 1, 1]} : vector<4x8x8xf32> to vector<1x8x8xf32>
    %513 = vector.shape_cast %512 : vector<1x8x8xf32> to vector<8x8xf32>
    %514 = vector.extract_strided_slice %507 {offsets = [3, 0, 0], sizes = [1, 8, 8], strides = [1, 1, 1]} : vector<4x8x8xf32> to vector<1x8x8xf32>
    %515 = vector.shape_cast %514 : vector<1x8x8xf32> to vector<8x8xf32>
    %516 = tpu.concatenate %509, %511, %513, %515 in 1 : vector<8x8xf32>, vector<8x8xf32>, vector<8x8xf32>, vector<8x8xf32> -> vector<8x32xf32>
    %517 = tpu.concatenate %459, %516 in 0 : vector<8x32xf32>, vector<8x32xf32> -> vector<16x32xf32>
    %c1_145 = arith.constant 1 : index
    %c0_146 = arith.constant 0 : index
    %c0_147 = arith.constant 0 : index
    %518 = vector.load %arg6[%c1_145, %c0_146, %c0_147] : memref<2x32x32xf32, #tpu.memory_space<vmem>>, vector<1x32x32xf32>
    %519 = vector.shape_cast %518 : vector<1x32x32xf32> to vector<32x32xf32>
    %cst_148 = arith.constant dense<0.000000e+00> : vector<16x32xf32>
    %520 = tpu.matmul %517, %519, %cst_148 {dimension_numbers = #tpu.dot_dimension_numbers<[1], [0], [0], [1], [0, 0, 1, 1], [], []>} : vector<16x32xf32>, vector<32x32xf32>, vector<16x32xf32> -> vector<16x32xf32>
    %c1_149 = arith.constant 1 : index
    %c0_150 = arith.constant 0 : index
    %c0_151 = arith.constant 0 : index
    %521 = vector.load %arg7[%c1_149, %c0_150, %c0_151] : memref<2x1x32xf32, #tpu.memory_space<vmem>>, vector<1x1x32xf32>
    %522 = vector.shape_cast %521 : vector<1x1x32xf32> to vector<1x32xf32>
    %523 = vector.broadcast %522 : vector<1x32xf32> to vector<16x32xf32>
    %524 = arith.addf %520, %523 : vector<16x32xf32>
    %525 = arith.addf %524, %395 : vector<16x32xf32>
    %c1_152 = arith.constant 1 : index
    %c0_153 = arith.constant 0 : index
    %c0_154 = arith.constant 0 : index
    %526 = vector.load %arg8[%c1_152, %c0_153, %c0_154] : memref<2x1x32xf32, #tpu.memory_space<vmem>>, vector<1x1x32xf32>
    %527 = vector.shape_cast %526 : vector<1x1x32xf32> to vector<1x32xf32>
    %c1_155 = arith.constant 1 : index
    %c0_156 = arith.constant 0 : index
    %c0_157 = arith.constant 0 : index
    %528 = vector.load %arg9[%c1_155, %c0_156, %c0_157] : memref<2x1x32xf32, #tpu.memory_space<vmem>>, vector<1x1x32xf32>
    %529 = vector.shape_cast %528 : vector<1x1x32xf32> to vector<1x32xf32>
    %cst_158 = arith.constant dense<0.000000e+00> : vector<16xf32>
    %530 = vector.multi_reduction <add>, %525, %cst_158 [1] : vector<16x32xf32> to vector<16xf32>
    %531 = vector.shape_cast %530 : vector<16xf32> to vector<16x1xf32>
    %cst_159 = arith.constant 3.200000e+01 : f32
    %532 = vector.broadcast %cst_159 : f32 to vector<16x1xf32>
    %533 = arith.divf %531, %532 : vector<16x1xf32>
    %534 = vector.broadcast %533 : vector<16x1xf32> to vector<16x32xf32>
    %535 = arith.subf %525, %534 : vector<16x32xf32>
    %536 = arith.mulf %535, %535 : vector<16x32xf32>
    %cst_160 = arith.constant dense<0.000000e+00> : vector<16xf32>
    %537 = vector.multi_reduction <add>, %536, %cst_160 [1] : vector<16x32xf32> to vector<16xf32>
    %538 = vector.shape_cast %537 : vector<16xf32> to vector<16x1xf32>
    %cst_161 = arith.constant 3.200000e+01 : f32
    %539 = vector.broadcast %cst_161 : f32 to vector<16x1xf32>
    %540 = arith.divf %538, %539 : vector<16x1xf32>
    %541 = vector.broadcast %533 : vector<16x1xf32> to vector<16x32xf32>
    %542 = arith.subf %525, %541 : vector<16x32xf32>
    %cst_162 = arith.constant 9.99999974E-6 : f32
    %543 = vector.broadcast %cst_162 : f32 to vector<16x1xf32>
    %544 = arith.addf %540, %543 : vector<16x1xf32>
    %545 = math.rsqrt %544 : vector<16x1xf32>
    %546 = vector.broadcast %545 : vector<16x1xf32> to vector<16x32xf32>
    %547 = arith.mulf %542, %546 : vector<16x32xf32>
    %548 = vector.broadcast %527 : vector<1x32xf32> to vector<16x32xf32>
    %549 = arith.mulf %547, %548 : vector<16x32xf32>
    %550 = vector.broadcast %529 : vector<1x32xf32> to vector<16x32xf32>
    %551 = arith.addf %549, %550 : vector<16x32xf32>
    %c1_163 = arith.constant 1 : index
    %c0_164 = arith.constant 0 : index
    %c0_165 = arith.constant 0 : index
    %552 = vector.load %arg10[%c1_163, %c0_164, %c0_165] : memref<2x32x32xf32, #tpu.memory_space<vmem>>, vector<1x32x32xf32>
    %553 = vector.shape_cast %552 : vector<1x32x32xf32> to vector<32x32xf32>
    %cst_166 = arith.constant dense<0.000000e+00> : vector<16x32xf32>
    %554 = tpu.matmul %551, %553, %cst_166 {dimension_numbers = #tpu.dot_dimension_numbers<[1], [0], [0], [1], [0, 0, 1, 1], [], []>} : vector<16x32xf32>, vector<32x32xf32>, vector<16x32xf32> -> vector<16x32xf32>
    %c1_167 = arith.constant 1 : index
    %c0_168 = arith.constant 0 : index
    %c0_169 = arith.constant 0 : index
    %555 = vector.load %arg11[%c1_167, %c0_168, %c0_169] : memref<2x1x32xf32, #tpu.memory_space<vmem>>, vector<1x1x32xf32>
    %556 = vector.shape_cast %555 : vector<1x1x32xf32> to vector<1x32xf32>
    %557 = vector.broadcast %556 : vector<1x32xf32> to vector<16x32xf32>
    %558 = arith.addf %554, %557 : vector<16x32xf32>
    %c1_170 = arith.constant 1 : index
    %c0_171 = arith.constant 0 : index
    %c0_172 = arith.constant 0 : index
    %559 = vector.load %arg12[%c1_170, %c0_171, %c0_172] : memref<2x32x64xf32, #tpu.memory_space<vmem>>, vector<1x32x64xf32>
    %560 = vector.shape_cast %559 : vector<1x32x64xf32> to vector<32x64xf32>
    %cst_173 = arith.constant dense<0.000000e+00> : vector<16x64xf32>
    %561 = tpu.matmul %1, %560, %cst_173 {dimension_numbers = #tpu.dot_dimension_numbers<[1], [0], [0], [1], [0, 0, 1, 1], [], []>} : vector<16x32xf32>, vector<32x64xf32>, vector<16x64xf32> -> vector<16x64xf32>
    %c1_174 = arith.constant 1 : index
    %c0_175 = arith.constant 0 : index
    %c0_176 = arith.constant 0 : index
    %562 = vector.load %arg13[%c1_174, %c0_175, %c0_176] : memref<2x1x64xf32, #tpu.memory_space<vmem>>, vector<1x1x64xf32>
    %563 = vector.shape_cast %562 : vector<1x1x64xf32> to vector<1x64xf32>
    %564 = vector.broadcast %563 : vector<1x64xf32> to vector<16x64xf32>
    %565 = arith.addf %561, %564 : vector<16x64xf32>
    %566 = vector.extract_strided_slice %558 {offsets = [0, 0], sizes = [8, 32], strides = [1, 1]} : vector<16x32xf32> to vector<8x32xf32>
    %567 = vector.extract_strided_slice %565 {offsets = [0, 0], sizes = [8, 64], strides = [1, 1]} : vector<16x64xf32> to vector<8x64xf32>
    %568 = vector.extract_strided_slice %567 {offsets = [0, 0], sizes = [8, 32], strides = [1, 1]} : vector<8x64xf32> to vector<8x32xf32>
    %569 = vector.extract_strided_slice %567 {offsets = [0, 32], sizes = [8, 32], strides = [1, 1]} : vector<8x64xf32> to vector<8x32xf32>
    %570 = vector.extract_strided_slice %566 {offsets = [0, 0], sizes = [8, 8], strides = [1, 1]} : vector<8x32xf32> to vector<8x8xf32>
    %571 = vector.extract_strided_slice %566 {offsets = [0, 8], sizes = [8, 8], strides = [1, 1]} : vector<8x32xf32> to vector<8x8xf32>
    %572 = vector.extract_strided_slice %566 {offsets = [0, 16], sizes = [8, 8], strides = [1, 1]} : vector<8x32xf32> to vector<8x8xf32>
    %573 = vector.extract_strided_slice %566 {offsets = [0, 24], sizes = [8, 8], strides = [1, 1]} : vector<8x32xf32> to vector<8x8xf32>
    %574 = vector.shape_cast %570 : vector<8x8xf32> to vector<1x8x8xf32>
    %575 = vector.shape_cast %571 : vector<8x8xf32> to vector<1x8x8xf32>
    %576 = vector.shape_cast %572 : vector<8x8xf32> to vector<1x8x8xf32>
    %577 = vector.shape_cast %573 : vector<8x8xf32> to vector<1x8x8xf32>
    %578 = tpu.concatenate %574, %575, %576, %577 in 0 : vector<1x8x8xf32>, vector<1x8x8xf32>, vector<1x8x8xf32>, vector<1x8x8xf32> -> vector<4x8x8xf32>
    %579 = vector.extract_strided_slice %568 {offsets = [0, 0], sizes = [8, 8], strides = [1, 1]} : vector<8x32xf32> to vector<8x8xf32>
    %580 = vector.extract_strided_slice %568 {offsets = [0, 8], sizes = [8, 8], strides = [1, 1]} : vector<8x32xf32> to vector<8x8xf32>
    %581 = vector.extract_strided_slice %568 {offsets = [0, 16], sizes = [8, 8], strides = [1, 1]} : vector<8x32xf32> to vector<8x8xf32>
    %582 = vector.extract_strided_slice %568 {offsets = [0, 24], sizes = [8, 8], strides = [1, 1]} : vector<8x32xf32> to vector<8x8xf32>
    %583 = vector.shape_cast %579 : vector<8x8xf32> to vector<1x8x8xf32>
    %584 = vector.shape_cast %580 : vector<8x8xf32> to vector<1x8x8xf32>
    %585 = vector.shape_cast %581 : vector<8x8xf32> to vector<1x8x8xf32>
    %586 = vector.shape_cast %582 : vector<8x8xf32> to vector<1x8x8xf32>
    %587 = tpu.concatenate %583, %584, %585, %586 in 0 : vector<1x8x8xf32>, vector<1x8x8xf32>, vector<1x8x8xf32>, vector<1x8x8xf32> -> vector<4x8x8xf32>
    %588 = vector.extract_strided_slice %569 {offsets = [0, 0], sizes = [8, 8], strides = [1, 1]} : vector<8x32xf32> to vector<8x8xf32>
    %589 = vector.extract_strided_slice %569 {offsets = [0, 8], sizes = [8, 8], strides = [1, 1]} : vector<8x32xf32> to vector<8x8xf32>
    %590 = vector.extract_strided_slice %569 {offsets = [0, 16], sizes = [8, 8], strides = [1, 1]} : vector<8x32xf32> to vector<8x8xf32>
    %591 = vector.extract_strided_slice %569 {offsets = [0, 24], sizes = [8, 8], strides = [1, 1]} : vector<8x32xf32> to vector<8x8xf32>
    %592 = vector.shape_cast %588 : vector<8x8xf32> to vector<1x8x8xf32>
    %593 = vector.shape_cast %589 : vector<8x8xf32> to vector<1x8x8xf32>
    %594 = vector.shape_cast %590 : vector<8x8xf32> to vector<1x8x8xf32>
    %595 = vector.shape_cast %591 : vector<8x8xf32> to vector<1x8x8xf32>
    %596 = tpu.concatenate %592, %593, %594, %595 in 0 : vector<1x8x8xf32>, vector<1x8x8xf32>, vector<1x8x8xf32>, vector<1x8x8xf32> -> vector<4x8x8xf32>
    "tpu.trace_start"() <{level = 10 : i32, message = "hqd,hkd->hqk"}> : () -> ()
    %cst_177 = arith.constant dense<0.000000e+00> : vector<4x8x8xf32>
    %597 = tpu.matmul %578, %587, %cst_177 {dimension_numbers = #tpu.dot_dimension_numbers<[2], [2], [1], [1], [0, 0, 0, 1, 1, 1], [0], [0]>} : vector<4x8x8xf32>, vector<4x8x8xf32>, vector<4x8x8xf32> -> vector<4x8x8xf32>
    "tpu.trace_stop"() : () -> ()
    %598 = vector.shape_cast %24 : vector<8x8xf32> to vector<1x8x8xf32>
    %599 = vector.broadcast %598 : vector<1x8x8xf32> to vector<4x8x8xf32>
    %600 = arith.addf %597, %599 : vector<4x8x8xf32>
    %cst_178 = arith.constant 0.176776692 : f32
    %601 = vector.broadcast %cst_178 : f32 to vector<4x8x8xf32>
    %602 = arith.mulf %600, %601 : vector<4x8x8xf32>
    %cst_179 = arith.constant dense<0xFF800000> : vector<4x8xf32>
    %603 = vector.multi_reduction <maximumf>, %602, %cst_179 [2] : vector<4x8x8xf32> to vector<4x8xf32>
    %604 = vector.shape_cast %603 : vector<4x8xf32> to vector<4x8x1xf32>
    %605 = vector.broadcast %604 : vector<4x8x1xf32> to vector<4x8x8xf32>
    %606 = arith.subf %602, %605 : vector<4x8x8xf32>
    %607 = math.exp %606 : vector<4x8x8xf32>
    %cst_180 = arith.constant dense<0.000000e+00> : vector<4x8xf32>
    %608 = vector.multi_reduction <add>, %607, %cst_180 [2] : vector<4x8x8xf32> to vector<4x8xf32>
    %609 = vector.shape_cast %608 : vector<4x8xf32> to vector<4x8x1xf32>
    %610 = tpu.reciprocal %609 : vector<4x8x1xf32> -> vector<4x8x1xf32>
    %611 = vector.broadcast %610 : vector<4x8x1xf32> to vector<4x8x8xf32>
    %612 = arith.mulf %607, %611 : vector<4x8x8xf32>
    "tpu.trace_start"() <{level = 10 : i32, message = "hqk,hkd->hqd"}> : () -> ()
    %cst_181 = arith.constant dense<0.000000e+00> : vector<4x8x8xf32>
    %613 = tpu.matmul %612, %596, %cst_181 {dimension_numbers = #tpu.dot_dimension_numbers<[2], [1], [1], [2], [0, 0, 0, 1, 1, 2], [0], [0]>} : vector<4x8x8xf32>, vector<4x8x8xf32>, vector<4x8x8xf32> -> vector<4x8x8xf32>
    "tpu.trace_stop"() : () -> ()
    %614 = vector.extract_strided_slice %613 {offsets = [0, 0, 0], sizes = [1, 8, 8], strides = [1, 1, 1]} : vector<4x8x8xf32> to vector<1x8x8xf32>
    %615 = vector.shape_cast %614 : vector<1x8x8xf32> to vector<8x8xf32>
    %616 = vector.extract_strided_slice %613 {offsets = [1, 0, 0], sizes = [1, 8, 8], strides = [1, 1, 1]} : vector<4x8x8xf32> to vector<1x8x8xf32>
    %617 = vector.shape_cast %616 : vector<1x8x8xf32> to vector<8x8xf32>
    %618 = vector.extract_strided_slice %613 {offsets = [2, 0, 0], sizes = [1, 8, 8], strides = [1, 1, 1]} : vector<4x8x8xf32> to vector<1x8x8xf32>
    %619 = vector.shape_cast %618 : vector<1x8x8xf32> to vector<8x8xf32>
    %620 = vector.extract_strided_slice %613 {offsets = [3, 0, 0], sizes = [1, 8, 8], strides = [1, 1, 1]} : vector<4x8x8xf32> to vector<1x8x8xf32>
    %621 = vector.shape_cast %620 : vector<1x8x8xf32> to vector<8x8xf32>
    %622 = tpu.concatenate %615, %617, %619, %621 in 1 : vector<8x8xf32>, vector<8x8xf32>, vector<8x8xf32>, vector<8x8xf32> -> vector<8x32xf32>
    %623 = vector.extract_strided_slice %558 {offsets = [8, 0], sizes = [8, 32], strides = [1, 1]} : vector<16x32xf32> to vector<8x32xf32>
    %624 = vector.extract_strided_slice %565 {offsets = [8, 0], sizes = [8, 64], strides = [1, 1]} : vector<16x64xf32> to vector<8x64xf32>
    %625 = vector.extract_strided_slice %624 {offsets = [0, 0], sizes = [8, 32], strides = [1, 1]} : vector<8x64xf32> to vector<8x32xf32>
    %626 = vector.extract_strided_slice %624 {offsets = [0, 32], sizes = [8, 32], strides = [1, 1]} : vector<8x64xf32> to vector<8x32xf32>
    %627 = vector.extract_strided_slice %623 {offsets = [0, 0], sizes = [8, 8], strides = [1, 1]} : vector<8x32xf32> to vector<8x8xf32>
    %628 = vector.extract_strided_slice %623 {offsets = [0, 8], sizes = [8, 8], strides = [1, 1]} : vector<8x32xf32> to vector<8x8xf32>
    %629 = vector.extract_strided_slice %623 {offsets = [0, 16], sizes = [8, 8], strides = [1, 1]} : vector<8x32xf32> to vector<8x8xf32>
    %630 = vector.extract_strided_slice %623 {offsets = [0, 24], sizes = [8, 8], strides = [1, 1]} : vector<8x32xf32> to vector<8x8xf32>
    %631 = vector.shape_cast %627 : vector<8x8xf32> to vector<1x8x8xf32>
    %632 = vector.shape_cast %628 : vector<8x8xf32> to vector<1x8x8xf32>
    %633 = vector.shape_cast %629 : vector<8x8xf32> to vector<1x8x8xf32>
    %634 = vector.shape_cast %630 : vector<8x8xf32> to vector<1x8x8xf32>
    %635 = tpu.concatenate %631, %632, %633, %634 in 0 : vector<1x8x8xf32>, vector<1x8x8xf32>, vector<1x8x8xf32>, vector<1x8x8xf32> -> vector<4x8x8xf32>
    %636 = vector.extract_strided_slice %625 {offsets = [0, 0], sizes = [8, 8], strides = [1, 1]} : vector<8x32xf32> to vector<8x8xf32>
    %637 = vector.extract_strided_slice %625 {offsets = [0, 8], sizes = [8, 8], strides = [1, 1]} : vector<8x32xf32> to vector<8x8xf32>
    %638 = vector.extract_strided_slice %625 {offsets = [0, 16], sizes = [8, 8], strides = [1, 1]} : vector<8x32xf32> to vector<8x8xf32>
    %639 = vector.extract_strided_slice %625 {offsets = [0, 24], sizes = [8, 8], strides = [1, 1]} : vector<8x32xf32> to vector<8x8xf32>
    %640 = vector.shape_cast %636 : vector<8x8xf32> to vector<1x8x8xf32>
    %641 = vector.shape_cast %637 : vector<8x8xf32> to vector<1x8x8xf32>
    %642 = vector.shape_cast %638 : vector<8x8xf32> to vector<1x8x8xf32>
    %643 = vector.shape_cast %639 : vector<8x8xf32> to vector<1x8x8xf32>
    %644 = tpu.concatenate %640, %641, %642, %643 in 0 : vector<1x8x8xf32>, vector<1x8x8xf32>, vector<1x8x8xf32>, vector<1x8x8xf32> -> vector<4x8x8xf32>
    %645 = vector.extract_strided_slice %626 {offsets = [0, 0], sizes = [8, 8], strides = [1, 1]} : vector<8x32xf32> to vector<8x8xf32>
    %646 = vector.extract_strided_slice %626 {offsets = [0, 8], sizes = [8, 8], strides = [1, 1]} : vector<8x32xf32> to vector<8x8xf32>
    %647 = vector.extract_strided_slice %626 {offsets = [0, 16], sizes = [8, 8], strides = [1, 1]} : vector<8x32xf32> to vector<8x8xf32>
    %648 = vector.extract_strided_slice %626 {offsets = [0, 24], sizes = [8, 8], strides = [1, 1]} : vector<8x32xf32> to vector<8x8xf32>
    %649 = vector.shape_cast %645 : vector<8x8xf32> to vector<1x8x8xf32>
    %650 = vector.shape_cast %646 : vector<8x8xf32> to vector<1x8x8xf32>
    %651 = vector.shape_cast %647 : vector<8x8xf32> to vector<1x8x8xf32>
    %652 = vector.shape_cast %648 : vector<8x8xf32> to vector<1x8x8xf32>
    %653 = tpu.concatenate %649, %650, %651, %652 in 0 : vector<1x8x8xf32>, vector<1x8x8xf32>, vector<1x8x8xf32>, vector<1x8x8xf32> -> vector<4x8x8xf32>
    "tpu.trace_start"() <{level = 10 : i32, message = "hqd,hkd->hqk"}> : () -> ()
    %cst_182 = arith.constant dense<0.000000e+00> : vector<4x8x8xf32>
    %654 = tpu.matmul %635, %644, %cst_182 {dimension_numbers = #tpu.dot_dimension_numbers<[2], [2], [1], [1], [0, 0, 0, 1, 1, 1], [0], [0]>} : vector<4x8x8xf32>, vector<4x8x8xf32>, vector<4x8x8xf32> -> vector<4x8x8xf32>
    "tpu.trace_stop"() : () -> ()
    %655 = vector.shape_cast %33 : vector<8x8xf32> to vector<1x8x8xf32>
    %656 = vector.broadcast %655 : vector<1x8x8xf32> to vector<4x8x8xf32>
    %657 = arith.addf %654, %656 : vector<4x8x8xf32>
    %cst_183 = arith.constant 0.176776692 : f32
    %658 = vector.broadcast %cst_183 : f32 to vector<4x8x8xf32>
    %659 = arith.mulf %657, %658 : vector<4x8x8xf32>
    %cst_184 = arith.constant dense<0xFF800000> : vector<4x8xf32>
    %660 = vector.multi_reduction <maximumf>, %659, %cst_184 [2] : vector<4x8x8xf32> to vector<4x8xf32>
    %661 = vector.shape_cast %660 : vector<4x8xf32> to vector<4x8x1xf32>
    %662 = vector.broadcast %661 : vector<4x8x1xf32> to vector<4x8x8xf32>
    %663 = arith.subf %659, %662 : vector<4x8x8xf32>
    %664 = math.exp %663 : vector<4x8x8xf32>
    %cst_185 = arith.constant dense<0.000000e+00> : vector<4x8xf32>
    %665 = vector.multi_reduction <add>, %664, %cst_185 [2] : vector<4x8x8xf32> to vector<4x8xf32>
    %666 = vector.shape_cast %665 : vector<4x8xf32> to vector<4x8x1xf32>
    %667 = tpu.reciprocal %666 : vector<4x8x1xf32> -> vector<4x8x1xf32>
    %668 = vector.broadcast %667 : vector<4x8x1xf32> to vector<4x8x8xf32>
    %669 = arith.mulf %664, %668 : vector<4x8x8xf32>
    "tpu.trace_start"() <{level = 10 : i32, message = "hqk,hkd->hqd"}> : () -> ()
    %cst_186 = arith.constant dense<0.000000e+00> : vector<4x8x8xf32>
    %670 = tpu.matmul %669, %653, %cst_186 {dimension_numbers = #tpu.dot_dimension_numbers<[2], [1], [1], [2], [0, 0, 0, 1, 1, 2], [0], [0]>} : vector<4x8x8xf32>, vector<4x8x8xf32>, vector<4x8x8xf32> -> vector<4x8x8xf32>
    "tpu.trace_stop"() : () -> ()
    %671 = vector.extract_strided_slice %670 {offsets = [0, 0, 0], sizes = [1, 8, 8], strides = [1, 1, 1]} : vector<4x8x8xf32> to vector<1x8x8xf32>
    %672 = vector.shape_cast %671 : vector<1x8x8xf32> to vector<8x8xf32>
    %673 = vector.extract_strided_slice %670 {offsets = [1, 0, 0], sizes = [1, 8, 8], strides = [1, 1, 1]} : vector<4x8x8xf32> to vector<1x8x8xf32>
    %674 = vector.shape_cast %673 : vector<1x8x8xf32> to vector<8x8xf32>
    %675 = vector.extract_strided_slice %670 {offsets = [2, 0, 0], sizes = [1, 8, 8], strides = [1, 1, 1]} : vector<4x8x8xf32> to vector<1x8x8xf32>
    %676 = vector.shape_cast %675 : vector<1x8x8xf32> to vector<8x8xf32>
    %677 = vector.extract_strided_slice %670 {offsets = [3, 0, 0], sizes = [1, 8, 8], strides = [1, 1, 1]} : vector<4x8x8xf32> to vector<1x8x8xf32>
    %678 = vector.shape_cast %677 : vector<1x8x8xf32> to vector<8x8xf32>
    %679 = tpu.concatenate %672, %674, %676, %678 in 1 : vector<8x8xf32>, vector<8x8xf32>, vector<8x8xf32>, vector<8x8xf32> -> vector<8x32xf32>
    %680 = tpu.concatenate %622, %679 in 0 : vector<8x32xf32>, vector<8x32xf32> -> vector<16x32xf32>
    %c1_187 = arith.constant 1 : index
    %c0_188 = arith.constant 0 : index
    %c0_189 = arith.constant 0 : index
    %681 = vector.load %arg14[%c1_187, %c0_188, %c0_189] : memref<2x32x32xf32, #tpu.memory_space<vmem>>, vector<1x32x32xf32>
    %682 = vector.shape_cast %681 : vector<1x32x32xf32> to vector<32x32xf32>
    %cst_190 = arith.constant dense<0.000000e+00> : vector<16x32xf32>
    %683 = tpu.matmul %680, %682, %cst_190 {dimension_numbers = #tpu.dot_dimension_numbers<[1], [0], [0], [1], [0, 0, 1, 1], [], []>} : vector<16x32xf32>, vector<32x32xf32>, vector<16x32xf32> -> vector<16x32xf32>
    %c1_191 = arith.constant 1 : index
    %c0_192 = arith.constant 0 : index
    %c0_193 = arith.constant 0 : index
    %684 = vector.load %arg15[%c1_191, %c0_192, %c0_193] : memref<2x1x32xf32, #tpu.memory_space<vmem>>, vector<1x1x32xf32>
    %685 = vector.shape_cast %684 : vector<1x1x32xf32> to vector<1x32xf32>
    %686 = vector.broadcast %685 : vector<1x32xf32> to vector<16x32xf32>
    %687 = arith.addf %683, %686 : vector<16x32xf32>
    %688 = arith.addf %687, %551 : vector<16x32xf32>
    %c1_194 = arith.constant 1 : index
    %c0_195 = arith.constant 0 : index
    %c0_196 = arith.constant 0 : index
    %689 = vector.load %arg16[%c1_194, %c0_195, %c0_196] : memref<2x1x32xf32, #tpu.memory_space<vmem>>, vector<1x1x32xf32>
    %690 = vector.shape_cast %689 : vector<1x1x32xf32> to vector<1x32xf32>
    %c1_197 = arith.constant 1 : index
    %c0_198 = arith.constant 0 : index
    %c0_199 = arith.constant 0 : index
    %691 = vector.load %arg17[%c1_197, %c0_198, %c0_199] : memref<2x1x32xf32, #tpu.memory_space<vmem>>, vector<1x1x32xf32>
    %692 = vector.shape_cast %691 : vector<1x1x32xf32> to vector<1x32xf32>
    %cst_200 = arith.constant dense<0.000000e+00> : vector<16xf32>
    %693 = vector.multi_reduction <add>, %688, %cst_200 [1] : vector<16x32xf32> to vector<16xf32>
    %694 = vector.shape_cast %693 : vector<16xf32> to vector<16x1xf32>
    %cst_201 = arith.constant 3.200000e+01 : f32
    %695 = vector.broadcast %cst_201 : f32 to vector<16x1xf32>
    %696 = arith.divf %694, %695 : vector<16x1xf32>
    %697 = vector.broadcast %696 : vector<16x1xf32> to vector<16x32xf32>
    %698 = arith.subf %688, %697 : vector<16x32xf32>
    %699 = arith.mulf %698, %698 : vector<16x32xf32>
    %cst_202 = arith.constant dense<0.000000e+00> : vector<16xf32>
    %700 = vector.multi_reduction <add>, %699, %cst_202 [1] : vector<16x32xf32> to vector<16xf32>
    %701 = vector.shape_cast %700 : vector<16xf32> to vector<16x1xf32>
    %cst_203 = arith.constant 3.200000e+01 : f32
    %702 = vector.broadcast %cst_203 : f32 to vector<16x1xf32>
    %703 = arith.divf %701, %702 : vector<16x1xf32>
    %704 = vector.broadcast %696 : vector<16x1xf32> to vector<16x32xf32>
    %705 = arith.subf %688, %704 : vector<16x32xf32>
    %cst_204 = arith.constant 9.99999974E-6 : f32
    %706 = vector.broadcast %cst_204 : f32 to vector<16x1xf32>
    %707 = arith.addf %703, %706 : vector<16x1xf32>
    %708 = math.rsqrt %707 : vector<16x1xf32>
    %709 = vector.broadcast %708 : vector<16x1xf32> to vector<16x32xf32>
    %710 = arith.mulf %705, %709 : vector<16x32xf32>
    %711 = vector.broadcast %690 : vector<1x32xf32> to vector<16x32xf32>
    %712 = arith.mulf %710, %711 : vector<16x32xf32>
    %713 = vector.broadcast %692 : vector<1x32xf32> to vector<16x32xf32>
    %714 = arith.addf %712, %713 : vector<16x32xf32>
    %c1_205 = arith.constant 1 : index
    %c0_206 = arith.constant 0 : index
    %c0_207 = arith.constant 0 : index
    %715 = vector.load %arg18[%c1_205, %c0_206, %c0_207] : memref<2x32x64xf32, #tpu.memory_space<vmem>>, vector<1x32x64xf32>
    %716 = vector.shape_cast %715 : vector<1x32x64xf32> to vector<32x64xf32>
    %cst_208 = arith.constant dense<0.000000e+00> : vector<16x64xf32>
    %717 = tpu.matmul %714, %716, %cst_208 {dimension_numbers = #tpu.dot_dimension_numbers<[1], [0], [0], [1], [0, 0, 1, 1], [], []>} : vector<16x32xf32>, vector<32x64xf32>, vector<16x64xf32> -> vector<16x64xf32>
    %c1_209 = arith.constant 1 : index
    %c0_210 = arith.constant 0 : index
    %c0_211 = arith.constant 0 : index
    %718 = vector.load %arg19[%c1_209, %c0_210, %c0_211] : memref<2x1x64xf32, #tpu.memory_space<vmem>>, vector<1x1x64xf32>
    %719 = vector.shape_cast %718 : vector<1x1x64xf32> to vector<1x64xf32>
    %720 = vector.broadcast %719 : vector<1x64xf32> to vector<16x64xf32>
    %721 = arith.addf %717, %720 : vector<16x64xf32>
    %cst_212 = arith.constant 0.000000e+00 : f32
    %722 = vector.broadcast %cst_212 : f32 to vector<16x64xf32>
    %723 = arith.maximumf %721, %722 : vector<16x64xf32>
    %c1_213 = arith.constant 1 : index
    %c0_214 = arith.constant 0 : index
    %c0_215 = arith.constant 0 : index
    %724 = vector.load %arg20[%c1_213, %c0_214, %c0_215] : memref<2x64x32xf32, #tpu.memory_space<vmem>>, vector<1x64x32xf32>
    %725 = vector.shape_cast %724 : vector<1x64x32xf32> to vector<64x32xf32>
    %cst_216 = arith.constant dense<0.000000e+00> : vector<16x32xf32>
    %726 = tpu.matmul %723, %725, %cst_216 {dimension_numbers = #tpu.dot_dimension_numbers<[1], [0], [0], [1], [0, 0, 1, 1], [], []>} : vector<16x64xf32>, vector<64x32xf32>, vector<16x32xf32> -> vector<16x32xf32>
    %c1_217 = arith.constant 1 : index
    %c0_218 = arith.constant 0 : index
    %c0_219 = arith.constant 0 : index
    %727 = vector.load %arg21[%c1_217, %c0_218, %c0_219] : memref<2x1x32xf32, #tpu.memory_space<vmem>>, vector<1x1x32xf32>
    %728 = vector.shape_cast %727 : vector<1x1x32xf32> to vector<1x32xf32>
    %729 = vector.broadcast %728 : vector<1x32xf32> to vector<16x32xf32>
    %730 = arith.addf %726, %729 : vector<16x32xf32>
    %731 = arith.addf %730, %714 : vector<16x32xf32>
    %c1_220 = arith.constant 1 : index
    %c0_221 = arith.constant 0 : index
    %c0_222 = arith.constant 0 : index
    %732 = vector.load %arg22[%c1_220, %c0_221, %c0_222] : memref<2x1x32xf32, #tpu.memory_space<vmem>>, vector<1x1x32xf32>
    %733 = vector.shape_cast %732 : vector<1x1x32xf32> to vector<1x32xf32>
    %c1_223 = arith.constant 1 : index
    %c0_224 = arith.constant 0 : index
    %c0_225 = arith.constant 0 : index
    %734 = vector.load %arg23[%c1_223, %c0_224, %c0_225] : memref<2x1x32xf32, #tpu.memory_space<vmem>>, vector<1x1x32xf32>
    %735 = vector.shape_cast %734 : vector<1x1x32xf32> to vector<1x32xf32>
    %cst_226 = arith.constant dense<0.000000e+00> : vector<16xf32>
    %736 = vector.multi_reduction <add>, %731, %cst_226 [1] : vector<16x32xf32> to vector<16xf32>
    %737 = vector.shape_cast %736 : vector<16xf32> to vector<16x1xf32>
    %cst_227 = arith.constant 3.200000e+01 : f32
    %738 = vector.broadcast %cst_227 : f32 to vector<16x1xf32>
    %739 = arith.divf %737, %738 : vector<16x1xf32>
    %740 = vector.broadcast %739 : vector<16x1xf32> to vector<16x32xf32>
    %741 = arith.subf %731, %740 : vector<16x32xf32>
    %742 = arith.mulf %741, %741 : vector<16x32xf32>
    %cst_228 = arith.constant dense<0.000000e+00> : vector<16xf32>
    %743 = vector.multi_reduction <add>, %742, %cst_228 [1] : vector<16x32xf32> to vector<16xf32>
    %744 = vector.shape_cast %743 : vector<16xf32> to vector<16x1xf32>
    %cst_229 = arith.constant 3.200000e+01 : f32
    %745 = vector.broadcast %cst_229 : f32 to vector<16x1xf32>
    %746 = arith.divf %744, %745 : vector<16x1xf32>
    %747 = vector.broadcast %739 : vector<16x1xf32> to vector<16x32xf32>
    %748 = arith.subf %731, %747 : vector<16x32xf32>
    %cst_230 = arith.constant 9.99999974E-6 : f32
    %749 = vector.broadcast %cst_230 : f32 to vector<16x1xf32>
    %750 = arith.addf %746, %749 : vector<16x1xf32>
    %751 = math.rsqrt %750 : vector<16x1xf32>
    %752 = vector.broadcast %751 : vector<16x1xf32> to vector<16x32xf32>
    %753 = arith.mulf %748, %752 : vector<16x32xf32>
    %754 = vector.broadcast %733 : vector<1x32xf32> to vector<16x32xf32>
    %755 = arith.mulf %753, %754 : vector<16x32xf32>
    %756 = vector.broadcast %735 : vector<1x32xf32> to vector<16x32xf32>
    %757 = arith.addf %755, %756 : vector<16x32xf32>
    %c0_231 = arith.constant 0 : index
    %c0_232 = arith.constant 0 : index
    %758 = vector.load %arg24[%c0_231, %c0_232] : memref<32x128xf32, #tpu.memory_space<vmem>>, vector<32x128xf32>
    %cst_233 = arith.constant dense<0.000000e+00> : vector<16x128xf32>
    %759 = tpu.matmul %757, %758, %cst_233 {dimension_numbers = #tpu.dot_dimension_numbers<[1], [0], [0], [1], [0, 0, 1, 1], [], []>} : vector<16x32xf32>, vector<32x128xf32>, vector<16x128xf32> -> vector<16x128xf32>
    %c0_234 = arith.constant 0 : index
    %c0_235 = arith.constant 0 : index
    %760 = vector.load %arg25[%c0_234, %c0_235] : memref<1x128xf32, #tpu.memory_space<vmem>>, vector<1x128xf32>
    %761 = vector.broadcast %760 : vector<1x128xf32> to vector<16x128xf32>
    %762 = arith.addf %759, %761 : vector<16x128xf32>
    %c0_236 = arith.constant 0 : index
    %c0_237 = arith.constant 0 : index
    %763 = vector.load %arg26[%c0_236, %c0_237] : memref<16x128xf32, #tpu.memory_space<vmem>>, vector<16x128xf32>
    tpu.vector_store %arg26[%c0_236, %c0_237], %762 {strides = array<i32>} : memref<16x128xf32, #tpu.memory_space<vmem>>, vector<16x128xf32>,
    return
  }
}

</mosaic_0001>

<llo_original>
// kernel: decoder_forward.1
$region0: #{decoder_forward.1}
  #allocation0 [shape = 'u32[]', space=smem, size = 0x4, offset = 0x4, fixed_abs, tag = 'smem constant byte address 0x4 - core index']
  #allocation1 [shape = 'u32[144,128]{1,0:T(1,128)}', space=vmem, size = 0x12000, scoped, tag = 'internal scratch']
  %s0 = inlined_call_operand.vmem [shape: f32[16,32], index: 0, kind: input, shape index: {}]
  %s1 = inlined_call_operand.vmem [shape: f32[16,32], index: 1, kind: input, shape index: {}]
  %s2 = inlined_call_operand.vmem [shape: f32[2,8,8], index: 2, kind: input, shape index: {}]
  %s3 = inlined_call_operand.vmem [shape: f32[2,1,8], index: 3, kind: input, shape index: {}]
  %s4 = inlined_call_operand.vmem [shape: f32[2,32,96], index: 4, kind: input, shape index: {}]
  %s5 = inlined_call_operand.vmem [shape: f32[2,1,96], index: 5, kind: input, shape index: {}]
  %s6 = inlined_call_operand.vmem [shape: f32[2,32,32], index: 6, kind: input, shape index: {}]
  %s7 = inlined_call_operand.vmem [shape: f32[2,1,32], index: 7, kind: input, shape index: {}]
  %s8 = inlined_call_operand.vmem [shape: f32[2,1,32], index: 8, kind: input, shape index: {}]
  %s9 = inlined_call_operand.vmem [shape: f32[2,1,32], index: 9, kind: input, shape index: {}]
  %s10 = inlined_call_operand.vmem [shape: f32[2,32,32], index: 10, kind: input, shape index: {}]
  %s11 = inlined_call_operand.vmem [shape: f32[2,1,32], index: 11, kind: input, shape index: {}]
  %s12 = inlined_call_operand.vmem [shape: f32[2,32,64], index: 12, kind: input, shape index: {}]
  %s13 = inlined_call_operand.vmem [shape: f32[2,1,64], index: 13, kind: input, shape index: {}]
  %s14 = inlined_call_operand.vmem [shape: f32[2,32,32], index: 14, kind: input, shape index: {}]
  %s15 = inlined_call_operand.vmem [shape: f32[2,1,32], index: 15, kind: input, shape index: {}]
  %s16 = inlined_call_operand.vmem [shape: f32[2,1,32], index: 16, kind: input, shape index: {}]
  %s17 = inlined_call_operand.vmem [shape: f32[2,1,32], index: 17, kind: input, shape index: {}]
  %s18 = inlined_call_operand.vmem [shape: f32[2,32,64], index: 18, kind: input, shape index: {}]
  %s19 = inlined_call_operand.vmem [shape: f32[2,1,64], index: 19, kind: input, shape index: {}]
  %s20 = inlined_call_operand.vmem [shape: f32[2,64,32], index: 20, kind: input, shape index: {}]
  %s21 = inlined_call_operand.vmem [shape: f32[2,1,32], index: 21, kind: input, shape index: {}]
  %s22 = inlined_call_operand.vmem [shape: f32[2,1,32], index: 22, kind: input, shape index: {}]
  %s23 = inlined_call_operand.vmem [shape: f32[2,1,32], index: 23, kind: input, shape index: {}]
  %s24 = inlined_call_operand.vmem [shape: f32[32,128], index: 24, kind: input, shape index: {}]
  %s25 = inlined_call_operand.vmem [shape: f32[1,128], index: 25, kind: input, shape index: {}]
  %s26 = inlined_call_operand.hbm [shape: f32[16,128], index: 26, kind: output, shape index: {}]
  %s27 = sld [smem:[#allocation0]]
  $region114: #{decoder_forward.1} parent=0
    _
  %s29 = ssub.s32 1, %s27
  %s30 = scalar_select 0, %s29, %s27
  $region1: #{decoder_forward.1} parent=0
    #allocation2 [shape = 'u8[8192]{0}', space=vmem, size = 0x2000, scoped, tag = 'output window, operand 0, single buffered']
    #allocation3 [shape = 's32[1]{0}', space=sflag, size = 0x4, scoped, tag = 'scoped memory for decoder_forward.1']
    %31 = vsyncpa [#allocation3], 0
    // Predicated region
    $region2: #{decoder_forward.1} parent=1 // pred_check
      _
    $region3: #{decoder_forward.1} parent=1 // pred_check_branch
      %33 = sbr.rel (0) target = $region5
    $region4: #{decoder_forward.1} parent=1 // pred_region
      _
    $region5: #{decoder_forward.1} parent=1 // pred_fallthru
      _
    // Predicated region
    $region6: #{decoder_forward.1} parent=1 // pred_check
      _
    $region7: #{decoder_forward.1} parent=1 // pred_check_branch
      %35 = sbr.rel (0) target = $region9
    $region8: #{decoder_forward.1} parent=1 // pred_region
      _
    $region9: #{decoder_forward.1} parent=1 // pred_fallthru
      _
    // Predicated region
    $region10: #{decoder_forward.1} parent=1 // pred_check
      _
    $region11: #{decoder_forward.1} parent=1 // pred_check_branch
      %37 = sbr.rel (0) target = $region13
    $region12: #{decoder_forward.1} parent=1 // pred_region
      _
    $region13: #{decoder_forward.1} parent=1 // pred_fallthru
      _
    // Predicated region
    $region14: #{decoder_forward.1} parent=1 // pred_check
      _
    $region15: #{decoder_forward.1} parent=1 // pred_check_branch
      %39 = sbr.rel (0) target = $region17
    $region16: #{decoder_forward.1} parent=1 // pred_region
      _
    $region17: #{decoder_forward.1} parent=1 // pred_fallthru
      _
    // Predicated region
    $region18: #{decoder_forward.1} parent=1 // pred_check
      _
    $region19: #{decoder_forward.1} parent=1 // pred_check_branch
      %41 = sbr.rel (0) target = $region21
    $region20: #{decoder_forward.1} parent=1 // pred_region
      _
    $region21: #{decoder_forward.1} parent=1 // pred_fallthru
      _
    // Predicated region
    $region22: #{decoder_forward.1} parent=1 // pred_check
      _
    $region23: #{decoder_forward.1} parent=1 // pred_check_branch
      %43 = sbr.rel (0) target = $region25
    $region24: #{decoder_forward.1} parent=1 // pred_region
      _
    $region25: #{decoder_forward.1} parent=1 // pred_fallthru
      _
    // Predicated region
    $region26: #{decoder_forward.1} parent=1 // pred_check
      _
    $region27: #{decoder_forward.1} parent=1 // pred_check_branch
      %45 = sbr.rel (0) target = $region29
    $region28: #{decoder_forward.1} parent=1 // pred_region
      _
    $region29: #{decoder_forward.1} parent=1 // pred_fallthru
      _
    // Predicated region
    $region30: #{decoder_forward.1} parent=1 // pred_check
      _
    $region31: #{decoder_forward.1} parent=1 // pred_check_branch
      %47 = sbr.rel (0) target = $region33
    $region32: #{decoder_forward.1} parent=1 // pred_region
      _
    $region33: #{decoder_forward.1} parent=1 // pred_fallthru
      _
    // Predicated region
    $region34: #{decoder_forward.1} parent=1 // pred_check
      _
    $region35: #{decoder_forward.1} parent=1 // pred_check_branch
      %49 = sbr.rel (0) target = $region37
    $region36: #{decoder_forward.1} parent=1 // pred_region
      _
    $region37: #{decoder_forward.1} parent=1 // pred_fallthru
      _
    // Predicated region
    $region38: #{decoder_forward.1} parent=1 // pred_check
      _
    $region39: #{decoder_forward.1} parent=1 // pred_check_branch
      %51 = sbr.rel (0) target = $region41
    $region40: #{decoder_forward.1} parent=1 // pred_region
      _
    $region41: #{decoder_forward.1} parent=1 // pred_fallthru
      _
    // Predicated region
    $region42: #{decoder_forward.1} parent=1 // pred_check
      _
    $region43: #{decoder_forward.1} parent=1 // pred_check_branch
      %53 = sbr.rel (0) target = $region45
    $region44: #{decoder_forward.1} parent=1 // pred_region
      _
    $region45: #{decoder_forward.1} parent=1 // pred_fallthru
      _
    // Predicated region
    $region46: #{decoder_forward.1} parent=1 // pred_check
      _
    $region47: #{decoder_forward.1} parent=1 // pred_check_branch
      %55 = sbr.rel (0) target = $region49
    $region48: #{decoder_forward.1} parent=1 // pred_region
      _
    $region49: #{decoder_forward.1} parent=1 // pred_fallthru
      _
    // Predicated region
    $region50: #{decoder_forward.1} parent=1 // pred_check
      _
    $region51: #{decoder_forward.1} parent=1 // pred_check_branch
      %57 = sbr.rel (0) target = $region53
    $region52: #{decoder_forward.1} parent=1 // pred_region
      _
    $region53: #{decoder_forward.1} parent=1 // pred_fallthru
      _
    // Predicated region
    $region54: #{decoder_forward.1} parent=1 // pred_check
      _
    $region55: #{decoder_forward.1} parent=1 // pred_check_branch
      %59 = sbr.rel (0) target = $region57
    $region56: #{decoder_forward.1} parent=1 // pred_region
      _
    $region57: #{decoder_forward.1} parent=1 // pred_fallthru
      _
    // Predicated region
    $region58: #{decoder_forward.1} parent=1 // pred_check
      _
    $region59: #{decoder_forward.1} parent=1 // pred_check_branch
      %61 = sbr.rel (0) target = $region61
    $region60: #{decoder_forward.1} parent=1 // pred_region
      _
    $region61: #{decoder_forward.1} parent=1 // pred_fallthru
      _
    // Predicated region
    $region62: #{decoder_forward.1} parent=1 // pred_check
      _
    $region63: #{decoder_forward.1} parent=1 // pred_check_branch
      %63 = sbr.rel (0) target = $region65
    $region64: #{decoder_forward.1} parent=1 // pred_region
      _
    $region65: #{decoder_forward.1} parent=1 // pred_fallthru
      _
    // Predicated region
    $region66: #{decoder_forward.1} parent=1 // pred_check
      _
    $region67: #{decoder_forward.1} parent=1 // pred_check_branch
      %65 = sbr.rel (0) target = $region69
    $region68: #{decoder_forward.1} parent=1 // pred_region
      _
    $region69: #{decoder_forward.1} parent=1 // pred_fallthru
      _
    // Predicated region
    $region70: #{decoder_forward.1} parent=1 // pred_check
      _
    $region71: #{decoder_forward.1} parent=1 // pred_check_branch
      %67 = sbr.rel (0) target = $region73
    $region72: #{decoder_forward.1} parent=1 // pred_region
      _
    $region73: #{decoder_forward.1} parent=1 // pred_fallthru
      _
    // Predicated region
    $region74: #{decoder_forward.1} parent=1 // pred_check
      _
    $region75: #{decoder_forward.1} parent=1 // pred_check_branch
      %69 = sbr.rel (0) target = $region77
    $region76: #{decoder_forward.1} parent=1 // pred_region
      _
    $region77: #{decoder_forward.1} parent=1 // pred_fallthru
      _
    // Predicated region
    $region78: #{decoder_forward.1} parent=1 // pred_check
      _
    $region79: #{decoder_forward.1} parent=1 // pred_check_branch
      %71 = sbr.rel (0) target = $region81
    $region80: #{decoder_forward.1} parent=1 // pred_region
      _
    $region81: #{decoder_forward.1} parent=1 // pred_fallthru
      _
    // Predicated region
    $region82: #{decoder_forward.1} parent=1 // pred_check
      _
    $region83: #{decoder_forward.1} parent=1 // pred_check_branch
      %73 = sbr.rel (0) target = $region85
    $region84: #{decoder_forward.1} parent=1 // pred_region
      _
    $region85: #{decoder_forward.1} parent=1 // pred_fallthru
      _
    // Predicated region
    $region86: #{decoder_forward.1} parent=1 // pred_check
      _
    $region87: #{decoder_forward.1} parent=1 // pred_check_branch
      %75 = sbr.rel (0) target = $region89
    $region88: #{decoder_forward.1} parent=1 // pred_region
      _
    $region89: #{decoder_forward.1} parent=1 // pred_fallthru
      _
    // Predicated region
    $region90: #{decoder_forward.1} parent=1 // pred_check
      _
    $region91: #{decoder_forward.1} parent=1 // pred_check_branch
      %77 = sbr.rel (0) target = $region93
    $region92: #{decoder_forward.1} parent=1 // pred_region
      _
    $region93: #{decoder_forward.1} parent=1 // pred_fallthru
      _
    // Predicated region
    $region94: #{decoder_forward.1} parent=1 // pred_check
      _
    $region95: #{decoder_forward.1} parent=1 // pred_check_branch
      %79 = sbr.rel (0) target = $region97
    $region96: #{decoder_forward.1} parent=1 // pred_region
      _
    $region97: #{decoder_forward.1} parent=1 // pred_fallthru
      _
    // Predicated region
    $region98: #{decoder_forward.1} parent=1 // pred_check
      _
    $region99: #{decoder_forward.1} parent=1 // pred_check_branch
      %81 = sbr.rel (0) target = $region101
    $region100: #{decoder_forward.1} parent=1 // pred_region
      _
    $region101: #{decoder_forward.1} parent=1 // pred_fallthru
      _
    // Predicated region
    $region102: #{decoder_forward.1} parent=1 // pred_check
      _
    $region103: #{decoder_forward.1} parent=1 // pred_check_branch
      %83 = sbr.rel (0) target = $region105
    $region104: #{decoder_forward.1} parent=1 // pred_region
      _
    $region105: #{decoder_forward.1} parent=1 // pred_fallthru
      _
    %v84 = vld [vmem:[%s0] sm:$0xff]
    %v85 = vld [vmem:[%s0 + $0x8] sm:$0xff]
    %v86 = vld [vmem:[%s1] sm:$0xff]
    %v87 = vld [vmem:[%s1 + $0x8] sm:$0xff]
    %v88 = vld [vmem:[%s2] sm:$0xff]
    %vm89 = vcmp.eq.f32.partialorder %v88, 0.0
    %v90 = vsel %vm89, -1e+20, 0.0
    %s91 = scalar_lea.vmem %s2, 8
    %v92 = vld [vmem:[%s91] sm:$0xff]
    %vm93 = vcmp.eq.f32.partialorder %v92, 0.0
    %v94 = vsel %vm93, -1e+20, 0.0
    %v95 = vld [vmem:[%s3] sm:$0x1]
    %v97 = vlaneseq
    %v98 = vshrl.u32 %v97, 7
    %v99 = vsub.s32 0, %v98
    %v100 = vrot.slane %v95, %v99
    %vm102 = vcmp.eq.f32.partialorder %v100, 0.0
    %v103 = vsel %vm102, -1e+20, 0.0
    %s104 = scalar_lea.vmem %s3, 1
    %v105 = vld [vmem:[%s104] sm:$0x1]
    %v107 = vlaneseq
    %v108 = vshrl.u32 %v107, 7
    %v109 = vsub.s32 0, %v108
    %v110 = vrot.slane %v105, %v109
    %vm112 = vcmp.eq.f32.partialorder %v110, 0.0
    %v113 = vsel %vm112, -1e+20, 0.0
    %v114 = vld [vmem:[%s4] sm:$0xff]
    %v115 = vld [vmem:[%s4 + $0x8] sm:$0xff]
    %v116 = vld [vmem:[%s4 + $0x10] sm:$0xff]
    %v117 = vld [vmem:[%s4 + $0x18] sm:$0xff]
    %v118 = vld [vmem:[%s5] sm:$0x1]
    %v120 = vlaneseq
    %v121 = vshrl.u32 %v120, 7
    %v122 = vsub.s32 0, %v121
    %v123 = vrot.slane %v118, %v122
    %vm125 = vcmask 261120
    %v127 = vsel %vm125, %v84, 0
    %v130 = vsel %vm125, %v85, 0
    %132 = vmatprep.subr.mxu0 0.0
    %133 = vmatpush1.msra.mxu0 %v114
    %134 = vmatprep.subr.mxu0 0.0
    %135 = vmatpush1.msra.mxu0 %v115
    %136 = vmatprep.subr.mxu0 0.0
    %137 = vmatpush1.msra.mxu0 %v116
    %138 = vmatprep.subr.mxu0 0.0
    %139 = vmatpush1.msra.mxu0 %v117
    %140 = vmatprep.subr.mxu0 0.0
    %141 = vmatpush1.msra.mxu0 0.0
    %142 = vmatprep.subr.mxu0 0.0
    %143 = vmatpush1.msra.mxu0 0.0
    %144 = vmatprep.subr.mxu0 0.0
    %145 = vmatpush1.msra.mxu0 0.0
    %146 = vmatprep.subr.mxu0 0.0
    %147 = vmatpush1.msra.mxu0 0.0
    %148 = vmatprep.subr.mxu0 0.0
    %149 = vmatpush1.msra.mxu0 0.0
    %150 = vmatprep.subr.mxu0 0.0
    %151 = vmatpush1.msra.mxu0 0.0
    %152 = vmatprep.subr.mxu0 0.0
    %153 = vmatpush1.msra.mxu0 0.0
    %154 = vmatprep.subr.mxu0 0.0
    %155 = vmatpush1.msra.mxu0 0.0
    %156 = vmatprep.subr.mxu0 0.0
    %157 = vmatpush1.msra.mxu0 0.0
    %158 = vmatprep.subr.mxu0 0.0
    %159 = vmatpush1.msra.mxu0 0.0
    %160 = vmatprep.subr.mxu0 0.0
    %161 = vmatpush1.msra.mxu0 0.0
    %162 = vmatprep.subr.mxu0 0.0
    %163 = vmatpush1.msra.mxu0 0.0
    %164 = vmatprep.subr.mxu0 0.0
    %165 = vmatpush1.msra.mxu0 0.0
    %166 = vmatprep.subr.mxu0 0.0
    %167 = vmatpush1.msra.mxu0 0.0
    %168 = vmatprep.subr.mxu0 0.0
    %169 = vmatpush1.msra.mxu0 0.0
    %170 = vmatprep.subr.mxu0 0.0
    %171 = vmatpush1.msra.mxu0 0.0
    %172 = vmatprep.subr.mxu0 0.0
    %173 = vmatpush1.msra.mxu0 0.0
    %174 = vmatprep.subr.mxu0 0.0
    %175 = vmatpush1.msra.mxu0 0.0
    %176 = vmatprep.subr.mxu0 0.0
    %177 = vmatpush1.msra.mxu0 0.0
    %178 = vmatprep.subr.mxu0 0.0
    %179 = vmatpush1.msra.mxu0 0.0
    %180 = vmatprep.subr.mxu0 0.0
    %181 = vmatpush1.msra.mxu0 0.0
    %182 = vmatprep.subr.mxu0 0.0
    %183 = vmatpush1.msra.mxu0 0.0
    %184 = vmatprep.subr.mxu0 0.0
    %185 = vmatpush1.msra.mxu0 0.0
    %186 = vmatprep.subr.mxu0 0.0
    %187 = vmatpush1.msra.mxu0 0.0
    %188 = vmatprep.subr.mxu0 0.0
    %189 = vmatpush1.msra.mxu0 0.0
    %190 = vmatprep.subr.mxu0 0.0
    %191 = vmatpush1.msra.mxu0 0.0
    %192 = vmatprep.subr.mxu0 0.0
    %193 = vmatpush1.msra.mxu0 0.0
    %194 = vmatprep.subr.mxu0 0.0
    %195 = vmatpush1.msra.mxu0 0.0
    %196 = vmatprep.mubr.f32.mxu0 0.0
    %197 = vmatmul.mubr.f32.gmra.mrb[0].mxu0 %v127
    %v198 = vpop.f32.mrb[0].mxu0
    %v199 = vadd.f32 %v123, %v198
    %v200 = vpop.f32.mrb[0].mxu0
    %201 = vmatprep.mubr.f32.mxu0 0.0
    %202 = vmatmul.mubr.f32.gmra.mrb[0].mxu0 %v130
    %v203 = vpop.f32.mrb[0].mxu0
    %v204 = vadd.f32 %v123, %v203
    %v205 = vpop.f32.mrb[0].mxu0
    %206 = vdwg.mxu0
    %208 = vrot.lane.b32.xlu0 %v199, 120
    %v209 = vpop.permute.xlu0 %208
    %210 = vrot.lane.b32.xlu0 %v199, 112
    %v211 = vpop.permute.xlu0 %210
    %212 = vrot.lane.b32.xlu0 %v199, 104
    %v213 = vpop.permute.xlu0 %212
    %214 = vrot.lane.b32.xlu0 %v199, 96
    %v215 = vpop.permute.xlu0 %214
    %vm216 = vcmask 64512
    %v217 = vsel %vm216, %v199, 0
    %v219 = vsel %vm216, %v215, 0
    %221 = vmatprep.subr.mxu0 0.0
    %222 = vmatpush1.xpose.msra.mxu0 %v219
    %223 = vmatprep.subr.mxu0 0.0
    %224 = vmatpush1.xpose.msra.mxu0 0.0
    %225 = vmatprep.subr.mxu0 0.0
    %226 = vmatpush1.xpose.msra.mxu0 0.0
    %227 = vmatprep.subr.mxu0 0.0
    %228 = vmatpush1.xpose.msra.mxu0 0.0
    %229 = vmatprep.subr.mxu0 0.0
    %230 = vmatpush1.xpose.msra.mxu0 0.0
    %231 = vmatprep.subr.mxu0 0.0
    %232 = vmatpush1.xpose.msra.mxu0 0.0
    %233 = vmatprep.subr.mxu0 0.0
    %234 = vmatpush1.xpose.msra.mxu0 0.0
    %235 = vmatprep.subr.mxu0 0.0
    %236 = vmatpush1.xpose.msra.mxu0 0.0
    %237 = vmatprep.subr.mxu0 0.0
    %238 = vmatpush1.xpose.msra.mxu0 0.0
    %239 = vmatprep.subr.mxu0 0.0
    %240 = vmatpush1.xpose.msra.mxu0 0.0
    %241 = vmatprep.subr.mxu0 0.0
    %242 = vmatpush1.xpose.msra.mxu0 0.0
    %243 = vmatprep.subr.mxu0 0.0
    %244 = vmatpush1.xpose.msra.mxu0 0.0
    %245 = vmatprep.subr.mxu0 0.0
    %246 = vmatpush1.xpose.msra.mxu0 0.0
    %247 = vmatprep.subr.mxu0 0.0
    %248 = vmatpush1.xpose.msra.mxu0 0.0
    %249 = vmatprep.subr.mxu0 0.0
    %250 = vmatpush1.xpose.msra.mxu0 0.0
    %251 = vmatprep.subr.mxu0 0.0
    %252 = vmatpush1.xpose.msra.mxu0 0.0
    %253 = vmatprep.subr.mxu0 0.0
    %254 = vmatpush1.xpose.msra.mxu0 0.0
    %255 = vmatprep.subr.mxu0 0.0
    %256 = vmatpush1.xpose.msra.mxu0 0.0
    %257 = vmatprep.subr.mxu0 0.0
    %258 = vmatpush1.xpose.msra.mxu0 0.0
    %259 = vmatprep.subr.mxu0 0.0
    %260 = vmatpush1.xpose.msra.mxu0 0.0
    %261 = vmatprep.subr.mxu0 0.0
    %262 = vmatpush1.xpose.msra.mxu0 0.0
    %263 = vmatprep.subr.mxu0 0.0
    %264 = vmatpush1.xpose.msra.mxu0 0.0
    %265 = vmatprep.subr.mxu0 0.0
    %266 = vmatpush1.xpose.msra.mxu0 0.0
    %267 = vmatprep.subr.mxu0 0.0
    %268 = vmatpush1.xpose.msra.mxu0 0.0
    %269 = vmatprep.subr.mxu0 0.0
    %270 = vmatpush1.xpose.msra.mxu0 0.0
    %271 = vmatprep.subr.mxu0 0.0
    %272 = vmatpush1.xpose.msra.mxu0 0.0
    %273 = vmatprep.subr.mxu0 0.0
    %274 = vmatpush1.xpose.msra.mxu0 0.0
    %275 = vmatprep.subr.mxu0 0.0
    %276 = vmatpush1.xpose.msra.mxu0 0.0
    %277 = vmatprep.subr.mxu0 0.0
    %278 = vmatpush1.xpose.msra.mxu0 0.0
    %279 = vmatprep.subr.mxu0 0.0
    %280 = vmatpush1.xpose.msra.mxu0 0.0
    %281 = vmatprep.subr.mxu0 0.0
    %282 = vmatpush1.xpose.msra.mxu0 0.0
    %283 = vmatprep.subr.mxu0 0.0
    %284 = vmatpush1.xpose.msra.mxu0 0.0
    %285 = vmatprep.mubr.f32.mxu0 0.0
    %286 = vmatmul.mubr.f32.gmra.mrb[0].mxu0 %v217
    %v287 = vpop.f32.mrb[0].mxu0
    %v288 = vadd.f32 %v90, %v287
    %v289 = vpop.f32.mrb[0].mxu0
    %290 = vdwg.mxu0
    %291 = vrot.lane.b32.xlu0 %v209, 96
    %v292 = vpop.permute.xlu0 %291
    %v293 = vsel %vm216, %v209, 0
    %v295 = vsel %vm216, %v292, 0
    %297 = vmatprep.subr.mxu0 0.0
    %298 = vmatpush1.xpose.msra.mxu0 %v295
    %299 = vmatprep.subr.mxu0 0.0
    %300 = vmatpush1.xpose.msra.mxu0 0.0
    %301 = vmatprep.subr.mxu0 0.0
    %302 = vmatpush1.xpose.msra.mxu0 0.0
    %303 = vmatprep.subr.mxu0 0.0
    %304 = vmatpush1.xpose.msra.mxu0 0.0
    %305 = vmatprep.subr.mxu0 0.0
    %306 = vmatpush1.xpose.msra.mxu0 0.0
    %307 = vmatprep.subr.mxu0 0.0
    %308 = vmatpush1.xpose.msra.mxu0 0.0
    %309 = vmatprep.subr.mxu0 0.0
    %310 = vmatpush1.xpose.msra.mxu0 0.0
    %311 = vmatprep.subr.mxu0 0.0
    %312 = vmatpush1.xpose.msra.mxu0 0.0
    %313 = vmatprep.subr.mxu0 0.0
    %314 = vmatpush1.xpose.msra.mxu0 0.0
    %315 = vmatprep.subr.mxu0 0.0
    %316 = vmatpush1.xpose.msra.mxu0 0.0
    %317 = vmatprep.subr.mxu0 0.0
    %318 = vmatpush1.xpose.msra.mxu0 0.0
    %319 = vmatprep.subr.mxu0 0.0
    %320 = vmatpush1.xpose.msra.mxu0 0.0
    %321 = vmatprep.subr.mxu0 0.0
    %322 = vmatpush1.xpose.msra.mxu0 0.0
    %323 = vmatprep.subr.mxu0 0.0
    %324 = vmatpush1.xpose.msra.mxu0 0.0
    %325 = vmatprep.subr.mxu0 0.0
    %326 = vmatpush1.xpose.msra.mxu0 0.0
    %327 = vmatprep.subr.mxu0 0.0
    %328 = vmatpush1.xpose.msra.mxu0 0.0
    %329 = vmatprep.subr.mxu0 0.0
    %330 = vmatpush1.xpose.msra.mxu0 0.0
    %331 = vmatprep.subr.mxu0 0.0
    %332 = vmatpush1.xpose.msra.mxu0 0.0
    %333 = vmatprep.subr.mxu0 0.0
    %334 = vmatpush1.xpose.msra.mxu0 0.0
    %335 = vmatprep.subr.mxu0 0.0
    %336 = vmatpush1.xpose.msra.mxu0 0.0
    %337 = vmatprep.subr.mxu0 0.0
    %338 = vmatpush1.xpose.msra.mxu0 0.0
    %339 = vmatprep.subr.mxu0 0.0
    %340 = vmatpush1.xpose.msra.mxu0 0.0
    %341 = vmatprep.subr.mxu0 0.0
    %342 = vmatpush1.xpose.msra.mxu0 0.0
    %343 = vmatprep.subr.mxu0 0.0
    %344 = vmatpush1.xpose.msra.mxu0 0.0
    %345 = vmatprep.subr.mxu0 0.0
    %346 = vmatpush1.xpose.msra.mxu0 0.0
    %347 = vmatprep.subr.mxu0 0.0
    %348 = vmatpush1.xpose.msra.mxu0 0.0
    %349 = vmatprep.subr.mxu0 0.0
    %350 = vmatpush1.xpose.msra.mxu0 0.0
    %351 = vmatprep.subr.mxu0 0.0
    %352 = vmatpush1.xpose.msra.mxu0 0.0
    %353 = vmatprep.subr.mxu0 0.0
    %354 = vmatpush1.xpose.msra.mxu0 0.0
    %355 = vmatprep.subr.mxu0 0.0
    %356 = vmatpush1.xpose.msra.mxu0 0.0
    %357 = vmatprep.subr.mxu0 0.0
    %358 = vmatpush1.xpose.msra.mxu0 0.0
    %359 = vmatprep.subr.mxu0 0.0
    %360 = vmatpush1.xpose.msra.mxu0 0.0
    %361 = vmatprep.mubr.f32.mxu0 0.0
    %362 = vmatmul.mubr.f32.gmra.mrb[0].mxu0 %v293
    %v363 = vpop.f32.mrb[0].mxu0
    %v364 = vadd.f32 %v90, %v363
    %v365 = vpop.f32.mrb[0].mxu0
    %366 = vdwg.mxu0
    %367 = vrot.lane.b32.xlu0 %v211, 96
    %v368 = vpop.permute.xlu0 %367
    %v369 = vsel %vm216, %v211, 0
    %v371 = vsel %vm216, %v368, 0
    %373 = vmatprep.subr.mxu0 0.0
    %374 = vmatpush1.xpose.msra.mxu0 %v371
    %375 = vmatprep.subr.mxu0 0.0
    %376 = vmatpush1.xpose.msra.mxu0 0.0
    %377 = vmatprep.subr.mxu0 0.0
    %378 = vmatpush1.xpose.msra.mxu0 0.0
    %379 = vmatprep.subr.mxu0 0.0
    %380 = vmatpush1.xpose.msra.mxu0 0.0
    %381 = vmatprep.subr.mxu0 0.0
    %382 = vmatpush1.xpose.msra.mxu0 0.0
    %383 = vmatprep.subr.mxu0 0.0
    %384 = vmatpush1.xpose.msra.mxu0 0.0
    %385 = vmatprep.subr.mxu0 0.0
    %386 = vmatpush1.xpose.msra.mxu0 0.0
    %387 = vmatprep.subr.mxu0 0.0
    %388 = vmatpush1.xpose.msra.mxu0 0.0
    %389 = vmatprep.subr.mxu0 0.0
    %390 = vmatpush1.xpose.msra.mxu0 0.0
    %391 = vmatprep.subr.mxu0 0.0
    %392 = vmatpush1.xpose.msra.mxu0 0.0
    %393 = vmatprep.subr.mxu0 0.0
    %394 = vmatpush1.xpose.msra.mxu0 0.0
    %395 = vmatprep.subr.mxu0 0.0
    %396 = vmatpush1.xpose.msra.mxu0 0.0
    %397 = vmatprep.subr.mxu0 0.0
    %398 = vmatpush1.xpose.msra.mxu0 0.0
    %399 = vmatprep.subr.mxu0 0.0
    %400 = vmatpush1.xpose.msra.mxu0 0.0
    %401 = vmatprep.subr.mxu0 0.0
    %402 = vmatpush1.xpose.msra.mxu0 0.0
    %403 = vmatprep.subr.mxu0 0.0
    %404 = vmatpush1.xpose.msra.mxu0 0.0
    %405 = vmatprep.subr.mxu0 0.0
    %406 = vmatpush1.xpose.msra.mxu0 0.0
    %407 = vmatprep.subr.mxu0 0.0
    %408 = vmatpush1.xpose.msra.mxu0 0.0
    %409 = vmatprep.subr.mxu0 0.0
    %410 = vmatpush1.xpose.msra.mxu0 0.0
    %411 = vmatprep.subr.mxu0 0.0
    %412 = vmatpush1.xpose.msra.mxu0 0.0
    %413 = vmatprep.subr.mxu0 0.0
    %414 = vmatpush1.xpose.msra.mxu0 0.0
    %415 = vmatprep.subr.mxu0 0.0
    %416 = vmatpush1.xpose.msra.mxu0 0.0
    %417 = vmatprep.subr.mxu0 0.0
    %418 = vmatpush1.xpose.msra.mxu0 0.0
    %419 = vmatprep.subr.mxu0 0.0
    %420 = vmatpush1.xpose.msra.mxu0 0.0
    %421 = vmatprep.subr.mxu0 0.0
    %422 = vmatpush1.xpose.msra.mxu0 0.0
    %423 = vmatprep.subr.mxu0 0.0
    %424 = vmatpush1.xpose.msra.mxu0 0.0
    %425 = vmatprep.subr.mxu0 0.0
    %426 = vmatpush1.xpose.msra.mxu0 0.0
    %427 = vmatprep.subr.mxu0 0.0
    %428 = vmatpush1.xpose.msra.mxu0 0.0
    %429 = vmatprep.subr.mxu0 0.0
    %430 = vmatpush1.xpose.msra.mxu0 0.0
    %431 = vmatprep.subr.mxu0 0.0
    %432 = vmatpush1.xpose.msra.mxu0 0.0
    %433 = vmatprep.subr.mxu0 0.0
    %434 = vmatpush1.xpose.msra.mxu0 0.0
    %435 = vmatprep.subr.mxu0 0.0
    %436 = vmatpush1.xpose.msra.mxu0 0.0
    %437 = vmatprep.mubr.f32.mxu0 0.0
    %438 = vmatmul.mubr.f32.gmra.mrb[0].mxu0 %v369
    %v439 = vpop.f32.mrb[0].mxu0
    %v440 = vadd.f32 %v90, %v439
    %v441 = vpop.f32.mrb[0].mxu0
    %442 = vdwg.mxu0
    %443 = vrot.lane.b32.xlu0 %v213, 96
    %v444 = vpop.permute.xlu0 %443
    %v445 = vsel %vm216, %v213, 0
    %v447 = vsel %vm216, %v444, 0
    %449 = vmatprep.subr.mxu0 0.0
    %450 = vmatpush1.xpose.msra.mxu0 %v447
    %451 = vmatprep.subr.mxu0 0.0
    %452 = vmatpush1.xpose.msra.mxu0 0.0
    %453 = vmatprep.subr.mxu0 0.0
    %454 = vmatpush1.xpose.msra.mxu0 0.0
    %455 = vmatprep.subr.mxu0 0.0
    %456 = vmatpush1.xpose.msra.mxu0 0.0
    %457 = vmatprep.subr.mxu0 0.0
    %458 = vmatpush1.xpose.msra.mxu0 0.0
    %459 = vmatprep.subr.mxu0 0.0
    %460 = vmatpush1.xpose.msra.mxu0 0.0
    %461 = vmatprep.subr.mxu0 0.0
    %462 = vmatpush1.xpose.msra.mxu0 0.0
    %463 = vmatprep.subr.mxu0 0.0
    %464 = vmatpush1.xpose.msra.mxu0 0.0
    %465 = vmatprep.subr.mxu0 0.0
    %466 = vmatpush1.xpose.msra.mxu0 0.0
    %467 = vmatprep.subr.mxu0 0.0
    %468 = vmatpush1.xpose.msra.mxu0 0.0
    %469 = vmatprep.subr.mxu0 0.0
    %470 = vmatpush1.xpose.msra.mxu0 0.0
    %471 = vmatprep.subr.mxu0 0.0
    %472 = vmatpush1.xpose.msra.mxu0 0.0
    %473 = vmatprep.subr.mxu0 0.0
    %474 = vmatpush1.xpose.msra.mxu0 0.0
    %475 = vmatprep.subr.mxu0 0.0
    %476 = vmatpush1.xpose.msra.mxu0 0.0
    %477 = vmatprep.subr.mxu0 0.0
    %478 = vmatpush1.xpose.msra.mxu0 0.0
    %479 = vmatprep.subr.mxu0 0.0
    %480 = vmatpush1.xpose.msra.mxu0 0.0
    %481 = vmatprep.subr.mxu0 0.0
    %482 = vmatpush1.xpose.msra.mxu0 0.0
    %483 = vmatprep.subr.mxu0 0.0
    %484 = vmatpush1.xpose.msra.mxu0 0.0
    %485 = vmatprep.subr.mxu0 0.0
    %486 = vmatpush1.xpose.msra.mxu0 0.0
    %487 = vmatprep.subr.mxu0 0.0
    %488 = vmatpush1.xpose.msra.mxu0 0.0
    %489 = vmatprep.subr.mxu0 0.0
    %490 = vmatpush1.xpose.msra.mxu0 0.0
    %491 = vmatprep.subr.mxu0 0.0
    %492 = vmatpush1.xpose.msra.mxu0 0.0
    %493 = vmatprep.subr.mxu0 0.0
    %494 = vmatpush1.xpose.msra.mxu0 0.0
    %495 = vmatprep.subr.mxu0 0.0
    %496 = vmatpush1.xpose.msra.mxu0 0.0
    %497 = vmatprep.subr.mxu0 0.0
    %498 = vmatpush1.xpose.msra.mxu0 0.0
    %499 = vmatprep.subr.mxu0 0.0
    %500 = vmatpush1.xpose.msra.mxu0 0.0
    %501 = vmatprep.subr.mxu0 0.0
    %502 = vmatpush1.xpose.msra.mxu0 0.0
    %503 = vmatprep.subr.mxu0 0.0
    %504 = vmatpush1.xpose.msra.mxu0 0.0
    %505 = vmatprep.subr.mxu0 0.0
    %506 = vmatpush1.xpose.msra.mxu0 0.0
    %507 = vmatprep.subr.mxu0 0.0
    %508 = vmatpush1.xpose.msra.mxu0 0.0
    %509 = vmatprep.subr.mxu0 0.0
    %510 = vmatpush1.xpose.msra.mxu0 0.0
    %511 = vmatprep.subr.mxu0 0.0
    %512 = vmatpush1.xpose.msra.mxu0 0.0
    %513 = vmatprep.mubr.f32.mxu0 0.0
    %514 = vmatmul.mubr.f32.gmra.mrb[0].mxu0 %v445
    %v515 = vpop.f32.mrb[0].mxu0
    %v516 = vadd.f32 %v90, %v515
    %v517 = vpop.f32.mrb[0].mxu0
    %518 = vdwg.mxu0
    %v519 = vmul.f32 %v288, 0.17677669
    %v520 = vmul.f32 %v364, 0.17677669
    %v521 = vmul.f32 %v440, 0.17677669
    %v522 = vmul.f32 %v516, 0.17677669
    %v523 = vsel %vm216, %v519, -inf
    %524 = vmax.xlane.f32.xlu0 %v523
    %v525 = vpop.xlane.xlu0 %524
    %v526 = vsel %vm216, %v520, -inf
    %527 = vmax.xlane.f32.xlu0 %v526
    %v528 = vpop.xlane.xlu0 %527
    %v529 = vsel %vm216, %v521, -inf
    %530 = vmax.xlane.f32.xlu0 %v529
    %v531 = vpop.xlane.xlu0 %530
    %v532 = vsel %vm216, %v522, -inf
    %533 = vmax.xlane.f32.xlu0 %v532
    %v534 = vpop.xlane.xlu0 %533
    %v535 = vsub.f32 %v519, %v525
    %v536 = vsub.f32 %v520, %v528
    %v537 = vsub.f32 %v521, %v531
    %v538 = vsub.f32 %v522, %v534
    %v539 = vmul.f32 %v535, 1.442695
    %v540 = vpow.pop %v539
    %v541 = vmul.f32 %v536, 1.442695
    %v542 = vpow.pop %v541
    %v543 = vmul.f32 %v537, 1.442695
    %v544 = vpow.pop %v543
    %v545 = vmul.f32 %v538, 1.442695
    %v546 = vpow.pop %v545
    %v547 = vsel %vm216, %v540, 0.0
    %548 = vadd.xlane.f32.xlu0 %v547
    %v549 = vpop.xlane.xlu0 %548
    %v550 = vsel %vm216, %v542, 0.0
    %551 = vadd.xlane.f32.xlu0 %v550
    %v552 = vpop.xlane.xlu0 %551
    %v553 = vsel %vm216, %v544, 0.0
    %554 = vadd.xlane.f32.xlu0 %v553
    %v555 = vpop.xlane.xlu0 %554
    %v556 = vsel %vm216, %v546, 0.0
    %557 = vadd.xlane.f32.xlu0 %v556
    %v558 = vpop.xlane.xlu0 %557
    %v559 = vrcp.pop %v549
    %v560 = vrcp.pop %v552
    %v561 = vrcp.pop %v555
    %v562 = vrcp.pop %v558
    %v563 = vmul.f32 %v540, %v559
    %v564 = vmul.f32 %v542, %v560
    %v565 = vmul.f32 %v544, %v561
    %v566 = vmul.f32 %v546, %v562
    %567 = vrot.lane.b32.xlu0 %v199, 64
    %v568 = vpop.permute.xlu0 %567
    %v571 = vsel %vm216, %v563, 0
    %573 = vmatprep.subr.mxu0 0.0
    %574 = vmatpush1.msra.mxu0 %v568
    %575 = vmatprep.subr.mxu0 0.0
    %576 = vmatpush1.msra.mxu0 0.0
    %577 = vmatprep.subr.mxu0 0.0
    %578 = vmatpush1.msra.mxu0 0.0
    %579 = vmatprep.subr.mxu0 0.0
    %580 = vmatpush1.msra.mxu0 0.0
    %581 = vmatprep.subr.mxu0 0.0
    %582 = vmatpush1.msra.mxu0 0.0
    %583 = vmatprep.subr.mxu0 0.0
    %584 = vmatpush1.msra.mxu0 0.0
    %585 = vmatprep.subr.mxu0 0.0
    %586 = vmatpush1.msra.mxu0 0.0
    %587 = vmatprep.subr.mxu0 0.0
    %588 = vmatpush1.msra.mxu0 0.0
    %589 = vmatprep.subr.mxu0 0.0
    %590 = vmatpush1.msra.mxu0 0.0
    %591 = vmatprep.subr.mxu0 0.0
    %592 = vmatpush1.msra.mxu0 0.0
    %593 = vmatprep.subr.mxu0 0.0
    %594 = vmatpush1.msra.mxu0 0.0
    %595 = vmatprep.subr.mxu0 0.0
    %596 = vmatpush1.msra.mxu0 0.0
    %597 = vmatprep.subr.mxu0 0.0
    %598 = vmatpush1.msra.mxu0 0.0
    %599 = vmatprep.subr.mxu0 0.0
    %600 = vmatpush1.msra.mxu0 0.0
    %601 = vmatprep.subr.mxu0 0.0
    %602 = vmatpush1.msra.mxu0 0.0
    %603 = vmatprep.subr.mxu0 0.0
    %604 = vmatpush1.msra.mxu0 0.0
    %605 = vmatprep.subr.mxu0 0.0
    %606 = vmatpush1.msra.mxu0 0.0
    %607 = vmatprep.subr.mxu0 0.0
    %608 = vmatpush1.msra.mxu0 0.0
    %609 = vmatprep.subr.mxu0 0.0
    %610 = vmatpush1.msra.mxu0 0.0
    %611 = vmatprep.subr.mxu0 0.0
    %612 = vmatpush1.msra.mxu0 0.0
    %613 = vmatprep.subr.mxu0 0.0
    %614 = vmatpush1.msra.mxu0 0.0
    %615 = vmatprep.subr.mxu0 0.0
    %616 = vmatpush1.msra.mxu0 0.0
    %617 = vmatprep.subr.mxu0 0.0
    %618 = vmatpush1.msra.mxu0 0.0
    %619 = vmatprep.subr.mxu0 0.0
    %620 = vmatpush1.msra.mxu0 0.0
    %621 = vmatprep.subr.mxu0 0.0
    %622 = vmatpush1.msra.mxu0 0.0
    %623 = vmatprep.subr.mxu0 0.0
    %624 = vmatpush1.msra.mxu0 0.0
    %625 = vmatprep.subr.mxu0 0.0
    %626 = vmatpush1.msra.mxu0 0.0
    %627 = vmatprep.subr.mxu0 0.0
    %628 = vmatpush1.msra.mxu0 0.0
    %629 = vmatprep.subr.mxu0 0.0
    %630 = vmatpush1.msra.mxu0 0.0
    %631 = vmatprep.subr.mxu0 0.0
    %632 = vmatpush1.msra.mxu0 0.0
    %633 = vmatprep.subr.mxu0 0.0
    %634 = vmatpush1.msra.mxu0 0.0
    %635 = vmatprep.subr.mxu0 0.0
    %636 = vmatpush1.msra.mxu0 0.0
    %637 = vmatprep.mubr.f32.mxu0 0.0
    %638 = vmatmul.mubr.f32.gmra.mrb[0].mxu0 %v571
    %v639 = vpop.f32.mrb[0].mxu0
    %v640 = vadd.f32 0.0, %v639
    %v641 = vpop.f32.mrb[0].mxu0
    %642 = vdwg.mxu0
    %643 = vrot.lane.b32.xlu0 %v209, 64
    %v644 = vpop.permute.xlu0 %643
    %v647 = vsel %vm216, %v564, 0
    %649 = vmatprep.subr.mxu0 0.0
    %650 = vmatpush1.msra.mxu0 %v644
    %651 = vmatprep.subr.mxu0 0.0
    %652 = vmatpush1.msra.mxu0 0.0
    %653 = vmatprep.subr.mxu0 0.0
    %654 = vmatpush1.msra.mxu0 0.0
    %655 = vmatprep.subr.mxu0 0.0
    %656 = vmatpush1.msra.mxu0 0.0
    %657 = vmatprep.subr.mxu0 0.0
    %658 = vmatpush1.msra.mxu0 0.0
    %659 = vmatprep.subr.mxu0 0.0
    %660 = vmatpush1.msra.mxu0 0.0
    %661 = vmatprep.subr.mxu0 0.0
    %662 = vmatpush1.msra.mxu0 0.0
    %663 = vmatprep.subr.mxu0 0.0
    %664 = vmatpush1.msra.mxu0 0.0
    %665 = vmatprep.subr.mxu0 0.0
    %666 = vmatpush1.msra.mxu0 0.0
    %667 = vmatprep.subr.mxu0 0.0
    %668 = vmatpush1.msra.mxu0 0.0
    %669 = vmatprep.subr.mxu0 0.0
    %670 = vmatpush1.msra.mxu0 0.0
    %671 = vmatprep.subr.mxu0 0.0
    %672 = vmatpush1.msra.mxu0 0.0
    %673 = vmatprep.subr.mxu0 0.0
    %674 = vmatpush1.msra.mxu0 0.0
    %675 = vmatprep.subr.mxu0 0.0
    %676 = vmatpush1.msra.mxu0 0.0
    %677 = vmatprep.subr.mxu0 0.0
    %678 = vmatpush1.msra.mxu0 0.0
    %679 = vmatprep.subr.mxu0 0.0
    %680 = vmatpush1.msra.mxu0 0.0
    %681 = vmatprep.subr.mxu0 0.0
    %682 = vmatpush1.msra.mxu0 0.0
    %683 = vmatprep.subr.mxu0 0.0
    %684 = vmatpush1.msra.mxu0 0.0
    %685 = vmatprep.subr.mxu0 0.0
    %686 = vmatpush1.msra.mxu0 0.0
    %687 = vmatprep.subr.mxu0 0.0
    %688 = vmatpush1.msra.mxu0 0.0
    %689 = vmatprep.subr.mxu0 0.0
    %690 = vmatpush1.msra.mxu0 0.0
    %691 = vmatprep.subr.mxu0 0.0
    %692 = vmatpush1.msra.mxu0 0.0
    %693 = vmatprep.subr.mxu0 0.0
    %694 = vmatpush1.msra.mxu0 0.0
    %695 = vmatprep.subr.mxu0 0.0
    %696 = vmatpush1.msra.mxu0 0.0
    %697 = vmatprep.subr.mxu0 0.0
    %698 = vmatpush1.msra.mxu0 0.0
    %699 = vmatprep.subr.mxu0 0.0
    %700 = vmatpush1.msra.mxu0 0.0
    %701 = vmatprep.subr.mxu0 0.0
    %702 = vmatpush1.msra.mxu0 0.0
    %703 = vmatprep.subr.mxu0 0.0
    %704 = vmatpush1.msra.mxu0 0.0
    %705 = vmatprep.subr.mxu0 0.0
    %706 = vmatpush1.msra.mxu0 0.0
    %707 = vmatprep.subr.mxu0 0.0
    %708 = vmatpush1.msra.mxu0 0.0
    %709 = vmatprep.subr.mxu0 0.0
    %710 = vmatpush1.msra.mxu0 0.0
    %711 = vmatprep.subr.mxu0 0.0
    %712 = vmatpush1.msra.mxu0 0.0
    %713 = vmatprep.mubr.f32.mxu0 0.0
    %714 = vmatmul.mubr.f32.gmra.mrb[0].mxu0 %v647
    %v715 = vpop.f32.mrb[0].mxu0
    %v716 = vadd.f32 0.0, %v715
    %v717 = vpop.f32.mrb[0].mxu0
    %718 = vdwg.mxu0
    %719 = vrot.lane.b32.xlu0 %v211, 64
    %v720 = vpop.permute.xlu0 %719
    %v723 = vsel %vm216, %v565, 0
    %725 = vmatprep.subr.mxu0 0.0
    %726 = vmatpush1.msra.mxu0 %v720
    %727 = vmatprep.subr.mxu0 0.0
    %728 = vmatpush1.msra.mxu0 0.0
    %729 = vmatprep.subr.mxu0 0.0
    %730 = vmatpush1.msra.mxu0 0.0
    %731 = vmatprep.subr.mxu0 0.0
    %732 = vmatpush1.msra.mxu0 0.0
    %733 = vmatprep.subr.mxu0 0.0
    %734 = vmatpush1.msra.mxu0 0.0
    %735 = vmatprep.subr.mxu0 0.0
    %736 = vmatpush1.msra.mxu0 0.0
    %737 = vmatprep.subr.mxu0 0.0
    %738 = vmatpush1.msra.mxu0 0.0
    %739 = vmatprep.subr.mxu0 0.0
    %740 = vmatpush1.msra.mxu0 0.0
    %741 = vmatprep.subr.mxu0 0.0
    %742 = vmatpush1.msra.mxu0 0.0
    %743 = vmatprep.subr.mxu0 0.0
    %744 = vmatpush1.msra.mxu0 0.0
    %745 = vmatprep.subr.mxu0 0.0
    %746 = vmatpush1.msra.mxu0 0.0
    %747 = vmatprep.subr.mxu0 0.0
    %748 = vmatpush1.msra.mxu0 0.0
    %749 = vmatprep.subr.mxu0 0.0
    %750 = vmatpush1.msra.mxu0 0.0
    %751 = vmatprep.subr.mxu0 0.0
    %752 = vmatpush1.msra.mxu0 0.0
    %753 = vmatprep.subr.mxu0 0.0
    %754 = vmatpush1.msra.mxu0 0.0
    %755 = vmatprep.subr.mxu0 0.0
    %756 = vmatpush1.msra.mxu0 0.0
    %757 = vmatprep.subr.mxu0 0.0
    %758 = vmatpush1.msra.mxu0 0.0
    %759 = vmatprep.subr.mxu0 0.0
    %760 = vmatpush1.msra.mxu0 0.0
    %761 = vmatprep.subr.mxu0 0.0
    %762 = vmatpush1.msra.mxu0 0.0
    %763 = vmatprep.subr.mxu0 0.0
    %764 = vmatpush1.msra.mxu0 0.0
    %765 = vmatprep.subr.mxu0 0.0
    %766 = vmatpush1.msra.mxu0 0.0
    %767 = vmatprep.subr.mxu0 0.0
    %768 = vmatpush1.msra.mxu0 0.0
    %769 = vmatprep.subr.mxu0 0.0
    %770 = vmatpush1.msra.mxu0 0.0
    %771 = vmatprep.subr.mxu0 0.0
    %772 = vmatpush1.msra.mxu0 0.0
    %773 = vmatprep.subr.mxu0 0.0
    %774 = vmatpush1.msra.mxu0 0.0
    %775 = vmatprep.subr.mxu0 0.0
    %776 = vmatpush1.msra.mxu0 0.0
    %777 = vmatprep.subr.mxu0 0.0
    %778 = vmatpush1.msra.mxu0 0.0
    %779 = vmatprep.subr.mxu0 0.0
    %780 = vmatpush1.msra.mxu0 0.0
    %781 = vmatprep.subr.mxu0 0.0
    %782 = vmatpush1.msra.mxu0 0.0
    %783 = vmatprep.subr.mxu0 0.0
    %784 = vmatpush1.msra.mxu0 0.0
    %785 = vmatprep.subr.mxu0 0.0
    %786 = vmatpush1.msra.mxu0 0.0
    %787 = vmatprep.subr.mxu0 0.0
    %788 = vmatpush1.msra.mxu0 0.0
    %789 = vmatprep.mubr.f32.mxu0 0.0
    %790 = vmatmul.mubr.f32.gmra.mrb[0].mxu0 %v723
    %v791 = vpop.f32.mrb[0].mxu0
    %v792 = vadd.f32 0.0, %v791
    %v793 = vpop.f32.mrb[0].mxu0
    %794 = vdwg.mxu0
    %795 = vrot.lane.b32.xlu0 %v213, 64
    %v796 = vpop.permute.xlu0 %795
    %v799 = vsel %vm216, %v566, 0
    %801 = vmatprep.subr.mxu0 0.0
    %802 = vmatpush1.msra.mxu0 %v796
    %803 = vmatprep.subr.mxu0 0.0
    %804 = vmatpush1.msra.mxu0 0.0
    %805 = vmatprep.subr.mxu0 0.0
    %806 = vmatpush1.msra.mxu0 0.0
    %807 = vmatprep.subr.mxu0 0.0
    %808 = vmatpush1.msra.mxu0 0.0
    %809 = vmatprep.subr.mxu0 0.0
    %810 = vmatpush1.msra.mxu0 0.0
    %811 = vmatprep.subr.mxu0 0.0
    %812 = vmatpush1.msra.mxu0 0.0
    %813 = vmatprep.subr.mxu0 0.0
    %814 = vmatpush1.msra.mxu0 0.0
    %815 = vmatprep.subr.mxu0 0.0
    %816 = vmatpush1.msra.mxu0 0.0
    %817 = vmatprep.subr.mxu0 0.0
    %818 = vmatpush1.msra.mxu0 0.0
    %819 = vmatprep.subr.mxu0 0.0
    %820 = vmatpush1.msra.mxu0 0.0
    %821 = vmatprep.subr.mxu0 0.0
    %822 = vmatpush1.msra.mxu0 0.0
    %823 = vmatprep.subr.mxu0 0.0
    %824 = vmatpush1.msra.mxu0 0.0
    %825 = vmatprep.subr.mxu0 0.0
    %826 = vmatpush1.msra.mxu0 0.0
    %827 = vmatprep.subr.mxu0 0.0
    %828 = vmatpush1.msra.mxu0 0.0
    %829 = vmatprep.subr.mxu0 0.0
    %830 = vmatpush1.msra.mxu0 0.0
    %831 = vmatprep.subr.mxu0 0.0
    %832 = vmatpush1.msra.mxu0 0.0
    %833 = vmatprep.subr.mxu0 0.0
    %834 = vmatpush1.msra.mxu0 0.0
    %835 = vmatprep.subr.mxu0 0.0
    %836 = vmatpush1.msra.mxu0 0.0
    %837 = vmatprep.subr.mxu0 0.0
    %838 = vmatpush1.msra.mxu0 0.0
    %839 = vmatprep.subr.mxu0 0.0
    %840 = vmatpush1.msra.mxu0 0.0
    %841 = vmatprep.subr.mxu0 0.0
    %842 = vmatpush1.msra.mxu0 0.0
    %843 = vmatprep.subr.mxu0 0.0
    %844 = vmatpush1.msra.mxu0 0.0
    %845 = vmatprep.subr.mxu0 0.0
    %846 = vmatpush1.msra.mxu0 0.0
    %847 = vmatprep.subr.mxu0 0.0
    %848 = vmatpush1.msra.mxu0 0.0
    %849 = vmatprep.subr.mxu0 0.0
    %850 = vmatpush1.msra.mxu0 0.0
    %851 = vmatprep.subr.mxu0 0.0
    %852 = vmatpush1.msra.mxu0 0.0
    %853 = vmatprep.subr.mxu0 0.0
    %854 = vmatpush1.msra.mxu0 0.0
    %855 = vmatprep.subr.mxu0 0.0
    %856 = vmatpush1.msra.mxu0 0.0
    %857 = vmatprep.subr.mxu0 0.0
    %858 = vmatpush1.msra.mxu0 0.0
    %859 = vmatprep.subr.mxu0 0.0
    %860 = vmatpush1.msra.mxu0 0.0
    %861 = vmatprep.subr.mxu0 0.0
    %862 = vmatpush1.msra.mxu0 0.0
    %863 = vmatprep.subr.mxu0 0.0
    %864 = vmatpush1.msra.mxu0 0.0
    %865 = vmatprep.mubr.f32.mxu0 0.0
    %866 = vmatmul.mubr.f32.gmra.mrb[0].mxu0 %v799
    %v867 = vpop.f32.mrb[0].mxu0
    %v868 = vadd.f32 0.0, %v867
    %v869 = vpop.f32.mrb[0].mxu0
    %870 = vdwg.mxu0
    %872 = vrot.lane.b32.xlu0 %v716, 8
    %v873 = vpop.permute.xlu0 %872
    %876 = vrot.lane.b32.xlu0 %v792, 16
    %v877 = vpop.permute.xlu0 %876
    %880 = vrot.lane.b32.xlu0 %v868, 24
    %v881 = vpop.permute.xlu0 %880
    %v883 = vsel %vm216, %v640, %v873
    %vm884 = vcmask 130048
    %v885 = vsel %vm884, %v883, %v877
    %vm886 = vcmask 195584
    %v887 = vsel %vm886, %v885, %v881
    %889 = vrot.lane.b32.xlu0 %v204, 120
    %v890 = vpop.permute.xlu0 %889
    %891 = vrot.lane.b32.xlu0 %v204, 112
    %v892 = vpop.permute.xlu0 %891
    %893 = vrot.lane.b32.xlu0 %v204, 104
    %v894 = vpop.permute.xlu0 %893
    %895 = vrot.lane.b32.xlu0 %v204, 96
    %v896 = vpop.permute.xlu0 %895
    %v897 = vsel %vm216, %v204, 0
    %v899 = vsel %vm216, %v896, 0
    %901 = vmatprep.subr.mxu0 0.0
    %902 = vmatpush1.xpose.msra.mxu0 %v899
    %903 = vmatprep.subr.mxu0 0.0
    %904 = vmatpush1.xpose.msra.mxu0 0.0
    %905 = vmatprep.subr.mxu0 0.0
    %906 = vmatpush1.xpose.msra.mxu0 0.0
    %907 = vmatprep.subr.mxu0 0.0
    %908 = vmatpush1.xpose.msra.mxu0 0.0
    %909 = vmatprep.subr.mxu0 0.0
    %910 = vmatpush1.xpose.msra.mxu0 0.0
    %911 = vmatprep.subr.mxu0 0.0
    %912 = vmatpush1.xpose.msra.mxu0 0.0
    %913 = vmatprep.subr.mxu0 0.0
    %914 = vmatpush1.xpose.msra.mxu0 0.0
    %915 = vmatprep.subr.mxu0 0.0
    %916 = vmatpush1.xpose.msra.mxu0 0.0
    %917 = vmatprep.subr.mxu0 0.0
    %918 = vmatpush1.xpose.msra.mxu0 0.0
    %919 = vmatprep.subr.mxu0 0.0
    %920 = vmatpush1.xpose.msra.mxu0 0.0
    %921 = vmatprep.subr.mxu0 0.0
    %922 = vmatpush1.xpose.msra.mxu0 0.0
    %923 = vmatprep.subr.mxu0 0.0
    %924 = vmatpush1.xpose.msra.mxu0 0.0
    %925 = vmatprep.subr.mxu0 0.0
    %926 = vmatpush1.xpose.msra.mxu0 0.0
    %927 = vmatprep.subr.mxu0 0.0
    %928 = vmatpush1.xpose.msra.mxu0 0.0
    %929 = vmatprep.subr.mxu0 0.0
    %930 = vmatpush1.xpose.msra.mxu0 0.0
    %931 = vmatprep.subr.mxu0 0.0
    %932 = vmatpush1.xpose.msra.mxu0 0.0
    %933 = vmatprep.subr.mxu0 0.0
    %934 = vmatpush1.xpose.msra.mxu0 0.0
    %935 = vmatprep.subr.mxu0 0.0
    %936 = vmatpush1.xpose.msra.mxu0 0.0
    %937 = vmatprep.subr.mxu0 0.0
    %938 = vmatpush1.xpose.msra.mxu0 0.0
    %939 = vmatprep.subr.mxu0 0.0
    %940 = vmatpush1.xpose.msra.mxu0 0.0
    %941 = vmatprep.subr.mxu0 0.0
    %942 = vmatpush1.xpose.msra.mxu0 0.0
    %943 = vmatprep.subr.mxu0 0.0
    %944 = vmatpush1.xpose.msra.mxu0 0.0
    %945 = vmatprep.subr.mxu0 0.0
    %946 = vmatpush1.xpose.msra.mxu0 0.0
    %947 = vmatprep.subr.mxu0 0.0
    %948 = vmatpush1.xpose.msra.mxu0 0.0
    %949 = vmatprep.subr.mxu0 0.0
    %950 = vmatpush1.xpose.msra.mxu0 0.0
    %951 = vmatprep.subr.mxu0 0.0
    %952 = vmatpush1.xpose.msra.mxu0 0.0
    %953 = vmatprep.subr.mxu0 0.0
    %954 = vmatpush1.xpose.msra.mxu0 0.0
    %955 = vmatprep.subr.mxu0 0.0
    %956 = vmatpush1.xpose.msra.mxu0 0.0
    %957 = vmatprep.subr.mxu0 0.0
    %958 = vmatpush1.xpose.msra.mxu0 0.0
    %959 = vmatprep.subr.mxu0 0.0
    %960 = vmatpush1.xpose.msra.mxu0 0.0
    %961 = vmatprep.subr.mxu0 0.0
    %962 = vmatpush1.xpose.msra.mxu0 0.0
    %963 = vmatprep.subr.mxu0 0.0
    %964 = vmatpush1.xpose.msra.mxu0 0.0
    %965 = vmatprep.mubr.f32.mxu0 0.0
    %966 = vmatmul.mubr.f32.gmra.mrb[0].mxu0 %v897
    %v967 = vpop.f32.mrb[0].mxu0
    %v968 = vadd.f32 %v94, %v967
    %v969 = vpop.f32.mrb[0].mxu0
    %970 = vdwg.mxu0
    %971 = vrot.lane.b32.xlu0 %v890, 96
    %v972 = vpop.permute.xlu0 %971
    %v973 = vsel %vm216, %v890, 0
    %v975 = vsel %vm216, %v972, 0
    %977 = vmatprep.subr.mxu0 0.0
    %978 = vmatpush1.xpose.msra.mxu0 %v975
    %979 = vmatprep.subr.mxu0 0.0
    %980 = vmatpush1.xpose.msra.mxu0 0.0
    %981 = vmatprep.subr.mxu0 0.0
    %982 = vmatpush1.xpose.msra.mxu0 0.0
    %983 = vmatprep.subr.mxu0 0.0
    %984 = vmatpush1.xpose.msra.mxu0 0.0
    %985 = vmatprep.subr.mxu0 0.0
    %986 = vmatpush1.xpose.msra.mxu0 0.0
    %987 = vmatprep.subr.mxu0 0.0
    %988 = vmatpush1.xpose.msra.mxu0 0.0
    %989 = vmatprep.subr.mxu0 0.0
    %990 = vmatpush1.xpose.msra.mxu0 0.0
    %991 = vmatprep.subr.mxu0 0.0
    %992 = vmatpush1.xpose.msra.mxu0 0.0
    %993 = vmatprep.subr.mxu0 0.0
    %994 = vmatpush1.xpose.msra.mxu0 0.0
    %995 = vmatprep.subr.mxu0 0.0
    %996 = vmatpush1.xpose.msra.mxu0 0.0
    %997 = vmatprep.subr.mxu0 0.0
    %998 = vmatpush1.xpose.msra.mxu0 0.0
    %999 = vmatprep.subr.mxu0 0.0
    %1000 = vmatpush1.xpose.msra.mxu0 0.0
    %1001 = vmatprep.subr.mxu0 0.0
    %1002 = vmatpush1.xpose.msra.mxu0 0.0
    %1003 = vmatprep.subr.mxu0 0.0
    %1004 = vmatpush1.xpose.msra.mxu0 0.0
    %1005 = vmatprep.subr.mxu0 0.0
    %1006 = vmatpush1.xpose.msra.mxu0 0.0
    %1007 = vmatprep.subr.mxu0 0.0
    %1008 = vmatpush1.xpose.msra.mxu0 0.0
    %1009 = vmatprep.subr.mxu0 0.0
    %1010 = vmatpush1.xpose.msra.mxu0 0.0
    %1011 = vmatprep.subr.mxu0 0.0
    %1012 = vmatpush1.xpose.msra.mxu0 0.0
    %1013 = vmatprep.subr.mxu0 0.0
    %1014 = vmatpush1.xpose.msra.mxu0 0.0
    %1015 = vmatprep.subr.mxu0 0.0
    %1016 = vmatpush1.xpose.msra.mxu0 0.0
    %1017 = vmatprep.subr.mxu0 0.0
    %1018 = vmatpush1.xpose.msra.mxu0 0.0
    %1019 = vmatprep.subr.mxu0 0.0
    %1020 = vmatpush1.xpose.msra.mxu0 0.0
    %1021 = vmatprep.subr.mxu0 0.0
    %1022 = vmatpush1.xpose.msra.mxu0 0.0
    %1023 = vmatprep.subr.mxu0 0.0
    %1024 = vmatpush1.xpose.msra.mxu0 0.0
    %1025 = vmatprep.subr.mxu0 0.0
    %1026 = vmatpush1.xpose.msra.mxu0 0.0
    %1027 = vmatprep.subr.mxu0 0.0
    %1028 = vmatpush1.xpose.msra.mxu0 0.0
    %1029 = vmatprep.subr.mxu0 0.0
    %1030 = vmatpush1.xpose.msra.mxu0 0.0
    %1031 = vmatprep.subr.mxu0 0.0
    %1032 = vmatpush1.xpose.msra.mxu0 0.0
    %1033 = vmatprep.subr.mxu0 0.0
    %1034 = vmatpush1.xpose.msra.mxu0 0.0
    %1035 = vmatprep.subr.mxu0 0.0
    %1036 = vmatpush1.xpose.msra.mxu0 0.0
    %1037 = vmatprep.subr.mxu0 0.0
    %1038 = vmatpush1.xpose.msra.mxu0 0.0
    %1039 = vmatprep.subr.mxu0 0.0
    %1040 = vmatpush1.xpose.msra.mxu0 0.0
    %1041 = vmatprep.mubr.f32.mxu0 0.0
    %1042 = vmatmul.mubr.f32.gmra.mrb[0].mxu0 %v973
    %v1043 = vpop.f32.mrb[0].mxu0
    %v1044 = vadd.f32 %v94, %v1043
    %v1045 = vpop.f32.mrb[0].mxu0
    %1046 = vdwg.mxu0
    %1047 = vrot.lane.b32.xlu0 %v892, 96
    %v1048 = vpop.permute.xlu0 %1047
    %v1049 = vsel %vm216, %v892, 0
    %v1051 = vsel %vm216, %v1048, 0
    %1053 = vmatprep.subr.mxu0 0.0
    %1054 = vmatpush1.xpose.msra.mxu0 %v1051
    %1055 = vmatprep.subr.mxu0 0.0
    %1056 = vmatpush1.xpose.msra.mxu0 0.0
    %1057 = vmatprep.subr.mxu0 0.0
    %1058 = vmatpush1.xpose.msra.mxu0 0.0
    %1059 = vmatprep.subr.mxu0 0.0
    %1060 = vmatpush1.xpose.msra.mxu0 0.0
    %1061 = vmatprep.subr.mxu0 0.0
    %1062 = vmatpush1.xpose.msra.mxu0 0.0
    %1063 = vmatprep.subr.mxu0 0.0
    %1064 = vmatpush1.xpose.msra.mxu0 0.0
    %1065 = vmatprep.subr.mxu0 0.0
    %1066 = vmatpush1.xpose.msra.mxu0 0.0
    %1067 = vmatprep.subr.mxu0 0.0
    %1068 = vmatpush1.xpose.msra.mxu0 0.0
    %1069 = vmatprep.subr.mxu0 0.0
    %1070 = vmatpush1.xpose.msra.mxu0 0.0
    %1071 = vmatprep.subr.mxu0 0.0
    %1072 = vmatpush1.xpose.msra.mxu0 0.0
    %1073 = vmatprep.subr.mxu0 0.0
    %1074 = vmatpush1.xpose.msra.mxu0 0.0
    %1075 = vmatprep.subr.mxu0 0.0
    %1076 = vmatpush1.xpose.msra.mxu0 0.0
    %1077 = vmatprep.subr.mxu0 0.0
    %1078 = vmatpush1.xpose.msra.mxu0 0.0
    %1079 = vmatprep.subr.mxu0 0.0
    %1080 = vmatpush1.xpose.msra.mxu0 0.0
    %1081 = vmatprep.subr.mxu0 0.0
    %1082 = vmatpush1.xpose.msra.mxu0 0.0
    %1083 = vmatprep.subr.mxu0 0.0
    %1084 = vmatpush1.xpose.msra.mxu0 0.0
    %1085 = vmatprep.subr.mxu0 0.0
    %1086 = vmatpush1.xpose.msra.mxu0 0.0
    %1087 = vmatprep.subr.mxu0 0.0
    %1088 = vmatpush1.xpose.msra.mxu0 0.0
    %1089 = vmatprep.subr.mxu0 0.0
    %1090 = vmatpush1.xpose.msra.mxu0 0.0
    %1091 = vmatprep.subr.mxu0 0.0
    %1092 = vmatpush1.xpose.msra.mxu0 0.0
    %1093 = vmatprep.subr.mxu0 0.0
    %1094 = vmatpush1.xpose.msra.mxu0 0.0
    %1095 = vmatprep.subr.mxu0 0.0
    %1096 = vmatpush1.xpose.msra.mxu0 0.0
    %1097 = vmatprep.subr.mxu0 0.0
    %1098 = vmatpush1.xpose.msra.mxu0 0.0
    %1099 = vmatprep.subr.mxu0 0.0
    %1100 = vmatpush1.xpose.msra.mxu0 0.0
    %1101 = vmatprep.subr.mxu0 0.0
    %1102 = vmatpush1.xpose.msra.mxu0 0.0
    %1103 = vmatprep.subr.mxu0 0.0
    %1104 = vmatpush1.xpose.msra.mxu0 0.0
    %1105 = vmatprep.subr.mxu0 0.0
    %1106 = vmatpush1.xpose.msra.mxu0 0.0
    %1107 = vmatprep.subr.mxu0 0.0
    %1108 = vmatpush1.xpose.msra.mxu0 0.0
    %1109 = vmatprep.subr.mxu0 0.0
    %1110 = vmatpush1.xpose.msra.mxu0 0.0
    %1111 = vmatprep.subr.mxu0 0.0
    %1112 = vmatpush1.xpose.msra.mxu0 0.0
    %1113 = vmatprep.subr.mxu0 0.0
    %1114 = vmatpush1.xpose.msra.mxu0 0.0
    %1115 = vmatprep.subr.mxu0 0.0
    %1116 = vmatpush1.xpose.msra.mxu0 0.0
    %1117 = vmatprep.mubr.f32.mxu0 0.0
    %1118 = vmatmul.mubr.f32.gmra.mrb[0].mxu0 %v1049
    %v1119 = vpop.f32.mrb[0].mxu0
    %v1120 = vadd.f32 %v94, %v1119
    %v1121 = vpop.f32.mrb[0].mxu0
    %1122 = vdwg.mxu0
    %1123 = vrot.lane.b32.xlu0 %v894, 96
    %v1124 = vpop.permute.xlu0 %1123
    %v1125 = vsel %vm216, %v894, 0
    %v1127 = vsel %vm216, %v1124, 0
    %1129 = vmatprep.subr.mxu0 0.0
    %1130 = vmatpush1.xpose.msra.mxu0 %v1127
    %1131 = vmatprep.subr.mxu0 0.0
    %1132 = vmatpush1.xpose.msra.mxu0 0.0
    %1133 = vmatprep.subr.mxu0 0.0
    %1134 = vmatpush1.xpose.msra.mxu0 0.0
    %1135 = vmatprep.subr.mxu0 0.0
    %1136 = vmatpush1.xpose.msra.mxu0 0.0
    %1137 = vmatprep.subr.mxu0 0.0
    %1138 = vmatpush1.xpose.msra.mxu0 0.0
    %1139 = vmatprep.subr.mxu0 0.0
    %1140 = vmatpush1.xpose.msra.mxu0 0.0
    %1141 = vmatprep.subr.mxu0 0.0
    %1142 = vmatpush1.xpose.msra.mxu0 0.0
    %1143 = vmatprep.subr.mxu0 0.0
    %1144 = vmatpush1.xpose.msra.mxu0 0.0
    %1145 = vmatprep.subr.mxu0 0.0
    %1146 = vmatpush1.xpose.msra.mxu0 0.0
    %1147 = vmatprep.subr.mxu0 0.0
    %1148 = vmatpush1.xpose.msra.mxu0 0.0
    %1149 = vmatprep.subr.mxu0 0.0
    %1150 = vmatpush1.xpose.msra.mxu0 0.0
    %1151 = vmatprep.subr.mxu0 0.0
    %1152 = vmatpush1.xpose.msra.mxu0 0.0
    %1153 = vmatprep.subr.mxu0 0.0
    %1154 = vmatpush1.xpose.msra.mxu0 0.0
    %1155 = vmatprep.subr.mxu0 0.0
    %1156 = vmatpush1.xpose.msra.mxu0 0.0
    %1157 = vmatprep.subr.mxu0 0.0
    %1158 = vmatpush1.xpose.msra.mxu0 0.0
    %1159 = vmatprep.subr.mxu0 0.0
    %1160 = vmatpush1.xpose.msra.mxu0 0.0
    %1161 = vmatprep.subr.mxu0 0.0
    %1162 = vmatpush1.xpose.msra.mxu0 0.0
    %1163 = vmatprep.subr.mxu0 0.0
    %1164 = vmatpush1.xpose.msra.mxu0 0.0
    %1165 = vmatprep.subr.mxu0 0.0
    %1166 = vmatpush1.xpose.msra.mxu0 0.0
    %1167 = vmatprep.subr.mxu0 0.0
    %1168 = vmatpush1.xpose.msra.mxu0 0.0
    %1169 = vmatprep.subr.mxu0 0.0
    %1170 = vmatpush1.xpose.msra.mxu0 0.0
    %1171 = vmatprep.subr.mxu0 0.0
    %1172 = vmatpush1.xpose.msra.mxu0 0.0
    %1173 = vmatprep.subr.mxu0 0.0
    %1174 = vmatpush1.xpose.msra.mxu0 0.0
    %1175 = vmatprep.subr.mxu0 0.0
    %1176 = vmatpush1.xpose.msra.mxu0 0.0
    %1177 = vmatprep.subr.mxu0 0.0
    %1178 = vmatpush1.xpose.msra.mxu0 0.0
    %1179 = vmatprep.subr.mxu0 0.0
    %1180 = vmatpush1.xpose.msra.mxu0 0.0
    %1181 = vmatprep.subr.mxu0 0.0
    %1182 = vmatpush1.xpose.msra.mxu0 0.0
    %1183 = vmatprep.subr.mxu0 0.0
    %1184 = vmatpush1.xpose.msra.mxu0 0.0
    %1185 = vmatprep.subr.mxu0 0.0
    %1186 = vmatpush1.xpose.msra.mxu0 0.0
    %1187 = vmatprep.subr.mxu0 0.0
    %1188 = vmatpush1.xpose.msra.mxu0 0.0
    %1189 = vmatprep.subr.mxu0 0.0
    %1190 = vmatpush1.xpose.msra.mxu0 0.0
    %1191 = vmatprep.subr.mxu0 0.0
    %1192 = vmatpush1.xpose.msra.mxu0 0.0
    %1193 = vmatprep.mubr.f32.mxu0 0.0
    %1194 = vmatmul.mubr.f32.gmra.mrb[0].mxu0 %v1125
    %v1195 = vpop.f32.mrb[0].mxu0
    %v1196 = vadd.f32 %v94, %v1195
    %v1197 = vpop.f32.mrb[0].mxu0
    %1198 = vdwg.mxu0
    %v1199 = vmul.f32 %v968, 0.17677669
    %v1200 = vmul.f32 %v1044, 0.17677669
    %v1201 = vmul.f32 %v1120, 0.17677669
    %v1202 = vmul.f32 %v1196, 0.17677669
    %v1203 = vsel %vm216, %v1199, -inf
    %1204 = vmax.xlane.f32.xlu0 %v1203
    %v1205 = vpop.xlane.xlu0 %1204
    %v1206 = vsel %vm216, %v1200, -inf
    %1207 = vmax.xlane.f32.xlu0 %v1206
    %v1208 = vpop.xlane.xlu0 %1207
    %v1209 = vsel %vm216, %v1201, -inf
    %1210 = vmax.xlane.f32.xlu0 %v1209
    %v1211 = vpop.xlane.xlu0 %1210
    %v1212 = vsel %vm216, %v1202, -inf
    %1213 = vmax.xlane.f32.xlu0 %v1212
    %v1214 = vpop.xlane.xlu0 %1213
    %v1215 = vsub.f32 %v1199, %v1205
    %v1216 = vsub.f32 %v1200, %v1208
    %v1217 = vsub.f32 %v1201, %v1211
    %v1218 = vsub.f32 %v1202, %v1214
    %v1219 = vmul.f32 %v1215, 1.442695
    %v1220 = vpow.pop %v1219
    %v1221 = vmul.f32 %v1216, 1.442695
    %v1222 = vpow.pop %v1221
    %v1223 = vmul.f32 %v1217, 1.442695
    %v1224 = vpow.pop %v1223
    %v1225 = vmul.f32 %v1218, 1.442695
    %v1226 = vpow.pop %v1225
    %v1227 = vsel %vm216, %v1220, 0.0
    %1228 = vadd.xlane.f32.xlu0 %v1227
    %v1229 = vpop.xlane.xlu0 %1228
    %v1230 = vsel %vm216, %v1222, 0.0
    %1231 = vadd.xlane.f32.xlu0 %v1230
    %v1232 = vpop.xlane.xlu0 %1231
    %v1233 = vsel %vm216, %v1224, 0.0
    %1234 = vadd.xlane.f32.xlu0 %v1233
    %v1235 = vpop.xlane.xlu0 %1234
    %v1236 = vsel %vm216, %v1226, 0.0
    %1237 = vadd.xlane.f32.xlu0 %v1236
    %v1238 = vpop.xlane.xlu0 %1237
    %v1239 = vrcp.pop %v1229
    %v1240 = vrcp.pop %v1232
    %v1241 = vrcp.pop %v1235
    %v1242 = vrcp.pop %v1238
    %v1243 = vmul.f32 %v1220, %v1239
    %v1244 = vmul.f32 %v1222, %v1240
    %v1245 = vmul.f32 %v1224, %v1241
    %v1246 = vmul.f32 %v1226, %v1242
    %1247 = vrot.lane.b32.xlu0 %v204, 64
    %v1248 = vpop.permute.xlu0 %1247
    %v1251 = vsel %vm216, %v1243, 0
    %1253 = vmatprep.subr.mxu0 0.0
    %1254 = vmatpush1.msra.mxu0 %v1248
    %1255 = vmatprep.subr.mxu0 0.0
    %1256 = vmatpush1.msra.mxu0 0.0
    %1257 = vmatprep.subr.mxu0 0.0
    %1258 = vmatpush1.msra.mxu0 0.0
    %1259 = vmatprep.subr.mxu0 0.0
    %1260 = vmatpush1.msra.mxu0 0.0
    %1261 = vmatprep.subr.mxu0 0.0
    %1262 = vmatpush1.msra.mxu0 0.0
    %1263 = vmatprep.subr.mxu0 0.0
    %1264 = vmatpush1.msra.mxu0 0.0
    %1265 = vmatprep.subr.mxu0 0.0
    %1266 = vmatpush1.msra.mxu0 0.0
    %1267 = vmatprep.subr.mxu0 0.0
    %1268 = vmatpush1.msra.mxu0 0.0
    %1269 = vmatprep.subr.mxu0 0.0
    %1270 = vmatpush1.msra.mxu0 0.0
    %1271 = vmatprep.subr.mxu0 0.0
    %1272 = vmatpush1.msra.mxu0 0.0
    %1273 = vmatprep.subr.mxu0 0.0
    %1274 = vmatpush1.msra.mxu0 0.0
    %1275 = vmatprep.subr.mxu0 0.0
    %1276 = vmatpush1.msra.mxu0 0.0
    %1277 = vmatprep.subr.mxu0 0.0
    %1278 = vmatpush1.msra.mxu0 0.0
    %1279 = vmatprep.subr.mxu0 0.0
    %1280 = vmatpush1.msra.mxu0 0.0
    %1281 = vmatprep.subr.mxu0 0.0
    %1282 = vmatpush1.msra.mxu0 0.0
    %1283 = vmatprep.subr.mxu0 0.0
    %1284 = vmatpush1.msra.mxu0 0.0
    %1285 = vmatprep.subr.mxu0 0.0
    %1286 = vmatpush1.msra.mxu0 0.0
    %1287 = vmatprep.subr.mxu0 0.0
    %1288 = vmatpush1.msra.mxu0 0.0
    %1289 = vmatprep.subr.mxu0 0.0
    %1290 = vmatpush1.msra.mxu0 0.0
    %1291 = vmatprep.subr.mxu0 0.0
    %1292 = vmatpush1.msra.mxu0 0.0
    %1293 = vmatprep.subr.mxu0 0.0
    %1294 = vmatpush1.msra.mxu0 0.0
    %1295 = vmatprep.subr.mxu0 0.0
    %1296 = vmatpush1.msra.mxu0 0.0
    %1297 = vmatprep.subr.mxu0 0.0
    %1298 = vmatpush1.msra.mxu0 0.0
    %1299 = vmatprep.subr.mxu0 0.0
    %1300 = vmatpush1.msra.mxu0 0.0
    %1301 = vmatprep.subr.mxu0 0.0
    %1302 = vmatpush1.msra.mxu0 0.0
    %1303 = vmatprep.subr.mxu0 0.0
    %1304 = vmatpush1.msra.mxu0 0.0
    %1305 = vmatprep.subr.mxu0 0.0
    %1306 = vmatpush1.msra.mxu0 0.0
    %1307 = vmatprep.subr.mxu0 0.0
    %1308 = vmatpush1.msra.mxu0 0.0
    %1309 = vmatprep.subr.mxu0 0.0
    %1310 = vmatpush1.msra.mxu0 0.0
    %1311 = vmatprep.subr.mxu0 0.0
    %1312 = vmatpush1.msra.mxu0 0.0
    %1313 = vmatprep.subr.mxu0 0.0
    %1314 = vmatpush1.msra.mxu0 0.0
    %1315 = vmatprep.subr.mxu0 0.0
    %1316 = vmatpush1.msra.mxu0 0.0
    %1317 = vmatprep.mubr.f32.mxu0 0.0
    %1318 = vmatmul.mubr.f32.gmra.mrb[0].mxu0 %v1251
    %v1319 = vpop.f32.mrb[0].mxu0
    %v1320 = vadd.f32 0.0, %v1319
    %v1321 = vpop.f32.mrb[0].mxu0
    %1322 = vdwg.mxu0
    %1323 = vrot.lane.b32.xlu0 %v890, 64
    %v1324 = vpop.permute.xlu0 %1323
    %v1327 = vsel %vm216, %v1244, 0
    %1329 = vmatprep.subr.mxu0 0.0
    %1330 = vmatpush1.msra.mxu0 %v1324
    %1331 = vmatprep.subr.mxu0 0.0
    %1332 = vmatpush1.msra.mxu0 0.0
    %1333 = vmatprep.subr.mxu0 0.0
    %1334 = vmatpush1.msra.mxu0 0.0
    %1335 = vmatprep.subr.mxu0 0.0
    %1336 = vmatpush1.msra.mxu0 0.0
    %1337 = vmatprep.subr.mxu0 0.0
    %1338 = vmatpush1.msra.mxu0 0.0
    %1339 = vmatprep.subr.mxu0 0.0
    %1340 = vmatpush1.msra.mxu0 0.0
    %1341 = vmatprep.subr.mxu0 0.0
    %1342 = vmatpush1.msra.mxu0 0.0
    %1343 = vmatprep.subr.mxu0 0.0
    %1344 = vmatpush1.msra.mxu0 0.0
    %1345 = vmatprep.subr.mxu0 0.0
    %1346 = vmatpush1.msra.mxu0 0.0
    %1347 = vmatprep.subr.mxu0 0.0
    %1348 = vmatpush1.msra.mxu0 0.0
    %1349 = vmatprep.subr.mxu0 0.0
    %1350 = vmatpush1.msra.mxu0 0.0
    %1351 = vmatprep.subr.mxu0 0.0
    %1352 = vmatpush1.msra.mxu0 0.0
    %1353 = vmatprep.subr.mxu0 0.0
    %1354 = vmatpush1.msra.mxu0 0.0
    %1355 = vmatprep.subr.mxu0 0.0
    %1356 = vmatpush1.msra.mxu0 0.0
    %1357 = vmatprep.subr.mxu0 0.0
    %1358 = vmatpush1.msra.mxu0 0.0
    %1359 = vmatprep.subr.mxu0 0.0
    %1360 = vmatpush1.msra.mxu0 0.0
    %1361 = vmatprep.subr.mxu0 0.0
    %1362 = vmatpush1.msra.mxu0 0.0
    %1363 = vmatprep.subr.mxu0 0.0
    %1364 = vmatpush1.msra.mxu0 0.0
    %1365 = vmatprep.subr.mxu0 0.0
    %1366 = vmatpush1.msra.mxu0 0.0
    %1367 = vmatprep.subr.mxu0 0.0
    %1368 = vmatpush1.msra.mxu0 0.0
    %1369 = vmatprep.subr.mxu0 0.0
    %1370 = vmatpush1.msra.mxu0 0.0
    %1371 = vmatprep.subr.mxu0 0.0
    %1372 = vmatpush1.msra.mxu0 0.0
    %1373 = vmatprep.subr.mxu0 0.0
    %1374 = vmatpush1.msra.mxu0 0.0
    %1375 = vmatprep.subr.mxu0 0.0
    %1376 = vmatpush1.msra.mxu0 0.0
    %1377 = vmatprep.subr.mxu0 0.0
    %1378 = vmatpush1.msra.mxu0 0.0
    %1379 = vmatprep.subr.mxu0 0.0
    %1380 = vmatpush1.msra.mxu0 0.0
    %1381 = vmatprep.subr.mxu0 0.0
    %1382 = vmatpush1.msra.mxu0 0.0
    %1383 = vmatprep.subr.mxu0 0.0
    %1384 = vmatpush1.msra.mxu0 0.0
    %1385 = vmatprep.subr.mxu0 0.0
    %1386 = vmatpush1.msra.mxu0 0.0
    %1387 = vmatprep.subr.mxu0 0.0
    %1388 = vmatpush1.msra.mxu0 0.0
    %1389 = vmatprep.subr.mxu0 0.0
    %1390 = vmatpush1.msra.mxu0 0.0
    %1391 = vmatprep.subr.mxu0 0.0
    %1392 = vmatpush1.msra.mxu0 0.0
    %1393 = vmatprep.mubr.f32.mxu0 0.0
    %1394 = vmatmul.mubr.f32.gmra.mrb[0].mxu0 %v1327
    %v1395 = vpop.f32.mrb[0].mxu0
    %v1396 = vadd.f32 0.0, %v1395
    %v1397 = vpop.f32.mrb[0].mxu0
    %1398 = vdwg.mxu0
    %1399 = vrot.lane.b32.xlu0 %v892, 64
    %v1400 = vpop.permute.xlu0 %1399
    %v1403 = vsel %vm216, %v1245, 0
    %1405 = vmatprep.subr.mxu0 0.0
    %1406 = vmatpush1.msra.mxu0 %v1400
    %1407 = vmatprep.subr.mxu0 0.0
    %1408 = vmatpush1.msra.mxu0 0.0
    %1409 = vmatprep.subr.mxu0 0.0
    %1410 = vmatpush1.msra.mxu0 0.0
    %1411 = vmatprep.subr.mxu0 0.0
    %1412 = vmatpush1.msra.mxu0 0.0
    %1413 = vmatprep.subr.mxu0 0.0
    %1414 = vmatpush1.msra.mxu0 0.0
    %1415 = vmatprep.subr.mxu0 0.0
    %1416 = vmatpush1.msra.mxu0 0.0
    %1417 = vmatprep.subr.mxu0 0.0
    %1418 = vmatpush1.msra.mxu0 0.0
    %1419 = vmatprep.subr.mxu0 0.0
    %1420 = vmatpush1.msra.mxu0 0.0
    %1421 = vmatprep.subr.mxu0 0.0
    %1422 = vmatpush1.msra.mxu0 0.0
    %1423 = vmatprep.subr.mxu0 0.0
    %1424 = vmatpush1.msra.mxu0 0.0
    %1425 = vmatprep.subr.mxu0 0.0
    %1426 = vmatpush1.msra.mxu0 0.0
    %1427 = vmatprep.subr.mxu0 0.0
    %1428 = vmatpush1.msra.mxu0 0.0
    %1429 = vmatprep.subr.mxu0 0.0
    %1430 = vmatpush1.msra.mxu0 0.0
    %1431 = vmatprep.subr.mxu0 0.0
    %1432 = vmatpush1.msra.mxu0 0.0
    %1433 = vmatprep.subr.mxu0 0.0
    %1434 = vmatpush1.msra.mxu0 0.0
    %1435 = vmatprep.subr.mxu0 0.0
    %1436 = vmatpush1.msra.mxu0 0.0
    %1437 = vmatprep.subr.mxu0 0.0
    %1438 = vmatpush1.msra.mxu0 0.0
    %1439 = vmatprep.subr.mxu0 0.0
    %1440 = vmatpush1.msra.mxu0 0.0
    %1441 = vmatprep.subr.mxu0 0.0
    %1442 = vmatpush1.msra.mxu0 0.0
    %1443 = vmatprep.subr.mxu0 0.0
    %1444 = vmatpush1.msra.mxu0 0.0
    %1445 = vmatprep.subr.mxu0 0.0
    %1446 = vmatpush1.msra.mxu0 0.0
    %1447 = vmatprep.subr.mxu0 0.0
    %1448 = vmatpush1.msra.mxu0 0.0
    %1449 = vmatprep.subr.mxu0 0.0
    %1450 = vmatpush1.msra.mxu0 0.0
    %1451 = vmatprep.subr.mxu0 0.0
    %1452 = vmatpush1.msra.mxu0 0.0
    %1453 = vmatprep.subr.mxu0 0.0
    %1454 = vmatpush1.msra.mxu0 0.0
    %1455 = vmatprep.subr.mxu0 0.0
    %1456 = vmatpush1.msra.mxu0 0.0
    %1457 = vmatprep.subr.mxu0 0.0
    %1458 = vmatpush1.msra.mxu0 0.0
    %1459 = vmatprep.subr.mxu0 0.0
    %1460 = vmatpush1.msra.mxu0 0.0
    %1461 = vmatprep.subr.mxu0 0.0
    %1462 = vmatpush1.msra.mxu0 0.0
    %1463 = vmatprep.subr.mxu0 0.0
    %1464 = vmatpush1.msra.mxu0 0.0
    %1465 = vmatprep.subr.mxu0 0.0
    %1466 = vmatpush1.msra.mxu0 0.0
    %1467 = vmatprep.subr.mxu0 0.0
    %1468 = vmatpush1.msra.mxu0 0.0
    %1469 = vmatprep.mubr.f32.mxu0 0.0
    %1470 = vmatmul.mubr.f32.gmra.mrb[0].mxu0 %v1403
    %v1471 = vpop.f32.mrb[0].mxu0
    %v1472 = vadd.f32 0.0, %v1471
    %v1473 = vpop.f32.mrb[0].mxu0
    %1474 = vdwg.mxu0
    %1475 = vrot.lane.b32.xlu0 %v894, 64
    %v1476 = vpop.permute.xlu0 %1475
    %v1479 = vsel %vm216, %v1246, 0
    %1481 = vmatprep.subr.mxu0 0.0
    %1482 = vmatpush1.msra.mxu0 %v1476
    %1483 = vmatprep.subr.mxu0 0.0
    %1484 = vmatpush1.msra.mxu0 0.0
    %1485 = vmatprep.subr.mxu0 0.0
    %1486 = vmatpush1.msra.mxu0 0.0
    %1487 = vmatprep.subr.mxu0 0.0
    %1488 = vmatpush1.msra.mxu0 0.0
    %1489 = vmatprep.subr.mxu0 0.0
    %1490 = vmatpush1.msra.mxu0 0.0
    %1491 = vmatprep.subr.mxu0 0.0
    %1492 = vmatpush1.msra.mxu0 0.0
    %1493 = vmatprep.subr.mxu0 0.0
    %1494 = vmatpush1.msra.mxu0 0.0
    %1495 = vmatprep.subr.mxu0 0.0
    %1496 = vmatpush1.msra.mxu0 0.0
    %1497 = vmatprep.subr.mxu0 0.0
    %1498 = vmatpush1.msra.mxu0 0.0
    %1499 = vmatprep.subr.mxu0 0.0
    %1500 = vmatpush1.msra.mxu0 0.0
    %1501 = vmatprep.subr.mxu0 0.0
    %1502 = vmatpush1.msra.mxu0 0.0
    %1503 = vmatprep.subr.mxu0 0.0
    %1504 = vmatpush1.msra.mxu0 0.0
    %1505 = vmatprep.subr.mxu0 0.0
    %1506 = vmatpush1.msra.mxu0 0.0
    %1507 = vmatprep.subr.mxu0 0.0
    %1508 = vmatpush1.msra.mxu0 0.0
    %1509 = vmatprep.subr.mxu0 0.0
    %1510 = vmatpush1.msra.mxu0 0.0
    %1511 = vmatprep.subr.mxu0 0.0
    %1512 = vmatpush1.msra.mxu0 0.0
    %1513 = vmatprep.subr.mxu0 0.0
    %1514 = vmatpush1.msra.mxu0 0.0
    %1515 = vmatprep.subr.mxu0 0.0
    %1516 = vmatpush1.msra.mxu0 0.0
    %1517 = vmatprep.subr.mxu0 0.0
    %1518 = vmatpush1.msra.mxu0 0.0
    %1519 = vmatprep.subr.mxu0 0.0
    %1520 = vmatpush1.msra.mxu0 0.0
    %1521 = vmatprep.subr.mxu0 0.0
    %1522 = vmatpush1.msra.mxu0 0.0
    %1523 = vmatprep.subr.mxu0 0.0
    %1524 = vmatpush1.msra.mxu0 0.0
    %1525 = vmatprep.subr.mxu0 0.0
    %1526 = vmatpush1.msra.mxu0 0.0
    %1527 = vmatprep.subr.mxu0 0.0
    %1528 = vmatpush1.msra.mxu0 0.0
    %1529 = vmatprep.subr.mxu0 0.0
    %1530 = vmatpush1.msra.mxu0 0.0
    %1531 = vmatprep.subr.mxu0 0.0
    %1532 = vmatpush1.msra.mxu0 0.0
    %1533 = vmatprep.subr.mxu0 0.0
    %1534 = vmatpush1.msra.mxu0 0.0
    %1535 = vmatprep.subr.mxu0 0.0
    %1536 = vmatpush1.msra.mxu0 0.0
    %1537 = vmatprep.subr.mxu0 0.0
    %1538 = vmatpush1.msra.mxu0 0.0
    %1539 = vmatprep.subr.mxu0 0.0
    %1540 = vmatpush1.msra.mxu0 0.0
    %1541 = vmatprep.subr.mxu0 0.0
    %1542 = vmatpush1.msra.mxu0 0.0
    %1543 = vmatprep.subr.mxu0 0.0
    %1544 = vmatpush1.msra.mxu0 0.0
    %1545 = vmatprep.mubr.f32.mxu0 0.0
    %1546 = vmatmul.mubr.f32.gmra.mrb[0].mxu0 %v1479
    %v1547 = vpop.f32.mrb[0].mxu0
    %v1548 = vadd.f32 0.0, %v1547
    %v1549 = vpop.f32.mrb[0].mxu0
    %1550 = vdwg.mxu0
    %1552 = vrot.lane.b32.xlu0 %v1396, 8
    %v1553 = vpop.permute.xlu0 %1552
    %1556 = vrot.lane.b32.xlu0 %v1472, 16
    %v1557 = vpop.permute.xlu0 %1556
    %1560 = vrot.lane.b32.xlu0 %v1548, 24
    %v1561 = vpop.permute.xlu0 %1560
    %v1563 = vsel %vm216, %v1320, %v1553
    %v1564 = vsel %vm884, %v1563, %v1557
    %v1565 = vsel %vm886, %v1564, %v1561
    %v1566 = vld [vmem:[%s6] sm:$0xff]
    %v1567 = vld [vmem:[%s6 + $0x8] sm:$0xff]
    %v1568 = vld [vmem:[%s6 + $0x10] sm:$0xff]
    %v1569 = vld [vmem:[%s6 + $0x18] sm:$0xff]
    %v1570 = vld [vmem:[%s7] sm:$0x1]
    %v1572 = vlaneseq
    %v1573 = vshrl.u32 %v1572, 7
    %v1574 = vsub.s32 0, %v1573
    %v1575 = vrot.slane %v1570, %v1574
    %v1578 = vsel %vm125, %v887, 0
    %v1581 = vsel %vm125, %v1565, 0
    %1583 = vmatprep.subr.mxu0 0.0
    %1584 = vmatpush1.msra.mxu0 %v1566
    %1585 = vmatprep.subr.mxu0 0.0
    %1586 = vmatpush1.msra.mxu0 %v1567
    %1587 = vmatprep.subr.mxu0 0.0
    %1588 = vmatpush1.msra.mxu0 %v1568
    %1589 = vmatprep.subr.mxu0 0.0
    %1590 = vmatpush1.msra.mxu0 %v1569
    %1591 = vmatprep.subr.mxu0 0.0
    %1592 = vmatpush1.msra.mxu0 0.0
    %1593 = vmatprep.subr.mxu0 0.0
    %1594 = vmatpush1.msra.mxu0 0.0
    %1595 = vmatprep.subr.mxu0 0.0
    %1596 = vmatpush1.msra.mxu0 0.0
    %1597 = vmatprep.subr.mxu0 0.0
    %1598 = vmatpush1.msra.mxu0 0.0
    %1599 = vmatprep.subr.mxu0 0.0
    %1600 = vmatpush1.msra.mxu0 0.0
    %1601 = vmatprep.subr.mxu0 0.0
    %1602 = vmatpush1.msra.mxu0 0.0
    %1603 = vmatprep.subr.mxu0 0.0
    %1604 = vmatpush1.msra.mxu0 0.0
    %1605 = vmatprep.subr.mxu0 0.0
    %1606 = vmatpush1.msra.mxu0 0.0
    %1607 = vmatprep.subr.mxu0 0.0
    %1608 = vmatpush1.msra.mxu0 0.0
    %1609 = vmatprep.subr.mxu0 0.0
    %1610 = vmatpush1.msra.mxu0 0.0
    %1611 = vmatprep.subr.mxu0 0.0
    %1612 = vmatpush1.msra.mxu0 0.0
    %1613 = vmatprep.subr.mxu0 0.0
    %1614 = vmatpush1.msra.mxu0 0.0
    %1615 = vmatprep.subr.mxu0 0.0
    %1616 = vmatpush1.msra.mxu0 0.0
    %1617 = vmatprep.subr.mxu0 0.0
    %1618 = vmatpush1.msra.mxu0 0.0
    %1619 = vmatprep.subr.mxu0 0.0
    %1620 = vmatpush1.msra.mxu0 0.0
    %1621 = vmatprep.subr.mxu0 0.0
    %1622 = vmatpush1.msra.mxu0 0.0
    %1623 = vmatprep.subr.mxu0 0.0
    %1624 = vmatpush1.msra.mxu0 0.0
    %1625 = vmatprep.subr.mxu0 0.0
    %1626 = vmatpush1.msra.mxu0 0.0
    %1627 = vmatprep.subr.mxu0 0.0
    %1628 = vmatpush1.msra.mxu0 0.0
    %1629 = vmatprep.subr.mxu0 0.0
    %1630 = vmatpush1.msra.mxu0 0.0
    %1631 = vmatprep.subr.mxu0 0.0
    %1632 = vmatpush1.msra.mxu0 0.0
    %1633 = vmatprep.subr.mxu0 0.0
    %1634 = vmatpush1.msra.mxu0 0.0
    %1635 = vmatprep.subr.mxu0 0.0
    %1636 = vmatpush1.msra.mxu0 0.0
    %1637 = vmatprep.subr.mxu0 0.0
    %1638 = vmatpush1.msra.mxu0 0.0
    %1639 = vmatprep.subr.mxu0 0.0
    %1640 = vmatpush1.msra.mxu0 0.0
    %1641 = vmatprep.subr.mxu0 0.0
    %1642 = vmatpush1.msra.mxu0 0.0
    %1643 = vmatprep.subr.mxu0 0.0
    %1644 = vmatpush1.msra.mxu0 0.0
    %1645 = vmatprep.subr.mxu0 0.0
    %1646 = vmatpush1.msra.mxu0 0.0
    %1647 = vmatprep.mubr.f32.mxu0 0.0
    %1648 = vmatmul.mubr.f32.gmra.mrb[0].mxu0 %v1578
    %v1649 = vpop.f32.mrb[0].mxu0
    %v1650 = vadd.f32 %v1575, %v1649
    %v1651 = vpop.f32.mrb[0].mxu0
    %1652 = vmatprep.mubr.f32.mxu0 0.0
    %1653 = vmatmul.mubr.f32.gmra.mrb[0].mxu0 %v1581
    %v1654 = vpop.f32.mrb[0].mxu0
    %v1655 = vadd.f32 %v1575, %v1654
    %v1656 = vpop.f32.mrb[0].mxu0
    %1657 = vdwg.mxu0
    %v1658 = vadd.f32 %v1650, %v84
    %v1659 = vadd.f32 %v1655, %v85
    %v1660 = vld [vmem:[%s8] sm:$0x1]
    %v1661 = vld [vmem:[%s9] sm:$0x1]
    %v1662 = vsel %vm125, %v1658, 0.0
    %1663 = vadd.xlane.f32.xlu0 %v1662
    %v1664 = vpop.xlane.xlu0 %1663
    %v1665 = vsel %vm125, %v1659, 0.0
    %1666 = vadd.xlane.f32.xlu0 %v1665
    %v1667 = vpop.xlane.xlu0 %1666
    %v1668 = vrcp.pop 32.0
    %v1669 = vmul.f32 %v1664, %v1668
    %v1670 = vmul.f32 %v1667, %v1668
    %v1671 = vsub.f32 %v1658, %v1669
    %v1672 = vsub.f32 %v1659, %v1670
    %v1673 = vmul.f32 %v1671, %v1671
    %v1674 = vmul.f32 %v1672, %v1672
    %v1675 = vsel %vm125, %v1673, 0.0
    %1676 = vadd.xlane.f32.xlu0 %v1675
    %v1677 = vpop.xlane.xlu0 %1676
    %v1678 = vsel %vm125, %v1674, 0.0
    %1679 = vadd.xlane.f32.xlu0 %v1678
    %v1680 = vpop.xlane.xlu0 %1679
    %v1681 = vmul.f32 %v1677, %v1668
    %v1682 = vmul.f32 %v1680, %v1668
    %v1683 = vadd.f32 %v1681, 1e-05
    %v1684 = vadd.f32 %v1682, 1e-05
    %v1685 = vrsqrt.pop %v1683
    %v1686 = vrsqrt.pop %v1684
    %v1687 = vmul.f32 %v1671, %v1685
    %v1688 = vmul.f32 %v1672, %v1686
    %v1690 = vlaneseq
    %v1691 = vshrl.u32 %v1690, 7
    %v1692 = vsub.s32 0, %v1691
    %v1693 = vrot.slane %v1660, %v1692
    %v1695 = vmul.f32 %v1687, %v1693
    %v1696 = vmul.f32 %v1688, %v1693
    %v1698 = vlaneseq
    %v1699 = vshrl.u32 %v1698, 7
    %v1700 = vsub.s32 0, %v1699
    %v1701 = vrot.slane %v1661, %v1700
    %v1703 = vadd.f32 %v1695, %v1701
    %v1704 = vadd.f32 %v1696, %v1701
    %v1705 = vld [vmem:[%s10] sm:$0xff]
    %v1706 = vld [vmem:[%s10 + $0x8] sm:$0xff]
    %v1707 = vld [vmem:[%s10 + $0x10] sm:$0xff]
    %v1708 = vld [vmem:[%s10 + $0x18] sm:$0xff]
    %v1709 = vld [vmem:[%s11] sm:$0x1]
    %v1711 = vlaneseq
    %v1712 = vshrl.u32 %v1711, 7
    %v1713 = vsub.s32 0, %v1712
    %v1714 = vrot.slane %v1709, %v1713
    %v1717 = vsel %vm125, %v1703, 0
    %v1720 = vsel %vm125, %v1704, 0
    %1722 = vmatprep.subr.mxu0 0.0
    %1723 = vmatpush1.msra.mxu0 %v1705
    %1724 = vmatprep.subr.mxu0 0.0
    %1725 = vmatpush1.msra.mxu0 %v1706
    %1726 = vmatprep.subr.mxu0 0.0
    %1727 = vmatpush1.msra.mxu0 %v1707
    %1728 = vmatprep.subr.mxu0 0.0
    %1729 = vmatpush1.msra.mxu0 %v1708
    %1730 = vmatprep.subr.mxu0 0.0
    %1731 = vmatpush1.msra.mxu0 0.0
    %1732 = vmatprep.subr.mxu0 0.0
    %1733 = vmatpush1.msra.mxu0 0.0
    %1734 = vmatprep.subr.mxu0 0.0
    %1735 = vmatpush1.msra.mxu0 0.0
    %1736 = vmatprep.subr.mxu0 0.0
    %1737 = vmatpush1.msra.mxu0 0.0
    %1738 = vmatprep.subr.mxu0 0.0
    %1739 = vmatpush1.msra.mxu0 0.0
    %1740 = vmatprep.subr.mxu0 0.0
    %1741 = vmatpush1.msra.mxu0 0.0
    %1742 = vmatprep.subr.mxu0 0.0
    %1743 = vmatpush1.msra.mxu0 0.0
    %1744 = vmatprep.subr.mxu0 0.0
    %1745 = vmatpush1.msra.mxu0 0.0
    %1746 = vmatprep.subr.mxu0 0.0
    %1747 = vmatpush1.msra.mxu0 0.0
    %1748 = vmatprep.subr.mxu0 0.0
    %1749 = vmatpush1.msra.mxu0 0.0
    %1750 = vmatprep.subr.mxu0 0.0
    %1751 = vmatpush1.msra.mxu0 0.0
    %1752 = vmatprep.subr.mxu0 0.0
    %1753 = vmatpush1.msra.mxu0 0.0
    %1754 = vmatprep.subr.mxu0 0.0
    %1755 = vmatpush1.msra.mxu0 0.0
    %1756 = vmatprep.subr.mxu0 0.0
    %1757 = vmatpush1.msra.mxu0 0.0
    %1758 = vmatprep.subr.mxu0 0.0
    %1759 = vmatpush1.msra.mxu0 0.0
    %1760 = vmatprep.subr.mxu0 0.0
    %1761 = vmatpush1.msra.mxu0 0.0
    %1762 = vmatprep.subr.mxu0 0.0
    %1763 = vmatpush1.msra.mxu0 0.0
    %1764 = vmatprep.subr.mxu0 0.0
    %1765 = vmatpush1.msra.mxu0 0.0
    %1766 = vmatprep.subr.mxu0 0.0
    %1767 = vmatpush1.msra.mxu0 0.0
    %1768 = vmatprep.subr.mxu0 0.0
    %1769 = vmatpush1.msra.mxu0 0.0
    %1770 = vmatprep.subr.mxu0 0.0
    %1771 = vmatpush1.msra.mxu0 0.0
    %1772 = vmatprep.subr.mxu0 0.0
    %1773 = vmatpush1.msra.mxu0 0.0
    %1774 = vmatprep.subr.mxu0 0.0
    %1775 = vmatpush1.msra.mxu0 0.0
    %1776 = vmatprep.subr.mxu0 0.0
    %1777 = vmatpush1.msra.mxu0 0.0
    %1778 = vmatprep.subr.mxu0 0.0
    %1779 = vmatpush1.msra.mxu0 0.0
    %1780 = vmatprep.subr.mxu0 0.0
    %1781 = vmatpush1.msra.mxu0 0.0
    %1782 = vmatprep.subr.mxu0 0.0
    %1783 = vmatpush1.msra.mxu0 0.0
    %1784 = vmatprep.subr.mxu0 0.0
    %1785 = vmatpush1.msra.mxu0 0.0
    %1786 = vmatprep.mubr.f32.mxu0 0.0
    %1787 = vmatmul.mubr.f32.gmra.mrb[0].mxu0 %v1717
    %v1788 = vpop.f32.mrb[0].mxu0
    %v1789 = vadd.f32 %v1714, %v1788
    %v1790 = vpop.f32.mrb[0].mxu0
    %1791 = vmatprep.mubr.f32.mxu0 0.0
    %1792 = vmatmul.mubr.f32.gmra.mrb[0].mxu0 %v1720
    %v1793 = vpop.f32.mrb[0].mxu0
    %v1794 = vadd.f32 %v1714, %v1793
    %v1795 = vpop.f32.mrb[0].mxu0
    %1796 = vdwg.mxu0
    %v1797 = vld [vmem:[%s12] sm:$0xff]
    %v1798 = vld [vmem:[%s12 + $0x8] sm:$0xff]
    %v1799 = vld [vmem:[%s12 + $0x10] sm:$0xff]
    %v1800 = vld [vmem:[%s12 + $0x18] sm:$0xff]
    %v1801 = vld [vmem:[%s13] sm:$0x1]
    %v1803 = vlaneseq
    %v1804 = vshrl.u32 %v1803, 7
    %v1805 = vsub.s32 0, %v1804
    %v1806 = vrot.slane %v1801, %v1805
    %v1809 = vsel %vm125, %v86, 0
    %v1812 = vsel %vm125, %v87, 0
    %1814 = vmatprep.subr.mxu0 0.0
    %1815 = vmatpush1.msra.mxu0 %v1797
    %1816 = vmatprep.subr.mxu0 0.0
    %1817 = vmatpush1.msra.mxu0 %v1798
    %1818 = vmatprep.subr.mxu0 0.0
    %1819 = vmatpush1.msra.mxu0 %v1799
    %1820 = vmatprep.subr.mxu0 0.0
    %1821 = vmatpush1.msra.mxu0 %v1800
    %1822 = vmatprep.subr.mxu0 0.0
    %1823 = vmatpush1.msra.mxu0 0.0
    %1824 = vmatprep.subr.mxu0 0.0
    %1825 = vmatpush1.msra.mxu0 0.0
    %1826 = vmatprep.subr.mxu0 0.0
    %1827 = vmatpush1.msra.mxu0 0.0
    %1828 = vmatprep.subr.mxu0 0.0
    %1829 = vmatpush1.msra.mxu0 0.0
    %1830 = vmatprep.subr.mxu0 0.0
    %1831 = vmatpush1.msra.mxu0 0.0
    %1832 = vmatprep.subr.mxu0 0.0
    %1833 = vmatpush1.msra.mxu0 0.0
    %1834 = vmatprep.subr.mxu0 0.0
    %1835 = vmatpush1.msra.mxu0 0.0
    %1836 = vmatprep.subr.mxu0 0.0
    %1837 = vmatpush1.msra.mxu0 0.0
    %1838 = vmatprep.subr.mxu0 0.0
    %1839 = vmatpush1.msra.mxu0 0.0
    %1840 = vmatprep.subr.mxu0 0.0
    %1841 = vmatpush1.msra.mxu0 0.0
    %1842 = vmatprep.subr.mxu0 0.0
    %1843 = vmatpush1.msra.mxu0 0.0
    %1844 = vmatprep.subr.mxu0 0.0
    %1845 = vmatpush1.msra.mxu0 0.0
    %1846 = vmatprep.subr.mxu0 0.0
    %1847 = vmatpush1.msra.mxu0 0.0
    %1848 = vmatprep.subr.mxu0 0.0
    %1849 = vmatpush1.msra.mxu0 0.0
    %1850 = vmatprep.subr.mxu0 0.0
    %1851 = vmatpush1.msra.mxu0 0.0
    %1852 = vmatprep.subr.mxu0 0.0
    %1853 = vmatpush1.msra.mxu0 0.0
    %1854 = vmatprep.subr.mxu0 0.0
    %1855 = vmatpush1.msra.mxu0 0.0
    %1856 = vmatprep.subr.mxu0 0.0
    %1857 = vmatpush1.msra.mxu0 0.0
    %1858 = vmatprep.subr.mxu0 0.0
    %1859 = vmatpush1.msra.mxu0 0.0
    %1860 = vmatprep.subr.mxu0 0.0
    %1861 = vmatpush1.msra.mxu0 0.0
    %1862 = vmatprep.subr.mxu0 0.0
    %1863 = vmatpush1.msra.mxu0 0.0
    %1864 = vmatprep.subr.mxu0 0.0
    %1865 = vmatpush1.msra.mxu0 0.0
    %1866 = vmatprep.subr.mxu0 0.0
    %1867 = vmatpush1.msra.mxu0 0.0
    %1868 = vmatprep.subr.mxu0 0.0
    %1869 = vmatpush1.msra.mxu0 0.0
    %1870 = vmatprep.subr.mxu0 0.0
    %1871 = vmatpush1.msra.mxu0 0.0
    %1872 = vmatprep.subr.mxu0 0.0
    %1873 = vmatpush1.msra.mxu0 0.0
    %1874 = vmatprep.subr.mxu0 0.0
    %1875 = vmatpush1.msra.mxu0 0.0
    %1876 = vmatprep.subr.mxu0 0.0
    %1877 = vmatpush1.msra.mxu0 0.0
    %1878 = vmatprep.mubr.f32.mxu0 0.0
    %1879 = vmatmul.mubr.f32.gmra.mrb[0].mxu0 %v1809
    %v1880 = vpop.f32.mrb[0].mxu0
    %v1881 = vadd.f32 %v1806, %v1880
    %v1882 = vpop.f32.mrb[0].mxu0
    %1883 = vmatprep.mubr.f32.mxu0 0.0
    %1884 = vmatmul.mubr.f32.gmra.mrb[0].mxu0 %v1812
    %v1885 = vpop.f32.mrb[0].mxu0
    %v1886 = vadd.f32 %v1806, %v1885
    %v1887 = vpop.f32.mrb[0].mxu0
    %1888 = vdwg.mxu0
    %1890 = vrot.lane.b32.xlu0 %v1789, 120
    %v1891 = vpop.permute.xlu0 %1890
    %1892 = vrot.lane.b32.xlu0 %v1789, 112
    %v1893 = vpop.permute.xlu0 %1892
    %1894 = vrot.lane.b32.xlu0 %v1789, 104
    %v1895 = vpop.permute.xlu0 %1894
    %1897 = vrot.lane.b32.xlu0 %v1881, 120
    %v1898 = vpop.permute.xlu0 %1897
    %1899 = vrot.lane.b32.xlu0 %v1881, 112
    %v1900 = vpop.permute.xlu0 %1899
    %1901 = vrot.lane.b32.xlu0 %v1881, 104
    %v1902 = vpop.permute.xlu0 %1901
    %v1903 = vsel %vm216, %v1789, 0
    %v1905 = vsel %vm216, %v1881, 0
    %1907 = vmatprep.subr.mxu0 0.0
    %1908 = vmatpush1.xpose.msra.mxu0 %v1905
    %1909 = vmatprep.subr.mxu0 0.0
    %1910 = vmatpush1.xpose.msra.mxu0 0.0
    %1911 = vmatprep.subr.mxu0 0.0
    %1912 = vmatpush1.xpose.msra.mxu0 0.0
    %1913 = vmatprep.subr.mxu0 0.0
    %1914 = vmatpush1.xpose.msra.mxu0 0.0
    %1915 = vmatprep.subr.mxu0 0.0
    %1916 = vmatpush1.xpose.msra.mxu0 0.0
    %1917 = vmatprep.subr.mxu0 0.0
    %1918 = vmatpush1.xpose.msra.mxu0 0.0
    %1919 = vmatprep.subr.mxu0 0.0
    %1920 = vmatpush1.xpose.msra.mxu0 0.0
    %1921 = vmatprep.subr.mxu0 0.0
    %1922 = vmatpush1.xpose.msra.mxu0 0.0
    %1923 = vmatprep.subr.mxu0 0.0
    %1924 = vmatpush1.xpose.msra.mxu0 0.0
    %1925 = vmatprep.subr.mxu0 0.0
    %1926 = vmatpush1.xpose.msra.mxu0 0.0
    %1927 = vmatprep.subr.mxu0 0.0
    %1928 = vmatpush1.xpose.msra.mxu0 0.0
    %1929 = vmatprep.subr.mxu0 0.0
    %1930 = vmatpush1.xpose.msra.mxu0 0.0
    %1931 = vmatprep.subr.mxu0 0.0
    %1932 = vmatpush1.xpose.msra.mxu0 0.0
    %1933 = vmatprep.subr.mxu0 0.0
    %1934 = vmatpush1.xpose.msra.mxu0 0.0
    %1935 = vmatprep.subr.mxu0 0.0
    %1936 = vmatpush1.xpose.msra.mxu0 0.0
    %1937 = vmatprep.subr.mxu0 0.0
    %1938 = vmatpush1.xpose.msra.mxu0 0.0
    %1939 = vmatprep.subr.mxu0 0.0
    %1940 = vmatpush1.xpose.msra.mxu0 0.0
    %1941 = vmatprep.subr.mxu0 0.0
    %1942 = vmatpush1.xpose.msra.mxu0 0.0
    %1943 = vmatprep.subr.mxu0 0.0
    %1944 = vmatpush1.xpose.msra.mxu0 0.0
    %1945 = vmatprep.subr.mxu0 0.0
    %1946 = vmatpush1.xpose.msra.mxu0 0.0
    %1947 = vmatprep.subr.mxu0 0.0
    %1948 = vmatpush1.xpose.msra.mxu0 0.0
    %1949 = vmatprep.subr.mxu0 0.0
    %1950 = vmatpush1.xpose.msra.mxu0 0.0
    %1951 = vmatprep.subr.mxu0 0.0
    %1952 = vmatpush1.xpose.msra.mxu0 0.0
    %1953 = vmatprep.subr.mxu0 0.0
    %1954 = vmatpush1.xpose.msra.mxu0 0.0
    %1955 = vmatprep.subr.mxu0 0.0
    %1956 = vmatpush1.xpose.msra.mxu0 0.0
    %1957 = vmatprep.subr.mxu0 0.0
    %1958 = vmatpush1.xpose.msra.mxu0 0.0
    %1959 = vmatprep.subr.mxu0 0.0
    %1960 = vmatpush1.xpose.msra.mxu0 0.0
    %1961 = vmatprep.subr.mxu0 0.0
    %1962 = vmatpush1.xpose.msra.mxu0 0.0
    %1963 = vmatprep.subr.mxu0 0.0
    %1964 = vmatpush1.xpose.msra.mxu0 0.0
    %1965 = vmatprep.subr.mxu0 0.0
    %1966 = vmatpush1.xpose.msra.mxu0 0.0
    %1967 = vmatprep.subr.mxu0 0.0
    %1968 = vmatpush1.xpose.msra.mxu0 0.0
    %1969 = vmatprep.subr.mxu0 0.0
    %1970 = vmatpush1.xpose.msra.mxu0 0.0
    %1971 = vmatprep.mubr.f32.mxu0 0.0
    %1972 = vmatmul.mubr.f32.gmra.mrb[0].mxu0 %v1903
    %v1973 = vpop.f32.mrb[0].mxu0
    %v1974 = vadd.f32 %v103, %v1973
    %v1975 = vpop.f32.mrb[0].mxu0
    %1976 = vdwg.mxu0
    %v1977 = vsel %vm216, %v1891, 0
    %v1979 = vsel %vm216, %v1898, 0
    %1981 = vmatprep.subr.mxu0 0.0
    %1982 = vmatpush1.xpose.msra.mxu0 %v1979
    %1983 = vmatprep.subr.mxu0 0.0
    %1984 = vmatpush1.xpose.msra.mxu0 0.0
    %1985 = vmatprep.subr.mxu0 0.0
    %1986 = vmatpush1.xpose.msra.mxu0 0.0
    %1987 = vmatprep.subr.mxu0 0.0
    %1988 = vmatpush1.xpose.msra.mxu0 0.0
    %1989 = vmatprep.subr.mxu0 0.0
    %1990 = vmatpush1.xpose.msra.mxu0 0.0
    %1991 = vmatprep.subr.mxu0 0.0
    %1992 = vmatpush1.xpose.msra.mxu0 0.0
    %1993 = vmatprep.subr.mxu0 0.0
    %1994 = vmatpush1.xpose.msra.mxu0 0.0
    %1995 = vmatprep.subr.mxu0 0.0
    %1996 = vmatpush1.xpose.msra.mxu0 0.0
    %1997 = vmatprep.subr.mxu0 0.0
    %1998 = vmatpush1.xpose.msra.mxu0 0.0
    %1999 = vmatprep.subr.mxu0 0.0
    %2000 = vmatpush1.xpose.msra.mxu0 0.0
    %2001 = vmatprep.subr.mxu0 0.0
    %2002 = vmatpush1.xpose.msra.mxu0 0.0
    %2003 = vmatprep.subr.mxu0 0.0
    %2004 = vmatpush1.xpose.msra.mxu0 0.0
    %2005 = vmatprep.subr.mxu0 0.0
    %2006 = vmatpush1.xpose.msra.mxu0 0.0
    %2007 = vmatprep.subr.mxu0 0.0
    %2008 = vmatpush1.xpose.msra.mxu0 0.0
    %2009 = vmatprep.subr.mxu0 0.0
    %2010 = vmatpush1.xpose.msra.mxu0 0.0
    %2011 = vmatprep.subr.mxu0 0.0
    %2012 = vmatpush1.xpose.msra.mxu0 0.0
    %2013 = vmatprep.subr.mxu0 0.0
    %2014 = vmatpush1.xpose.msra.mxu0 0.0
    %2015 = vmatprep.subr.mxu0 0.0
    %2016 = vmatpush1.xpose.msra.mxu0 0.0
    %2017 = vmatprep.subr.mxu0 0.0
    %2018 = vmatpush1.xpose.msra.mxu0 0.0
    %2019 = vmatprep.subr.mxu0 0.0
    %2020 = vmatpush1.xpose.msra.mxu0 0.0
    %2021 = vmatprep.subr.mxu0 0.0
    %2022 = vmatpush1.xpose.msra.mxu0 0.0
    %2023 = vmatprep.subr.mxu0 0.0
    %2024 = vmatpush1.xpose.msra.mxu0 0.0
    %2025 = vmatprep.subr.mxu0 0.0
    %2026 = vmatpush1.xpose.msra.mxu0 0.0
    %2027 = vmatprep.subr.mxu0 0.0
    %2028 = vmatpush1.xpose.msra.mxu0 0.0
    %2029 = vmatprep.subr.mxu0 0.0
    %2030 = vmatpush1.xpose.msra.mxu0 0.0
    %2031 = vmatprep.subr.mxu0 0.0
    %2032 = vmatpush1.xpose.msra.mxu0 0.0
    %2033 = vmatprep.subr.mxu0 0.0
    %2034 = vmatpush1.xpose.msra.mxu0 0.0
    %2035 = vmatprep.subr.mxu0 0.0
    %2036 = vmatpush1.xpose.msra.mxu0 0.0
    %2037 = vmatprep.subr.mxu0 0.0
    %2038 = vmatpush1.xpose.msra.mxu0 0.0
    %2039 = vmatprep.subr.mxu0 0.0
    %2040 = vmatpush1.xpose.msra.mxu0 0.0
    %2041 = vmatprep.subr.mxu0 0.0
    %2042 = vmatpush1.xpose.msra.mxu0 0.0
    %2043 = vmatprep.subr.mxu0 0.0
    %2044 = vmatpush1.xpose.msra.mxu0 0.0
    %2045 = vmatprep.mubr.f32.mxu0 0.0
    %2046 = vmatmul.mubr.f32.gmra.mrb[0].mxu0 %v1977
    %v2047 = vpop.f32.mrb[0].mxu0
    %v2048 = vadd.f32 %v103, %v2047
    %v2049 = vpop.f32.mrb[0].mxu0
    %2050 = vdwg.mxu0
    %v2051 = vsel %vm216, %v1893, 0
    %v2053 = vsel %vm216, %v1900, 0
    %2055 = vmatprep.subr.mxu0 0.0
    %2056 = vmatpush1.xpose.msra.mxu0 %v2053
    %2057 = vmatprep.subr.mxu0 0.0
    %2058 = vmatpush1.xpose.msra.mxu0 0.0
    %2059 = vmatprep.subr.mxu0 0.0
    %2060 = vmatpush1.xpose.msra.mxu0 0.0
    %2061 = vmatprep.subr.mxu0 0.0
    %2062 = vmatpush1.xpose.msra.mxu0 0.0
    %2063 = vmatprep.subr.mxu0 0.0
    %2064 = vmatpush1.xpose.msra.mxu0 0.0
    %2065 = vmatprep.subr.mxu0 0.0
    %2066 = vmatpush1.xpose.msra.mxu0 0.0
    %2067 = vmatprep.subr.mxu0 0.0
    %2068 = vmatpush1.xpose.msra.mxu0 0.0
    %2069 = vmatprep.subr.mxu0 0.0
    %2070 = vmatpush1.xpose.msra.mxu0 0.0
    %2071 = vmatprep.subr.mxu0 0.0
    %2072 = vmatpush1.xpose.msra.mxu0 0.0
    %2073 = vmatprep.subr.mxu0 0.0
    %2074 = vmatpush1.xpose.msra.mxu0 0.0
    %2075 = vmatprep.subr.mxu0 0.0
    %2076 = vmatpush1.xpose.msra.mxu0 0.0
    %2077 = vmatprep.subr.mxu0 0.0
    %2078 = vmatpush1.xpose.msra.mxu0 0.0
    %2079 = vmatprep.subr.mxu0 0.0
    %2080 = vmatpush1.xpose.msra.mxu0 0.0
    %2081 = vmatprep.subr.mxu0 0.0
    %2082 = vmatpush1.xpose.msra.mxu0 0.0
    %2083 = vmatprep.subr.mxu0 0.0
    %2084 = vmatpush1.xpose.msra.mxu0 0.0
    %2085 = vmatprep.subr.mxu0 0.0
    %2086 = vmatpush1.xpose.msra.mxu0 0.0
    %2087 = vmatprep.subr.mxu0 0.0
    %2088 = vmatpush1.xpose.msra.mxu0 0.0
    %2089 = vmatprep.subr.mxu0 0.0
    %2090 = vmatpush1.xpose.msra.mxu0 0.0
    %2091 = vmatprep.subr.mxu0 0.0
    %2092 = vmatpush1.xpose.msra.mxu0 0.0
    %2093 = vmatprep.subr.mxu0 0.0
    %2094 = vmatpush1.xpose.msra.mxu0 0.0
    %2095 = vmatprep.subr.mxu0 0.0
    %2096 = vmatpush1.xpose.msra.mxu0 0.0
    %2097 = vmatprep.subr.mxu0 0.0
    %2098 = vmatpush1.xpose.msra.mxu0 0.0
    %2099 = vmatprep.subr.mxu0 0.0
    %2100 = vmatpush1.xpose.msra.mxu0 0.0
    %2101 = vmatprep.subr.mxu0 0.0
    %2102 = vmatpush1.xpose.msra.mxu0 0.0
    %2103 = vmatprep.subr.mxu0 0.0
    %2104 = vmatpush1.xpose.msra.mxu0 0.0
    %2105 = vmatprep.subr.mxu0 0.0
    %2106 = vmatpush1.xpose.msra.mxu0 0.0
    %2107 = vmatprep.subr.mxu0 0.0
    %2108 = vmatpush1.xpose.msra.mxu0 0.0
    %2109 = vmatprep.subr.mxu0 0.0
    %2110 = vmatpush1.xpose.msra.mxu0 0.0
    %2111 = vmatprep.subr.mxu0 0.0
    %2112 = vmatpush1.xpose.msra.mxu0 0.0
    %2113 = vmatprep.subr.mxu0 0.0
    %2114 = vmatpush1.xpose.msra.mxu0 0.0
    %2115 = vmatprep.subr.mxu0 0.0
    %2116 = vmatpush1.xpose.msra.mxu0 0.0
    %2117 = vmatprep.subr.mxu0 0.0
    %2118 = vmatpush1.xpose.msra.mxu0 0.0
    %2119 = vmatprep.mubr.f32.mxu0 0.0
    %2120 = vmatmul.mubr.f32.gmra.mrb[0].mxu0 %v2051
    %v2121 = vpop.f32.mrb[0].mxu0
    %v2122 = vadd.f32 %v103, %v2121
    %v2123 = vpop.f32.mrb[0].mxu0
    %2124 = vdwg.mxu0
    %v2125 = vsel %vm216, %v1895, 0
    %v2127 = vsel %vm216, %v1902, 0
    %2129 = vmatprep.subr.mxu0 0.0
    %2130 = vmatpush1.xpose.msra.mxu0 %v2127
    %2131 = vmatprep.subr.mxu0 0.0
    %2132 = vmatpush1.xpose.msra.mxu0 0.0
    %2133 = vmatprep.subr.mxu0 0.0
    %2134 = vmatpush1.xpose.msra.mxu0 0.0
    %2135 = vmatprep.subr.mxu0 0.0
    %2136 = vmatpush1.xpose.msra.mxu0 0.0
    %2137 = vmatprep.subr.mxu0 0.0
    %2138 = vmatpush1.xpose.msra.mxu0 0.0
    %2139 = vmatprep.subr.mxu0 0.0
    %2140 = vmatpush1.xpose.msra.mxu0 0.0
    %2141 = vmatprep.subr.mxu0 0.0
    %2142 = vmatpush1.xpose.msra.mxu0 0.0
    %2143 = vmatprep.subr.mxu0 0.0
    %2144 = vmatpush1.xpose.msra.mxu0 0.0
    %2145 = vmatprep.subr.mxu0 0.0
    %2146 = vmatpush1.xpose.msra.mxu0 0.0
    %2147 = vmatprep.subr.mxu0 0.0
    %2148 = vmatpush1.xpose.msra.mxu0 0.0
    %2149 = vmatprep.subr.mxu0 0.0
    %2150 = vmatpush1.xpose.msra.mxu0 0.0
    %2151 = vmatprep.subr.mxu0 0.0
    %2152 = vmatpush1.xpose.msra.mxu0 0.0
    %2153 = vmatprep.subr.mxu0 0.0
    %2154 = vmatpush1.xpose.msra.mxu0 0.0
    %2155 = vmatprep.subr.mxu0 0.0
    %2156 = vmatpush1.xpose.msra.mxu0 0.0
    %2157 = vmatprep.subr.mxu0 0.0
    %2158 = vmatpush1.xpose.msra.mxu0 0.0
    %2159 = vmatprep.subr.mxu0 0.0
    %2160 = vmatpush1.xpose.msra.mxu0 0.0
    %2161 = vmatprep.subr.mxu0 0.0
    %2162 = vmatpush1.xpose.msra.mxu0 0.0
    %2163 = vmatprep.subr.mxu0 0.0
    %2164 = vmatpush1.xpose.msra.mxu0 0.0
    %2165 = vmatprep.subr.mxu0 0.0
    %2166 = vmatpush1.xpose.msra.mxu0 0.0
    %2167 = vmatprep.subr.mxu0 0.0
    %2168 = vmatpush1.xpose.msra.mxu0 0.0
    %2169 = vmatprep.subr.mxu0 0.0
    %2170 = vmatpush1.xpose.msra.mxu0 0.0
    %2171 = vmatprep.subr.mxu0 0.0
    %2172 = vmatpush1.xpose.msra.mxu0 0.0
    %2173 = vmatprep.subr.mxu0 0.0
    %2174 = vmatpush1.xpose.msra.mxu0 0.0
    %2175 = vmatprep.subr.mxu0 0.0
    %2176 = vmatpush1.xpose.msra.mxu0 0.0
    %2177 = vmatprep.subr.mxu0 0.0
    %2178 = vmatpush1.xpose.msra.mxu0 0.0
    %2179 = vmatprep.subr.mxu0 0.0
    %2180 = vmatpush1.xpose.msra.mxu0 0.0
    %2181 = vmatprep.subr.mxu0 0.0
    %2182 = vmatpush1.xpose.msra.mxu0 0.0
    %2183 = vmatprep.subr.mxu0 0.0
    %2184 = vmatpush1.xpose.msra.mxu0 0.0
    %2185 = vmatprep.subr.mxu0 0.0
    %2186 = vmatpush1.xpose.msra.mxu0 0.0
    %2187 = vmatprep.subr.mxu0 0.0
    %2188 = vmatpush1.xpose.msra.mxu0 0.0
    %2189 = vmatprep.subr.mxu0 0.0
    %2190 = vmatpush1.xpose.msra.mxu0 0.0
    %2191 = vmatprep.subr.mxu0 0.0
    %2192 = vmatpush1.xpose.msra.mxu0 0.0
    %2193 = vmatprep.mubr.f32.mxu0 0.0
    %2194 = vmatmul.mubr.f32.gmra.mrb[0].mxu0 %v2125
    %v2195 = vpop.f32.mrb[0].mxu0
    %v2196 = vadd.f32 %v103, %v2195
    %v2197 = vpop.f32.mrb[0].mxu0
    %2198 = vdwg.mxu0
    %v2199 = vmul.f32 %v1974, 0.17677669
    %v2200 = vmul.f32 %v2048, 0.17677669
    %v2201 = vmul.f32 %v2122, 0.17677669
    %v2202 = vmul.f32 %v2196, 0.17677669
    %v2203 = vsel %vm216, %v2199, -inf
    %2204 = vmax.xlane.f32.xlu0 %v2203
    %v2205 = vpop.xlane.xlu0 %2204
    %v2206 = vsel %vm216, %v2200, -inf
    %2207 = vmax.xlane.f32.xlu0 %v2206
    %v2208 = vpop.xlane.xlu0 %2207
    %v2209 = vsel %vm216, %v2201, -inf
    %2210 = vmax.xlane.f32.xlu0 %v2209
    %v2211 = vpop.xlane.xlu0 %2210
    %v2212 = vsel %vm216, %v2202, -inf
    %2213 = vmax.xlane.f32.xlu0 %v2212
    %v2214 = vpop.xlane.xlu0 %2213
    %v2215 = vsub.f32 %v2199, %v2205
    %v2216 = vsub.f32 %v2200, %v2208
    %v2217 = vsub.f32 %v2201, %v2211
    %v2218 = vsub.f32 %v2202, %v2214
    %v2219 = vmul.f32 %v2215, 1.442695
    %v2220 = vpow.pop %v2219
    %v2221 = vmul.f32 %v2216, 1.442695
    %v2222 = vpow.pop %v2221
    %v2223 = vmul.f32 %v2217, 1.442695
    %v2224 = vpow.pop %v2223
    %v2225 = vmul.f32 %v2218, 1.442695
    %v2226 = vpow.pop %v2225
    %v2227 = vsel %vm216, %v2220, 0.0
    %2228 = vadd.xlane.f32.xlu0 %v2227
    %v2229 = vpop.xlane.xlu0 %2228
    %v2230 = vsel %vm216, %v2222, 0.0
    %2231 = vadd.xlane.f32.xlu0 %v2230
    %v2232 = vpop.xlane.xlu0 %2231
    %v2233 = vsel %vm216, %v2224, 0.0
    %2234 = vadd.xlane.f32.xlu0 %v2233
    %v2235 = vpop.xlane.xlu0 %2234
    %v2236 = vsel %vm216, %v2226, 0.0
    %2237 = vadd.xlane.f32.xlu0 %v2236
    %v2238 = vpop.xlane.xlu0 %2237
    %v2239 = vrcp.pop %v2229
    %v2240 = vrcp.pop %v2232
    %v2241 = vrcp.pop %v2235
    %v2242 = vrcp.pop %v2238
    %v2243 = vmul.f32 %v2220, %v2239
    %v2244 = vmul.f32 %v2222, %v2240
    %v2245 = vmul.f32 %v2224, %v2241
    %v2246 = vmul.f32 %v2226, %v2242
    %2247 = vrot.lane.b32.xlu0 %v1881, 96
    %v2248 = vpop.permute.xlu0 %2247
    %v2251 = vsel %vm216, %v2243, 0
    %2253 = vmatprep.subr.mxu0 0.0
    %2254 = vmatpush1.msra.mxu0 %v2248
    %2255 = vmatprep.subr.mxu0 0.0
    %2256 = vmatpush1.msra.mxu0 0.0
    %2257 = vmatprep.subr.mxu0 0.0
    %2258 = vmatpush1.msra.mxu0 0.0
    %2259 = vmatprep.subr.mxu0 0.0
    %2260 = vmatpush1.msra.mxu0 0.0
    %2261 = vmatprep.subr.mxu0 0.0
    %2262 = vmatpush1.msra.mxu0 0.0
    %2263 = vmatprep.subr.mxu0 0.0
    %2264 = vmatpush1.msra.mxu0 0.0
    %2265 = vmatprep.subr.mxu0 0.0
    %2266 = vmatpush1.msra.mxu0 0.0
    %2267 = vmatprep.subr.mxu0 0.0
    %2268 = vmatpush1.msra.mxu0 0.0
    %2269 = vmatprep.subr.mxu0 0.0
    %2270 = vmatpush1.msra.mxu0 0.0
    %2271 = vmatprep.subr.mxu0 0.0
    %2272 = vmatpush1.msra.mxu0 0.0
    %2273 = vmatprep.subr.mxu0 0.0
    %2274 = vmatpush1.msra.mxu0 0.0
    %2275 = vmatprep.subr.mxu0 0.0
    %2276 = vmatpush1.msra.mxu0 0.0
    %2277 = vmatprep.subr.mxu0 0.0
    %2278 = vmatpush1.msra.mxu0 0.0
    %2279 = vmatprep.subr.mxu0 0.0
    %2280 = vmatpush1.msra.mxu0 0.0
    %2281 = vmatprep.subr.mxu0 0.0
    %2282 = vmatpush1.msra.mxu0 0.0
    %2283 = vmatprep.subr.mxu0 0.0
    %2284 = vmatpush1.msra.mxu0 0.0
    %2285 = vmatprep.subr.mxu0 0.0
    %2286 = vmatpush1.msra.mxu0 0.0
    %2287 = vmatprep.subr.mxu0 0.0
    %2288 = vmatpush1.msra.mxu0 0.0
    %2289 = vmatprep.subr.mxu0 0.0
    %2290 = vmatpush1.msra.mxu0 0.0
    %2291 = vmatprep.subr.mxu0 0.0
    %2292 = vmatpush1.msra.mxu0 0.0
    %2293 = vmatprep.subr.mxu0 0.0
    %2294 = vmatpush1.msra.mxu0 0.0
    %2295 = vmatprep.subr.mxu0 0.0
    %2296 = vmatpush1.msra.mxu0 0.0
    %2297 = vmatprep.subr.mxu0 0.0
    %2298 = vmatpush1.msra.mxu0 0.0
    %2299 = vmatprep.subr.mxu0 0.0
    %2300 = vmatpush1.msra.mxu0 0.0
    %2301 = vmatprep.subr.mxu0 0.0
    %2302 = vmatpush1.msra.mxu0 0.0
    %2303 = vmatprep.subr.mxu0 0.0
    %2304 = vmatpush1.msra.mxu0 0.0
    %2305 = vmatprep.subr.mxu0 0.0
    %2306 = vmatpush1.msra.mxu0 0.0
    %2307 = vmatprep.subr.mxu0 0.0
    %2308 = vmatpush1.msra.mxu0 0.0
    %2309 = vmatprep.subr.mxu0 0.0
    %2310 = vmatpush1.msra.mxu0 0.0
    %2311 = vmatprep.subr.mxu0 0.0
    %2312 = vmatpush1.msra.mxu0 0.0
    %2313 = vmatprep.subr.mxu0 0.0
    %2314 = vmatpush1.msra.mxu0 0.0
    %2315 = vmatprep.subr.mxu0 0.0
    %2316 = vmatpush1.msra.mxu0 0.0
    %2317 = vmatprep.mubr.f32.mxu0 0.0
    %2318 = vmatmul.mubr.f32.gmra.mrb[0].mxu0 %v2251
    %v2319 = vpop.f32.mrb[0].mxu0
    %v2320 = vadd.f32 0.0, %v2319
    %v2321 = vpop.f32.mrb[0].mxu0
    %2322 = vdwg.mxu0
    %2323 = vrot.lane.b32.xlu0 %v1898, 96
    %v2324 = vpop.permute.xlu0 %2323
    %v2327 = vsel %vm216, %v2244, 0
    %2329 = vmatprep.subr.mxu0 0.0
    %2330 = vmatpush1.msra.mxu0 %v2324
    %2331 = vmatprep.subr.mxu0 0.0
    %2332 = vmatpush1.msra.mxu0 0.0
    %2333 = vmatprep.subr.mxu0 0.0
    %2334 = vmatpush1.msra.mxu0 0.0
    %2335 = vmatprep.subr.mxu0 0.0
    %2336 = vmatpush1.msra.mxu0 0.0
    %2337 = vmatprep.subr.mxu0 0.0
    %2338 = vmatpush1.msra.mxu0 0.0
    %2339 = vmatprep.subr.mxu0 0.0
    %2340 = vmatpush1.msra.mxu0 0.0
    %2341 = vmatprep.subr.mxu0 0.0
    %2342 = vmatpush1.msra.mxu0 0.0
    %2343 = vmatprep.subr.mxu0 0.0
    %2344 = vmatpush1.msra.mxu0 0.0
    %2345 = vmatprep.subr.mxu0 0.0
    %2346 = vmatpush1.msra.mxu0 0.0
    %2347 = vmatprep.subr.mxu0 0.0
    %2348 = vmatpush1.msra.mxu0 0.0
    %2349 = vmatprep.subr.mxu0 0.0
    %2350 = vmatpush1.msra.mxu0 0.0
    %2351 = vmatprep.subr.mxu0 0.0
    %2352 = vmatpush1.msra.mxu0 0.0
    %2353 = vmatprep.subr.mxu0 0.0
    %2354 = vmatpush1.msra.mxu0 0.0
    %2355 = vmatprep.subr.mxu0 0.0
    %2356 = vmatpush1.msra.mxu0 0.0
    %2357 = vmatprep.subr.mxu0 0.0
    %2358 = vmatpush1.msra.mxu0 0.0
    %2359 = vmatprep.subr.mxu0 0.0
    %2360 = vmatpush1.msra.mxu0 0.0
    %2361 = vmatprep.subr.mxu0 0.0
    %2362 = vmatpush1.msra.mxu0 0.0
    %2363 = vmatprep.subr.mxu0 0.0
    %2364 = vmatpush1.msra.mxu0 0.0
    %2365 = vmatprep.subr.mxu0 0.0
    %2366 = vmatpush1.msra.mxu0 0.0
    %2367 = vmatprep.subr.mxu0 0.0
    %2368 = vmatpush1.msra.mxu0 0.0
    %2369 = vmatprep.subr.mxu0 0.0
    %2370 = vmatpush1.msra.mxu0 0.0
    %2371 = vmatprep.subr.mxu0 0.0
    %2372 = vmatpush1.msra.mxu0 0.0
    %2373 = vmatprep.subr.mxu0 0.0
    %2374 = vmatpush1.msra.mxu0 0.0
    %2375 = vmatprep.subr.mxu0 0.0
    %2376 = vmatpush1.msra.mxu0 0.0
    %2377 = vmatprep.subr.mxu0 0.0
    %2378 = vmatpush1.msra.mxu0 0.0
    %2379 = vmatprep.subr.mxu0 0.0
    %2380 = vmatpush1.msra.mxu0 0.0
    %2381 = vmatprep.subr.mxu0 0.0
    %2382 = vmatpush1.msra.mxu0 0.0
    %2383 = vmatprep.subr.mxu0 0.0
    %2384 = vmatpush1.msra.mxu0 0.0
    %2385 = vmatprep.subr.mxu0 0.0
    %2386 = vmatpush1.msra.mxu0 0.0
    %2387 = vmatprep.subr.mxu0 0.0
    %2388 = vmatpush1.msra.mxu0 0.0
    %2389 = vmatprep.subr.mxu0 0.0
    %2390 = vmatpush1.msra.mxu0 0.0
    %2391 = vmatprep.subr.mxu0 0.0
    %2392 = vmatpush1.msra.mxu0 0.0
    %2393 = vmatprep.mubr.f32.mxu0 0.0
    %2394 = vmatmul.mubr.f32.gmra.mrb[0].mxu0 %v2327
    %v2395 = vpop.f32.mrb[0].mxu0
    %v2396 = vadd.f32 0.0, %v2395
    %v2397 = vpop.f32.mrb[0].mxu0
    %2398 = vdwg.mxu0
    %2399 = vrot.lane.b32.xlu0 %v1900, 96
    %v2400 = vpop.permute.xlu0 %2399
    %v2403 = vsel %vm216, %v2245, 0
    %2405 = vmatprep.subr.mxu0 0.0
    %2406 = vmatpush1.msra.mxu0 %v2400
    %2407 = vmatprep.subr.mxu0 0.0
    %2408 = vmatpush1.msra.mxu0 0.0
    %2409 = vmatprep.subr.mxu0 0.0
    %2410 = vmatpush1.msra.mxu0 0.0
    %2411 = vmatprep.subr.mxu0 0.0
    %2412 = vmatpush1.msra.mxu0 0.0
    %2413 = vmatprep.subr.mxu0 0.0
    %2414 = vmatpush1.msra.mxu0 0.0
    %2415 = vmatprep.subr.mxu0 0.0
    %2416 = vmatpush1.msra.mxu0 0.0
    %2417 = vmatprep.subr.mxu0 0.0
    %2418 = vmatpush1.msra.mxu0 0.0
    %2419 = vmatprep.subr.mxu0 0.0
    %2420 = vmatpush1.msra.mxu0 0.0
    %2421 = vmatprep.subr.mxu0 0.0
    %2422 = vmatpush1.msra.mxu0 0.0
    %2423 = vmatprep.subr.mxu0 0.0
    %2424 = vmatpush1.msra.mxu0 0.0
    %2425 = vmatprep.subr.mxu0 0.0
    %2426 = vmatpush1.msra.mxu0 0.0
    %2427 = vmatprep.subr.mxu0 0.0
    %2428 = vmatpush1.msra.mxu0 0.0
    %2429 = vmatprep.subr.mxu0 0.0
    %2430 = vmatpush1.msra.mxu0 0.0
    %2431 = vmatprep.subr.mxu0 0.0
    %2432 = vmatpush1.msra.mxu0 0.0
    %2433 = vmatprep.subr.mxu0 0.0
    %2434 = vmatpush1.msra.mxu0 0.0
    %2435 = vmatprep.subr.mxu0 0.0
    %2436 = vmatpush1.msra.mxu0 0.0
    %2437 = vmatprep.subr.mxu0 0.0
    %2438 = vmatpush1.msra.mxu0 0.0
    %2439 = vmatprep.subr.mxu0 0.0
    %2440 = vmatpush1.msra.mxu0 0.0
    %2441 = vmatprep.subr.mxu0 0.0
    %2442 = vmatpush1.msra.mxu0 0.0
    %2443 = vmatprep.subr.mxu0 0.0
    %2444 = vmatpush1.msra.mxu0 0.0
    %2445 = vmatprep.subr.mxu0 0.0
    %2446 = vmatpush1.msra.mxu0 0.0
    %2447 = vmatprep.subr.mxu0 0.0
    %2448 = vmatpush1.msra.mxu0 0.0
    %2449 = vmatprep.subr.mxu0 0.0
    %2450 = vmatpush1.msra.mxu0 0.0
    %2451 = vmatprep.subr.mxu0 0.0
    %2452 = vmatpush1.msra.mxu0 0.0
    %2453 = vmatprep.subr.mxu0 0.0
    %2454 = vmatpush1.msra.mxu0 0.0
    %2455 = vmatprep.subr.mxu0 0.0
    %2456 = vmatpush1.msra.mxu0 0.0
    %2457 = vmatprep.subr.mxu0 0.0
    %2458 = vmatpush1.msra.mxu0 0.0
    %2459 = vmatprep.subr.mxu0 0.0
    %2460 = vmatpush1.msra.mxu0 0.0
    %2461 = vmatprep.subr.mxu0 0.0
    %2462 = vmatpush1.msra.mxu0 0.0
    %2463 = vmatprep.subr.mxu0 0.0
    %2464 = vmatpush1.msra.mxu0 0.0
    %2465 = vmatprep.subr.mxu0 0.0
    %2466 = vmatpush1.msra.mxu0 0.0
    %2467 = vmatprep.subr.mxu0 0.0
    %2468 = vmatpush1.msra.mxu0 0.0
    %2469 = vmatprep.mubr.f32.mxu0 0.0
    %2470 = vmatmul.mubr.f32.gmra.mrb[0].mxu0 %v2403
    %v2471 = vpop.f32.mrb[0].mxu0
    %v2472 = vadd.f32 0.0, %v2471
    %v2473 = vpop.f32.mrb[0].mxu0
    %2474 = vdwg.mxu0
    %2475 = vrot.lane.b32.xlu0 %v1902, 96
    %v2476 = vpop.permute.xlu0 %2475
    %v2479 = vsel %vm216, %v2246, 0
    %2481 = vmatprep.subr.mxu0 0.0
    %2482 = vmatpush1.msra.mxu0 %v2476
    %2483 = vmatprep.subr.mxu0 0.0
    %2484 = vmatpush1.msra.mxu0 0.0
    %2485 = vmatprep.subr.mxu0 0.0
    %2486 = vmatpush1.msra.mxu0 0.0
    %2487 = vmatprep.subr.mxu0 0.0
    %2488 = vmatpush1.msra.mxu0 0.0
    %2489 = vmatprep.subr.mxu0 0.0
    %2490 = vmatpush1.msra.mxu0 0.0
    %2491 = vmatprep.subr.mxu0 0.0
    %2492 = vmatpush1.msra.mxu0 0.0
    %2493 = vmatprep.subr.mxu0 0.0
    %2494 = vmatpush1.msra.mxu0 0.0
    %2495 = vmatprep.subr.mxu0 0.0
    %2496 = vmatpush1.msra.mxu0 0.0
    %2497 = vmatprep.subr.mxu0 0.0
    %2498 = vmatpush1.msra.mxu0 0.0
    %2499 = vmatprep.subr.mxu0 0.0
    %2500 = vmatpush1.msra.mxu0 0.0
    %2501 = vmatprep.subr.mxu0 0.0
    %2502 = vmatpush1.msra.mxu0 0.0
    %2503 = vmatprep.subr.mxu0 0.0
    %2504 = vmatpush1.msra.mxu0 0.0
    %2505 = vmatprep.subr.mxu0 0.0
    %2506 = vmatpush1.msra.mxu0 0.0
    %2507 = vmatprep.subr.mxu0 0.0
    %2508 = vmatpush1.msra.mxu0 0.0
    %2509 = vmatprep.subr.mxu0 0.0
    %2510 = vmatpush1.msra.mxu0 0.0
    %2511 = vmatprep.subr.mxu0 0.0
    %2512 = vmatpush1.msra.mxu0 0.0
    %2513 = vmatprep.subr.mxu0 0.0
    %2514 = vmatpush1.msra.mxu0 0.0
    %2515 = vmatprep.subr.mxu0 0.0
    %2516 = vmatpush1.msra.mxu0 0.0
    %2517 = vmatprep.subr.mxu0 0.0
    %2518 = vmatpush1.msra.mxu0 0.0
    %2519 = vmatprep.subr.mxu0 0.0
    %2520 = vmatpush1.msra.mxu0 0.0
    %2521 = vmatprep.subr.mxu0 0.0
    %2522 = vmatpush1.msra.mxu0 0.0
    %2523 = vmatprep.subr.mxu0 0.0
    %2524 = vmatpush1.msra.mxu0 0.0
    %2525 = vmatprep.subr.mxu0 0.0
    %2526 = vmatpush1.msra.mxu0 0.0
    %2527 = vmatprep.subr.mxu0 0.0
    %2528 = vmatpush1.msra.mxu0 0.0
    %2529 = vmatprep.subr.mxu0 0.0
    %2530 = vmatpush1.msra.mxu0 0.0
    %2531 = vmatprep.subr.mxu0 0.0
    %2532 = vmatpush1.msra.mxu0 0.0
    %2533 = vmatprep.subr.mxu0 0.0
    %2534 = vmatpush1.msra.mxu0 0.0
    %2535 = vmatprep.subr.mxu0 0.0
    %2536 = vmatpush1.msra.mxu0 0.0
    %2537 = vmatprep.subr.mxu0 0.0
    %2538 = vmatpush1.msra.mxu0 0.0
    %2539 = vmatprep.subr.mxu0 0.0
    %2540 = vmatpush1.msra.mxu0 0.0
    %2541 = vmatprep.subr.mxu0 0.0
    %2542 = vmatpush1.msra.mxu0 0.0
    %2543 = vmatprep.subr.mxu0 0.0
    %2544 = vmatpush1.msra.mxu0 0.0
    %2545 = vmatprep.mubr.f32.mxu0 0.0
    %2546 = vmatmul.mubr.f32.gmra.mrb[0].mxu0 %v2479
    %v2547 = vpop.f32.mrb[0].mxu0
    %v2548 = vadd.f32 0.0, %v2547
    %v2549 = vpop.f32.mrb[0].mxu0
    %2550 = vdwg.mxu0
    %2552 = vrot.lane.b32.xlu0 %v2396, 8
    %v2553 = vpop.permute.xlu0 %2552
    %2556 = vrot.lane.b32.xlu0 %v2472, 16
    %v2557 = vpop.permute.xlu0 %2556
    %2560 = vrot.lane.b32.xlu0 %v2548, 24
    %v2561 = vpop.permute.xlu0 %2560
    %v2563 = vsel %vm216, %v2320, %v2553
    %v2564 = vsel %vm884, %v2563, %v2557
    %v2565 = vsel %vm886, %v2564, %v2561
    %2567 = vrot.lane.b32.xlu0 %v1794, 120
    %v2568 = vpop.permute.xlu0 %2567
    %2569 = vrot.lane.b32.xlu0 %v1794, 112
    %v2570 = vpop.permute.xlu0 %2569
    %2571 = vrot.lane.b32.xlu0 %v1794, 104
    %v2572 = vpop.permute.xlu0 %2571
    %2574 = vrot.lane.b32.xlu0 %v1886, 120
    %v2575 = vpop.permute.xlu0 %2574
    %2576 = vrot.lane.b32.xlu0 %v1886, 112
    %v2577 = vpop.permute.xlu0 %2576
    %2578 = vrot.lane.b32.xlu0 %v1886, 104
    %v2579 = vpop.permute.xlu0 %2578
    %v2580 = vsel %vm216, %v1794, 0
    %v2582 = vsel %vm216, %v1886, 0
    %2584 = vmatprep.subr.mxu0 0.0
    %2585 = vmatpush1.xpose.msra.mxu0 %v2582
    %2586 = vmatprep.subr.mxu0 0.0
    %2587 = vmatpush1.xpose.msra.mxu0 0.0
    %2588 = vmatprep.subr.mxu0 0.0
    %2589 = vmatpush1.xpose.msra.mxu0 0.0
    %2590 = vmatprep.subr.mxu0 0.0
    %2591 = vmatpush1.xpose.msra.mxu0 0.0
    %2592 = vmatprep.subr.mxu0 0.0
    %2593 = vmatpush1.xpose.msra.mxu0 0.0
    %2594 = vmatprep.subr.mxu0 0.0
    %2595 = vmatpush1.xpose.msra.mxu0 0.0
    %2596 = vmatprep.subr.mxu0 0.0
    %2597 = vmatpush1.xpose.msra.mxu0 0.0
    %2598 = vmatprep.subr.mxu0 0.0
    %2599 = vmatpush1.xpose.msra.mxu0 0.0
    %2600 = vmatprep.subr.mxu0 0.0
    %2601 = vmatpush1.xpose.msra.mxu0 0.0
    %2602 = vmatprep.subr.mxu0 0.0
    %2603 = vmatpush1.xpose.msra.mxu0 0.0
    %2604 = vmatprep.subr.mxu0 0.0
    %2605 = vmatpush1.xpose.msra.mxu0 0.0
    %2606 = vmatprep.subr.mxu0 0.0
    %2607 = vmatpush1.xpose.msra.mxu0 0.0
    %2608 = vmatprep.subr.mxu0 0.0
    %2609 = vmatpush1.xpose.msra.mxu0 0.0
    %2610 = vmatprep.subr.mxu0 0.0
    %2611 = vmatpush1.xpose.msra.mxu0 0.0
    %2612 = vmatprep.subr.mxu0 0.0
    %2613 = vmatpush1.xpose.msra.mxu0 0.0
    %2614 = vmatprep.subr.mxu0 0.0
    %2615 = vmatpush1.xpose.msra.mxu0 0.0
    %2616 = vmatprep.subr.mxu0 0.0
    %2617 = vmatpush1.xpose.msra.mxu0 0.0
    %2618 = vmatprep.subr.mxu0 0.0
    %2619 = vmatpush1.xpose.msra.mxu0 0.0
    %2620 = vmatprep.subr.mxu0 0.0
    %2621 = vmatpush1.xpose.msra.mxu0 0.0
    %2622 = vmatprep.subr.mxu0 0.0
    %2623 = vmatpush1.xpose.msra.mxu0 0.0
    %2624 = vmatprep.subr.mxu0 0.0
    %2625 = vmatpush1.xpose.msra.mxu0 0.0
    %2626 = vmatprep.subr.mxu0 0.0
    %2627 = vmatpush1.xpose.msra.mxu0 0.0
    %2628 = vmatprep.subr.mxu0 0.0
    %2629 = vmatpush1.xpose.msra.mxu0 0.0
    %2630 = vmatprep.subr.mxu0 0.0
    %2631 = vmatpush1.xpose.msra.mxu0 0.0
    %2632 = vmatprep.subr.mxu0 0.0
    %2633 = vmatpush1.xpose.msra.mxu0 0.0
    %2634 = vmatprep.subr.mxu0 0.0
    %2635 = vmatpush1.xpose.msra.mxu0 0.0
    %2636 = vmatprep.subr.mxu0 0.0
    %2637 = vmatpush1.xpose.msra.mxu0 0.0
    %2638 = vmatprep.subr.mxu0 0.0
    %2639 = vmatpush1.xpose.msra.mxu0 0.0
    %2640 = vmatprep.subr.mxu0 0.0
    %2641 = vmatpush1.xpose.msra.mxu0 0.0
    %2642 = vmatprep.subr.mxu0 0.0
    %2643 = vmatpush1.xpose.msra.mxu0 0.0
    %2644 = vmatprep.subr.mxu0 0.0
    %2645 = vmatpush1.xpose.msra.mxu0 0.0
    %2646 = vmatprep.subr.mxu0 0.0
    %2647 = vmatpush1.xpose.msra.mxu0 0.0
    %2648 = vmatprep.mubr.f32.mxu0 0.0
    %2649 = vmatmul.mubr.f32.gmra.mrb[0].mxu0 %v2580
    %v2650 = vpop.f32.mrb[0].mxu0
    %v2651 = vadd.f32 %v113, %v2650
    %v2652 = vpop.f32.mrb[0].mxu0
    %2653 = vdwg.mxu0
    %v2654 = vsel %vm216, %v2568, 0
    %v2656 = vsel %vm216, %v2575, 0
    %2658 = vmatprep.subr.mxu0 0.0
    %2659 = vmatpush1.xpose.msra.mxu0 %v2656
    %2660 = vmatprep.subr.mxu0 0.0
    %2661 = vmatpush1.xpose.msra.mxu0 0.0
    %2662 = vmatprep.subr.mxu0 0.0
    %2663 = vmatpush1.xpose.msra.mxu0 0.0
    %2664 = vmatprep.subr.mxu0 0.0
    %2665 = vmatpush1.xpose.msra.mxu0 0.0
    %2666 = vmatprep.subr.mxu0 0.0
    %2667 = vmatpush1.xpose.msra.mxu0 0.0
    %2668 = vmatprep.subr.mxu0 0.0
    %2669 = vmatpush1.xpose.msra.mxu0 0.0
    %2670 = vmatprep.subr.mxu0 0.0
    %2671 = vmatpush1.xpose.msra.mxu0 0.0
    %2672 = vmatprep.subr.mxu0 0.0
    %2673 = vmatpush1.xpose.msra.mxu0 0.0
    %2674 = vmatprep.subr.mxu0 0.0
    %2675 = vmatpush1.xpose.msra.mxu0 0.0
    %2676 = vmatprep.subr.mxu0 0.0
    %2677 = vmatpush1.xpose.msra.mxu0 0.0
    %2678 = vmatprep.subr.mxu0 0.0
    %2679 = vmatpush1.xpose.msra.mxu0 0.0
    %2680 = vmatprep.subr.mxu0 0.0
    %2681 = vmatpush1.xpose.msra.mxu0 0.0
    %2682 = vmatprep.subr.mxu0 0.0
    %2683 = vmatpush1.xpose.msra.mxu0 0.0
    %2684 = vmatprep.subr.mxu0 0.0
    %2685 = vmatpush1.xpose.msra.mxu0 0.0
    %2686 = vmatprep.subr.mxu0 0.0
    %2687 = vmatpush1.xpose.msra.mxu0 0.0
    %2688 = vmatprep.subr.mxu0 0.0
    %2689 = vmatpush1.xpose.msra.mxu0 0.0
    %2690 = vmatprep.subr.mxu0 0.0
    %2691 = vmatpush1.xpose.msra.mxu0 0.0
    %2692 = vmatprep.subr.mxu0 0.0
    %2693 = vmatpush1.xpose.msra.mxu0 0.0
    %2694 = vmatprep.subr.mxu0 0.0
    %2695 = vmatpush1.xpose.msra.mxu0 0.0
    %2696 = vmatprep.subr.mxu0 0.0
    %2697 = vmatpush1.xpose.msra.mxu0 0.0
    %2698 = vmatprep.subr.mxu0 0.0
    %2699 = vmatpush1.xpose.msra.mxu0 0.0
    %2700 = vmatprep.subr.mxu0 0.0
    %2701 = vmatpush1.xpose.msra.mxu0 0.0
    %2702 = vmatprep.subr.mxu0 0.0
    %2703 = vmatpush1.xpose.msra.mxu0 0.0
    %2704 = vmatprep.subr.mxu0 0.0
    %2705 = vmatpush1.xpose.msra.mxu0 0.0
    %2706 = vmatprep.subr.mxu0 0.0
    %2707 = vmatpush1.xpose.msra.mxu0 0.0
    %2708 = vmatprep.subr.mxu0 0.0
    %2709 = vmatpush1.xpose.msra.mxu0 0.0
    %2710 = vmatprep.subr.mxu0 0.0
    %2711 = vmatpush1.xpose.msra.mxu0 0.0
    %2712 = vmatprep.subr.mxu0 0.0
    %2713 = vmatpush1.xpose.msra.mxu0 0.0
    %2714 = vmatprep.subr.mxu0 0.0
    %2715 = vmatpush1.xpose.msra.mxu0 0.0
    %2716 = vmatprep.subr.mxu0 0.0
    %2717 = vmatpush1.xpose.msra.mxu0 0.0
    %2718 = vmatprep.subr.mxu0 0.0
    %2719 = vmatpush1.xpose.msra.mxu0 0.0
    %2720 = vmatprep.subr.mxu0 0.0
    %2721 = vmatpush1.xpose.msra.mxu0 0.0
    %2722 = vmatprep.mubr.f32.mxu0 0.0
    %2723 = vmatmul.mubr.f32.gmra.mrb[0].mxu0 %v2654
    %v2724 = vpop.f32.mrb[0].mxu0
    %v2725 = vadd.f32 %v113, %v2724
    %v2726 = vpop.f32.mrb[0].mxu0
    %2727 = vdwg.mxu0
    %v2728 = vsel %vm216, %v2570, 0
    %v2730 = vsel %vm216, %v2577, 0
    %2732 = vmatprep.subr.mxu0 0.0
    %2733 = vmatpush1.xpose.msra.mxu0 %v2730
    %2734 = vmatprep.subr.mxu0 0.0
    %2735 = vmatpush1.xpose.msra.mxu0 0.0
    %2736 = vmatprep.subr.mxu0 0.0
    %2737 = vmatpush1.xpose.msra.mxu0 0.0
    %2738 = vmatprep.subr.mxu0 0.0
    %2739 = vmatpush1.xpose.msra.mxu0 0.0
    %2740 = vmatprep.subr.mxu0 0.0
    %2741 = vmatpush1.xpose.msra.mxu0 0.0
    %2742 = vmatprep.subr.mxu0 0.0
    %2743 = vmatpush1.xpose.msra.mxu0 0.0
    %2744 = vmatprep.subr.mxu0 0.0
    %2745 = vmatpush1.xpose.msra.mxu0 0.0
    %2746 = vmatprep.subr.mxu0 0.0
    %2747 = vmatpush1.xpose.msra.mxu0 0.0
    %2748 = vmatprep.subr.mxu0 0.0
    %2749 = vmatpush1.xpose.msra.mxu0 0.0
    %2750 = vmatprep.subr.mxu0 0.0
    %2751 = vmatpush1.xpose.msra.mxu0 0.0
    %2752 = vmatprep.subr.mxu0 0.0
    %2753 = vmatpush1.xpose.msra.mxu0 0.0
    %2754 = vmatprep.subr.mxu0 0.0
    %2755 = vmatpush1.xpose.msra.mxu0 0.0
    %2756 = vmatprep.subr.mxu0 0.0
    %2757 = vmatpush1.xpose.msra.mxu0 0.0
    %2758 = vmatprep.subr.mxu0 0.0
    %2759 = vmatpush1.xpose.msra.mxu0 0.0
    %2760 = vmatprep.subr.mxu0 0.0
    %2761 = vmatpush1.xpose.msra.mxu0 0.0
    %2762 = vmatprep.subr.mxu0 0.0
    %2763 = vmatpush1.xpose.msra.mxu0 0.0
    %2764 = vmatprep.subr.mxu0 0.0
    %2765 = vmatpush1.xpose.msra.mxu0 0.0
    %2766 = vmatprep.subr.mxu0 0.0
    %2767 = vmatpush1.xpose.msra.mxu0 0.0
    %2768 = vmatprep.subr.mxu0 0.0
    %2769 = vmatpush1.xpose.msra.mxu0 0.0
    %2770 = vmatprep.subr.mxu0 0.0
    %2771 = vmatpush1.xpose.msra.mxu0 0.0
    %2772 = vmatprep.subr.mxu0 0.0
    %2773 = vmatpush1.xpose.msra.mxu0 0.0
    %2774 = vmatprep.subr.mxu0 0.0
    %2775 = vmatpush1.xpose.msra.mxu0 0.0
    %2776 = vmatprep.subr.mxu0 0.0
    %2777 = vmatpush1.xpose.msra.mxu0 0.0
    %2778 = vmatprep.subr.mxu0 0.0
    %2779 = vmatpush1.xpose.msra.mxu0 0.0
    %2780 = vmatprep.subr.mxu0 0.0
    %2781 = vmatpush1.xpose.msra.mxu0 0.0
    %2782 = vmatprep.subr.mxu0 0.0
    %2783 = vmatpush1.xpose.msra.mxu0 0.0
    %2784 = vmatprep.subr.mxu0 0.0
    %2785 = vmatpush1.xpose.msra.mxu0 0.0
    %2786 = vmatprep.subr.mxu0 0.0
    %2787 = vmatpush1.xpose.msra.mxu0 0.0
    %2788 = vmatprep.subr.mxu0 0.0
    %2789 = vmatpush1.xpose.msra.mxu0 0.0
    %2790 = vmatprep.subr.mxu0 0.0
    %2791 = vmatpush1.xpose.msra.mxu0 0.0
    %2792 = vmatprep.subr.mxu0 0.0
    %2793 = vmatpush1.xpose.msra.mxu0 0.0
    %2794 = vmatprep.subr.mxu0 0.0
    %2795 = vmatpush1.xpose.msra.mxu0 0.0
    %2796 = vmatprep.mubr.f32.mxu0 0.0
    %2797 = vmatmul.mubr.f32.gmra.mrb[0].mxu0 %v2728
    %v2798 = vpop.f32.mrb[0].mxu0
    %v2799 = vadd.f32 %v113, %v2798
    %v2800 = vpop.f32.mrb[0].mxu0
    %2801 = vdwg.mxu0
    %v2802 = vsel %vm216, %v2572, 0
    %v2804 = vsel %vm216, %v2579, 0
    %2806 = vmatprep.subr.mxu0 0.0
    %2807 = vmatpush1.xpose.msra.mxu0 %v2804
    %2808 = vmatprep.subr.mxu0 0.0
    %2809 = vmatpush1.xpose.msra.mxu0 0.0
    %2810 = vmatprep.subr.mxu0 0.0
    %2811 = vmatpush1.xpose.msra.mxu0 0.0
    %2812 = vmatprep.subr.mxu0 0.0
    %2813 = vmatpush1.xpose.msra.mxu0 0.0
    %2814 = vmatprep.subr.mxu0 0.0
    %2815 = vmatpush1.xpose.msra.mxu0 0.0
    %2816 = vmatprep.subr.mxu0 0.0
    %2817 = vmatpush1.xpose.msra.mxu0 0.0
    %2818 = vmatprep.subr.mxu0 0.0
    %2819 = vmatpush1.xpose.msra.mxu0 0.0
    %2820 = vmatprep.subr.mxu0 0.0
    %2821 = vmatpush1.xpose.msra.mxu0 0.0
    %2822 = vmatprep.subr.mxu0 0.0
    %2823 = vmatpush1.xpose.msra.mxu0 0.0
    %2824 = vmatprep.subr.mxu0 0.0
    %2825 = vmatpush1.xpose.msra.mxu0 0.0
    %2826 = vmatprep.subr.mxu0 0.0
    %2827 = vmatpush1.xpose.msra.mxu0 0.0
    %2828 = vmatprep.subr.mxu0 0.0
    %2829 = vmatpush1.xpose.msra.mxu0 0.0
    %2830 = vmatprep.subr.mxu0 0.0
    %2831 = vmatpush1.xpose.msra.mxu0 0.0
    %2832 = vmatprep.subr.mxu0 0.0
    %2833 = vmatpush1.xpose.msra.mxu0 0.0
    %2834 = vmatprep.subr.mxu0 0.0
    %2835 = vmatpush1.xpose.msra.mxu0 0.0
    %2836 = vmatprep.subr.mxu0 0.0
    %2837 = vmatpush1.xpose.msra.mxu0 0.0
    %2838 = vmatprep.subr.mxu0 0.0
    %2839 = vmatpush1.xpose.msra.mxu0 0.0
    %2840 = vmatprep.subr.mxu0 0.0
    %2841 = vmatpush1.xpose.msra.mxu0 0.0
    %2842 = vmatprep.subr.mxu0 0.0
    %2843 = vmatpush1.xpose.msra.mxu0 0.0
    %2844 = vmatprep.subr.mxu0 0.0
    %2845 = vmatpush1.xpose.msra.mxu0 0.0
    %2846 = vmatprep.subr.mxu0 0.0
    %2847 = vmatpush1.xpose.msra.mxu0 0.0
    %2848 = vmatprep.subr.mxu0 0.0
    %2849 = vmatpush1.xpose.msra.mxu0 0.0
    %2850 = vmatprep.subr.mxu0 0.0
    %2851 = vmatpush1.xpose.msra.mxu0 0.0
    %2852 = vmatprep.subr.mxu0 0.0
    %2853 = vmatpush1.xpose.msra.mxu0 0.0
    %2854 = vmatprep.subr.mxu0 0.0
    %2855 = vmatpush1.xpose.msra.mxu0 0.0
    %2856 = vmatprep.subr.mxu0 0.0
    %2857 = vmatpush1.xpose.msra.mxu0 0.0
    %2858 = vmatprep.subr.mxu0 0.0
    %2859 = vmatpush1.xpose.msra.mxu0 0.0
    %2860 = vmatprep.subr.mxu0 0.0
    %2861 = vmatpush1.xpose.msra.mxu0 0.0
    %2862 = vmatprep.subr.mxu0 0.0
    %2863 = vmatpush1.xpose.msra.mxu0 0.0
    %2864 = vmatprep.subr.mxu0 0.0
    %2865 = vmatpush1.xpose.msra.mxu0 0.0
    %2866 = vmatprep.subr.mxu0 0.0
    %2867 = vmatpush1.xpose.msra.mxu0 0.0
    %2868 = vmatprep.subr.mxu0 0.0
    %2869 = vmatpush1.xpose.msra.mxu0 0.0
    %2870 = vmatprep.mubr.f32.mxu0 0.0
    %2871 = vmatmul.mubr.f32.gmra.mrb[0].mxu0 %v2802
    %v2872 = vpop.f32.mrb[0].mxu0
    %v2873 = vadd.f32 %v113, %v2872
    %v2874 = vpop.f32.mrb[0].mxu0
    %2875 = vdwg.mxu0
    %v2876 = vmul.f32 %v2651, 0.17677669
    %v2877 = vmul.f32 %v2725, 0.17677669
    %v2878 = vmul.f32 %v2799, 0.17677669
    %v2879 = vmul.f32 %v2873, 0.17677669
    %v2880 = vsel %vm216, %v2876, -inf
    %2881 = vmax.xlane.f32.xlu0 %v2880
    %v2882 = vpop.xlane.xlu0 %2881
    %v2883 = vsel %vm216, %v2877, -inf
    %2884 = vmax.xlane.f32.xlu0 %v2883
    %v2885 = vpop.xlane.xlu0 %2884
    %v2886 = vsel %vm216, %v2878, -inf
    %2887 = vmax.xlane.f32.xlu0 %v2886
    %v2888 = vpop.xlane.xlu0 %2887
    %v2889 = vsel %vm216, %v2879, -inf
    %2890 = vmax.xlane.f32.xlu0 %v2889
    %v2891 = vpop.xlane.xlu0 %2890
    %v2892 = vsub.f32 %v2876, %v2882
    %v2893 = vsub.f32 %v2877, %v2885
    %v2894 = vsub.f32 %v2878, %v2888
    %v2895 = vsub.f32 %v2879, %v2891
    %v2896 = vmul.f32 %v2892, 1.442695
    %v2897 = vpow.pop %v2896
    %v2898 = vmul.f32 %v2893, 1.442695
    %v2899 = vpow.pop %v2898
    %v2900 = vmul.f32 %v2894, 1.442695
    %v2901 = vpow.pop %v2900
    %v2902 = vmul.f32 %v2895, 1.442695
    %v2903 = vpow.pop %v2902
    %v2904 = vsel %vm216, %v2897, 0.0
    %2905 = vadd.xlane.f32.xlu0 %v2904
    %v2906 = vpop.xlane.xlu0 %2905
    %v2907 = vsel %vm216, %v2899, 0.0
    %2908 = vadd.xlane.f32.xlu0 %v2907
    %v2909 = vpop.xlane.xlu0 %2908
    %v2910 = vsel %vm216, %v2901, 0.0
    %2911 = vadd.xlane.f32.xlu0 %v2910
    %v2912 = vpop.xlane.xlu0 %2911
    %v2913 = vsel %vm216, %v2903, 0.0
    %2914 = vadd.xlane.f32.xlu0 %v2913
    %v2915 = vpop.xlane.xlu0 %2914
    %v2916 = vrcp.pop %v2906
    %v2917 = vrcp.pop %v2909
    %v2918 = vrcp.pop %v2912
    %v2919 = vrcp.pop %v2915
    %v2920 = vmul.f32 %v2897, %v2916
    %v2921 = vmul.f32 %v2899, %v2917
    %v2922 = vmul.f32 %v2901, %v2918
    %v2923 = vmul.f32 %v2903, %v2919
    %2924 = vrot.lane.b32.xlu0 %v1886, 96
    %v2925 = vpop.permute.xlu0 %2924
    %v2928 = vsel %vm216, %v2920, 0
    %2930 = vmatprep.subr.mxu0 0.0
    %2931 = vmatpush1.msra.mxu0 %v2925
    %2932 = vmatprep.subr.mxu0 0.0
    %2933 = vmatpush1.msra.mxu0 0.0
    %2934 = vmatprep.subr.mxu0 0.0
    %2935 = vmatpush1.msra.mxu0 0.0
    %2936 = vmatprep.subr.mxu0 0.0
    %2937 = vmatpush1.msra.mxu0 0.0
    %2938 = vmatprep.subr.mxu0 0.0
    %2939 = vmatpush1.msra.mxu0 0.0
    %2940 = vmatprep.subr.mxu0 0.0
    %2941 = vmatpush1.msra.mxu0 0.0
    %2942 = vmatprep.subr.mxu0 0.0
    %2943 = vmatpush1.msra.mxu0 0.0
    %2944 = vmatprep.subr.mxu0 0.0
    %2945 = vmatpush1.msra.mxu0 0.0
    %2946 = vmatprep.subr.mxu0 0.0
    %2947 = vmatpush1.msra.mxu0 0.0
    %2948 = vmatprep.subr.mxu0 0.0
    %2949 = vmatpush1.msra.mxu0 0.0
    %2950 = vmatprep.subr.mxu0 0.0
    %2951 = vmatpush1.msra.mxu0 0.0
    %2952 = vmatprep.subr.mxu0 0.0
    %2953 = vmatpush1.msra.mxu0 0.0
    %2954 = vmatprep.subr.mxu0 0.0
    %2955 = vmatpush1.msra.mxu0 0.0
    %2956 = vmatprep.subr.mxu0 0.0
    %2957 = vmatpush1.msra.mxu0 0.0
    %2958 = vmatprep.subr.mxu0 0.0
    %2959 = vmatpush1.msra.mxu0 0.0
    %2960 = vmatprep.subr.mxu0 0.0
    %2961 = vmatpush1.msra.mxu0 0.0
    %2962 = vmatprep.subr.mxu0 0.0
    %2963 = vmatpush1.msra.mxu0 0.0
    %2964 = vmatprep.subr.mxu0 0.0
    %2965 = vmatpush1.msra.mxu0 0.0
    %2966 = vmatprep.subr.mxu0 0.0
    %2967 = vmatpush1.msra.mxu0 0.0
    %2968 = vmatprep.subr.mxu0 0.0
    %2969 = vmatpush1.msra.mxu0 0.0
    %2970 = vmatprep.subr.mxu0 0.0
    %2971 = vmatpush1.msra.mxu0 0.0
    %2972 = vmatprep.subr.mxu0 0.0
    %2973 = vmatpush1.msra.mxu0 0.0
    %2974 = vmatprep.subr.mxu0 0.0
    %2975 = vmatpush1.msra.mxu0 0.0
    %2976 = vmatprep.subr.mxu0 0.0
    %2977 = vmatpush1.msra.mxu0 0.0
    %2978 = vmatprep.subr.mxu0 0.0
    %2979 = vmatpush1.msra.mxu0 0.0
    %2980 = vmatprep.subr.mxu0 0.0
    %2981 = vmatpush1.msra.mxu0 0.0
    %2982 = vmatprep.subr.mxu0 0.0
    %2983 = vmatpush1.msra.mxu0 0.0
    %2984 = vmatprep.subr.mxu0 0.0
    %2985 = vmatpush1.msra.mxu0 0.0
    %2986 = vmatprep.subr.mxu0 0.0
    %2987 = vmatpush1.msra.mxu0 0.0
    %2988 = vmatprep.subr.mxu0 0.0
    %2989 = vmatpush1.msra.mxu0 0.0
    %2990 = vmatprep.subr.mxu0 0.0
    %2991 = vmatpush1.msra.mxu0 0.0
    %2992 = vmatprep.subr.mxu0 0.0
    %2993 = vmatpush1.msra.mxu0 0.0
    %2994 = vmatprep.mubr.f32.mxu0 0.0
    %2995 = vmatmul.mubr.f32.gmra.mrb[0].mxu0 %v2928
    %v2996 = vpop.f32.mrb[0].mxu0
    %v2997 = vadd.f32 0.0, %v2996
    %v2998 = vpop.f32.mrb[0].mxu0
    %2999 = vdwg.mxu0
    %3000 = vrot.lane.b32.xlu0 %v2575, 96
    %v3001 = vpop.permute.xlu0 %3000
    %v3004 = vsel %vm216, %v2921, 0
    %3006 = vmatprep.subr.mxu0 0.0
    %3007 = vmatpush1.msra.mxu0 %v3001
    %3008 = vmatprep.subr.mxu0 0.0
    %3009 = vmatpush1.msra.mxu0 0.0
    %3010 = vmatprep.subr.mxu0 0.0
    %3011 = vmatpush1.msra.mxu0 0.0
    %3012 = vmatprep.subr.mxu0 0.0
    %3013 = vmatpush1.msra.mxu0 0.0
    %3014 = vmatprep.subr.mxu0 0.0
    %3015 = vmatpush1.msra.mxu0 0.0
    %3016 = vmatprep.subr.mxu0 0.0
    %3017 = vmatpush1.msra.mxu0 0.0
    %3018 = vmatprep.subr.mxu0 0.0
    %3019 = vmatpush1.msra.mxu0 0.0
    %3020 = vmatprep.subr.mxu0 0.0
    %3021 = vmatpush1.msra.mxu0 0.0
    %3022 = vmatprep.subr.mxu0 0.0
    %3023 = vmatpush1.msra.mxu0 0.0
    %3024 = vmatprep.subr.mxu0 0.0
    %3025 = vmatpush1.msra.mxu0 0.0
    %3026 = vmatprep.subr.mxu0 0.0
    %3027 = vmatpush1.msra.mxu0 0.0
    %3028 = vmatprep.subr.mxu0 0.0
    %3029 = vmatpush1.msra.mxu0 0.0
    %3030 = vmatprep.subr.mxu0 0.0
    %3031 = vmatpush1.msra.mxu0 0.0
    %3032 = vmatprep.subr.mxu0 0.0
    %3033 = vmatpush1.msra.mxu0 0.0
    %3034 = vmatprep.subr.mxu0 0.0
    %3035 = vmatpush1.msra.mxu0 0.0
    %3036 = vmatprep.subr.mxu0 0.0
    %3037 = vmatpush1.msra.mxu0 0.0
    %3038 = vmatprep.subr.mxu0 0.0
    %3039 = vmatpush1.msra.mxu0 0.0
    %3040 = vmatprep.subr.mxu0 0.0
    %3041 = vmatpush1.msra.mxu0 0.0
    %3042 = vmatprep.subr.mxu0 0.0
    %3043 = vmatpush1.msra.mxu0 0.0
    %3044 = vmatprep.subr.mxu0 0.0
    %3045 = vmatpush1.msra.mxu0 0.0
    %3046 = vmatprep.subr.mxu0 0.0
    %3047 = vmatpush1.msra.mxu0 0.0
    %3048 = vmatprep.subr.mxu0 0.0
    %3049 = vmatpush1.msra.mxu0 0.0
    %3050 = vmatprep.subr.mxu0 0.0
    %3051 = vmatpush1.msra.mxu0 0.0
    %3052 = vmatprep.subr.mxu0 0.0
    %3053 = vmatpush1.msra.mxu0 0.0
    %3054 = vmatprep.subr.mxu0 0.0
    %3055 = vmatpush1.msra.mxu0 0.0
    %3056 = vmatprep.subr.mxu0 0.0
    %3057 = vmatpush1.msra.mxu0 0.0
    %3058 = vmatprep.subr.mxu0 0.0
    %3059 = vmatpush1.msra.mxu0 0.0
    %3060 = vmatprep.subr.mxu0 0.0
    %3061 = vmatpush1.msra.mxu0 0.0
    %3062 = vmatprep.subr.mxu0 0.0
    %3063 = vmatpush1.msra.mxu0 0.0
    %3064 = vmatprep.subr.mxu0 0.0
    %3065 = vmatpush1.msra.mxu0 0.0
    %3066 = vmatprep.subr.mxu0 0.0
    %3067 = vmatpush1.msra.mxu0 0.0
    %3068 = vmatprep.subr.mxu0 0.0
    %3069 = vmatpush1.msra.mxu0 0.0
    %3070 = vmatprep.mubr.f32.mxu0 0.0
    %3071 = vmatmul.mubr.f32.gmra.mrb[0].mxu0 %v3004
    %v3072 = vpop.f32.mrb[0].mxu0
    %v3073 = vadd.f32 0.0, %v3072
    %v3074 = vpop.f32.mrb[0].mxu0
    %3075 = vdwg.mxu0
    %3076 = vrot.lane.b32.xlu0 %v2577, 96
    %v3077 = vpop.permute.xlu0 %3076
    %v3080 = vsel %vm216, %v2922, 0
    %3082 = vmatprep.subr.mxu0 0.0
    %3083 = vmatpush1.msra.mxu0 %v3077
    %3084 = vmatprep.subr.mxu0 0.0
    %3085 = vmatpush1.msra.mxu0 0.0
    %3086 = vmatprep.subr.mxu0 0.0
    %3087 = vmatpush1.msra.mxu0 0.0
    %3088 = vmatprep.subr.mxu0 0.0
    %3089 = vmatpush1.msra.mxu0 0.0
    %3090 = vmatprep.subr.mxu0 0.0
    %3091 = vmatpush1.msra.mxu0 0.0
    %3092 = vmatprep.subr.mxu0 0.0
    %3093 = vmatpush1.msra.mxu0 0.0
    %3094 = vmatprep.subr.mxu0 0.0
    %3095 = vmatpush1.msra.mxu0 0.0
    %3096 = vmatprep.subr.mxu0 0.0
    %3097 = vmatpush1.msra.mxu0 0.0
    %3098 = vmatprep.subr.mxu0 0.0
    %3099 = vmatpush1.msra.mxu0 0.0
    %3100 = vmatprep.subr.mxu0 0.0
    %3101 = vmatpush1.msra.mxu0 0.0
    %3102 = vmatprep.subr.mxu0 0.0
    %3103 = vmatpush1.msra.mxu0 0.0
    %3104 = vmatprep.subr.mxu0 0.0
    %3105 = vmatpush1.msra.mxu0 0.0
    %3106 = vmatprep.subr.mxu0 0.0
    %3107 = vmatpush1.msra.mxu0 0.0
    %3108 = vmatprep.subr.mxu0 0.0
    %3109 = vmatpush1.msra.mxu0 0.0
    %3110 = vmatprep.subr.mxu0 0.0
    %3111 = vmatpush1.msra.mxu0 0.0
    %3112 = vmatprep.subr.mxu0 0.0
    %3113 = vmatpush1.msra.mxu0 0.0
    %3114 = vmatprep.subr.mxu0 0.0
    %3115 = vmatpush1.msra.mxu0 0.0
    %3116 = vmatprep.subr.mxu0 0.0
    %3117 = vmatpush1.msra.mxu0 0.0
    %3118 = vmatprep.subr.mxu0 0.0
    %3119 = vmatpush1.msra.mxu0 0.0
    %3120 = vmatprep.subr.mxu0 0.0
    %3121 = vmatpush1.msra.mxu0 0.0
    %3122 = vmatprep.subr.mxu0 0.0
    %3123 = vmatpush1.msra.mxu0 0.0
    %3124 = vmatprep.subr.mxu0 0.0
    %3125 = vmatpush1.msra.mxu0 0.0
    %3126 = vmatprep.subr.mxu0 0.0
    %3127 = vmatpush1.msra.mxu0 0.0
    %3128 = vmatprep.subr.mxu0 0.0
    %3129 = vmatpush1.msra.mxu0 0.0
    %3130 = vmatprep.subr.mxu0 0.0
    %3131 = vmatpush1.msra.mxu0 0.0
    %3132 = vmatprep.subr.mxu0 0.0
    %3133 = vmatpush1.msra.mxu0 0.0
    %3134 = vmatprep.subr.mxu0 0.0
    %3135 = vmatpush1.msra.mxu0 0.0
    %3136 = vmatprep.subr.mxu0 0.0
    %3137 = vmatpush1.msra.mxu0 0.0
    %3138 = vmatprep.subr.mxu0 0.0
    %3139 = vmatpush1.msra.mxu0 0.0
    %3140 = vmatprep.subr.mxu0 0.0
    %3141 = vmatpush1.msra.mxu0 0.0
    %3142 = vmatprep.subr.mxu0 0.0
    %3143 = vmatpush1.msra.mxu0 0.0
    %3144 = vmatprep.subr.mxu0 0.0
    %3145 = vmatpush1.msra.mxu0 0.0
    %3146 = vmatprep.mubr.f32.mxu0 0.0
    %3147 = vmatmul.mubr.f32.gmra.mrb[0].mxu0 %v3080
    %v3148 = vpop.f32.mrb[0].mxu0
    %v3149 = vadd.f32 0.0, %v3148
    %v3150 = vpop.f32.mrb[0].mxu0
    %3151 = vdwg.mxu0
    %3152 = vrot.lane.b32.xlu0 %v2579, 96
    %v3153 = vpop.permute.xlu0 %3152
    %v3156 = vsel %vm216, %v2923, 0
    %3158 = vmatprep.subr.mxu0 0.0
    %3159 = vmatpush1.msra.mxu0 %v3153
    %3160 = vmatprep.subr.mxu0 0.0
    %3161 = vmatpush1.msra.mxu0 0.0
    %3162 = vmatprep.subr.mxu0 0.0
    %3163 = vmatpush1.msra.mxu0 0.0
    %3164 = vmatprep.subr.mxu0 0.0
    %3165 = vmatpush1.msra.mxu0 0.0
    %3166 = vmatprep.subr.mxu0 0.0
    %3167 = vmatpush1.msra.mxu0 0.0
    %3168 = vmatprep.subr.mxu0 0.0
    %3169 = vmatpush1.msra.mxu0 0.0
    %3170 = vmatprep.subr.mxu0 0.0
    %3171 = vmatpush1.msra.mxu0 0.0
    %3172 = vmatprep.subr.mxu0 0.0
    %3173 = vmatpush1.msra.mxu0 0.0
    %3174 = vmatprep.subr.mxu0 0.0
    %3175 = vmatpush1.msra.mxu0 0.0
    %3176 = vmatprep.subr.mxu0 0.0
    %3177 = vmatpush1.msra.mxu0 0.0
    %3178 = vmatprep.subr.mxu0 0.0
    %3179 = vmatpush1.msra.mxu0 0.0
    %3180 = vmatprep.subr.mxu0 0.0
    %3181 = vmatpush1.msra.mxu0 0.0
    %3182 = vmatprep.subr.mxu0 0.0
    %3183 = vmatpush1.msra.mxu0 0.0
    %3184 = vmatprep.subr.mxu0 0.0
    %3185 = vmatpush1.msra.mxu0 0.0
    %3186 = vmatprep.subr.mxu0 0.0
    %3187 = vmatpush1.msra.mxu0 0.0
    %3188 = vmatprep.subr.mxu0 0.0
    %3189 = vmatpush1.msra.mxu0 0.0
    %3190 = vmatprep.subr.mxu0 0.0
    %3191 = vmatpush1.msra.mxu0 0.0
    %3192 = vmatprep.subr.mxu0 0.0
    %3193 = vmatpush1.msra.mxu0 0.0
    %3194 = vmatprep.subr.mxu0 0.0
    %3195 = vmatpush1.msra.mxu0 0.0
    %3196 = vmatprep.subr.mxu0 0.0
    %3197 = vmatpush1.msra.mxu0 0.0
    %3198 = vmatprep.subr.mxu0 0.0
    %3199 = vmatpush1.msra.mxu0 0.0
    %3200 = vmatprep.subr.mxu0 0.0
    %3201 = vmatpush1.msra.mxu0 0.0
    %3202 = vmatprep.subr.mxu0 0.0
    %3203 = vmatpush1.msra.mxu0 0.0
    %3204 = vmatprep.subr.mxu0 0.0
    %3205 = vmatpush1.msra.mxu0 0.0
    %3206 = vmatprep.subr.mxu0 0.0
    %3207 = vmatpush1.msra.mxu0 0.0
    %3208 = vmatprep.subr.mxu0 0.0
    %3209 = vmatpush1.msra.mxu0 0.0
    %3210 = vmatprep.subr.mxu0 0.0
    %3211 = vmatpush1.msra.mxu0 0.0
    %3212 = vmatprep.subr.mxu0 0.0
    %3213 = vmatpush1.msra.mxu0 0.0
    %3214 = vmatprep.subr.mxu0 0.0
    %3215 = vmatpush1.msra.mxu0 0.0
    %3216 = vmatprep.subr.mxu0 0.0
    %3217 = vmatpush1.msra.mxu0 0.0
    %3218 = vmatprep.subr.mxu0 0.0
    %3219 = vmatpush1.msra.mxu0 0.0
    %3220 = vmatprep.subr.mxu0 0.0
    %3221 = vmatpush1.msra.mxu0 0.0
    %3222 = vmatprep.mubr.f32.mxu0 0.0
    %3223 = vmatmul.mubr.f32.gmra.mrb[0].mxu0 %v3156
    %v3224 = vpop.f32.mrb[0].mxu0
    %v3225 = vadd.f32 0.0, %v3224
    %v3226 = vpop.f32.mrb[0].mxu0
    %3227 = vdwg.mxu0
    %3229 = vrot.lane.b32.xlu0 %v3073, 8
    %v3230 = vpop.permute.xlu0 %3229
    %3233 = vrot.lane.b32.xlu0 %v3149, 16
    %v3234 = vpop.permute.xlu0 %3233
    %3237 = vrot.lane.b32.xlu0 %v3225, 24
    %v3238 = vpop.permute.xlu0 %3237
    %v3240 = vsel %vm216, %v2997, %v3230
    %v3241 = vsel %vm884, %v3240, %v3234
    %v3242 = vsel %vm886, %v3241, %v3238
    %v3243 = vld [vmem:[%s14] sm:$0xff]
    %v3244 = vld [vmem:[%s14 + $0x8] sm:$0xff]
    %v3245 = vld [vmem:[%s14 + $0x10] sm:$0xff]
    %v3246 = vld [vmem:[%s14 + $0x18] sm:$0xff]
    %v3247 = vld [vmem:[%s15] sm:$0x1]
    %v3249 = vlaneseq
    %v3250 = vshrl.u32 %v3249, 7
    %v3251 = vsub.s32 0, %v3250
    %v3252 = vrot.slane %v3247, %v3251
    %v3255 = vsel %vm125, %v2565, 0
    %v3258 = vsel %vm125, %v3242, 0
    %3260 = vmatprep.subr.mxu0 0.0
    %3261 = vmatpush1.msra.mxu0 %v3243
    %3262 = vmatprep.subr.mxu0 0.0
    %3263 = vmatpush1.msra.mxu0 %v3244
    %3264 = vmatprep.subr.mxu0 0.0
    %3265 = vmatpush1.msra.mxu0 %v3245
    %3266 = vmatprep.subr.mxu0 0.0
    %3267 = vmatpush1.msra.mxu0 %v3246
    %3268 = vmatprep.subr.mxu0 0.0
    %3269 = vmatpush1.msra.mxu0 0.0
    %3270 = vmatprep.subr.mxu0 0.0
    %3271 = vmatpush1.msra.mxu0 0.0
    %3272 = vmatprep.subr.mxu0 0.0
    %3273 = vmatpush1.msra.mxu0 0.0
    %3274 = vmatprep.subr.mxu0 0.0
    %3275 = vmatpush1.msra.mxu0 0.0
    %3276 = vmatprep.subr.mxu0 0.0
    %3277 = vmatpush1.msra.mxu0 0.0
    %3278 = vmatprep.subr.mxu0 0.0
    %3279 = vmatpush1.msra.mxu0 0.0
    %3280 = vmatprep.subr.mxu0 0.0
    %3281 = vmatpush1.msra.mxu0 0.0
    %3282 = vmatprep.subr.mxu0 0.0
    %3283 = vmatpush1.msra.mxu0 0.0
    %3284 = vmatprep.subr.mxu0 0.0
    %3285 = vmatpush1.msra.mxu0 0.0
    %3286 = vmatprep.subr.mxu0 0.0
    %3287 = vmatpush1.msra.mxu0 0.0
    %3288 = vmatprep.subr.mxu0 0.0
    %3289 = vmatpush1.msra.mxu0 0.0
    %3290 = vmatprep.subr.mxu0 0.0
    %3291 = vmatpush1.msra.mxu0 0.0
    %3292 = vmatprep.subr.mxu0 0.0
    %3293 = vmatpush1.msra.mxu0 0.0
    %3294 = vmatprep.subr.mxu0 0.0
    %3295 = vmatpush1.msra.mxu0 0.0
    %3296 = vmatprep.subr.mxu0 0.0
    %3297 = vmatpush1.msra.mxu0 0.0
    %3298 = vmatprep.subr.mxu0 0.0
    %3299 = vmatpush1.msra.mxu0 0.0
    %3300 = vmatprep.subr.mxu0 0.0
    %3301 = vmatpush1.msra.mxu0 0.0
    %3302 = vmatprep.subr.mxu0 0.0
    %3303 = vmatpush1.msra.mxu0 0.0
    %3304 = vmatprep.subr.mxu0 0.0
    %3305 = vmatpush1.msra.mxu0 0.0
    %3306 = vmatprep.subr.mxu0 0.0
    %3307 = vmatpush1.msra.mxu0 0.0
    %3308 = vmatprep.subr.mxu0 0.0
    %3309 = vmatpush1.msra.mxu0 0.0
    %3310 = vmatprep.subr.mxu0 0.0
    %3311 = vmatpush1.msra.mxu0 0.0
    %3312 = vmatprep.subr.mxu0 0.0
    %3313 = vmatpush1.msra.mxu0 0.0
    %3314 = vmatprep.subr.mxu0 0.0
    %3315 = vmatpush1.msra.mxu0 0.0
    %3316 = vmatprep.subr.mxu0 0.0
    %3317 = vmatpush1.msra.mxu0 0.0
    %3318 = vmatprep.subr.mxu0 0.0
    %3319 = vmatpush1.msra.mxu0 0.0
    %3320 = vmatprep.subr.mxu0 0.0
    %3321 = vmatpush1.msra.mxu0 0.0
    %3322 = vmatprep.subr.mxu0 0.0
    %3323 = vmatpush1.msra.mxu0 0.0
    %3324 = vmatprep.mubr.f32.mxu0 0.0
    %3325 = vmatmul.mubr.f32.gmra.mrb[0].mxu0 %v3255
    %v3326 = vpop.f32.mrb[0].mxu0
    %v3327 = vadd.f32 %v3252, %v3326
    %v3328 = vpop.f32.mrb[0].mxu0
    %3329 = vmatprep.mubr.f32.mxu0 0.0
    %3330 = vmatmul.mubr.f32.gmra.mrb[0].mxu0 %v3258
    %v3331 = vpop.f32.mrb[0].mxu0
    %v3332 = vadd.f32 %v3252, %v3331
    %v3333 = vpop.f32.mrb[0].mxu0
    %3334 = vdwg.mxu0
    %v3335 = vadd.f32 %v3327, %v1703
    %v3336 = vadd.f32 %v3332, %v1704
    %v3337 = vld [vmem:[%s16] sm:$0x1]
    %v3338 = vld [vmem:[%s17] sm:$0x1]
    %v3339 = vsel %vm125, %v3335, 0.0
    %3340 = vadd.xlane.f32.xlu0 %v3339
    %v3341 = vpop.xlane.xlu0 %3340
    %v3342 = vsel %vm125, %v3336, 0.0
    %3343 = vadd.xlane.f32.xlu0 %v3342
    %v3344 = vpop.xlane.xlu0 %3343
    %v3345 = vmul.f32 %v3341, %v1668
    %v3346 = vmul.f32 %v3344, %v1668
    %v3347 = vsub.f32 %v3335, %v3345
    %v3348 = vsub.f32 %v3336, %v3346
    %v3349 = vmul.f32 %v3347, %v3347
    %v3350 = vmul.f32 %v3348, %v3348
    %v3351 = vsel %vm125, %v3349, 0.0
    %3352 = vadd.xlane.f32.xlu0 %v3351
    %v3353 = vpop.xlane.xlu0 %3352
    %v3354 = vsel %vm125, %v3350, 0.0
    %3355 = vadd.xlane.f32.xlu0 %v3354
    %v3356 = vpop.xlane.xlu0 %3355
    %v3357 = vmul.f32 %v3353, %v1668
    %v3358 = vmul.f32 %v3356, %v1668
    %v3359 = vadd.f32 %v3357, 1e-05
    %v3360 = vadd.f32 %v3358, 1e-05
    %v3361 = vrsqrt.pop %v3359
    %v3362 = vrsqrt.pop %v3360
    %v3363 = vmul.f32 %v3347, %v3361
    %v3364 = vmul.f32 %v3348, %v3362
    %v3366 = vlaneseq
    %v3367 = vshrl.u32 %v3366, 7
    %v3368 = vsub.s32 0, %v3367
    %v3369 = vrot.slane %v3337, %v3368
    %v3371 = vmul.f32 %v3363, %v3369
    %v3372 = vmul.f32 %v3364, %v3369
    %v3374 = vlaneseq
    %v3375 = vshrl.u32 %v3374, 7
    %v3376 = vsub.s32 0, %v3375
    %v3377 = vrot.slane %v3338, %v3376
    %v3379 = vadd.f32 %v3371, %v3377
    %v3380 = vadd.f32 %v3372, %v3377
    %v3381 = vld [vmem:[%s18] sm:$0xff]
    %v3382 = vld [vmem:[%s18 + $0x8] sm:$0xff]
    %v3383 = vld [vmem:[%s18 + $0x10] sm:$0xff]
    %v3384 = vld [vmem:[%s18 + $0x18] sm:$0xff]
    %v3385 = vld [vmem:[%s19] sm:$0x1]
    %v3387 = vlaneseq
    %v3388 = vshrl.u32 %v3387, 7
    %v3389 = vsub.s32 0, %v3388
    %v3390 = vrot.slane %v3385, %v3389
    %v3393 = vsel %vm125, %v3379, 0
    %v3396 = vsel %vm125, %v3380, 0
    %3398 = vmatprep.subr.mxu0 0.0
    %3399 = vmatpush1.msra.mxu0 %v3381
    %3400 = vmatprep.subr.mxu0 0.0
    %3401 = vmatpush1.msra.mxu0 %v3382
    %3402 = vmatprep.subr.mxu0 0.0
    %3403 = vmatpush1.msra.mxu0 %v3383
    %3404 = vmatprep.subr.mxu0 0.0
    %3405 = vmatpush1.msra.mxu0 %v3384
    %3406 = vmatprep.subr.mxu0 0.0
    %3407 = vmatpush1.msra.mxu0 0.0
    %3408 = vmatprep.subr.mxu0 0.0
    %3409 = vmatpush1.msra.mxu0 0.0
    %3410 = vmatprep.subr.mxu0 0.0
    %3411 = vmatpush1.msra.mxu0 0.0
    %3412 = vmatprep.subr.mxu0 0.0
    %3413 = vmatpush1.msra.mxu0 0.0
    %3414 = vmatprep.subr.mxu0 0.0
    %3415 = vmatpush1.msra.mxu0 0.0
    %3416 = vmatprep.subr.mxu0 0.0
    %3417 = vmatpush1.msra.mxu0 0.0
    %3418 = vmatprep.subr.mxu0 0.0
    %3419 = vmatpush1.msra.mxu0 0.0
    %3420 = vmatprep.subr.mxu0 0.0
    %3421 = vmatpush1.msra.mxu0 0.0
    %3422 = vmatprep.subr.mxu0 0.0
    %3423 = vmatpush1.msra.mxu0 0.0
    %3424 = vmatprep.subr.mxu0 0.0
    %3425 = vmatpush1.msra.mxu0 0.0
    %3426 = vmatprep.subr.mxu0 0.0
    %3427 = vmatpush1.msra.mxu0 0.0
    %3428 = vmatprep.subr.mxu0 0.0
    %3429 = vmatpush1.msra.mxu0 0.0
    %3430 = vmatprep.subr.mxu0 0.0
    %3431 = vmatpush1.msra.mxu0 0.0
    %3432 = vmatprep.subr.mxu0 0.0
    %3433 = vmatpush1.msra.mxu0 0.0
    %3434 = vmatprep.subr.mxu0 0.0
    %3435 = vmatpush1.msra.mxu0 0.0
    %3436 = vmatprep.subr.mxu0 0.0
    %3437 = vmatpush1.msra.mxu0 0.0
    %3438 = vmatprep.subr.mxu0 0.0
    %3439 = vmatpush1.msra.mxu0 0.0
    %3440 = vmatprep.subr.mxu0 0.0
    %3441 = vmatpush1.msra.mxu0 0.0
    %3442 = vmatprep.subr.mxu0 0.0
    %3443 = vmatpush1.msra.mxu0 0.0
    %3444 = vmatprep.subr.mxu0 0.0
    %3445 = vmatpush1.msra.mxu0 0.0
    %3446 = vmatprep.subr.mxu0 0.0
    %3447 = vmatpush1.msra.mxu0 0.0
    %3448 = vmatprep.subr.mxu0 0.0
    %3449 = vmatpush1.msra.mxu0 0.0
    %3450 = vmatprep.subr.mxu0 0.0
    %3451 = vmatpush1.msra.mxu0 0.0
    %3452 = vmatprep.subr.mxu0 0.0
    %3453 = vmatpush1.msra.mxu0 0.0
    %3454 = vmatprep.subr.mxu0 0.0
    %3455 = vmatpush1.msra.mxu0 0.0
    %3456 = vmatprep.subr.mxu0 0.0
    %3457 = vmatpush1.msra.mxu0 0.0
    %3458 = vmatprep.subr.mxu0 0.0
    %3459 = vmatpush1.msra.mxu0 0.0
    %3460 = vmatprep.subr.mxu0 0.0
    %3461 = vmatpush1.msra.mxu0 0.0
    %3462 = vmatprep.mubr.f32.mxu0 0.0
    %3463 = vmatmul.mubr.f32.gmra.mrb[0].mxu0 %v3393
    %v3464 = vpop.f32.mrb[0].mxu0
    %v3465 = vadd.f32 %v3390, %v3464
    %v3466 = vpop.f32.mrb[0].mxu0
    %3467 = vmatprep.mubr.f32.mxu0 0.0
    %3468 = vmatmul.mubr.f32.gmra.mrb[0].mxu0 %v3396
    %v3469 = vpop.f32.mrb[0].mxu0
    %v3470 = vadd.f32 %v3390, %v3469
    %v3471 = vpop.f32.mrb[0].mxu0
    %3472 = vdwg.mxu0
    %v3473 = vmax.f32 %v3465, 0.0
    %v3474 = vmax.f32 %v3470, 0.0
    %v3475 = vld [vmem:[%s20] sm:$0xff]
    %v3476 = vld [vmem:[%s20 + $0x8] sm:$0xff]
    %v3477 = vld [vmem:[%s20 + $0x10] sm:$0xff]
    %v3478 = vld [vmem:[%s20 + $0x18] sm:$0xff]
    %v3479 = vld [vmem:[%s20 + $0x20] sm:$0xff]
    %v3480 = vld [vmem:[%s20 + $0x28] sm:$0xff]
    %v3481 = vld [vmem:[%s20 + $0x30] sm:$0xff]
    %v3482 = vld [vmem:[%s20 + $0x38] sm:$0xff]
    %v3483 = vld [vmem:[%s21] sm:$0x1]
    %v3485 = vlaneseq
    %v3486 = vshrl.u32 %v3485, 7
    %v3487 = vsub.s32 0, %v3486
    %v3488 = vrot.slane %v3483, %v3487
    %vm3490 = vcmask 523264
    %v3492 = vsel %vm3490, %v3473, 0
    %v3495 = vsel %vm3490, %v3474, 0
    %3497 = vmatprep.subr.mxu0 0.0
    %3498 = vmatpush1.msra.mxu0 %v3475
    %3499 = vmatprep.subr.mxu0 0.0
    %3500 = vmatpush1.msra.mxu0 %v3476
    %3501 = vmatprep.subr.mxu0 0.0
    %3502 = vmatpush1.msra.mxu0 %v3477
    %3503 = vmatprep.subr.mxu0 0.0
    %3504 = vmatpush1.msra.mxu0 %v3478
    %3505 = vmatprep.subr.mxu0 0.0
    %3506 = vmatpush1.msra.mxu0 %v3479
    %3507 = vmatprep.subr.mxu0 0.0
    %3508 = vmatpush1.msra.mxu0 %v3480
    %3509 = vmatprep.subr.mxu0 0.0
    %3510 = vmatpush1.msra.mxu0 %v3481
    %3511 = vmatprep.subr.mxu0 0.0
    %3512 = vmatpush1.msra.mxu0 %v3482
    %3513 = vmatprep.subr.mxu0 0.0
    %3514 = vmatpush1.msra.mxu0 0.0
    %3515 = vmatprep.subr.mxu0 0.0
    %3516 = vmatpush1.msra.mxu0 0.0
    %3517 = vmatprep.subr.mxu0 0.0
    %3518 = vmatpush1.msra.mxu0 0.0
    %3519 = vmatprep.subr.mxu0 0.0
    %3520 = vmatpush1.msra.mxu0 0.0
    %3521 = vmatprep.subr.mxu0 0.0
    %3522 = vmatpush1.msra.mxu0 0.0
    %3523 = vmatprep.subr.mxu0 0.0
    %3524 = vmatpush1.msra.mxu0 0.0
    %3525 = vmatprep.subr.mxu0 0.0
    %3526 = vmatpush1.msra.mxu0 0.0
    %3527 = vmatprep.subr.mxu0 0.0
    %3528 = vmatpush1.msra.mxu0 0.0
    %3529 = vmatprep.subr.mxu0 0.0
    %3530 = vmatpush1.msra.mxu0 0.0
    %3531 = vmatprep.subr.mxu0 0.0
    %3532 = vmatpush1.msra.mxu0 0.0
    %3533 = vmatprep.subr.mxu0 0.0
    %3534 = vmatpush1.msra.mxu0 0.0
    %3535 = vmatprep.subr.mxu0 0.0
    %3536 = vmatpush1.msra.mxu0 0.0
    %3537 = vmatprep.subr.mxu0 0.0
    %3538 = vmatpush1.msra.mxu0 0.0
    %3539 = vmatprep.subr.mxu0 0.0
    %3540 = vmatpush1.msra.mxu0 0.0
    %3541 = vmatprep.subr.mxu0 0.0
    %3542 = vmatpush1.msra.mxu0 0.0
    %3543 = vmatprep.subr.mxu0 0.0
    %3544 = vmatpush1.msra.mxu0 0.0
    %3545 = vmatprep.subr.mxu0 0.0
    %3546 = vmatpush1.msra.mxu0 0.0
    %3547 = vmatprep.subr.mxu0 0.0
    %3548 = vmatpush1.msra.mxu0 0.0
    %3549 = vmatprep.subr.mxu0 0.0
    %3550 = vmatpush1.msra.mxu0 0.0
    %3551 = vmatprep.subr.mxu0 0.0
    %3552 = vmatpush1.msra.mxu0 0.0
    %3553 = vmatprep.subr.mxu0 0.0
    %3554 = vmatpush1.msra.mxu0 0.0
    %3555 = vmatprep.subr.mxu0 0.0
    %3556 = vmatpush1.msra.mxu0 0.0
    %3557 = vmatprep.subr.mxu0 0.0
    %3558 = vmatpush1.msra.mxu0 0.0
    %3559 = vmatprep.subr.mxu0 0.0
    %3560 = vmatpush1.msra.mxu0 0.0
    %3561 = vmatprep.mubr.f32.mxu0 0.0
    %3562 = vmatmul.mubr.f32.gmra.mrb[0].mxu0 %v3492
    %v3563 = vpop.f32.mrb[0].mxu0
    %v3564 = vadd.f32 %v3488, %v3563
    %v3565 = vpop.f32.mrb[0].mxu0
    %3566 = vmatprep.mubr.f32.mxu0 0.0
    %3567 = vmatmul.mubr.f32.gmra.mrb[0].mxu0 %v3495
    %v3568 = vpop.f32.mrb[0].mxu0
    %v3569 = vadd.f32 %v3488, %v3568
    %v3570 = vpop.f32.mrb[0].mxu0
    %3571 = vdwg.mxu0
    %v3572 = vadd.f32 %v3564, %v3379
    %v3573 = vadd.f32 %v3569, %v3380
    %v3574 = vld [vmem:[%s22] sm:$0x1]
    %v3575 = vld [vmem:[%s23] sm:$0x1]
    %v3576 = vsel %vm125, %v3572, 0.0
    %3577 = vadd.xlane.f32.xlu0 %v3576
    %v3578 = vpop.xlane.xlu0 %3577
    %v3579 = vsel %vm125, %v3573, 0.0
    %3580 = vadd.xlane.f32.xlu0 %v3579
    %v3581 = vpop.xlane.xlu0 %3580
    %v3582 = vmul.f32 %v3578, %v1668
    %v3583 = vmul.f32 %v3581, %v1668
    %v3584 = vsub.f32 %v3572, %v3582
    %v3585 = vsub.f32 %v3573, %v3583
    %v3586 = vmul.f32 %v3584, %v3584
    %v3587 = vmul.f32 %v3585, %v3585
    %v3588 = vsel %vm125, %v3586, 0.0
    %3589 = vadd.xlane.f32.xlu0 %v3588
    %v3590 = vpop.xlane.xlu0 %3589
    %v3591 = vsel %vm125, %v3587, 0.0
    %3592 = vadd.xlane.f32.xlu0 %v3591
    %v3593 = vpop.xlane.xlu0 %3592
    %v3594 = vmul.f32 %v3590, %v1668
    %v3595 = vmul.f32 %v3593, %v1668
    %v3596 = vadd.f32 %v3594, 1e-05
    %v3597 = vadd.f32 %v3595, 1e-05
    %v3598 = vrsqrt.pop %v3596
    %v3599 = vrsqrt.pop %v3597
    %v3600 = vmul.f32 %v3584, %v3598
    %v3601 = vmul.f32 %v3585, %v3599
    %v3603 = vlaneseq
    %v3604 = vshrl.u32 %v3603, 7
    %v3605 = vsub.s32 0, %v3604
    %v3606 = vrot.slane %v3574, %v3605
    %v3608 = vmul.f32 %v3600, %v3606
    %v3609 = vmul.f32 %v3601, %v3606
    %v3611 = vlaneseq
    %v3612 = vshrl.u32 %v3611, 7
    %v3613 = vsub.s32 0, %v3612
    %v3614 = vrot.slane %v3575, %v3613
    %v3616 = vadd.f32 %v3608, %v3614
    %v3617 = vadd.f32 %v3609, %v3614
    %s3618 = scalar_lea.vmem %s4, 32
    %v3619 = vld [vmem:[%s3618] sm:$0xff]
    %v3620 = vld [vmem:[%s3618 + $0x8] sm:$0xff]
    %v3621 = vld [vmem:[%s3618 + $0x10] sm:$0xff]
    %v3622 = vld [vmem:[%s3618 + $0x18] sm:$0xff]
    %s3623 = scalar_lea.vmem %s5, 1
    %v3624 = vld [vmem:[%s3623] sm:$0x1]
    %v3626 = vlaneseq
    %v3627 = vshrl.u32 %v3626, 7
    %v3628 = vsub.s32 0, %v3627
    %v3629 = vrot.slane %v3624, %v3628
    %v3632 = vsel %vm125, %v3616, 0
    %v3635 = vsel %vm125, %v3617, 0
    %3637 = vmatprep.subr.mxu0 0.0
    %3638 = vmatpush1.msra.mxu0 %v3619
    %3639 = vmatprep.subr.mxu0 0.0
    %3640 = vmatpush1.msra.mxu0 %v3620
    %3641 = vmatprep.subr.mxu0 0.0
    %3642 = vmatpush1.msra.mxu0 %v3621
    %3643 = vmatprep.subr.mxu0 0.0
    %3644 = vmatpush1.msra.mxu0 %v3622
    %3645 = vmatprep.subr.mxu0 0.0
    %3646 = vmatpush1.msra.mxu0 0.0
    %3647 = vmatprep.subr.mxu0 0.0
    %3648 = vmatpush1.msra.mxu0 0.0
    %3649 = vmatprep.subr.mxu0 0.0
    %3650 = vmatpush1.msra.mxu0 0.0
    %3651 = vmatprep.subr.mxu0 0.0
    %3652 = vmatpush1.msra.mxu0 0.0
    %3653 = vmatprep.subr.mxu0 0.0
    %3654 = vmatpush1.msra.mxu0 0.0
    %3655 = vmatprep.subr.mxu0 0.0
    %3656 = vmatpush1.msra.mxu0 0.0
    %3657 = vmatprep.subr.mxu0 0.0
    %3658 = vmatpush1.msra.mxu0 0.0
    %3659 = vmatprep.subr.mxu0 0.0
    %3660 = vmatpush1.msra.mxu0 0.0
    %3661 = vmatprep.subr.mxu0 0.0
    %3662 = vmatpush1.msra.mxu0 0.0
    %3663 = vmatprep.subr.mxu0 0.0
    %3664 = vmatpush1.msra.mxu0 0.0
    %3665 = vmatprep.subr.mxu0 0.0
    %3666 = vmatpush1.msra.mxu0 0.0
    %3667 = vmatprep.subr.mxu0 0.0
    %3668 = vmatpush1.msra.mxu0 0.0
    %3669 = vmatprep.subr.mxu0 0.0
    %3670 = vmatpush1.msra.mxu0 0.0
    %3671 = vmatprep.subr.mxu0 0.0
    %3672 = vmatpush1.msra.mxu0 0.0
    %3673 = vmatprep.subr.mxu0 0.0
    %3674 = vmatpush1.msra.mxu0 0.0
    %3675 = vmatprep.subr.mxu0 0.0
    %3676 = vmatpush1.msra.mxu0 0.0
    %3677 = vmatprep.subr.mxu0 0.0
    %3678 = vmatpush1.msra.mxu0 0.0
    %3679 = vmatprep.subr.mxu0 0.0
    %3680 = vmatpush1.msra.mxu0 0.0
    %3681 = vmatprep.subr.mxu0 0.0
    %3682 = vmatpush1.msra.mxu0 0.0
    %3683 = vmatprep.subr.mxu0 0.0
    %3684 = vmatpush1.msra.mxu0 0.0
    %3685 = vmatprep.subr.mxu0 0.0
    %3686 = vmatpush1.msra.mxu0 0.0
    %3687 = vmatprep.subr.mxu0 0.0
    %3688 = vmatpush1.msra.mxu0 0.0
    %3689 = vmatprep.subr.mxu0 0.0
    %3690 = vmatpush1.msra.mxu0 0.0
    %3691 = vmatprep.subr.mxu0 0.0
    %3692 = vmatpush1.msra.mxu0 0.0
    %3693 = vmatprep.subr.mxu0 0.0
    %3694 = vmatpush1.msra.mxu0 0.0
    %3695 = vmatprep.subr.mxu0 0.0
    %3696 = vmatpush1.msra.mxu0 0.0
    %3697 = vmatprep.subr.mxu0 0.0
    %3698 = vmatpush1.msra.mxu0 0.0
    %3699 = vmatprep.subr.mxu0 0.0
    %3700 = vmatpush1.msra.mxu0 0.0
    %3701 = vmatprep.mubr.f32.mxu0 0.0
    %3702 = vmatmul.mubr.f32.gmra.mrb[0].mxu0 %v3632
    %v3703 = vpop.f32.mrb[0].mxu0
    %v3704 = vadd.f32 %v3629, %v3703
    %v3705 = vpop.f32.mrb[0].mxu0
    %3706 = vmatprep.mubr.f32.mxu0 0.0
    %3707 = vmatmul.mubr.f32.gmra.mrb[0].mxu0 %v3635
    %v3708 = vpop.f32.mrb[0].mxu0
    %v3709 = vadd.f32 %v3629, %v3708
    %v3710 = vpop.f32.mrb[0].mxu0
    %3711 = vdwg.mxu0
    %3713 = vrot.lane.b32.xlu0 %v3704, 120
    %v3714 = vpop.permute.xlu0 %3713
    %3715 = vrot.lane.b32.xlu0 %v3704, 112
    %v3716 = vpop.permute.xlu0 %3715
    %3717 = vrot.lane.b32.xlu0 %v3704, 104
    %v3718 = vpop.permute.xlu0 %3717
    %3719 = vrot.lane.b32.xlu0 %v3704, 96
    %v3720 = vpop.permute.xlu0 %3719
    %v3721 = vsel %vm216, %v3704, 0
    %v3723 = vsel %vm216, %v3720, 0
    %3725 = vmatprep.subr.mxu0 0.0
    %3726 = vmatpush1.xpose.msra.mxu0 %v3723
    %3727 = vmatprep.subr.mxu0 0.0
    %3728 = vmatpush1.xpose.msra.mxu0 0.0
    %3729 = vmatprep.subr.mxu0 0.0
    %3730 = vmatpush1.xpose.msra.mxu0 0.0
    %3731 = vmatprep.subr.mxu0 0.0
    %3732 = vmatpush1.xpose.msra.mxu0 0.0
    %3733 = vmatprep.subr.mxu0 0.0
    %3734 = vmatpush1.xpose.msra.mxu0 0.0
    %3735 = vmatprep.subr.mxu0 0.0
    %3736 = vmatpush1.xpose.msra.mxu0 0.0
    %3737 = vmatprep.subr.mxu0 0.0
    %3738 = vmatpush1.xpose.msra.mxu0 0.0
    %3739 = vmatprep.subr.mxu0 0.0
    %3740 = vmatpush1.xpose.msra.mxu0 0.0
    %3741 = vmatprep.subr.mxu0 0.0
    %3742 = vmatpush1.xpose.msra.mxu0 0.0
    %3743 = vmatprep.subr.mxu0 0.0
    %3744 = vmatpush1.xpose.msra.mxu0 0.0
    %3745 = vmatprep.subr.mxu0 0.0
    %3746 = vmatpush1.xpose.msra.mxu0 0.0
    %3747 = vmatprep.subr.mxu0 0.0
    %3748 = vmatpush1.xpose.msra.mxu0 0.0
    %3749 = vmatprep.subr.mxu0 0.0
    %3750 = vmatpush1.xpose.msra.mxu0 0.0
    %3751 = vmatprep.subr.mxu0 0.0
    %3752 = vmatpush1.xpose.msra.mxu0 0.0
    %3753 = vmatprep.subr.mxu0 0.0
    %3754 = vmatpush1.xpose.msra.mxu0 0.0
    %3755 = vmatprep.subr.mxu0 0.0
    %3756 = vmatpush1.xpose.msra.mxu0 0.0
    %3757 = vmatprep.subr.mxu0 0.0
    %3758 = vmatpush1.xpose.msra.mxu0 0.0
    %3759 = vmatprep.subr.mxu0 0.0
    %3760 = vmatpush1.xpose.msra.mxu0 0.0
    %3761 = vmatprep.subr.mxu0 0.0
    %3762 = vmatpush1.xpose.msra.mxu0 0.0
    %3763 = vmatprep.subr.mxu0 0.0
    %3764 = vmatpush1.xpose.msra.mxu0 0.0
    %3765 = vmatprep.subr.mxu0 0.0
    %3766 = vmatpush1.xpose.msra.mxu0 0.0
    %3767 = vmatprep.subr.mxu0 0.0
    %3768 = vmatpush1.xpose.msra.mxu0 0.0
    %3769 = vmatprep.subr.mxu0 0.0
    %3770 = vmatpush1.xpose.msra.mxu0 0.0
    %3771 = vmatprep.subr.mxu0 0.0
    %3772 = vmatpush1.xpose.msra.mxu0 0.0
    %3773 = vmatprep.subr.mxu0 0.0
    %3774 = vmatpush1.xpose.msra.mxu0 0.0
    %3775 = vmatprep.subr.mxu0 0.0
    %3776 = vmatpush1.xpose.msra.mxu0 0.0
    %3777 = vmatprep.subr.mxu0 0.0
    %3778 = vmatpush1.xpose.msra.mxu0 0.0
    %3779 = vmatprep.subr.mxu0 0.0
    %3780 = vmatpush1.xpose.msra.mxu0 0.0
    %3781 = vmatprep.subr.mxu0 0.0
    %3782 = vmatpush1.xpose.msra.mxu0 0.0
    %3783 = vmatprep.subr.mxu0 0.0
    %3784 = vmatpush1.xpose.msra.mxu0 0.0
    %3785 = vmatprep.subr.mxu0 0.0
    %3786 = vmatpush1.xpose.msra.mxu0 0.0
    %3787 = vmatprep.subr.mxu0 0.0
    %3788 = vmatpush1.xpose.msra.mxu0 0.0
    %3789 = vmatprep.mubr.f32.mxu0 0.0
    %3790 = vmatmul.mubr.f32.gmra.mrb[0].mxu0 %v3721
    %v3791 = vpop.f32.mrb[0].mxu0
    %v3792 = vadd.f32 %v90, %v3791
    %v3793 = vpop.f32.mrb[0].mxu0
    %3794 = vdwg.mxu0
    %3795 = vrot.lane.b32.xlu0 %v3714, 96
    %v3796 = vpop.permute.xlu0 %3795
    %v3797 = vsel %vm216, %v3714, 0
    %v3799 = vsel %vm216, %v3796, 0
    %3801 = vmatprep.subr.mxu0 0.0
    %3802 = vmatpush1.xpose.msra.mxu0 %v3799
    %3803 = vmatprep.subr.mxu0 0.0
    %3804 = vmatpush1.xpose.msra.mxu0 0.0
    %3805 = vmatprep.subr.mxu0 0.0
    %3806 = vmatpush1.xpose.msra.mxu0 0.0
    %3807 = vmatprep.subr.mxu0 0.0
    %3808 = vmatpush1.xpose.msra.mxu0 0.0
    %3809 = vmatprep.subr.mxu0 0.0
    %3810 = vmatpush1.xpose.msra.mxu0 0.0
    %3811 = vmatprep.subr.mxu0 0.0
    %3812 = vmatpush1.xpose.msra.mxu0 0.0
    %3813 = vmatprep.subr.mxu0 0.0
    %3814 = vmatpush1.xpose.msra.mxu0 0.0
    %3815 = vmatprep.subr.mxu0 0.0
    %3816 = vmatpush1.xpose.msra.mxu0 0.0
    %3817 = vmatprep.subr.mxu0 0.0
    %3818 = vmatpush1.xpose.msra.mxu0 0.0
    %3819 = vmatprep.subr.mxu0 0.0
    %3820 = vmatpush1.xpose.msra.mxu0 0.0
    %3821 = vmatprep.subr.mxu0 0.0
    %3822 = vmatpush1.xpose.msra.mxu0 0.0
    %3823 = vmatprep.subr.mxu0 0.0
    %3824 = vmatpush1.xpose.msra.mxu0 0.0
    %3825 = vmatprep.subr.mxu0 0.0
    %3826 = vmatpush1.xpose.msra.mxu0 0.0
    %3827 = vmatprep.subr.mxu0 0.0
    %3828 = vmatpush1.xpose.msra.mxu0 0.0
    %3829 = vmatprep.subr.mxu0 0.0
    %3830 = vmatpush1.xpose.msra.mxu0 0.0
    %3831 = vmatprep.subr.mxu0 0.0
    %3832 = vmatpush1.xpose.msra.mxu0 0.0
    %3833 = vmatprep.subr.mxu0 0.0
    %3834 = vmatpush1.xpose.msra.mxu0 0.0
    %3835 = vmatprep.subr.mxu0 0.0
    %3836 = vmatpush1.xpose.msra.mxu0 0.0
    %3837 = vmatprep.subr.mxu0 0.0
    %3838 = vmatpush1.xpose.msra.mxu0 0.0
    %3839 = vmatprep.subr.mxu0 0.0
    %3840 = vmatpush1.xpose.msra.mxu0 0.0
    %3841 = vmatprep.subr.mxu0 0.0
    %3842 = vmatpush1.xpose.msra.mxu0 0.0
    %3843 = vmatprep.subr.mxu0 0.0
    %3844 = vmatpush1.xpose.msra.mxu0 0.0
    %3845 = vmatprep.subr.mxu0 0.0
    %3846 = vmatpush1.xpose.msra.mxu0 0.0
    %3847 = vmatprep.subr.mxu0 0.0
    %3848 = vmatpush1.xpose.msra.mxu0 0.0
    %3849 = vmatprep.subr.mxu0 0.0
    %3850 = vmatpush1.xpose.msra.mxu0 0.0
    %3851 = vmatprep.subr.mxu0 0.0
    %3852 = vmatpush1.xpose.msra.mxu0 0.0
    %3853 = vmatprep.subr.mxu0 0.0
    %3854 = vmatpush1.xpose.msra.mxu0 0.0
    %3855 = vmatprep.subr.mxu0 0.0
    %3856 = vmatpush1.xpose.msra.mxu0 0.0
    %3857 = vmatprep.subr.mxu0 0.0
    %3858 = vmatpush1.xpose.msra.mxu0 0.0
    %3859 = vmatprep.subr.mxu0 0.0
    %3860 = vmatpush1.xpose.msra.mxu0 0.0
    %3861 = vmatprep.subr.mxu0 0.0
    %3862 = vmatpush1.xpose.msra.mxu0 0.0
    %3863 = vmatprep.subr.mxu0 0.0
    %3864 = vmatpush1.xpose.msra.mxu0 0.0
    %3865 = vmatprep.mubr.f32.mxu0 0.0
    %3866 = vmatmul.mubr.f32.gmra.mrb[0].mxu0 %v3797
    %v3867 = vpop.f32.mrb[0].mxu0
    %v3868 = vadd.f32 %v90, %v3867
    %v3869 = vpop.f32.mrb[0].mxu0
    %3870 = vdwg.mxu0
    %3871 = vrot.lane.b32.xlu0 %v3716, 96
    %v3872 = vpop.permute.xlu0 %3871
    %v3873 = vsel %vm216, %v3716, 0
    %v3875 = vsel %vm216, %v3872, 0
    %3877 = vmatprep.subr.mxu0 0.0
    %3878 = vmatpush1.xpose.msra.mxu0 %v3875
    %3879 = vmatprep.subr.mxu0 0.0
    %3880 = vmatpush1.xpose.msra.mxu0 0.0
    %3881 = vmatprep.subr.mxu0 0.0
    %3882 = vmatpush1.xpose.msra.mxu0 0.0
    %3883 = vmatprep.subr.mxu0 0.0
    %3884 = vmatpush1.xpose.msra.mxu0 0.0
    %3885 = vmatprep.subr.mxu0 0.0
    %3886 = vmatpush1.xpose.msra.mxu0 0.0
    %3887 = vmatprep.subr.mxu0 0.0
    %3888 = vmatpush1.xpose.msra.mxu0 0.0
    %3889 = vmatprep.subr.mxu0 0.0
    %3890 = vmatpush1.xpose.msra.mxu0 0.0
    %3891 = vmatprep.subr.mxu0 0.0
    %3892 = vmatpush1.xpose.msra.mxu0 0.0
    %3893 = vmatprep.subr.mxu0 0.0
    %3894 = vmatpush1.xpose.msra.mxu0 0.0
    %3895 = vmatprep.subr.mxu0 0.0
    %3896 = vmatpush1.xpose.msra.mxu0 0.0
    %3897 = vmatprep.subr.mxu0 0.0
    %3898 = vmatpush1.xpose.msra.mxu0 0.0
    %3899 = vmatprep.subr.mxu0 0.0
    %3900 = vmatpush1.xpose.msra.mxu0 0.0
    %3901 = vmatprep.subr.mxu0 0.0
    %3902 = vmatpush1.xpose.msra.mxu0 0.0
    %3903 = vmatprep.subr.mxu0 0.0
    %3904 = vmatpush1.xpose.msra.mxu0 0.0
    %3905 = vmatprep.subr.mxu0 0.0
    %3906 = vmatpush1.xpose.msra.mxu0 0.0
    %3907 = vmatprep.subr.mxu0 0.0
    %3908 = vmatpush1.xpose.msra.mxu0 0.0
    %3909 = vmatprep.subr.mxu0 0.0
    %3910 = vmatpush1.xpose.msra.mxu0 0.0
    %3911 = vmatprep.subr.mxu0 0.0
    %3912 = vmatpush1.xpose.msra.mxu0 0.0
    %3913 = vmatprep.subr.mxu0 0.0
    %3914 = vmatpush1.xpose.msra.mxu0 0.0
    %3915 = vmatprep.subr.mxu0 0.0
    %3916 = vmatpush1.xpose.msra.mxu0 0.0
    %3917 = vmatprep.subr.mxu0 0.0
    %3918 = vmatpush1.xpose.msra.mxu0 0.0
    %3919 = vmatprep.subr.mxu0 0.0
    %3920 = vmatpush1.xpose.msra.mxu0 0.0
    %3921 = vmatprep.subr.mxu0 0.0
    %3922 = vmatpush1.xpose.msra.mxu0 0.0
    %3923 = vmatprep.subr.mxu0 0.0
    %3924 = vmatpush1.xpose.msra.mxu0 0.0
    %3925 = vmatprep.subr.mxu0 0.0
    %3926 = vmatpush1.xpose.msra.mxu0 0.0
    %3927 = vmatprep.subr.mxu0 0.0
    %3928 = vmatpush1.xpose.msra.mxu0 0.0
    %3929 = vmatprep.subr.mxu0 0.0
    %3930 = vmatpush1.xpose.msra.mxu0 0.0
    %3931 = vmatprep.subr.mxu0 0.0
    %3932 = vmatpush1.xpose.msra.mxu0 0.0
    %3933 = vmatprep.subr.mxu0 0.0
    %3934 = vmatpush1.xpose.msra.mxu0 0.0
    %3935 = vmatprep.subr.mxu0 0.0
    %3936 = vmatpush1.xpose.msra.mxu0 0.0
    %3937 = vmatprep.subr.mxu0 0.0
    %3938 = vmatpush1.xpose.msra.mxu0 0.0
    %3939 = vmatprep.subr.mxu0 0.0
    %3940 = vmatpush1.xpose.msra.mxu0 0.0
    %3941 = vmatprep.mubr.f32.mxu0 0.0
    %3942 = vmatmul.mubr.f32.gmra.mrb[0].mxu0 %v3873
    %v3943 = vpop.f32.mrb[0].mxu0
    %v3944 = vadd.f32 %v90, %v3943
    %v3945 = vpop.f32.mrb[0].mxu0
    %3946 = vdwg.mxu0
    %3947 = vrot.lane.b32.xlu0 %v3718, 96
    %v3948 = vpop.permute.xlu0 %3947
    %v3949 = vsel %vm216, %v3718, 0
    %v3951 = vsel %vm216, %v3948, 0
    %3953 = vmatprep.subr.mxu0 0.0
    %3954 = vmatpush1.xpose.msra.mxu0 %v3951
    %3955 = vmatprep.subr.mxu0 0.0
    %3956 = vmatpush1.xpose.msra.mxu0 0.0
    %3957 = vmatprep.subr.mxu0 0.0
    %3958 = vmatpush1.xpose.msra.mxu0 0.0
    %3959 = vmatprep.subr.mxu0 0.0
    %3960 = vmatpush1.xpose.msra.mxu0 0.0
    %3961 = vmatprep.subr.mxu0 0.0
    %3962 = vmatpush1.xpose.msra.mxu0 0.0
    %3963 = vmatprep.subr.mxu0 0.0
    %3964 = vmatpush1.xpose.msra.mxu0 0.0
    %3965 = vmatprep.subr.mxu0 0.0
    %3966 = vmatpush1.xpose.msra.mxu0 0.0
    %3967 = vmatprep.subr.mxu0 0.0
    %3968 = vmatpush1.xpose.msra.mxu0 0.0
    %3969 = vmatprep.subr.mxu0 0.0
    %3970 = vmatpush1.xpose.msra.mxu0 0.0
    %3971 = vmatprep.subr.mxu0 0.0
    %3972 = vmatpush1.xpose.msra.mxu0 0.0
    %3973 = vmatprep.subr.mxu0 0.0
    %3974 = vmatpush1.xpose.msra.mxu0 0.0
    %3975 = vmatprep.subr.mxu0 0.0
    %3976 = vmatpush1.xpose.msra.mxu0 0.0
    %3977 = vmatprep.subr.mxu0 0.0
    %3978 = vmatpush1.xpose.msra.mxu0 0.0
    %3979 = vmatprep.subr.mxu0 0.0
    %3980 = vmatpush1.xpose.msra.mxu0 0.0
    %3981 = vmatprep.subr.mxu0 0.0
    %3982 = vmatpush1.xpose.msra.mxu0 0.0
    %3983 = vmatprep.subr.mxu0 0.0
    %3984 = vmatpush1.xpose.msra.mxu0 0.0
    %3985 = vmatprep.subr.mxu0 0.0
    %3986 = vmatpush1.xpose.msra.mxu0 0.0
    %3987 = vmatprep.subr.mxu0 0.0
    %3988 = vmatpush1.xpose.msra.mxu0 0.0
    %3989 = vmatprep.subr.mxu0 0.0
    %3990 = vmatpush1.xpose.msra.mxu0 0.0
    %3991 = vmatprep.subr.mxu0 0.0
    %3992 = vmatpush1.xpose.msra.mxu0 0.0
    %3993 = vmatprep.subr.mxu0 0.0
    %3994 = vmatpush1.xpose.msra.mxu0 0.0
    %3995 = vmatprep.subr.mxu0 0.0
    %3996 = vmatpush1.xpose.msra.mxu0 0.0
    %3997 = vmatprep.subr.mxu0 0.0
    %3998 = vmatpush1.xpose.msra.mxu0 0.0
    %3999 = vmatprep.subr.mxu0 0.0
    %4000 = vmatpush1.xpose.msra.mxu0 0.0
    %4001 = vmatprep.subr.mxu0 0.0
    %4002 = vmatpush1.xpose.msra.mxu0 0.0
    %4003 = vmatprep.subr.mxu0 0.0
    %4004 = vmatpush1.xpose.msra.mxu0 0.0
    %4005 = vmatprep.subr.mxu0 0.0
    %4006 = vmatpush1.xpose.msra.mxu0 0.0
    %4007 = vmatprep.subr.mxu0 0.0
    %4008 = vmatpush1.xpose.msra.mxu0 0.0
    %4009 = vmatprep.subr.mxu0 0.0
    %4010 = vmatpush1.xpose.msra.mxu0 0.0
    %4011 = vmatprep.subr.mxu0 0.0
    %4012 = vmatpush1.xpose.msra.mxu0 0.0
    %4013 = vmatprep.subr.mxu0 0.0
    %4014 = vmatpush1.xpose.msra.mxu0 0.0
    %4015 = vmatprep.subr.mxu0 0.0
    %4016 = vmatpush1.xpose.msra.mxu0 0.0
    %4017 = vmatprep.mubr.f32.mxu0 0.0
    %4018 = vmatmul.mubr.f32.gmra.mrb[0].mxu0 %v3949
    %v4019 = vpop.f32.mrb[0].mxu0
    %v4020 = vadd.f32 %v90, %v4019
    %v4021 = vpop.f32.mrb[0].mxu0
    %4022 = vdwg.mxu0
    %v4023 = vmul.f32 %v3792, 0.17677669
    %v4024 = vmul.f32 %v3868, 0.17677669
    %v4025 = vmul.f32 %v3944, 0.17677669
    %v4026 = vmul.f32 %v4020, 0.17677669
    %v4027 = vsel %vm216, %v4023, -inf
    %4028 = vmax.xlane.f32.xlu0 %v4027
    %v4029 = vpop.xlane.xlu0 %4028
    %v4030 = vsel %vm216, %v4024, -inf
    %4031 = vmax.xlane.f32.xlu0 %v4030
    %v4032 = vpop.xlane.xlu0 %4031
    %v4033 = vsel %vm216, %v4025, -inf
    %4034 = vmax.xlane.f32.xlu0 %v4033
    %v4035 = vpop.xlane.xlu0 %4034
    %v4036 = vsel %vm216, %v4026, -inf
    %4037 = vmax.xlane.f32.xlu0 %v4036
    %v4038 = vpop.xlane.xlu0 %4037
    %v4039 = vsub.f32 %v4023, %v4029
    %v4040 = vsub.f32 %v4024, %v4032
    %v4041 = vsub.f32 %v4025, %v4035
    %v4042 = vsub.f32 %v4026, %v4038
    %v4043 = vmul.f32 %v4039, 1.442695
    %v4044 = vpow.pop %v4043
    %v4045 = vmul.f32 %v4040, 1.442695
    %v4046 = vpow.pop %v4045
    %v4047 = vmul.f32 %v4041, 1.442695
    %v4048 = vpow.pop %v4047
    %v4049 = vmul.f32 %v4042, 1.442695
    %v4050 = vpow.pop %v4049
    %v4051 = vsel %vm216, %v4044, 0.0
    %4052 = vadd.xlane.f32.xlu0 %v4051
    %v4053 = vpop.xlane.xlu0 %4052
    %v4054 = vsel %vm216, %v4046, 0.0
    %4055 = vadd.xlane.f32.xlu0 %v4054
    %v4056 = vpop.xlane.xlu0 %4055
    %v4057 = vsel %vm216, %v4048, 0.0
    %4058 = vadd.xlane.f32.xlu0 %v4057
    %v4059 = vpop.xlane.xlu0 %4058
    %v4060 = vsel %vm216, %v4050, 0.0
    %4061 = vadd.xlane.f32.xlu0 %v4060
    %v4062 = vpop.xlane.xlu0 %4061
    %v4063 = vrcp.pop %v4053
    %v4064 = vrcp.pop %v4056
    %v4065 = vrcp.pop %v4059
    %v4066 = vrcp.pop %v4062
    %v4067 = vmul.f32 %v4044, %v4063
    %v4068 = vmul.f32 %v4046, %v4064
    %v4069 = vmul.f32 %v4048, %v4065
    %v4070 = vmul.f32 %v4050, %v4066
    %4071 = vrot.lane.b32.xlu0 %v3704, 64
    %v4072 = vpop.permute.xlu0 %4071
    %v4075 = vsel %vm216, %v4067, 0
    %4077 = vmatprep.subr.mxu0 0.0
    %4078 = vmatpush1.msra.mxu0 %v4072
    %4079 = vmatprep.subr.mxu0 0.0
    %4080 = vmatpush1.msra.mxu0 0.0
    %4081 = vmatprep.subr.mxu0 0.0
    %4082 = vmatpush1.msra.mxu0 0.0
    %4083 = vmatprep.subr.mxu0 0.0
    %4084 = vmatpush1.msra.mxu0 0.0
    %4085 = vmatprep.subr.mxu0 0.0
    %4086 = vmatpush1.msra.mxu0 0.0
    %4087 = vmatprep.subr.mxu0 0.0
    %4088 = vmatpush1.msra.mxu0 0.0
    %4089 = vmatprep.subr.mxu0 0.0
    %4090 = vmatpush1.msra.mxu0 0.0
    %4091 = vmatprep.subr.mxu0 0.0
    %4092 = vmatpush1.msra.mxu0 0.0
    %4093 = vmatprep.subr.mxu0 0.0
    %4094 = vmatpush1.msra.mxu0 0.0
    %4095 = vmatprep.subr.mxu0 0.0
    %4096 = vmatpush1.msra.mxu0 0.0
    %4097 = vmatprep.subr.mxu0 0.0
    %4098 = vmatpush1.msra.mxu0 0.0
    %4099 = vmatprep.subr.mxu0 0.0
    %4100 = vmatpush1.msra.mxu0 0.0
    %4101 = vmatprep.subr.mxu0 0.0
    %4102 = vmatpush1.msra.mxu0 0.0
    %4103 = vmatprep.subr.mxu0 0.0
    %4104 = vmatpush1.msra.mxu0 0.0
    %4105 = vmatprep.subr.mxu0 0.0
    %4106 = vmatpush1.msra.mxu0 0.0
    %4107 = vmatprep.subr.mxu0 0.0
    %4108 = vmatpush1.msra.mxu0 0.0
    %4109 = vmatprep.subr.mxu0 0.0
    %4110 = vmatpush1.msra.mxu0 0.0
    %4111 = vmatprep.subr.mxu0 0.0
    %4112 = vmatpush1.msra.mxu0 0.0
    %4113 = vmatprep.subr.mxu0 0.0
    %4114 = vmatpush1.msra.mxu0 0.0
    %4115 = vmatprep.subr.mxu0 0.0
    %4116 = vmatpush1.msra.mxu0 0.0
    %4117 = vmatprep.subr.mxu0 0.0
    %4118 = vmatpush1.msra.mxu0 0.0
    %4119 = vmatprep.subr.mxu0 0.0
    %4120 = vmatpush1.msra.mxu0 0.0
    %4121 = vmatprep.subr.mxu0 0.0
    %4122 = vmatpush1.msra.mxu0 0.0
    %4123 = vmatprep.subr.mxu0 0.0
    %4124 = vmatpush1.msra.mxu0 0.0
    %4125 = vmatprep.subr.mxu0 0.0
    %4126 = vmatpush1.msra.mxu0 0.0
    %4127 = vmatprep.subr.mxu0 0.0
    %4128 = vmatpush1.msra.mxu0 0.0
    %4129 = vmatprep.subr.mxu0 0.0
    %4130 = vmatpush1.msra.mxu0 0.0
    %4131 = vmatprep.subr.mxu0 0.0
    %4132 = vmatpush1.msra.mxu0 0.0
    %4133 = vmatprep.subr.mxu0 0.0
    %4134 = vmatpush1.msra.mxu0 0.0
    %4135 = vmatprep.subr.mxu0 0.0
    %4136 = vmatpush1.msra.mxu0 0.0
    %4137 = vmatprep.subr.mxu0 0.0
    %4138 = vmatpush1.msra.mxu0 0.0
    %4139 = vmatprep.subr.mxu0 0.0
    %4140 = vmatpush1.msra.mxu0 0.0
    %4141 = vmatprep.mubr.f32.mxu0 0.0
    %4142 = vmatmul.mubr.f32.gmra.mrb[0].mxu0 %v4075
    %v4143 = vpop.f32.mrb[0].mxu0
    %v4144 = vadd.f32 0.0, %v4143
    %v4145 = vpop.f32.mrb[0].mxu0
    %4146 = vdwg.mxu0
    %4147 = vrot.lane.b32.xlu0 %v3714, 64
    %v4148 = vpop.permute.xlu0 %4147
    %v4151 = vsel %vm216, %v4068, 0
    %4153 = vmatprep.subr.mxu0 0.0
    %4154 = vmatpush1.msra.mxu0 %v4148
    %4155 = vmatprep.subr.mxu0 0.0
    %4156 = vmatpush1.msra.mxu0 0.0
    %4157 = vmatprep.subr.mxu0 0.0
    %4158 = vmatpush1.msra.mxu0 0.0
    %4159 = vmatprep.subr.mxu0 0.0
    %4160 = vmatpush1.msra.mxu0 0.0
    %4161 = vmatprep.subr.mxu0 0.0
    %4162 = vmatpush1.msra.mxu0 0.0
    %4163 = vmatprep.subr.mxu0 0.0
    %4164 = vmatpush1.msra.mxu0 0.0
    %4165 = vmatprep.subr.mxu0 0.0
    %4166 = vmatpush1.msra.mxu0 0.0
    %4167 = vmatprep.subr.mxu0 0.0
    %4168 = vmatpush1.msra.mxu0 0.0
    %4169 = vmatprep.subr.mxu0 0.0
    %4170 = vmatpush1.msra.mxu0 0.0
    %4171 = vmatprep.subr.mxu0 0.0
    %4172 = vmatpush1.msra.mxu0 0.0
    %4173 = vmatprep.subr.mxu0 0.0
    %4174 = vmatpush1.msra.mxu0 0.0
    %4175 = vmatprep.subr.mxu0 0.0
    %4176 = vmatpush1.msra.mxu0 0.0
    %4177 = vmatprep.subr.mxu0 0.0
    %4178 = vmatpush1.msra.mxu0 0.0
    %4179 = vmatprep.subr.mxu0 0.0
    %4180 = vmatpush1.msra.mxu0 0.0
    %4181 = vmatprep.subr.mxu0 0.0
    %4182 = vmatpush1.msra.mxu0 0.0
    %4183 = vmatprep.subr.mxu0 0.0
    %4184 = vmatpush1.msra.mxu0 0.0
    %4185 = vmatprep.subr.mxu0 0.0
    %4186 = vmatpush1.msra.mxu0 0.0
    %4187 = vmatprep.subr.mxu0 0.0
    %4188 = vmatpush1.msra.mxu0 0.0
    %4189 = vmatprep.subr.mxu0 0.0
    %4190 = vmatpush1.msra.mxu0 0.0
    %4191 = vmatprep.subr.mxu0 0.0
    %4192 = vmatpush1.msra.mxu0 0.0
    %4193 = vmatprep.subr.mxu0 0.0
    %4194 = vmatpush1.msra.mxu0 0.0
    %4195 = vmatprep.subr.mxu0 0.0
    %4196 = vmatpush1.msra.mxu0 0.0
    %4197 = vmatprep.subr.mxu0 0.0
    %4198 = vmatpush1.msra.mxu0 0.0
    %4199 = vmatprep.subr.mxu0 0.0
    %4200 = vmatpush1.msra.mxu0 0.0
    %4201 = vmatprep.subr.mxu0 0.0
    %4202 = vmatpush1.msra.mxu0 0.0
    %4203 = vmatprep.subr.mxu0 0.0
    %4204 = vmatpush1.msra.mxu0 0.0
    %4205 = vmatprep.subr.mxu0 0.0
    %4206 = vmatpush1.msra.mxu0 0.0
    %4207 = vmatprep.subr.mxu0 0.0
    %4208 = vmatpush1.msra.mxu0 0.0
    %4209 = vmatprep.subr.mxu0 0.0
    %4210 = vmatpush1.msra.mxu0 0.0
    %4211 = vmatprep.subr.mxu0 0.0
    %4212 = vmatpush1.msra.mxu0 0.0
    %4213 = vmatprep.subr.mxu0 0.0
    %4214 = vmatpush1.msra.mxu0 0.0
    %4215 = vmatprep.subr.mxu0 0.0
    %4216 = vmatpush1.msra.mxu0 0.0
    %4217 = vmatprep.mubr.f32.mxu0 0.0
    %4218 = vmatmul.mubr.f32.gmra.mrb[0].mxu0 %v4151
    %v4219 = vpop.f32.mrb[0].mxu0
    %v4220 = vadd.f32 0.0, %v4219
    %v4221 = vpop.f32.mrb[0].mxu0
    %4222 = vdwg.mxu0
    %4223 = vrot.lane.b32.xlu0 %v3716, 64
    %v4224 = vpop.permute.xlu0 %4223
    %v4227 = vsel %vm216, %v4069, 0
    %4229 = vmatprep.subr.mxu0 0.0
    %4230 = vmatpush1.msra.mxu0 %v4224
    %4231 = vmatprep.subr.mxu0 0.0
    %4232 = vmatpush1.msra.mxu0 0.0
    %4233 = vmatprep.subr.mxu0 0.0
    %4234 = vmatpush1.msra.mxu0 0.0
    %4235 = vmatprep.subr.mxu0 0.0
    %4236 = vmatpush1.msra.mxu0 0.0
    %4237 = vmatprep.subr.mxu0 0.0
    %4238 = vmatpush1.msra.mxu0 0.0
    %4239 = vmatprep.subr.mxu0 0.0
    %4240 = vmatpush1.msra.mxu0 0.0
    %4241 = vmatprep.subr.mxu0 0.0
    %4242 = vmatpush1.msra.mxu0 0.0
    %4243 = vmatprep.subr.mxu0 0.0
    %4244 = vmatpush1.msra.mxu0 0.0
    %4245 = vmatprep.subr.mxu0 0.0
    %4246 = vmatpush1.msra.mxu0 0.0
    %4247 = vmatprep.subr.mxu0 0.0
    %4248 = vmatpush1.msra.mxu0 0.0
    %4249 = vmatprep.subr.mxu0 0.0
    %4250 = vmatpush1.msra.mxu0 0.0
    %4251 = vmatprep.subr.mxu0 0.0
    %4252 = vmatpush1.msra.mxu0 0.0
    %4253 = vmatprep.subr.mxu0 0.0
    %4254 = vmatpush1.msra.mxu0 0.0
    %4255 = vmatprep.subr.mxu0 0.0
    %4256 = vmatpush1.msra.mxu0 0.0
    %4257 = vmatprep.subr.mxu0 0.0
    %4258 = vmatpush1.msra.mxu0 0.0
    %4259 = vmatprep.subr.mxu0 0.0
    %4260 = vmatpush1.msra.mxu0 0.0
    %4261 = vmatprep.subr.mxu0 0.0
    %4262 = vmatpush1.msra.mxu0 0.0
    %4263 = vmatprep.subr.mxu0 0.0
    %4264 = vmatpush1.msra.mxu0 0.0
    %4265 = vmatprep.subr.mxu0 0.0
    %4266 = vmatpush1.msra.mxu0 0.0
    %4267 = vmatprep.subr.mxu0 0.0
    %4268 = vmatpush1.msra.mxu0 0.0
    %4269 = vmatprep.subr.mxu0 0.0
    %4270 = vmatpush1.msra.mxu0 0.0
    %4271 = vmatprep.subr.mxu0 0.0
    %4272 = vmatpush1.msra.mxu0 0.0
    %4273 = vmatprep.subr.mxu0 0.0
    %4274 = vmatpush1.msra.mxu0 0.0
    %4275 = vmatprep.subr.mxu0 0.0
    %4276 = vmatpush1.msra.mxu0 0.0
    %4277 = vmatprep.subr.mxu0 0.0
    %4278 = vmatpush1.msra.mxu0 0.0
    %4279 = vmatprep.subr.mxu0 0.0
    %4280 = vmatpush1.msra.mxu0 0.0
    %4281 = vmatprep.subr.mxu0 0.0
    %4282 = vmatpush1.msra.mxu0 0.0
    %4283 = vmatprep.subr.mxu0 0.0
    %4284 = vmatpush1.msra.mxu0 0.0
    %4285 = vmatprep.subr.mxu0 0.0
    %4286 = vmatpush1.msra.mxu0 0.0
    %4287 = vmatprep.subr.mxu0 0.0
    %4288 = vmatpush1.msra.mxu0 0.0
    %4289 = vmatprep.subr.mxu0 0.0
    %4290 = vmatpush1.msra.mxu0 0.0
    %4291 = vmatprep.subr.mxu0 0.0
    %4292 = vmatpush1.msra.mxu0 0.0
    %4293 = vmatprep.mubr.f32.mxu0 0.0
    %4294 = vmatmul.mubr.f32.gmra.mrb[0].mxu0 %v4227
    %v4295 = vpop.f32.mrb[0].mxu0
    %v4296 = vadd.f32 0.0, %v4295
    %v4297 = vpop.f32.mrb[0].mxu0
    %4298 = vdwg.mxu0
    %4299 = vrot.lane.b32.xlu0 %v3718, 64
    %v4300 = vpop.permute.xlu0 %4299
    %v4303 = vsel %vm216, %v4070, 0
    %4305 = vmatprep.subr.mxu0 0.0
    %4306 = vmatpush1.msra.mxu0 %v4300
    %4307 = vmatprep.subr.mxu0 0.0
    %4308 = vmatpush1.msra.mxu0 0.0
    %4309 = vmatprep.subr.mxu0 0.0
    %4310 = vmatpush1.msra.mxu0 0.0
    %4311 = vmatprep.subr.mxu0 0.0
    %4312 = vmatpush1.msra.mxu0 0.0
    %4313 = vmatprep.subr.mxu0 0.0
    %4314 = vmatpush1.msra.mxu0 0.0
    %4315 = vmatprep.subr.mxu0 0.0
    %4316 = vmatpush1.msra.mxu0 0.0
    %4317 = vmatprep.subr.mxu0 0.0
    %4318 = vmatpush1.msra.mxu0 0.0
    %4319 = vmatprep.subr.mxu0 0.0
    %4320 = vmatpush1.msra.mxu0 0.0
    %4321 = vmatprep.subr.mxu0 0.0
    %4322 = vmatpush1.msra.mxu0 0.0
    %4323 = vmatprep.subr.mxu0 0.0
    %4324 = vmatpush1.msra.mxu0 0.0
    %4325 = vmatprep.subr.mxu0 0.0
    %4326 = vmatpush1.msra.mxu0 0.0
    %4327 = vmatprep.subr.mxu0 0.0
    %4328 = vmatpush1.msra.mxu0 0.0
    %4329 = vmatprep.subr.mxu0 0.0
    %4330 = vmatpush1.msra.mxu0 0.0
    %4331 = vmatprep.subr.mxu0 0.0
    %4332 = vmatpush1.msra.mxu0 0.0
    %4333 = vmatprep.subr.mxu0 0.0
    %4334 = vmatpush1.msra.mxu0 0.0
    %4335 = vmatprep.subr.mxu0 0.0
    %4336 = vmatpush1.msra.mxu0 0.0
    %4337 = vmatprep.subr.mxu0 0.0
    %4338 = vmatpush1.msra.mxu0 0.0
    %4339 = vmatprep.subr.mxu0 0.0
    %4340 = vmatpush1.msra.mxu0 0.0
    %4341 = vmatprep.subr.mxu0 0.0
    %4342 = vmatpush1.msra.mxu0 0.0
    %4343 = vmatprep.subr.mxu0 0.0
    %4344 = vmatpush1.msra.mxu0 0.0
    %4345 = vmatprep.subr.mxu0 0.0
    %4346 = vmatpush1.msra.mxu0 0.0
    %4347 = vmatprep.subr.mxu0 0.0
    %4348 = vmatpush1.msra.mxu0 0.0
    %4349 = vmatprep.subr.mxu0 0.0
    %4350 = vmatpush1.msra.mxu0 0.0
    %4351 = vmatprep.subr.mxu0 0.0
    %4352 = vmatpush1.msra.mxu0 0.0
    %4353 = vmatprep.subr.mxu0 0.0
    %4354 = vmatpush1.msra.mxu0 0.0
    %4355 = vmatprep.subr.mxu0 0.0
    %4356 = vmatpush1.msra.mxu0 0.0
    %4357 = vmatprep.subr.mxu0 0.0
    %4358 = vmatpush1.msra.mxu0 0.0
    %4359 = vmatprep.subr.mxu0 0.0
    %4360 = vmatpush1.msra.mxu0 0.0
    %4361 = vmatprep.subr.mxu0 0.0
    %4362 = vmatpush1.msra.mxu0 0.0
    %4363 = vmatprep.subr.mxu0 0.0
    %4364 = vmatpush1.msra.mxu0 0.0
    %4365 = vmatprep.subr.mxu0 0.0
    %4366 = vmatpush1.msra.mxu0 0.0
    %4367 = vmatprep.subr.mxu0 0.0
    %4368 = vmatpush1.msra.mxu0 0.0
    %4369 = vmatprep.mubr.f32.mxu0 0.0
    %4370 = vmatmul.mubr.f32.gmra.mrb[0].mxu0 %v4303
    %v4371 = vpop.f32.mrb[0].mxu0
    %v4372 = vadd.f32 0.0, %v4371
    %v4373 = vpop.f32.mrb[0].mxu0
    %4374 = vdwg.mxu0
    %4376 = vrot.lane.b32.xlu0 %v4220, 8
    %v4377 = vpop.permute.xlu0 %4376
    %4380 = vrot.lane.b32.xlu0 %v4296, 16
    %v4381 = vpop.permute.xlu0 %4380
    %4384 = vrot.lane.b32.xlu0 %v4372, 24
    %v4385 = vpop.permute.xlu0 %4384
    %v4387 = vsel %vm216, %v4144, %v4377
    %v4388 = vsel %vm884, %v4387, %v4381
    %v4389 = vsel %vm886, %v4388, %v4385
    %4391 = vrot.lane.b32.xlu0 %v3709, 120
    %v4392 = vpop.permute.xlu0 %4391
    %4393 = vrot.lane.b32.xlu0 %v3709, 112
    %v4394 = vpop.permute.xlu0 %4393
    %4395 = vrot.lane.b32.xlu0 %v3709, 104
    %v4396 = vpop.permute.xlu0 %4395
    %4397 = vrot.lane.b32.xlu0 %v3709, 96
    %v4398 = vpop.permute.xlu0 %4397
    %v4399 = vsel %vm216, %v3709, 0
    %v4401 = vsel %vm216, %v4398, 0
    %4403 = vmatprep.subr.mxu0 0.0
    %4404 = vmatpush1.xpose.msra.mxu0 %v4401
    %4405 = vmatprep.subr.mxu0 0.0
    %4406 = vmatpush1.xpose.msra.mxu0 0.0
    %4407 = vmatprep.subr.mxu0 0.0
    %4408 = vmatpush1.xpose.msra.mxu0 0.0
    %4409 = vmatprep.subr.mxu0 0.0
    %4410 = vmatpush1.xpose.msra.mxu0 0.0
    %4411 = vmatprep.subr.mxu0 0.0
    %4412 = vmatpush1.xpose.msra.mxu0 0.0
    %4413 = vmatprep.subr.mxu0 0.0
    %4414 = vmatpush1.xpose.msra.mxu0 0.0
    %4415 = vmatprep.subr.mxu0 0.0
    %4416 = vmatpush1.xpose.msra.mxu0 0.0
    %4417 = vmatprep.subr.mxu0 0.0
    %4418 = vmatpush1.xpose.msra.mxu0 0.0
    %4419 = vmatprep.subr.mxu0 0.0
    %4420 = vmatpush1.xpose.msra.mxu0 0.0
    %4421 = vmatprep.subr.mxu0 0.0
    %4422 = vmatpush1.xpose.msra.mxu0 0.0
    %4423 = vmatprep.subr.mxu0 0.0
    %4424 = vmatpush1.xpose.msra.mxu0 0.0
    %4425 = vmatprep.subr.mxu0 0.0
    %4426 = vmatpush1.xpose.msra.mxu0 0.0
    %4427 = vmatprep.subr.mxu0 0.0
    %4428 = vmatpush1.xpose.msra.mxu0 0.0
    %4429 = vmatprep.subr.mxu0 0.0
    %4430 = vmatpush1.xpose.msra.mxu0 0.0
    %4431 = vmatprep.subr.mxu0 0.0
    %4432 = vmatpush1.xpose.msra.mxu0 0.0
    %4433 = vmatprep.subr.mxu0 0.0
    %4434 = vmatpush1.xpose.msra.mxu0 0.0
    %4435 = vmatprep.subr.mxu0 0.0
    %4436 = vmatpush1.xpose.msra.mxu0 0.0
    %4437 = vmatprep.subr.mxu0 0.0
    %4438 = vmatpush1.xpose.msra.mxu0 0.0
    %4439 = vmatprep.subr.mxu0 0.0
    %4440 = vmatpush1.xpose.msra.mxu0 0.0
    %4441 = vmatprep.subr.mxu0 0.0
    %4442 = vmatpush1.xpose.msra.mxu0 0.0
    %4443 = vmatprep.subr.mxu0 0.0
    %4444 = vmatpush1.xpose.msra.mxu0 0.0
    %4445 = vmatprep.subr.mxu0 0.0
    %4446 = vmatpush1.xpose.msra.mxu0 0.0
    %4447 = vmatprep.subr.mxu0 0.0
    %4448 = vmatpush1.xpose.msra.mxu0 0.0
    %4449 = vmatprep.subr.mxu0 0.0
    %4450 = vmatpush1.xpose.msra.mxu0 0.0
    %4451 = vmatprep.subr.mxu0 0.0
    %4452 = vmatpush1.xpose.msra.mxu0 0.0
    %4453 = vmatprep.subr.mxu0 0.0
    %4454 = vmatpush1.xpose.msra.mxu0 0.0
    %4455 = vmatprep.subr.mxu0 0.0
    %4456 = vmatpush1.xpose.msra.mxu0 0.0
    %4457 = vmatprep.subr.mxu0 0.0
    %4458 = vmatpush1.xpose.msra.mxu0 0.0
    %4459 = vmatprep.subr.mxu0 0.0
    %4460 = vmatpush1.xpose.msra.mxu0 0.0
    %4461 = vmatprep.subr.mxu0 0.0
    %4462 = vmatpush1.xpose.msra.mxu0 0.0
    %4463 = vmatprep.subr.mxu0 0.0
    %4464 = vmatpush1.xpose.msra.mxu0 0.0
    %4465 = vmatprep.subr.mxu0 0.0
    %4466 = vmatpush1.xpose.msra.mxu0 0.0
    %4467 = vmatprep.mubr.f32.mxu0 0.0
    %4468 = vmatmul.mubr.f32.gmra.mrb[0].mxu0 %v4399
    %v4469 = vpop.f32.mrb[0].mxu0
    %v4470 = vadd.f32 %v94, %v4469
    %v4471 = vpop.f32.mrb[0].mxu0
    %4472 = vdwg.mxu0
    %4473 = vrot.lane.b32.xlu0 %v4392, 96
    %v4474 = vpop.permute.xlu0 %4473
    %v4475 = vsel %vm216, %v4392, 0
    %v4477 = vsel %vm216, %v4474, 0
    %4479 = vmatprep.subr.mxu0 0.0
    %4480 = vmatpush1.xpose.msra.mxu0 %v4477
    %4481 = vmatprep.subr.mxu0 0.0
    %4482 = vmatpush1.xpose.msra.mxu0 0.0
    %4483 = vmatprep.subr.mxu0 0.0
    %4484 = vmatpush1.xpose.msra.mxu0 0.0
    %4485 = vmatprep.subr.mxu0 0.0
    %4486 = vmatpush1.xpose.msra.mxu0 0.0
    %4487 = vmatprep.subr.mxu0 0.0
    %4488 = vmatpush1.xpose.msra.mxu0 0.0
    %4489 = vmatprep.subr.mxu0 0.0
    %4490 = vmatpush1.xpose.msra.mxu0 0.0
    %4491 = vmatprep.subr.mxu0 0.0
    %4492 = vmatpush1.xpose.msra.mxu0 0.0
    %4493 = vmatprep.subr.mxu0 0.0
    %4494 = vmatpush1.xpose.msra.mxu0 0.0
    %4495 = vmatprep.subr.mxu0 0.0
    %4496 = vmatpush1.xpose.msra.mxu0 0.0
    %4497 = vmatprep.subr.mxu0 0.0
    %4498 = vmatpush1.xpose.msra.mxu0 0.0
    %4499 = vmatprep.subr.mxu0 0.0
    %4500 = vmatpush1.xpose.msra.mxu0 0.0
    %4501 = vmatprep.subr.mxu0 0.0
    %4502 = vmatpush1.xpose.msra.mxu0 0.0
    %4503 = vmatprep.subr.mxu0 0.0
    %4504 = vmatpush1.xpose.msra.mxu0 0.0
    %4505 = vmatprep.subr.mxu0 0.0
    %4506 = vmatpush1.xpose.msra.mxu0 0.0
    %4507 = vmatprep.subr.mxu0 0.0
    %4508 = vmatpush1.xpose.msra.mxu0 0.0
    %4509 = vmatprep.subr.mxu0 0.0
    %4510 = vmatpush1.xpose.msra.mxu0 0.0
    %4511 = vmatprep.subr.mxu0 0.0
    %4512 = vmatpush1.xpose.msra.mxu0 0.0
    %4513 = vmatprep.subr.mxu0 0.0
    %4514 = vmatpush1.xpose.msra.mxu0 0.0
    %4515 = vmatprep.subr.mxu0 0.0
    %4516 = vmatpush1.xpose.msra.mxu0 0.0
    %4517 = vmatprep.subr.mxu0 0.0
    %4518 = vmatpush1.xpose.msra.mxu0 0.0
    %4519 = vmatprep.subr.mxu0 0.0
    %4520 = vmatpush1.xpose.msra.mxu0 0.0
    %4521 = vmatprep.subr.mxu0 0.0
    %4522 = vmatpush1.xpose.msra.mxu0 0.0
    %4523 = vmatprep.subr.mxu0 0.0
    %4524 = vmatpush1.xpose.msra.mxu0 0.0
    %4525 = vmatprep.subr.mxu0 0.0
    %4526 = vmatpush1.xpose.msra.mxu0 0.0
    %4527 = vmatprep.subr.mxu0 0.0
    %4528 = vmatpush1.xpose.msra.mxu0 0.0
    %4529 = vmatprep.subr.mxu0 0.0
    %4530 = vmatpush1.xpose.msra.mxu0 0.0
    %4531 = vmatprep.subr.mxu0 0.0
    %4532 = vmatpush1.xpose.msra.mxu0 0.0
    %4533 = vmatprep.subr.mxu0 0.0
    %4534 = vmatpush1.xpose.msra.mxu0 0.0
    %4535 = vmatprep.subr.mxu0 0.0
    %4536 = vmatpush1.xpose.msra.mxu0 0.0
    %4537 = vmatprep.subr.mxu0 0.0
    %4538 = vmatpush1.xpose.msra.mxu0 0.0
    %4539 = vmatprep.subr.mxu0 0.0
    %4540 = vmatpush1.xpose.msra.mxu0 0.0
    %4541 = vmatprep.subr.mxu0 0.0
    %4542 = vmatpush1.xpose.msra.mxu0 0.0
    %4543 = vmatprep.mubr.f32.mxu0 0.0
    %4544 = vmatmul.mubr.f32.gmra.mrb[0].mxu0 %v4475
    %v4545 = vpop.f32.mrb[0].mxu0
    %v4546 = vadd.f32 %v94, %v4545
    %v4547 = vpop.f32.mrb[0].mxu0
    %4548 = vdwg.mxu0
    %4549 = vrot.lane.b32.xlu0 %v4394, 96
    %v4550 = vpop.permute.xlu0 %4549
    %v4551 = vsel %vm216, %v4394, 0
    %v4553 = vsel %vm216, %v4550, 0
    %4555 = vmatprep.subr.mxu0 0.0
    %4556 = vmatpush1.xpose.msra.mxu0 %v4553
    %4557 = vmatprep.subr.mxu0 0.0
    %4558 = vmatpush1.xpose.msra.mxu0 0.0
    %4559 = vmatprep.subr.mxu0 0.0
    %4560 = vmatpush1.xpose.msra.mxu0 0.0
    %4561 = vmatprep.subr.mxu0 0.0
    %4562 = vmatpush1.xpose.msra.mxu0 0.0
    %4563 = vmatprep.subr.mxu0 0.0
    %4564 = vmatpush1.xpose.msra.mxu0 0.0
    %4565 = vmatprep.subr.mxu0 0.0
    %4566 = vmatpush1.xpose.msra.mxu0 0.0
    %4567 = vmatprep.subr.mxu0 0.0
    %4568 = vmatpush1.xpose.msra.mxu0 0.0
    %4569 = vmatprep.subr.mxu0 0.0
    %4570 = vmatpush1.xpose.msra.mxu0 0.0
    %4571 = vmatprep.subr.mxu0 0.0
    %4572 = vmatpush1.xpose.msra.mxu0 0.0
    %4573 = vmatprep.subr.mxu0 0.0
    %4574 = vmatpush1.xpose.msra.mxu0 0.0
    %4575 = vmatprep.subr.mxu0 0.0
    %4576 = vmatpush1.xpose.msra.mxu0 0.0
    %4577 = vmatprep.subr.mxu0 0.0
    %4578 = vmatpush1.xpose.msra.mxu0 0.0
    %4579 = vmatprep.subr.mxu0 0.0
    %4580 = vmatpush1.xpose.msra.mxu0 0.0
    %4581 = vmatprep.subr.mxu0 0.0
    %4582 = vmatpush1.xpose.msra.mxu0 0.0
    %4583 = vmatprep.subr.mxu0 0.0
    %4584 = vmatpush1.xpose.msra.mxu0 0.0
    %4585 = vmatprep.subr.mxu0 0.0
    %4586 = vmatpush1.xpose.msra.mxu0 0.0
    %4587 = vmatprep.subr.mxu0 0.0
    %4588 = vmatpush1.xpose.msra.mxu0 0.0
    %4589 = vmatprep.subr.mxu0 0.0
    %4590 = vmatpush1.xpose.msra.mxu0 0.0
    %4591 = vmatprep.subr.mxu0 0.0
    %4592 = vmatpush1.xpose.msra.mxu0 0.0
    %4593 = vmatprep.subr.mxu0 0.0
    %4594 = vmatpush1.xpose.msra.mxu0 0.0
    %4595 = vmatprep.subr.mxu0 0.0
    %4596 = vmatpush1.xpose.msra.mxu0 0.0
    %4597 = vmatprep.subr.mxu0 0.0
    %4598 = vmatpush1.xpose.msra.mxu0 0.0
    %4599 = vmatprep.subr.mxu0 0.0
    %4600 = vmatpush1.xpose.msra.mxu0 0.0
    %4601 = vmatprep.subr.mxu0 0.0
    %4602 = vmatpush1.xpose.msra.mxu0 0.0
    %4603 = vmatprep.subr.mxu0 0.0
    %4604 = vmatpush1.xpose.msra.mxu0 0.0
    %4605 = vmatprep.subr.mxu0 0.0
    %4606 = vmatpush1.xpose.msra.mxu0 0.0
    %4607 = vmatprep.subr.mxu0 0.0
    %4608 = vmatpush1.xpose.msra.mxu0 0.0
    %4609 = vmatprep.subr.mxu0 0.0
    %4610 = vmatpush1.xpose.msra.mxu0 0.0
    %4611 = vmatprep.subr.mxu0 0.0
    %4612 = vmatpush1.xpose.msra.mxu0 0.0
    %4613 = vmatprep.subr.mxu0 0.0
    %4614 = vmatpush1.xpose.msra.mxu0 0.0
    %4615 = vmatprep.subr.mxu0 0.0
    %4616 = vmatpush1.xpose.msra.mxu0 0.0
    %4617 = vmatprep.subr.mxu0 0.0
    %4618 = vmatpush1.xpose.msra.mxu0 0.0
    %4619 = vmatprep.mubr.f32.mxu0 0.0
    %4620 = vmatmul.mubr.f32.gmra.mrb[0].mxu0 %v4551
    %v4621 = vpop.f32.mrb[0].mxu0
    %v4622 = vadd.f32 %v94, %v4621
    %v4623 = vpop.f32.mrb[0].mxu0
    %4624 = vdwg.mxu0
    %4625 = vrot.lane.b32.xlu0 %v4396, 96
    %v4626 = vpop.permute.xlu0 %4625
    %v4627 = vsel %vm216, %v4396, 0
    %v4629 = vsel %vm216, %v4626, 0
    %4631 = vmatprep.subr.mxu0 0.0
    %4632 = vmatpush1.xpose.msra.mxu0 %v4629
    %4633 = vmatprep.subr.mxu0 0.0
    %4634 = vmatpush1.xpose.msra.mxu0 0.0
    %4635 = vmatprep.subr.mxu0 0.0
    %4636 = vmatpush1.xpose.msra.mxu0 0.0
    %4637 = vmatprep.subr.mxu0 0.0
    %4638 = vmatpush1.xpose.msra.mxu0 0.0
    %4639 = vmatprep.subr.mxu0 0.0
    %4640 = vmatpush1.xpose.msra.mxu0 0.0
    %4641 = vmatprep.subr.mxu0 0.0
    %4642 = vmatpush1.xpose.msra.mxu0 0.0
    %4643 = vmatprep.subr.mxu0 0.0
    %4644 = vmatpush1.xpose.msra.mxu0 0.0
    %4645 = vmatprep.subr.mxu0 0.0
    %4646 = vmatpush1.xpose.msra.mxu0 0.0
    %4647 = vmatprep.subr.mxu0 0.0
    %4648 = vmatpush1.xpose.msra.mxu0 0.0
    %4649 = vmatprep.subr.mxu0 0.0
    %4650 = vmatpush1.xpose.msra.mxu0 0.0
    %4651 = vmatprep.subr.mxu0 0.0
    %4652 = vmatpush1.xpose.msra.mxu0 0.0
    %4653 = vmatprep.subr.mxu0 0.0
    %4654 = vmatpush1.xpose.msra.mxu0 0.0
    %4655 = vmatprep.subr.mxu0 0.0
    %4656 = vmatpush1.xpose.msra.mxu0 0.0
    %4657 = vmatprep.subr.mxu0 0.0
    %4658 = vmatpush1.xpose.msra.mxu0 0.0
    %4659 = vmatprep.subr.mxu0 0.0
    %4660 = vmatpush1.xpose.msra.mxu0 0.0
    %4661 = vmatprep.subr.mxu0 0.0
    %4662 = vmatpush1.xpose.msra.mxu0 0.0
    %4663 = vmatprep.subr.mxu0 0.0
    %4664 = vmatpush1.xpose.msra.mxu0 0.0
    %4665 = vmatprep.subr.mxu0 0.0
    %4666 = vmatpush1.xpose.msra.mxu0 0.0
    %4667 = vmatprep.subr.mxu0 0.0
    %4668 = vmatpush1.xpose.msra.mxu0 0.0
    %4669 = vmatprep.subr.mxu0 0.0
    %4670 = vmatpush1.xpose.msra.mxu0 0.0
    %4671 = vmatprep.subr.mxu0 0.0
    %4672 = vmatpush1.xpose.msra.mxu0 0.0
    %4673 = vmatprep.subr.mxu0 0.0
    %4674 = vmatpush1.xpose.msra.mxu0 0.0
    %4675 = vmatprep.subr.mxu0 0.0
    %4676 = vmatpush1.xpose.msra.mxu0 0.0
    %4677 = vmatprep.subr.mxu0 0.0
    %4678 = vmatpush1.xpose.msra.mxu0 0.0
    %4679 = vmatprep.subr.mxu0 0.0
    %4680 = vmatpush1.xpose.msra.mxu0 0.0
    %4681 = vmatprep.subr.mxu0 0.0
    %4682 = vmatpush1.xpose.msra.mxu0 0.0
    %4683 = vmatprep.subr.mxu0 0.0
    %4684 = vmatpush1.xpose.msra.mxu0 0.0
    %4685 = vmatprep.subr.mxu0 0.0
    %4686 = vmatpush1.xpose.msra.mxu0 0.0
    %4687 = vmatprep.subr.mxu0 0.0
    %4688 = vmatpush1.xpose.msra.mxu0 0.0
    %4689 = vmatprep.subr.mxu0 0.0
    %4690 = vmatpush1.xpose.msra.mxu0 0.0
    %4691 = vmatprep.subr.mxu0 0.0
    %4692 = vmatpush1.xpose.msra.mxu0 0.0
    %4693 = vmatprep.subr.mxu0 0.0
    %4694 = vmatpush1.xpose.msra.mxu0 0.0
    %4695 = vmatprep.mubr.f32.mxu0 0.0
    %4696 = vmatmul.mubr.f32.gmra.mrb[0].mxu0 %v4627
    %v4697 = vpop.f32.mrb[0].mxu0
    %v4698 = vadd.f32 %v94, %v4697
    %v4699 = vpop.f32.mrb[0].mxu0
    %4700 = vdwg.mxu0
    %v4701 = vmul.f32 %v4470, 0.17677669
    %v4702 = vmul.f32 %v4546, 0.17677669
    %v4703 = vmul.f32 %v4622, 0.17677669
    %v4704 = vmul.f32 %v4698, 0.17677669
    %v4705 = vsel %vm216, %v4701, -inf
    %4706 = vmax.xlane.f32.xlu0 %v4705
    %v4707 = vpop.xlane.xlu0 %4706
    %v4708 = vsel %vm216, %v4702, -inf
    %4709 = vmax.xlane.f32.xlu0 %v4708
    %v4710 = vpop.xlane.xlu0 %4709
    %v4711 = vsel %vm216, %v4703, -inf
    %4712 = vmax.xlane.f32.xlu0 %v4711
    %v4713 = vpop.xlane.xlu0 %4712
    %v4714 = vsel %vm216, %v4704, -inf
    %4715 = vmax.xlane.f32.xlu0 %v4714
    %v4716 = vpop.xlane.xlu0 %4715
    %v4717 = vsub.f32 %v4701, %v4707
    %v4718 = vsub.f32 %v4702, %v4710
    %v4719 = vsub.f32 %v4703, %v4713
    %v4720 = vsub.f32 %v4704, %v4716
    %v4721 = vmul.f32 %v4717, 1.442695
    %v4722 = vpow.pop %v4721
    %v4723 = vmul.f32 %v4718, 1.442695
    %v4724 = vpow.pop %v4723
    %v4725 = vmul.f32 %v4719, 1.442695
    %v4726 = vpow.pop %v4725
    %v4727 = vmul.f32 %v4720, 1.442695
    %v4728 = vpow.pop %v4727
    %v4729 = vsel %vm216, %v4722, 0.0
    %4730 = vadd.xlane.f32.xlu0 %v4729
    %v4731 = vpop.xlane.xlu0 %4730
    %v4732 = vsel %vm216, %v4724, 0.0
    %4733 = vadd.xlane.f32.xlu0 %v4732
    %v4734 = vpop.xlane.xlu0 %4733
    %v4735 = vsel %vm216, %v4726, 0.0
    %4736 = vadd.xlane.f32.xlu0 %v4735
    %v4737 = vpop.xlane.xlu0 %4736
    %v4738 = vsel %vm216, %v4728, 0.0
    %4739 = vadd.xlane.f32.xlu0 %v4738
    %v4740 = vpop.xlane.xlu0 %4739
    %v4741 = vrcp.pop %v4731
    %v4742 = vrcp.pop %v4734
    %v4743 = vrcp.pop %v4737
    %v4744 = vrcp.pop %v4740
    %v4745 = vmul.f32 %v4722, %v4741
    %v4746 = vmul.f32 %v4724, %v4742
    %v4747 = vmul.f32 %v4726, %v4743
    %v4748 = vmul.f32 %v4728, %v4744
    %4749 = vrot.lane.b32.xlu0 %v3709, 64
    %v4750 = vpop.permute.xlu0 %4749
    %v4753 = vsel %vm216, %v4745, 0
    %4755 = vmatprep.subr.mxu0 0.0
    %4756 = vmatpush1.msra.mxu0 %v4750
    %4757 = vmatprep.subr.mxu0 0.0
    %4758 = vmatpush1.msra.mxu0 0.0
    %4759 = vmatprep.subr.mxu0 0.0
    %4760 = vmatpush1.msra.mxu0 0.0
    %4761 = vmatprep.subr.mxu0 0.0
    %4762 = vmatpush1.msra.mxu0 0.0
    %4763 = vmatprep.subr.mxu0 0.0
    %4764 = vmatpush1.msra.mxu0 0.0
    %4765 = vmatprep.subr.mxu0 0.0
    %4766 = vmatpush1.msra.mxu0 0.0
    %4767 = vmatprep.subr.mxu0 0.0
    %4768 = vmatpush1.msra.mxu0 0.0
    %4769 = vmatprep.subr.mxu0 0.0
    %4770 = vmatpush1.msra.mxu0 0.0
    %4771 = vmatprep.subr.mxu0 0.0
    %4772 = vmatpush1.msra.mxu0 0.0
    %4773 = vmatprep.subr.mxu0 0.0
    %4774 = vmatpush1.msra.mxu0 0.0
    %4775 = vmatprep.subr.mxu0 0.0
    %4776 = vmatpush1.msra.mxu0 0.0
    %4777 = vmatprep.subr.mxu0 0.0
    %4778 = vmatpush1.msra.mxu0 0.0
    %4779 = vmatprep.subr.mxu0 0.0
    %4780 = vmatpush1.msra.mxu0 0.0
    %4781 = vmatprep.subr.mxu0 0.0
    %4782 = vmatpush1.msra.mxu0 0.0
    %4783 = vmatprep.subr.mxu0 0.0
    %4784 = vmatpush1.msra.mxu0 0.0
    %4785 = vmatprep.subr.mxu0 0.0
    %4786 = vmatpush1.msra.mxu0 0.0
    %4787 = vmatprep.subr.mxu0 0.0
    %4788 = vmatpush1.msra.mxu0 0.0
    %4789 = vmatprep.subr.mxu0 0.0
    %4790 = vmatpush1.msra.mxu0 0.0
    %4791 = vmatprep.subr.mxu0 0.0
    %4792 = vmatpush1.msra.mxu0 0.0
    %4793 = vmatprep.subr.mxu0 0.0
    %4794 = vmatpush1.msra.mxu0 0.0
    %4795 = vmatprep.subr.mxu0 0.0
    %4796 = vmatpush1.msra.mxu0 0.0
    %4797 = vmatprep.subr.mxu0 0.0
    %4798 = vmatpush1.msra.mxu0 0.0
    %4799 = vmatprep.subr.mxu0 0.0
    %4800 = vmatpush1.msra.mxu0 0.0
    %4801 = vmatprep.subr.mxu0 0.0
    %4802 = vmatpush1.msra.mxu0 0.0
    %4803 = vmatprep.subr.mxu0 0.0
    %4804 = vmatpush1.msra.mxu0 0.0
    %4805 = vmatprep.subr.mxu0 0.0
    %4806 = vmatpush1.msra.mxu0 0.0
    %4807 = vmatprep.subr.mxu0 0.0
    %4808 = vmatpush1.msra.mxu0 0.0
    %4809 = vmatprep.subr.mxu0 0.0
    %4810 = vmatpush1.msra.mxu0 0.0
    %4811 = vmatprep.subr.mxu0 0.0
    %4812 = vmatpush1.msra.mxu0 0.0
    %4813 = vmatprep.subr.mxu0 0.0
    %4814 = vmatpush1.msra.mxu0 0.0
    %4815 = vmatprep.subr.mxu0 0.0
    %4816 = vmatpush1.msra.mxu0 0.0
    %4817 = vmatprep.subr.mxu0 0.0
    %4818 = vmatpush1.msra.mxu0 0.0
    %4819 = vmatprep.mubr.f32.mxu0 0.0
    %4820 = vmatmul.mubr.f32.gmra.mrb[0].mxu0 %v4753
    %v4821 = vpop.f32.mrb[0].mxu0
    %v4822 = vadd.f32 0.0, %v4821
    %v4823 = vpop.f32.mrb[0].mxu0
    %4824 = vdwg.mxu0
    %4825 = vrot.lane.b32.xlu0 %v4392, 64
    %v4826 = vpop.permute.xlu0 %4825
    %v4829 = vsel %vm216, %v4746, 0
    %4831 = vmatprep.subr.mxu0 0.0
    %4832 = vmatpush1.msra.mxu0 %v4826
    %4833 = vmatprep.subr.mxu0 0.0
    %4834 = vmatpush1.msra.mxu0 0.0
    %4835 = vmatprep.subr.mxu0 0.0
    %4836 = vmatpush1.msra.mxu0 0.0
    %4837 = vmatprep.subr.mxu0 0.0
    %4838 = vmatpush1.msra.mxu0 0.0
    %4839 = vmatprep.subr.mxu0 0.0
    %4840 = vmatpush1.msra.mxu0 0.0
    %4841 = vmatprep.subr.mxu0 0.0
    %4842 = vmatpush1.msra.mxu0 0.0
    %4843 = vmatprep.subr.mxu0 0.0
    %4844 = vmatpush1.msra.mxu0 0.0
    %4845 = vmatprep.subr.mxu0 0.0
    %4846 = vmatpush1.msra.mxu0 0.0
    %4847 = vmatprep.subr.mxu0 0.0
    %4848 = vmatpush1.msra.mxu0 0.0
    %4849 = vmatprep.subr.mxu0 0.0
    %4850 = vmatpush1.msra.mxu0 0.0
    %4851 = vmatprep.subr.mxu0 0.0
    %4852 = vmatpush1.msra.mxu0 0.0
    %4853 = vmatprep.subr.mxu0 0.0
    %4854 = vmatpush1.msra.mxu0 0.0
    %4855 = vmatprep.subr.mxu0 0.0
    %4856 = vmatpush1.msra.mxu0 0.0
    %4857 = vmatprep.subr.mxu0 0.0
    %4858 = vmatpush1.msra.mxu0 0.0
    %4859 = vmatprep.subr.mxu0 0.0
    %4860 = vmatpush1.msra.mxu0 0.0
    %4861 = vmatprep.subr.mxu0 0.0
    %4862 = vmatpush1.msra.mxu0 0.0
    %4863 = vmatprep.subr.mxu0 0.0
    %4864 = vmatpush1.msra.mxu0 0.0
    %4865 = vmatprep.subr.mxu0 0.0
    %4866 = vmatpush1.msra.mxu0 0.0
    %4867 = vmatprep.subr.mxu0 0.0
    %4868 = vmatpush1.msra.mxu0 0.0
    %4869 = vmatprep.subr.mxu0 0.0
    %4870 = vmatpush1.msra.mxu0 0.0
    %4871 = vmatprep.subr.mxu0 0.0
    %4872 = vmatpush1.msra.mxu0 0.0
    %4873 = vmatprep.subr.mxu0 0.0
    %4874 = vmatpush1.msra.mxu0 0.0
    %4875 = vmatprep.subr.mxu0 0.0
    %4876 = vmatpush1.msra.mxu0 0.0
    %4877 = vmatprep.subr.mxu0 0.0
    %4878 = vmatpush1.msra.mxu0 0.0
    %4879 = vmatprep.subr.mxu0 0.0
    %4880 = vmatpush1.msra.mxu0 0.0
    %4881 = vmatprep.subr.mxu0 0.0
    %4882 = vmatpush1.msra.mxu0 0.0
    %4883 = vmatprep.subr.mxu0 0.0
    %4884 = vmatpush1.msra.mxu0 0.0
    %4885 = vmatprep.subr.mxu0 0.0
    %4886 = vmatpush1.msra.mxu0 0.0
    %4887 = vmatprep.subr.mxu0 0.0
    %4888 = vmatpush1.msra.mxu0 0.0
    %4889 = vmatprep.subr.mxu0 0.0
    %4890 = vmatpush1.msra.mxu0 0.0
    %4891 = vmatprep.subr.mxu0 0.0
    %4892 = vmatpush1.msra.mxu0 0.0
    %4893 = vmatprep.subr.mxu0 0.0
    %4894 = vmatpush1.msra.mxu0 0.0
    %4895 = vmatprep.mubr.f32.mxu0 0.0
    %4896 = vmatmul.mubr.f32.gmra.mrb[0].mxu0 %v4829
    %v4897 = vpop.f32.mrb[0].mxu0
    %v4898 = vadd.f32 0.0, %v4897
    %v4899 = vpop.f32.mrb[0].mxu0
    %4900 = vdwg.mxu0
    %4901 = vrot.lane.b32.xlu0 %v4394, 64
    %v4902 = vpop.permute.xlu0 %4901
    %v4905 = vsel %vm216, %v4747, 0
    %4907 = vmatprep.subr.mxu0 0.0
    %4908 = vmatpush1.msra.mxu0 %v4902
    %4909 = vmatprep.subr.mxu0 0.0
    %4910 = vmatpush1.msra.mxu0 0.0
    %4911 = vmatprep.subr.mxu0 0.0
    %4912 = vmatpush1.msra.mxu0 0.0
    %4913 = vmatprep.subr.mxu0 0.0
    %4914 = vmatpush1.msra.mxu0 0.0
    %4915 = vmatprep.subr.mxu0 0.0
    %4916 = vmatpush1.msra.mxu0 0.0
    %4917 = vmatprep.subr.mxu0 0.0
    %4918 = vmatpush1.msra.mxu0 0.0
    %4919 = vmatprep.subr.mxu0 0.0
    %4920 = vmatpush1.msra.mxu0 0.0
    %4921 = vmatprep.subr.mxu0 0.0
    %4922 = vmatpush1.msra.mxu0 0.0
    %4923 = vmatprep.subr.mxu0 0.0
    %4924 = vmatpush1.msra.mxu0 0.0
    %4925 = vmatprep.subr.mxu0 0.0
    %4926 = vmatpush1.msra.mxu0 0.0
    %4927 = vmatprep.subr.mxu0 0.0
    %4928 = vmatpush1.msra.mxu0 0.0
    %4929 = vmatprep.subr.mxu0 0.0
    %4930 = vmatpush1.msra.mxu0 0.0
    %4931 = vmatprep.subr.mxu0 0.0
    %4932 = vmatpush1.msra.mxu0 0.0
    %4933 = vmatprep.subr.mxu0 0.0
    %4934 = vmatpush1.msra.mxu0 0.0
    %4935 = vmatprep.subr.mxu0 0.0
    %4936 = vmatpush1.msra.mxu0 0.0
    %4937 = vmatprep.subr.mxu0 0.0
    %4938 = vmatpush1.msra.mxu0 0.0
    %4939 = vmatprep.subr.mxu0 0.0
    %4940 = vmatpush1.msra.mxu0 0.0
    %4941 = vmatprep.subr.mxu0 0.0
    %4942 = vmatpush1.msra.mxu0 0.0
    %4943 = vmatprep.subr.mxu0 0.0
    %4944 = vmatpush1.msra.mxu0 0.0
    %4945 = vmatprep.subr.mxu0 0.0
    %4946 = vmatpush1.msra.mxu0 0.0
    %4947 = vmatprep.subr.mxu0 0.0
    %4948 = vmatpush1.msra.mxu0 0.0
    %4949 = vmatprep.subr.mxu0 0.0
    %4950 = vmatpush1.msra.mxu0 0.0
    %4951 = vmatprep.subr.mxu0 0.0
    %4952 = vmatpush1.msra.mxu0 0.0
    %4953 = vmatprep.subr.mxu0 0.0
    %4954 = vmatpush1.msra.mxu0 0.0
    %4955 = vmatprep.subr.mxu0 0.0
    %4956 = vmatpush1.msra.mxu0 0.0
    %4957 = vmatprep.subr.mxu0 0.0
    %4958 = vmatpush1.msra.mxu0 0.0
    %4959 = vmatprep.subr.mxu0 0.0
    %4960 = vmatpush1.msra.mxu0 0.0
    %4961 = vmatprep.subr.mxu0 0.0
    %4962 = vmatpush1.msra.mxu0 0.0
    %4963 = vmatprep.subr.mxu0 0.0
    %4964 = vmatpush1.msra.mxu0 0.0
    %4965 = vmatprep.subr.mxu0 0.0
    %4966 = vmatpush1.msra.mxu0 0.0
    %4967 = vmatprep.subr.mxu0 0.0
    %4968 = vmatpush1.msra.mxu0 0.0
    %4969 = vmatprep.subr.mxu0 0.0
    %4970 = vmatpush1.msra.mxu0 0.0
    %4971 = vmatprep.mubr.f32.mxu0 0.0
    %4972 = vmatmul.mubr.f32.gmra.mrb[0].mxu0 %v4905
    %v4973 = vpop.f32.mrb[0].mxu0
    %v4974 = vadd.f32 0.0, %v4973
    %v4975 = vpop.f32.mrb[0].mxu0
    %4976 = vdwg.mxu0
    %4977 = vrot.lane.b32.xlu0 %v4396, 64
    %v4978 = vpop.permute.xlu0 %4977
    %v4981 = vsel %vm216, %v4748, 0
    %4983 = vmatprep.subr.mxu0 0.0
    %4984 = vmatpush1.msra.mxu0 %v4978
    %4985 = vmatprep.subr.mxu0 0.0
    %4986 = vmatpush1.msra.mxu0 0.0
    %4987 = vmatprep.subr.mxu0 0.0
    %4988 = vmatpush1.msra.mxu0 0.0
    %4989 = vmatprep.subr.mxu0 0.0
    %4990 = vmatpush1.msra.mxu0 0.0
    %4991 = vmatprep.subr.mxu0 0.0
    %4992 = vmatpush1.msra.mxu0 0.0
    %4993 = vmatprep.subr.mxu0 0.0
    %4994 = vmatpush1.msra.mxu0 0.0
    %4995 = vmatprep.subr.mxu0 0.0
    %4996 = vmatpush1.msra.mxu0 0.0
    %4997 = vmatprep.subr.mxu0 0.0
    %4998 = vmatpush1.msra.mxu0 0.0
    %4999 = vmatprep.subr.mxu0 0.0
    %5000 = vmatpush1.msra.mxu0 0.0
    %5001 = vmatprep.subr.mxu0 0.0
    %5002 = vmatpush1.msra.mxu0 0.0
    %5003 = vmatprep.subr.mxu0 0.0
    %5004 = vmatpush1.msra.mxu0 0.0
    %5005 = vmatprep.subr.mxu0 0.0
    %5006 = vmatpush1.msra.mxu0 0.0
    %5007 = vmatprep.subr.mxu0 0.0
    %5008 = vmatpush1.msra.mxu0 0.0
    %5009 = vmatprep.subr.mxu0 0.0
    %5010 = vmatpush1.msra.mxu0 0.0
    %5011 = vmatprep.subr.mxu0 0.0
    %5012 = vmatpush1.msra.mxu0 0.0
    %5013 = vmatprep.subr.mxu0 0.0
    %5014 = vmatpush1.msra.mxu0 0.0
    %5015 = vmatprep.subr.mxu0 0.0
    %5016 = vmatpush1.msra.mxu0 0.0
    %5017 = vmatprep.subr.mxu0 0.0
    %5018 = vmatpush1.msra.mxu0 0.0
    %5019 = vmatprep.subr.mxu0 0.0
    %5020 = vmatpush1.msra.mxu0 0.0
    %5021 = vmatprep.subr.mxu0 0.0
    %5022 = vmatpush1.msra.mxu0 0.0
    %5023 = vmatprep.subr.mxu0 0.0
    %5024 = vmatpush1.msra.mxu0 0.0
    %5025 = vmatprep.subr.mxu0 0.0
    %5026 = vmatpush1.msra.mxu0 0.0
    %5027 = vmatprep.subr.mxu0 0.0
    %5028 = vmatpush1.msra.mxu0 0.0
    %5029 = vmatprep.subr.mxu0 0.0
    %5030 = vmatpush1.msra.mxu0 0.0
    %5031 = vmatprep.subr.mxu0 0.0
    %5032 = vmatpush1.msra.mxu0 0.0
    %5033 = vmatprep.subr.mxu0 0.0
    %5034 = vmatpush1.msra.mxu0 0.0
    %5035 = vmatprep.subr.mxu0 0.0
    %5036 = vmatpush1.msra.mxu0 0.0
    %5037 = vmatprep.subr.mxu0 0.0
    %5038 = vmatpush1.msra.mxu0 0.0
    %5039 = vmatprep.subr.mxu0 0.0
    %5040 = vmatpush1.msra.mxu0 0.0
    %5041 = vmatprep.subr.mxu0 0.0
    %5042 = vmatpush1.msra.mxu0 0.0
    %5043 = vmatprep.subr.mxu0 0.0
    %5044 = vmatpush1.msra.mxu0 0.0
    %5045 = vmatprep.subr.mxu0 0.0
    %5046 = vmatpush1.msra.mxu0 0.0
    %5047 = vmatprep.mubr.f32.mxu0 0.0
    %5048 = vmatmul.mubr.f32.gmra.mrb[0].mxu0 %v4981
    %v5049 = vpop.f32.mrb[0].mxu0
    %v5050 = vadd.f32 0.0, %v5049
    %v5051 = vpop.f32.mrb[0].mxu0
    %5052 = vdwg.mxu0
    %5054 = vrot.lane.b32.xlu0 %v4898, 8
    %v5055 = vpop.permute.xlu0 %5054
    %5058 = vrot.lane.b32.xlu0 %v4974, 16
    %v5059 = vpop.permute.xlu0 %5058
    %5062 = vrot.lane.b32.xlu0 %v5050, 24
    %v5063 = vpop.permute.xlu0 %5062
    %v5065 = vsel %vm216, %v4822, %v5055
    %v5066 = vsel %vm884, %v5065, %v5059
    %v5067 = vsel %vm886, %v5066, %v5063
    %s5068 = scalar_lea.vmem %s6, 32
    %v5069 = vld [vmem:[%s5068] sm:$0xff]
    %v5070 = vld [vmem:[%s5068 + $0x8] sm:$0xff]
    %v5071 = vld [vmem:[%s5068 + $0x10] sm:$0xff]
    %v5072 = vld [vmem:[%s5068 + $0x18] sm:$0xff]
    %s5073 = scalar_lea.vmem %s7, 1
    %v5074 = vld [vmem:[%s5073] sm:$0x1]
    %v5076 = vlaneseq
    %v5077 = vshrl.u32 %v5076, 7
    %v5078 = vsub.s32 0, %v5077
    %v5079 = vrot.slane %v5074, %v5078
    %v5082 = vsel %vm125, %v4389, 0
    %v5085 = vsel %vm125, %v5067, 0
    %5087 = vmatprep.subr.mxu0 0.0
    %5088 = vmatpush1.msra.mxu0 %v5069
    %5089 = vmatprep.subr.mxu0 0.0
    %5090 = vmatpush1.msra.mxu0 %v5070
    %5091 = vmatprep.subr.mxu0 0.0
    %5092 = vmatpush1.msra.mxu0 %v5071
    %5093 = vmatprep.subr.mxu0 0.0
    %5094 = vmatpush1.msra.mxu0 %v5072
    %5095 = vmatprep.subr.mxu0 0.0
    %5096 = vmatpush1.msra.mxu0 0.0
    %5097 = vmatprep.subr.mxu0 0.0
    %5098 = vmatpush1.msra.mxu0 0.0
    %5099 = vmatprep.subr.mxu0 0.0
    %5100 = vmatpush1.msra.mxu0 0.0
    %5101 = vmatprep.subr.mxu0 0.0
    %5102 = vmatpush1.msra.mxu0 0.0
    %5103 = vmatprep.subr.mxu0 0.0
    %5104 = vmatpush1.msra.mxu0 0.0
    %5105 = vmatprep.subr.mxu0 0.0
    %5106 = vmatpush1.msra.mxu0 0.0
    %5107 = vmatprep.subr.mxu0 0.0
    %5108 = vmatpush1.msra.mxu0 0.0
    %5109 = vmatprep.subr.mxu0 0.0
    %5110 = vmatpush1.msra.mxu0 0.0
    %5111 = vmatprep.subr.mxu0 0.0
    %5112 = vmatpush1.msra.mxu0 0.0
    %5113 = vmatprep.subr.mxu0 0.0
    %5114 = vmatpush1.msra.mxu0 0.0
    %5115 = vmatprep.subr.mxu0 0.0
    %5116 = vmatpush1.msra.mxu0 0.0
    %5117 = vmatprep.subr.mxu0 0.0
    %5118 = vmatpush1.msra.mxu0 0.0
    %5119 = vmatprep.subr.mxu0 0.0
    %5120 = vmatpush1.msra.mxu0 0.0
    %5121 = vmatprep.subr.mxu0 0.0
    %5122 = vmatpush1.msra.mxu0 0.0
    %5123 = vmatprep.subr.mxu0 0.0
    %5124 = vmatpush1.msra.mxu0 0.0
    %5125 = vmatprep.subr.mxu0 0.0
    %5126 = vmatpush1.msra.mxu0 0.0
    %5127 = vmatprep.subr.mxu0 0.0
    %5128 = vmatpush1.msra.mxu0 0.0
    %5129 = vmatprep.subr.mxu0 0.0
    %5130 = vmatpush1.msra.mxu0 0.0
    %5131 = vmatprep.subr.mxu0 0.0
    %5132 = vmatpush1.msra.mxu0 0.0
    %5133 = vmatprep.subr.mxu0 0.0
    %5134 = vmatpush1.msra.mxu0 0.0
    %5135 = vmatprep.subr.mxu0 0.0
    %5136 = vmatpush1.msra.mxu0 0.0
    %5137 = vmatprep.subr.mxu0 0.0
    %5138 = vmatpush1.msra.mxu0 0.0
    %5139 = vmatprep.subr.mxu0 0.0
    %5140 = vmatpush1.msra.mxu0 0.0
    %5141 = vmatprep.subr.mxu0 0.0
    %5142 = vmatpush1.msra.mxu0 0.0
    %5143 = vmatprep.subr.mxu0 0.0
    %5144 = vmatpush1.msra.mxu0 0.0
    %5145 = vmatprep.subr.mxu0 0.0
    %5146 = vmatpush1.msra.mxu0 0.0
    %5147 = vmatprep.subr.mxu0 0.0
    %5148 = vmatpush1.msra.mxu0 0.0
    %5149 = vmatprep.subr.mxu0 0.0
    %5150 = vmatpush1.msra.mxu0 0.0
    %5151 = vmatprep.mubr.f32.mxu0 0.0
    %5152 = vmatmul.mubr.f32.gmra.mrb[0].mxu0 %v5082
    %v5153 = vpop.f32.mrb[0].mxu0
    %v5154 = vadd.f32 %v5079, %v5153
    %v5155 = vpop.f32.mrb[0].mxu0
    %5156 = vmatprep.mubr.f32.mxu0 0.0
    %5157 = vmatmul.mubr.f32.gmra.mrb[0].mxu0 %v5085
    %v5158 = vpop.f32.mrb[0].mxu0
    %v5159 = vadd.f32 %v5079, %v5158
    %v5160 = vpop.f32.mrb[0].mxu0
    %5161 = vdwg.mxu0
    %v5162 = vadd.f32 %v5154, %v3616
    %v5163 = vadd.f32 %v5159, %v3617
    %s5164 = scalar_lea.vmem %s8, 1
    %v5165 = vld [vmem:[%s5164] sm:$0x1]
    %s5166 = scalar_lea.vmem %s9, 1
    %v5167 = vld [vmem:[%s5166] sm:$0x1]
    %v5168 = vsel %vm125, %v5162, 0.0
    %5169 = vadd.xlane.f32.xlu0 %v5168
    %v5170 = vpop.xlane.xlu0 %5169
    %v5171 = vsel %vm125, %v5163, 0.0
    %5172 = vadd.xlane.f32.xlu0 %v5171
    %v5173 = vpop.xlane.xlu0 %5172
    %v5174 = vmul.f32 %v5170, %v1668
    %v5175 = vmul.f32 %v5173, %v1668
    %v5176 = vsub.f32 %v5162, %v5174
    %v5177 = vsub.f32 %v5163, %v5175
    %v5178 = vmul.f32 %v5176, %v5176
    %v5179 = vmul.f32 %v5177, %v5177
    %v5180 = vsel %vm125, %v5178, 0.0
    %5181 = vadd.xlane.f32.xlu0 %v5180
    %v5182 = vpop.xlane.xlu0 %5181
    %v5183 = vsel %vm125, %v5179, 0.0
    %5184 = vadd.xlane.f32.xlu0 %v5183
    %v5185 = vpop.xlane.xlu0 %5184
    %v5186 = vmul.f32 %v5182, %v1668
    %v5187 = vmul.f32 %v5185, %v1668
    %v5188 = vadd.f32 %v5186, 1e-05
    %v5189 = vadd.f32 %v5187, 1e-05
    %v5190 = vrsqrt.pop %v5188
    %v5191 = vrsqrt.pop %v5189
    %v5192 = vmul.f32 %v5176, %v5190
    %v5193 = vmul.f32 %v5177, %v5191
    %v5195 = vlaneseq
    %v5196 = vshrl.u32 %v5195, 7
    %v5197 = vsub.s32 0, %v5196
    %v5198 = vrot.slane %v5165, %v5197
    %v5200 = vmul.f32 %v5192, %v5198
    %v5201 = vmul.f32 %v5193, %v5198
    %v5203 = vlaneseq
    %v5204 = vshrl.u32 %v5203, 7
    %v5205 = vsub.s32 0, %v5204
    %v5206 = vrot.slane %v5167, %v5205
    %v5208 = vadd.f32 %v5200, %v5206
    %v5209 = vadd.f32 %v5201, %v5206
    %s5210 = scalar_lea.vmem %s10, 32
    %v5211 = vld [vmem:[%s5210] sm:$0xff]
    %v5212 = vld [vmem:[%s5210 + $0x8] sm:$0xff]
    %v5213 = vld [vmem:[%s5210 + $0x10] sm:$0xff]
    %v5214 = vld [vmem:[%s5210 + $0x18] sm:$0xff]
    %s5215 = scalar_lea.vmem %s11, 1
    %v5216 = vld [vmem:[%s5215] sm:$0x1]
    %v5218 = vlaneseq
    %v5219 = vshrl.u32 %v5218, 7
    %v5220 = vsub.s32 0, %v5219
    %v5221 = vrot.slane %v5216, %v5220
    %v5224 = vsel %vm125, %v5208, 0
    %v5227 = vsel %vm125, %v5209, 0
    %5229 = vmatprep.subr.mxu0 0.0
    %5230 = vmatpush1.msra.mxu0 %v5211
    %5231 = vmatprep.subr.mxu0 0.0
    %5232 = vmatpush1.msra.mxu0 %v5212
    %5233 = vmatprep.subr.mxu0 0.0
    %5234 = vmatpush1.msra.mxu0 %v5213
    %5235 = vmatprep.subr.mxu0 0.0
    %5236 = vmatpush1.msra.mxu0 %v5214
    %5237 = vmatprep.subr.mxu0 0.0
    %5238 = vmatpush1.msra.mxu0 0.0
    %5239 = vmatprep.subr.mxu0 0.0
    %5240 = vmatpush1.msra.mxu0 0.0
    %5241 = vmatprep.subr.mxu0 0.0
    %5242 = vmatpush1.msra.mxu0 0.0
    %5243 = vmatprep.subr.mxu0 0.0
    %5244 = vmatpush1.msra.mxu0 0.0
    %5245 = vmatprep.subr.mxu0 0.0
    %5246 = vmatpush1.msra.mxu0 0.0
    %5247 = vmatprep.subr.mxu0 0.0
    %5248 = vmatpush1.msra.mxu0 0.0
    %5249 = vmatprep.subr.mxu0 0.0
    %5250 = vmatpush1.msra.mxu0 0.0
    %5251 = vmatprep.subr.mxu0 0.0
    %5252 = vmatpush1.msra.mxu0 0.0
    %5253 = vmatprep.subr.mxu0 0.0
    %5254 = vmatpush1.msra.mxu0 0.0
    %5255 = vmatprep.subr.mxu0 0.0
    %5256 = vmatpush1.msra.mxu0 0.0
    %5257 = vmatprep.subr.mxu0 0.0
    %5258 = vmatpush1.msra.mxu0 0.0
    %5259 = vmatprep.subr.mxu0 0.0
    %5260 = vmatpush1.msra.mxu0 0.0
    %5261 = vmatprep.subr.mxu0 0.0
    %5262 = vmatpush1.msra.mxu0 0.0
    %5263 = vmatprep.subr.mxu0 0.0
    %5264 = vmatpush1.msra.mxu0 0.0
    %5265 = vmatprep.subr.mxu0 0.0
    %5266 = vmatpush1.msra.mxu0 0.0
    %5267 = vmatprep.subr.mxu0 0.0
    %5268 = vmatpush1.msra.mxu0 0.0
    %5269 = vmatprep.subr.mxu0 0.0
    %5270 = vmatpush1.msra.mxu0 0.0
    %5271 = vmatprep.subr.mxu0 0.0
    %5272 = vmatpush1.msra.mxu0 0.0
    %5273 = vmatprep.subr.mxu0 0.0
    %5274 = vmatpush1.msra.mxu0 0.0
    %5275 = vmatprep.subr.mxu0 0.0
    %5276 = vmatpush1.msra.mxu0 0.0
    %5277 = vmatprep.subr.mxu0 0.0
    %5278 = vmatpush1.msra.mxu0 0.0
    %5279 = vmatprep.subr.mxu0 0.0
    %5280 = vmatpush1.msra.mxu0 0.0
    %5281 = vmatprep.subr.mxu0 0.0
    %5282 = vmatpush1.msra.mxu0 0.0
    %5283 = vmatprep.subr.mxu0 0.0
    %5284 = vmatpush1.msra.mxu0 0.0
    %5285 = vmatprep.subr.mxu0 0.0
    %5286 = vmatpush1.msra.mxu0 0.0
    %5287 = vmatprep.subr.mxu0 0.0
    %5288 = vmatpush1.msra.mxu0 0.0
    %5289 = vmatprep.subr.mxu0 0.0
    %5290 = vmatpush1.msra.mxu0 0.0
    %5291 = vmatprep.subr.mxu0 0.0
    %5292 = vmatpush1.msra.mxu0 0.0
    %5293 = vmatprep.mubr.f32.mxu0 0.0
    %5294 = vmatmul.mubr.f32.gmra.mrb[0].mxu0 %v5224
    %v5295 = vpop.f32.mrb[0].mxu0
    %v5296 = vadd.f32 %v5221, %v5295
    %v5297 = vpop.f32.mrb[0].mxu0
    %5298 = vmatprep.mubr.f32.mxu0 0.0
    %5299 = vmatmul.mubr.f32.gmra.mrb[0].mxu0 %v5227
    %v5300 = vpop.f32.mrb[0].mxu0
    %v5301 = vadd.f32 %v5221, %v5300
    %v5302 = vpop.f32.mrb[0].mxu0
    %5303 = vdwg.mxu0
    %s5304 = scalar_lea.vmem %s12, 32
    %v5305 = vld [vmem:[%s5304] sm:$0xff]
    %v5306 = vld [vmem:[%s5304 + $0x8] sm:$0xff]
    %v5307 = vld [vmem:[%s5304 + $0x10] sm:$0xff]
    %v5308 = vld [vmem:[%s5304 + $0x18] sm:$0xff]
    %s5309 = scalar_lea.vmem %s13, 1
    %v5310 = vld [vmem:[%s5309] sm:$0x1]
    %v5312 = vlaneseq
    %v5313 = vshrl.u32 %v5312, 7
    %v5314 = vsub.s32 0, %v5313
    %v5315 = vrot.slane %v5310, %v5314
    %5317 = vmatprep.subr.mxu0 0.0
    %5318 = vmatpush1.msra.mxu0 %v5305
    %5319 = vmatprep.subr.mxu0 0.0
    %5320 = vmatpush1.msra.mxu0 %v5306
    %5321 = vmatprep.subr.mxu0 0.0
    %5322 = vmatpush1.msra.mxu0 %v5307
    %5323 = vmatprep.subr.mxu0 0.0
    %5324 = vmatpush1.msra.mxu0 %v5308
    %5325 = vmatprep.subr.mxu0 0.0
    %5326 = vmatpush1.msra.mxu0 0.0
    %5327 = vmatprep.subr.mxu0 0.0
    %5328 = vmatpush1.msra.mxu0 0.0
    %5329 = vmatprep.subr.mxu0 0.0
    %5330 = vmatpush1.msra.mxu0 0.0
    %5331 = vmatprep.subr.mxu0 0.0
    %5332 = vmatpush1.msra.mxu0 0.0
    %5333 = vmatprep.subr.mxu0 0.0
    %5334 = vmatpush1.msra.mxu0 0.0
    %5335 = vmatprep.subr.mxu0 0.0
    %5336 = vmatpush1.msra.mxu0 0.0
    %5337 = vmatprep.subr.mxu0 0.0
    %5338 = vmatpush1.msra.mxu0 0.0
    %5339 = vmatprep.subr.mxu0 0.0
    %5340 = vmatpush1.msra.mxu0 0.0
    %5341 = vmatprep.subr.mxu0 0.0
    %5342 = vmatpush1.msra.mxu0 0.0
    %5343 = vmatprep.subr.mxu0 0.0
    %5344 = vmatpush1.msra.mxu0 0.0
    %5345 = vmatprep.subr.mxu0 0.0
    %5346 = vmatpush1.msra.mxu0 0.0
    %5347 = vmatprep.subr.mxu0 0.0
    %5348 = vmatpush1.msra.mxu0 0.0
    %5349 = vmatprep.subr.mxu0 0.0
    %5350 = vmatpush1.msra.mxu0 0.0
    %5351 = vmatprep.subr.mxu0 0.0
    %5352 = vmatpush1.msra.mxu0 0.0
    %5353 = vmatprep.subr.mxu0 0.0
    %5354 = vmatpush1.msra.mxu0 0.0
    %5355 = vmatprep.subr.mxu0 0.0
    %5356 = vmatpush1.msra.mxu0 0.0
    %5357 = vmatprep.subr.mxu0 0.0
    %5358 = vmatpush1.msra.mxu0 0.0
    %5359 = vmatprep.subr.mxu0 0.0
    %5360 = vmatpush1.msra.mxu0 0.0
    %5361 = vmatprep.subr.mxu0 0.0
    %5362 = vmatpush1.msra.mxu0 0.0
    %5363 = vmatprep.subr.mxu0 0.0
    %5364 = vmatpush1.msra.mxu0 0.0
    %5365 = vmatprep.subr.mxu0 0.0
    %5366 = vmatpush1.msra.mxu0 0.0
    %5367 = vmatprep.subr.mxu0 0.0
    %5368 = vmatpush1.msra.mxu0 0.0
    %5369 = vmatprep.subr.mxu0 0.0
    %5370 = vmatpush1.msra.mxu0 0.0
    %5371 = vmatprep.subr.mxu0 0.0
    %5372 = vmatpush1.msra.mxu0 0.0
    %5373 = vmatprep.subr.mxu0 0.0
    %5374 = vmatpush1.msra.mxu0 0.0
    %5375 = vmatprep.subr.mxu0 0.0
    %5376 = vmatpush1.msra.mxu0 0.0
    %5377 = vmatprep.subr.mxu0 0.0
    %5378 = vmatpush1.msra.mxu0 0.0
    %5379 = vmatprep.subr.mxu0 0.0
    %5380 = vmatpush1.msra.mxu0 0.0
    %5381 = vmatprep.mubr.f32.mxu0 0.0
    %5382 = vmatmul.mubr.f32.gmra.mrb[0].mxu0 %v1809
    %v5383 = vpop.f32.mrb[0].mxu0
    %v5384 = vadd.f32 %v5315, %v5383
    %v5385 = vpop.f32.mrb[0].mxu0
    %5386 = vmatprep.mubr.f32.mxu0 0.0
    %5387 = vmatmul.mubr.f32.gmra.mrb[0].mxu0 %v1812
    %v5388 = vpop.f32.mrb[0].mxu0
    %v5389 = vadd.f32 %v5315, %v5388
    %v5390 = vpop.f32.mrb[0].mxu0
    %5391 = vdwg.mxu0
    %5393 = vrot.lane.b32.xlu0 %v5296, 120
    %v5394 = vpop.permute.xlu0 %5393
    %5395 = vrot.lane.b32.xlu0 %v5296, 112
    %v5396 = vpop.permute.xlu0 %5395
    %5397 = vrot.lane.b32.xlu0 %v5296, 104
    %v5398 = vpop.permute.xlu0 %5397
    %5400 = vrot.lane.b32.xlu0 %v5384, 120
    %v5401 = vpop.permute.xlu0 %5400
    %5402 = vrot.lane.b32.xlu0 %v5384, 112
    %v5403 = vpop.permute.xlu0 %5402
    %5404 = vrot.lane.b32.xlu0 %v5384, 104
    %v5405 = vpop.permute.xlu0 %5404
    %v5406 = vsel %vm216, %v5296, 0
    %v5408 = vsel %vm216, %v5384, 0
    %5410 = vmatprep.subr.mxu0 0.0
    %5411 = vmatpush1.xpose.msra.mxu0 %v5408
    %5412 = vmatprep.subr.mxu0 0.0
    %5413 = vmatpush1.xpose.msra.mxu0 0.0
    %5414 = vmatprep.subr.mxu0 0.0
    %5415 = vmatpush1.xpose.msra.mxu0 0.0
    %5416 = vmatprep.subr.mxu0 0.0
    %5417 = vmatpush1.xpose.msra.mxu0 0.0
    %5418 = vmatprep.subr.mxu0 0.0
    %5419 = vmatpush1.xpose.msra.mxu0 0.0
    %5420 = vmatprep.subr.mxu0 0.0
    %5421 = vmatpush1.xpose.msra.mxu0 0.0
    %5422 = vmatprep.subr.mxu0 0.0
    %5423 = vmatpush1.xpose.msra.mxu0 0.0
    %5424 = vmatprep.subr.mxu0 0.0
    %5425 = vmatpush1.xpose.msra.mxu0 0.0
    %5426 = vmatprep.subr.mxu0 0.0
    %5427 = vmatpush1.xpose.msra.mxu0 0.0
    %5428 = vmatprep.subr.mxu0 0.0
    %5429 = vmatpush1.xpose.msra.mxu0 0.0
    %5430 = vmatprep.subr.mxu0 0.0
    %5431 = vmatpush1.xpose.msra.mxu0 0.0
    %5432 = vmatprep.subr.mxu0 0.0
    %5433 = vmatpush1.xpose.msra.mxu0 0.0
    %5434 = vmatprep.subr.mxu0 0.0
    %5435 = vmatpush1.xpose.msra.mxu0 0.0
    %5436 = vmatprep.subr.mxu0 0.0
    %5437 = vmatpush1.xpose.msra.mxu0 0.0
    %5438 = vmatprep.subr.mxu0 0.0
    %5439 = vmatpush1.xpose.msra.mxu0 0.0
    %5440 = vmatprep.subr.mxu0 0.0
    %5441 = vmatpush1.xpose.msra.mxu0 0.0
    %5442 = vmatprep.subr.mxu0 0.0
    %5443 = vmatpush1.xpose.msra.mxu0 0.0
    %5444 = vmatprep.subr.mxu0 0.0
    %5445 = vmatpush1.xpose.msra.mxu0 0.0
    %5446 = vmatprep.subr.mxu0 0.0
    %5447 = vmatpush1.xpose.msra.mxu0 0.0
    %5448 = vmatprep.subr.mxu0 0.0
    %5449 = vmatpush1.xpose.msra.mxu0 0.0
    %5450 = vmatprep.subr.mxu0 0.0
    %5451 = vmatpush1.xpose.msra.mxu0 0.0
    %5452 = vmatprep.subr.mxu0 0.0
    %5453 = vmatpush1.xpose.msra.mxu0 0.0
    %5454 = vmatprep.subr.mxu0 0.0
    %5455 = vmatpush1.xpose.msra.mxu0 0.0
    %5456 = vmatprep.subr.mxu0 0.0
    %5457 = vmatpush1.xpose.msra.mxu0 0.0
    %5458 = vmatprep.subr.mxu0 0.0
    %5459 = vmatpush1.xpose.msra.mxu0 0.0
    %5460 = vmatprep.subr.mxu0 0.0
    %5461 = vmatpush1.xpose.msra.mxu0 0.0
    %5462 = vmatprep.subr.mxu0 0.0
    %5463 = vmatpush1.xpose.msra.mxu0 0.0
    %5464 = vmatprep.subr.mxu0 0.0
    %5465 = vmatpush1.xpose.msra.mxu0 0.0
    %5466 = vmatprep.subr.mxu0 0.0
    %5467 = vmatpush1.xpose.msra.mxu0 0.0
    %5468 = vmatprep.subr.mxu0 0.0
    %5469 = vmatpush1.xpose.msra.mxu0 0.0
    %5470 = vmatprep.subr.mxu0 0.0
    %5471 = vmatpush1.xpose.msra.mxu0 0.0
    %5472 = vmatprep.subr.mxu0 0.0
    %5473 = vmatpush1.xpose.msra.mxu0 0.0
    %5474 = vmatprep.mubr.f32.mxu0 0.0
    %5475 = vmatmul.mubr.f32.gmra.mrb[0].mxu0 %v5406
    %v5476 = vpop.f32.mrb[0].mxu0
    %v5477 = vadd.f32 %v103, %v5476
    %v5478 = vpop.f32.mrb[0].mxu0
    %5479 = vdwg.mxu0
    %v5480 = vsel %vm216, %v5394, 0
    %v5482 = vsel %vm216, %v5401, 0
    %5484 = vmatprep.subr.mxu0 0.0
    %5485 = vmatpush1.xpose.msra.mxu0 %v5482
    %5486 = vmatprep.subr.mxu0 0.0
    %5487 = vmatpush1.xpose.msra.mxu0 0.0
    %5488 = vmatprep.subr.mxu0 0.0
    %5489 = vmatpush1.xpose.msra.mxu0 0.0
    %5490 = vmatprep.subr.mxu0 0.0
    %5491 = vmatpush1.xpose.msra.mxu0 0.0
    %5492 = vmatprep.subr.mxu0 0.0
    %5493 = vmatpush1.xpose.msra.mxu0 0.0
    %5494 = vmatprep.subr.mxu0 0.0
    %5495 = vmatpush1.xpose.msra.mxu0 0.0
    %5496 = vmatprep.subr.mxu0 0.0
    %5497 = vmatpush1.xpose.msra.mxu0 0.0
    %5498 = vmatprep.subr.mxu0 0.0
    %5499 = vmatpush1.xpose.msra.mxu0 0.0
    %5500 = vmatprep.subr.mxu0 0.0
    %5501 = vmatpush1.xpose.msra.mxu0 0.0
    %5502 = vmatprep.subr.mxu0 0.0
    %5503 = vmatpush1.xpose.msra.mxu0 0.0
    %5504 = vmatprep.subr.mxu0 0.0
    %5505 = vmatpush1.xpose.msra.mxu0 0.0
    %5506 = vmatprep.subr.mxu0 0.0
    %5507 = vmatpush1.xpose.msra.mxu0 0.0
    %5508 = vmatprep.subr.mxu0 0.0
    %5509 = vmatpush1.xpose.msra.mxu0 0.0
    %5510 = vmatprep.subr.mxu0 0.0
    %5511 = vmatpush1.xpose.msra.mxu0 0.0
    %5512 = vmatprep.subr.mxu0 0.0
    %5513 = vmatpush1.xpose.msra.mxu0 0.0
    %5514 = vmatprep.subr.mxu0 0.0
    %5515 = vmatpush1.xpose.msra.mxu0 0.0
    %5516 = vmatprep.subr.mxu0 0.0
    %5517 = vmatpush1.xpose.msra.mxu0 0.0
    %5518 = vmatprep.subr.mxu0 0.0
    %5519 = vmatpush1.xpose.msra.mxu0 0.0
    %5520 = vmatprep.subr.mxu0 0.0
    %5521 = vmatpush1.xpose.msra.mxu0 0.0
    %5522 = vmatprep.subr.mxu0 0.0
    %5523 = vmatpush1.xpose.msra.mxu0 0.0
    %5524 = vmatprep.subr.mxu0 0.0
    %5525 = vmatpush1.xpose.msra.mxu0 0.0
    %5526 = vmatprep.subr.mxu0 0.0
    %5527 = vmatpush1.xpose.msra.mxu0 0.0
    %5528 = vmatprep.subr.mxu0 0.0
    %5529 = vmatpush1.xpose.msra.mxu0 0.0
    %5530 = vmatprep.subr.mxu0 0.0
    %5531 = vmatpush1.xpose.msra.mxu0 0.0
    %5532 = vmatprep.subr.mxu0 0.0
    %5533 = vmatpush1.xpose.msra.mxu0 0.0
    %5534 = vmatprep.subr.mxu0 0.0
    %5535 = vmatpush1.xpose.msra.mxu0 0.0
    %5536 = vmatprep.subr.mxu0 0.0
    %5537 = vmatpush1.xpose.msra.mxu0 0.0
    %5538 = vmatprep.subr.mxu0 0.0
    %5539 = vmatpush1.xpose.msra.mxu0 0.0
    %5540 = vmatprep.subr.mxu0 0.0
    %5541 = vmatpush1.xpose.msra.mxu0 0.0
    %5542 = vmatprep.subr.mxu0 0.0
    %5543 = vmatpush1.xpose.msra.mxu0 0.0
    %5544 = vmatprep.subr.mxu0 0.0
    %5545 = vmatpush1.xpose.msra.mxu0 0.0
    %5546 = vmatprep.subr.mxu0 0.0
    %5547 = vmatpush1.xpose.msra.mxu0 0.0
    %5548 = vmatprep.mubr.f32.mxu0 0.0
    %5549 = vmatmul.mubr.f32.gmra.mrb[0].mxu0 %v5480
    %v5550 = vpop.f32.mrb[0].mxu0
    %v5551 = vadd.f32 %v103, %v5550
    %v5552 = vpop.f32.mrb[0].mxu0
    %5553 = vdwg.mxu0
    %v5554 = vsel %vm216, %v5396, 0
    %v5556 = vsel %vm216, %v5403, 0
    %5558 = vmatprep.subr.mxu0 0.0
    %5559 = vmatpush1.xpose.msra.mxu0 %v5556
    %5560 = vmatprep.subr.mxu0 0.0
    %5561 = vmatpush1.xpose.msra.mxu0 0.0
    %5562 = vmatprep.subr.mxu0 0.0
    %5563 = vmatpush1.xpose.msra.mxu0 0.0
    %5564 = vmatprep.subr.mxu0 0.0
    %5565 = vmatpush1.xpose.msra.mxu0 0.0
    %5566 = vmatprep.subr.mxu0 0.0
    %5567 = vmatpush1.xpose.msra.mxu0 0.0
    %5568 = vmatprep.subr.mxu0 0.0
    %5569 = vmatpush1.xpose.msra.mxu0 0.0
    %5570 = vmatprep.subr.mxu0 0.0
    %5571 = vmatpush1.xpose.msra.mxu0 0.0
    %5572 = vmatprep.subr.mxu0 0.0
    %5573 = vmatpush1.xpose.msra.mxu0 0.0
    %5574 = vmatprep.subr.mxu0 0.0
    %5575 = vmatpush1.xpose.msra.mxu0 0.0
    %5576 = vmatprep.subr.mxu0 0.0
    %5577 = vmatpush1.xpose.msra.mxu0 0.0
    %5578 = vmatprep.subr.mxu0 0.0
    %5579 = vmatpush1.xpose.msra.mxu0 0.0
    %5580 = vmatprep.subr.mxu0 0.0
    %5581 = vmatpush1.xpose.msra.mxu0 0.0
    %5582 = vmatprep.subr.mxu0 0.0
    %5583 = vmatpush1.xpose.msra.mxu0 0.0
    %5584 = vmatprep.subr.mxu0 0.0
    %5585 = vmatpush1.xpose.msra.mxu0 0.0
    %5586 = vmatprep.subr.mxu0 0.0
    %5587 = vmatpush1.xpose.msra.mxu0 0.0
    %5588 = vmatprep.subr.mxu0 0.0
    %5589 = vmatpush1.xpose.msra.mxu0 0.0
    %5590 = vmatprep.subr.mxu0 0.0
    %5591 = vmatpush1.xpose.msra.mxu0 0.0
    %5592 = vmatprep.subr.mxu0 0.0
    %5593 = vmatpush1.xpose.msra.mxu0 0.0
    %5594 = vmatprep.subr.mxu0 0.0
    %5595 = vmatpush1.xpose.msra.mxu0 0.0
    %5596 = vmatprep.subr.mxu0 0.0
    %5597 = vmatpush1.xpose.msra.mxu0 0.0
    %5598 = vmatprep.subr.mxu0 0.0
    %5599 = vmatpush1.xpose.msra.mxu0 0.0
    %5600 = vmatprep.subr.mxu0 0.0
    %5601 = vmatpush1.xpose.msra.mxu0 0.0
    %5602 = vmatprep.subr.mxu0 0.0
    %5603 = vmatpush1.xpose.msra.mxu0 0.0
    %5604 = vmatprep.subr.mxu0 0.0
    %5605 = vmatpush1.xpose.msra.mxu0 0.0
    %5606 = vmatprep.subr.mxu0 0.0
    %5607 = vmatpush1.xpose.msra.mxu0 0.0
    %5608 = vmatprep.subr.mxu0 0.0
    %5609 = vmatpush1.xpose.msra.mxu0 0.0
    %5610 = vmatprep.subr.mxu0 0.0
    %5611 = vmatpush1.xpose.msra.mxu0 0.0
    %5612 = vmatprep.subr.mxu0 0.0
    %5613 = vmatpush1.xpose.msra.mxu0 0.0
    %5614 = vmatprep.subr.mxu0 0.0
    %5615 = vmatpush1.xpose.msra.mxu0 0.0
    %5616 = vmatprep.subr.mxu0 0.0
    %5617 = vmatpush1.xpose.msra.mxu0 0.0
    %5618 = vmatprep.subr.mxu0 0.0
    %5619 = vmatpush1.xpose.msra.mxu0 0.0
    %5620 = vmatprep.subr.mxu0 0.0
    %5621 = vmatpush1.xpose.msra.mxu0 0.0
    %5622 = vmatprep.mubr.f32.mxu0 0.0
    %5623 = vmatmul.mubr.f32.gmra.mrb[0].mxu0 %v5554
    %v5624 = vpop.f32.mrb[0].mxu0
    %v5625 = vadd.f32 %v103, %v5624
    %v5626 = vpop.f32.mrb[0].mxu0
    %5627 = vdwg.mxu0
    %v5628 = vsel %vm216, %v5398, 0
    %v5630 = vsel %vm216, %v5405, 0
    %5632 = vmatprep.subr.mxu0 0.0
    %5633 = vmatpush1.xpose.msra.mxu0 %v5630
    %5634 = vmatprep.subr.mxu0 0.0
    %5635 = vmatpush1.xpose.msra.mxu0 0.0
    %5636 = vmatprep.subr.mxu0 0.0
    %5637 = vmatpush1.xpose.msra.mxu0 0.0
    %5638 = vmatprep.subr.mxu0 0.0
    %5639 = vmatpush1.xpose.msra.mxu0 0.0
    %5640 = vmatprep.subr.mxu0 0.0
    %5641 = vmatpush1.xpose.msra.mxu0 0.0
    %5642 = vmatprep.subr.mxu0 0.0
    %5643 = vmatpush1.xpose.msra.mxu0 0.0
    %5644 = vmatprep.subr.mxu0 0.0
    %5645 = vmatpush1.xpose.msra.mxu0 0.0
    %5646 = vmatprep.subr.mxu0 0.0
    %5647 = vmatpush1.xpose.msra.mxu0 0.0
    %5648 = vmatprep.subr.mxu0 0.0
    %5649 = vmatpush1.xpose.msra.mxu0 0.0
    %5650 = vmatprep.subr.mxu0 0.0
    %5651 = vmatpush1.xpose.msra.mxu0 0.0
    %5652 = vmatprep.subr.mxu0 0.0
    %5653 = vmatpush1.xpose.msra.mxu0 0.0
    %5654 = vmatprep.subr.mxu0 0.0
    %5655 = vmatpush1.xpose.msra.mxu0 0.0
    %5656 = vmatprep.subr.mxu0 0.0
    %5657 = vmatpush1.xpose.msra.mxu0 0.0
    %5658 = vmatprep.subr.mxu0 0.0
    %5659 = vmatpush1.xpose.msra.mxu0 0.0
    %5660 = vmatprep.subr.mxu0 0.0
    %5661 = vmatpush1.xpose.msra.mxu0 0.0
    %5662 = vmatprep.subr.mxu0 0.0
    %5663 = vmatpush1.xpose.msra.mxu0 0.0
    %5664 = vmatprep.subr.mxu0 0.0
    %5665 = vmatpush1.xpose.msra.mxu0 0.0
    %5666 = vmatprep.subr.mxu0 0.0
    %5667 = vmatpush1.xpose.msra.mxu0 0.0
    %5668 = vmatprep.subr.mxu0 0.0
    %5669 = vmatpush1.xpose.msra.mxu0 0.0
    %5670 = vmatprep.subr.mxu0 0.0
    %5671 = vmatpush1.xpose.msra.mxu0 0.0
    %5672 = vmatprep.subr.mxu0 0.0
    %5673 = vmatpush1.xpose.msra.mxu0 0.0
    %5674 = vmatprep.subr.mxu0 0.0
    %5675 = vmatpush1.xpose.msra.mxu0 0.0
    %5676 = vmatprep.subr.mxu0 0.0
    %5677 = vmatpush1.xpose.msra.mxu0 0.0
    %5678 = vmatprep.subr.mxu0 0.0
    %5679 = vmatpush1.xpose.msra.mxu0 0.0
    %5680 = vmatprep.subr.mxu0 0.0
    %5681 = vmatpush1.xpose.msra.mxu0 0.0
    %5682 = vmatprep.subr.mxu0 0.0
    %5683 = vmatpush1.xpose.msra.mxu0 0.0
    %5684 = vmatprep.subr.mxu0 0.0
    %5685 = vmatpush1.xpose.msra.mxu0 0.0
    %5686 = vmatprep.subr.mxu0 0.0
    %5687 = vmatpush1.xpose.msra.mxu0 0.0
    %5688 = vmatprep.subr.mxu0 0.0
    %5689 = vmatpush1.xpose.msra.mxu0 0.0
    %5690 = vmatprep.subr.mxu0 0.0
    %5691 = vmatpush1.xpose.msra.mxu0 0.0
    %5692 = vmatprep.subr.mxu0 0.0
    %5693 = vmatpush1.xpose.msra.mxu0 0.0
    %5694 = vmatprep.subr.mxu0 0.0
    %5695 = vmatpush1.xpose.msra.mxu0 0.0
    %5696 = vmatprep.mubr.f32.mxu0 0.0
    %5697 = vmatmul.mubr.f32.gmra.mrb[0].mxu0 %v5628
    %v5698 = vpop.f32.mrb[0].mxu0
    %v5699 = vadd.f32 %v103, %v5698
    %v5700 = vpop.f32.mrb[0].mxu0
    %5701 = vdwg.mxu0
    %v5702 = vmul.f32 %v5477, 0.17677669
    %v5703 = vmul.f32 %v5551, 0.17677669
    %v5704 = vmul.f32 %v5625, 0.17677669
    %v5705 = vmul.f32 %v5699, 0.17677669
    %v5706 = vsel %vm216, %v5702, -inf
    %5707 = vmax.xlane.f32.xlu0 %v5706
    %v5708 = vpop.xlane.xlu0 %5707
    %v5709 = vsel %vm216, %v5703, -inf
    %5710 = vmax.xlane.f32.xlu0 %v5709
    %v5711 = vpop.xlane.xlu0 %5710
    %v5712 = vsel %vm216, %v5704, -inf
    %5713 = vmax.xlane.f32.xlu0 %v5712
    %v5714 = vpop.xlane.xlu0 %5713
    %v5715 = vsel %vm216, %v5705, -inf
    %5716 = vmax.xlane.f32.xlu0 %v5715
    %v5717 = vpop.xlane.xlu0 %5716
    %v5718 = vsub.f32 %v5702, %v5708
    %v5719 = vsub.f32 %v5703, %v5711
    %v5720 = vsub.f32 %v5704, %v5714
    %v5721 = vsub.f32 %v5705, %v5717
    %v5722 = vmul.f32 %v5718, 1.442695
    %v5723 = vpow.pop %v5722
    %v5724 = vmul.f32 %v5719, 1.442695
    %v5725 = vpow.pop %v5724
    %v5726 = vmul.f32 %v5720, 1.442695
    %v5727 = vpow.pop %v5726
    %v5728 = vmul.f32 %v5721, 1.442695
    %v5729 = vpow.pop %v5728
    %v5730 = vsel %vm216, %v5723, 0.0
    %5731 = vadd.xlane.f32.xlu0 %v5730
    %v5732 = vpop.xlane.xlu0 %5731
    %v5733 = vsel %vm216, %v5725, 0.0
    %5734 = vadd.xlane.f32.xlu0 %v5733
    %v5735 = vpop.xlane.xlu0 %5734
    %v5736 = vsel %vm216, %v5727, 0.0
    %5737 = vadd.xlane.f32.xlu0 %v5736
    %v5738 = vpop.xlane.xlu0 %5737
    %v5739 = vsel %vm216, %v5729, 0.0
    %5740 = vadd.xlane.f32.xlu0 %v5739
    %v5741 = vpop.xlane.xlu0 %5740
    %v5742 = vrcp.pop %v5732
    %v5743 = vrcp.pop %v5735
    %v5744 = vrcp.pop %v5738
    %v5745 = vrcp.pop %v5741
    %v5746 = vmul.f32 %v5723, %v5742
    %v5747 = vmul.f32 %v5725, %v5743
    %v5748 = vmul.f32 %v5727, %v5744
    %v5749 = vmul.f32 %v5729, %v5745
    %5750 = vrot.lane.b32.xlu0 %v5384, 96
    %v5751 = vpop.permute.xlu0 %5750
    %v5754 = vsel %vm216, %v5746, 0
    %5756 = vmatprep.subr.mxu0 0.0
    %5757 = vmatpush1.msra.mxu0 %v5751
    %5758 = vmatprep.subr.mxu0 0.0
    %5759 = vmatpush1.msra.mxu0 0.0
    %5760 = vmatprep.subr.mxu0 0.0
    %5761 = vmatpush1.msra.mxu0 0.0
    %5762 = vmatprep.subr.mxu0 0.0
    %5763 = vmatpush1.msra.mxu0 0.0
    %5764 = vmatprep.subr.mxu0 0.0
    %5765 = vmatpush1.msra.mxu0 0.0
    %5766 = vmatprep.subr.mxu0 0.0
    %5767 = vmatpush1.msra.mxu0 0.0
    %5768 = vmatprep.subr.mxu0 0.0
    %5769 = vmatpush1.msra.mxu0 0.0
    %5770 = vmatprep.subr.mxu0 0.0
    %5771 = vmatpush1.msra.mxu0 0.0
    %5772 = vmatprep.subr.mxu0 0.0
    %5773 = vmatpush1.msra.mxu0 0.0
    %5774 = vmatprep.subr.mxu0 0.0
    %5775 = vmatpush1.msra.mxu0 0.0
    %5776 = vmatprep.subr.mxu0 0.0
    %5777 = vmatpush1.msra.mxu0 0.0
    %5778 = vmatprep.subr.mxu0 0.0
    %5779 = vmatpush1.msra.mxu0 0.0
    %5780 = vmatprep.subr.mxu0 0.0
    %5781 = vmatpush1.msra.mxu0 0.0
    %5782 = vmatprep.subr.mxu0 0.0
    %5783 = vmatpush1.msra.mxu0 0.0
    %5784 = vmatprep.subr.mxu0 0.0
    %5785 = vmatpush1.msra.mxu0 0.0
    %5786 = vmatprep.subr.mxu0 0.0
    %5787 = vmatpush1.msra.mxu0 0.0
    %5788 = vmatprep.subr.mxu0 0.0
    %5789 = vmatpush1.msra.mxu0 0.0
    %5790 = vmatprep.subr.mxu0 0.0
    %5791 = vmatpush1.msra.mxu0 0.0
    %5792 = vmatprep.subr.mxu0 0.0
    %5793 = vmatpush1.msra.mxu0 0.0
    %5794 = vmatprep.subr.mxu0 0.0
    %5795 = vmatpush1.msra.mxu0 0.0
    %5796 = vmatprep.subr.mxu0 0.0
    %5797 = vmatpush1.msra.mxu0 0.0
    %5798 = vmatprep.subr.mxu0 0.0
    %5799 = vmatpush1.msra.mxu0 0.0
    %5800 = vmatprep.subr.mxu0 0.0
    %5801 = vmatpush1.msra.mxu0 0.0
    %5802 = vmatprep.subr.mxu0 0.0
    %5803 = vmatpush1.msra.mxu0 0.0
    %5804 = vmatprep.subr.mxu0 0.0
    %5805 = vmatpush1.msra.mxu0 0.0
    %5806 = vmatprep.subr.mxu0 0.0
    %5807 = vmatpush1.msra.mxu0 0.0
    %5808 = vmatprep.subr.mxu0 0.0
    %5809 = vmatpush1.msra.mxu0 0.0
    %5810 = vmatprep.subr.mxu0 0.0
    %5811 = vmatpush1.msra.mxu0 0.0
    %5812 = vmatprep.subr.mxu0 0.0
    %5813 = vmatpush1.msra.mxu0 0.0
    %5814 = vmatprep.subr.mxu0 0.0
    %5815 = vmatpush1.msra.mxu0 0.0
    %5816 = vmatprep.subr.mxu0 0.0
    %5817 = vmatpush1.msra.mxu0 0.0
    %5818 = vmatprep.subr.mxu0 0.0
    %5819 = vmatpush1.msra.mxu0 0.0
    %5820 = vmatprep.mubr.f32.mxu0 0.0
    %5821 = vmatmul.mubr.f32.gmra.mrb[0].mxu0 %v5754
    %v5822 = vpop.f32.mrb[0].mxu0
    %v5823 = vadd.f32 0.0, %v5822
    %v5824 = vpop.f32.mrb[0].mxu0
    %5825 = vdwg.mxu0
    %5826 = vrot.lane.b32.xlu0 %v5401, 96
    %v5827 = vpop.permute.xlu0 %5826
    %v5830 = vsel %vm216, %v5747, 0
    %5832 = vmatprep.subr.mxu0 0.0
    %5833 = vmatpush1.msra.mxu0 %v5827
    %5834 = vmatprep.subr.mxu0 0.0
    %5835 = vmatpush1.msra.mxu0 0.0
    %5836 = vmatprep.subr.mxu0 0.0
    %5837 = vmatpush1.msra.mxu0 0.0
    %5838 = vmatprep.subr.mxu0 0.0
    %5839 = vmatpush1.msra.mxu0 0.0
    %5840 = vmatprep.subr.mxu0 0.0
    %5841 = vmatpush1.msra.mxu0 0.0
    %5842 = vmatprep.subr.mxu0 0.0
    %5843 = vmatpush1.msra.mxu0 0.0
    %5844 = vmatprep.subr.mxu0 0.0
    %5845 = vmatpush1.msra.mxu0 0.0
    %5846 = vmatprep.subr.mxu0 0.0
    %5847 = vmatpush1.msra.mxu0 0.0
    %5848 = vmatprep.subr.mxu0 0.0
    %5849 = vmatpush1.msra.mxu0 0.0
    %5850 = vmatprep.subr.mxu0 0.0
    %5851 = vmatpush1.msra.mxu0 0.0
    %5852 = vmatprep.subr.mxu0 0.0
    %5853 = vmatpush1.msra.mxu0 0.0
    %5854 = vmatprep.subr.mxu0 0.0
    %5855 = vmatpush1.msra.mxu0 0.0
    %5856 = vmatprep.subr.mxu0 0.0
    %5857 = vmatpush1.msra.mxu0 0.0
    %5858 = vmatprep.subr.mxu0 0.0
    %5859 = vmatpush1.msra.mxu0 0.0
    %5860 = vmatprep.subr.mxu0 0.0
    %5861 = vmatpush1.msra.mxu0 0.0
    %5862 = vmatprep.subr.mxu0 0.0
    %5863 = vmatpush1.msra.mxu0 0.0
    %5864 = vmatprep.subr.mxu0 0.0
    %5865 = vmatpush1.msra.mxu0 0.0
    %5866 = vmatprep.subr.mxu0 0.0
    %5867 = vmatpush1.msra.mxu0 0.0
    %5868 = vmatprep.subr.mxu0 0.0
    %5869 = vmatpush1.msra.mxu0 0.0
    %5870 = vmatprep.subr.mxu0 0.0
    %5871 = vmatpush1.msra.mxu0 0.0
    %5872 = vmatprep.subr.mxu0 0.0
    %5873 = vmatpush1.msra.mxu0 0.0
    %5874 = vmatprep.subr.mxu0 0.0
    %5875 = vmatpush1.msra.mxu0 0.0
    %5876 = vmatprep.subr.mxu0 0.0
    %5877 = vmatpush1.msra.mxu0 0.0
    %5878 = vmatprep.subr.mxu0 0.0
    %5879 = vmatpush1.msra.mxu0 0.0
    %5880 = vmatprep.subr.mxu0 0.0
    %5881 = vmatpush1.msra.mxu0 0.0
    %5882 = vmatprep.subr.mxu0 0.0
    %5883 = vmatpush1.msra.mxu0 0.0
    %5884 = vmatprep.subr.mxu0 0.0
    %5885 = vmatpush1.msra.mxu0 0.0
    %5886 = vmatprep.subr.mxu0 0.0
    %5887 = vmatpush1.msra.mxu0 0.0
    %5888 = vmatprep.subr.mxu0 0.0
    %5889 = vmatpush1.msra.mxu0 0.0
    %5890 = vmatprep.subr.mxu0 0.0
    %5891 = vmatpush1.msra.mxu0 0.0
    %5892 = vmatprep.subr.mxu0 0.0
    %5893 = vmatpush1.msra.mxu0 0.0
    %5894 = vmatprep.subr.mxu0 0.0
    %5895 = vmatpush1.msra.mxu0 0.0
    %5896 = vmatprep.mubr.f32.mxu0 0.0
    %5897 = vmatmul.mubr.f32.gmra.mrb[0].mxu0 %v5830
    %v5898 = vpop.f32.mrb[0].mxu0
    %v5899 = vadd.f32 0.0, %v5898
    %v5900 = vpop.f32.mrb[0].mxu0
    %5901 = vdwg.mxu0
    %5902 = vrot.lane.b32.xlu0 %v5403, 96
    %v5903 = vpop.permute.xlu0 %5902
    %v5906 = vsel %vm216, %v5748, 0
    %5908 = vmatprep.subr.mxu0 0.0
    %5909 = vmatpush1.msra.mxu0 %v5903
    %5910 = vmatprep.subr.mxu0 0.0
    %5911 = vmatpush1.msra.mxu0 0.0
    %5912 = vmatprep.subr.mxu0 0.0
    %5913 = vmatpush1.msra.mxu0 0.0
    %5914 = vmatprep.subr.mxu0 0.0
    %5915 = vmatpush1.msra.mxu0 0.0
    %5916 = vmatprep.subr.mxu0 0.0
    %5917 = vmatpush1.msra.mxu0 0.0
    %5918 = vmatprep.subr.mxu0 0.0
    %5919 = vmatpush1.msra.mxu0 0.0
    %5920 = vmatprep.subr.mxu0 0.0
    %5921 = vmatpush1.msra.mxu0 0.0
    %5922 = vmatprep.subr.mxu0 0.0
    %5923 = vmatpush1.msra.mxu0 0.0
    %5924 = vmatprep.subr.mxu0 0.0
    %5925 = vmatpush1.msra.mxu0 0.0
    %5926 = vmatprep.subr.mxu0 0.0
    %5927 = vmatpush1.msra.mxu0 0.0
    %5928 = vmatprep.subr.mxu0 0.0
    %5929 = vmatpush1.msra.mxu0 0.0
    %5930 = vmatprep.subr.mxu0 0.0
    %5931 = vmatpush1.msra.mxu0 0.0
    %5932 = vmatprep.subr.mxu0 0.0
    %5933 = vmatpush1.msra.mxu0 0.0
    %5934 = vmatprep.subr.mxu0 0.0
    %5935 = vmatpush1.msra.mxu0 0.0
    %5936 = vmatprep.subr.mxu0 0.0
    %5937 = vmatpush1.msra.mxu0 0.0
    %5938 = vmatprep.subr.mxu0 0.0
    %5939 = vmatpush1.msra.mxu0 0.0
    %5940 = vmatprep.subr.mxu0 0.0
    %5941 = vmatpush1.msra.mxu0 0.0
    %5942 = vmatprep.subr.mxu0 0.0
    %5943 = vmatpush1.msra.mxu0 0.0
    %5944 = vmatprep.subr.mxu0 0.0
    %5945 = vmatpush1.msra.mxu0 0.0
    %5946 = vmatprep.subr.mxu0 0.0
    %5947 = vmatpush1.msra.mxu0 0.0
    %5948 = vmatprep.subr.mxu0 0.0
    %5949 = vmatpush1.msra.mxu0 0.0
    %5950 = vmatprep.subr.mxu0 0.0
    %5951 = vmatpush1.msra.mxu0 0.0
    %5952 = vmatprep.subr.mxu0 0.0
    %5953 = vmatpush1.msra.mxu0 0.0
    %5954 = vmatprep.subr.mxu0 0.0
    %5955 = vmatpush1.msra.mxu0 0.0
    %5956 = vmatprep.subr.mxu0 0.0
    %5957 = vmatpush1.msra.mxu0 0.0
    %5958 = vmatprep.subr.mxu0 0.0
    %5959 = vmatpush1.msra.mxu0 0.0
    %5960 = vmatprep.subr.mxu0 0.0
    %5961 = vmatpush1.msra.mxu0 0.0
    %5962 = vmatprep.subr.mxu0 0.0
    %5963 = vmatpush1.msra.mxu0 0.0
    %5964 = vmatprep.subr.mxu0 0.0
    %5965 = vmatpush1.msra.mxu0 0.0
    %5966 = vmatprep.subr.mxu0 0.0
    %5967 = vmatpush1.msra.mxu0 0.0
    %5968 = vmatprep.subr.mxu0 0.0
    %5969 = vmatpush1.msra.mxu0 0.0
    %5970 = vmatprep.subr.mxu0 0.0
    %5971 = vmatpush1.msra.mxu0 0.0
    %5972 = vmatprep.mubr.f32.mxu0 0.0
    %5973 = vmatmul.mubr.f32.gmra.mrb[0].mxu0 %v5906
    %v5974 = vpop.f32.mrb[0].mxu0
    %v5975 = vadd.f32 0.0, %v5974
    %v5976 = vpop.f32.mrb[0].mxu0
    %5977 = vdwg.mxu0
    %5978 = vrot.lane.b32.xlu0 %v5405, 96
    %v5979 = vpop.permute.xlu0 %5978
    %v5982 = vsel %vm216, %v5749, 0
    %5984 = vmatprep.subr.mxu0 0.0
    %5985 = vmatpush1.msra.mxu0 %v5979
    %5986 = vmatprep.subr.mxu0 0.0
    %5987 = vmatpush1.msra.mxu0 0.0
    %5988 = vmatprep.subr.mxu0 0.0
    %5989 = vmatpush1.msra.mxu0 0.0
    %5990 = vmatprep.subr.mxu0 0.0
    %5991 = vmatpush1.msra.mxu0 0.0
    %5992 = vmatprep.subr.mxu0 0.0
    %5993 = vmatpush1.msra.mxu0 0.0
    %5994 = vmatprep.subr.mxu0 0.0
    %5995 = vmatpush1.msra.mxu0 0.0
    %5996 = vmatprep.subr.mxu0 0.0
    %5997 = vmatpush1.msra.mxu0 0.0
    %5998 = vmatprep.subr.mxu0 0.0
    %5999 = vmatpush1.msra.mxu0 0.0
    %6000 = vmatprep.subr.mxu0 0.0
    %6001 = vmatpush1.msra.mxu0 0.0
    %6002 = vmatprep.subr.mxu0 0.0
    %6003 = vmatpush1.msra.mxu0 0.0
    %6004 = vmatprep.subr.mxu0 0.0
    %6005 = vmatpush1.msra.mxu0 0.0
    %6006 = vmatprep.subr.mxu0 0.0
    %6007 = vmatpush1.msra.mxu0 0.0
    %6008 = vmatprep.subr.mxu0 0.0
    %6009 = vmatpush1.msra.mxu0 0.0
    %6010 = vmatprep.subr.mxu0 0.0
    %6011 = vmatpush1.msra.mxu0 0.0
    %6012 = vmatprep.subr.mxu0 0.0
    %6013 = vmatpush1.msra.mxu0 0.0
    %6014 = vmatprep.subr.mxu0 0.0
    %6015 = vmatpush1.msra.mxu0 0.0
    %6016 = vmatprep.subr.mxu0 0.0
    %6017 = vmatpush1.msra.mxu0 0.0
    %6018 = vmatprep.subr.mxu0 0.0
    %6019 = vmatpush1.msra.mxu0 0.0
    %6020 = vmatprep.subr.mxu0 0.0
    %6021 = vmatpush1.msra.mxu0 0.0
    %6022 = vmatprep.subr.mxu0 0.0
    %6023 = vmatpush1.msra.mxu0 0.0
    %6024 = vmatprep.subr.mxu0 0.0
    %6025 = vmatpush1.msra.mxu0 0.0
    %6026 = vmatprep.subr.mxu0 0.0
    %6027 = vmatpush1.msra.mxu0 0.0
    %6028 = vmatprep.subr.mxu0 0.0
    %6029 = vmatpush1.msra.mxu0 0.0
    %6030 = vmatprep.subr.mxu0 0.0
    %6031 = vmatpush1.msra.mxu0 0.0
    %6032 = vmatprep.subr.mxu0 0.0
    %6033 = vmatpush1.msra.mxu0 0.0
    %6034 = vmatprep.subr.mxu0 0.0
    %6035 = vmatpush1.msra.mxu0 0.0
    %6036 = vmatprep.subr.mxu0 0.0
    %6037 = vmatpush1.msra.mxu0 0.0
    %6038 = vmatprep.subr.mxu0 0.0
    %6039 = vmatpush1.msra.mxu0 0.0
    %6040 = vmatprep.subr.mxu0 0.0
    %6041 = vmatpush1.msra.mxu0 0.0
    %6042 = vmatprep.subr.mxu0 0.0
    %6043 = vmatpush1.msra.mxu0 0.0
    %6044 = vmatprep.subr.mxu0 0.0
    %6045 = vmatpush1.msra.mxu0 0.0
    %6046 = vmatprep.subr.mxu0 0.0
    %6047 = vmatpush1.msra.mxu0 0.0
    %6048 = vmatprep.mubr.f32.mxu0 0.0
    %6049 = vmatmul.mubr.f32.gmra.mrb[0].mxu0 %v5982
    %v6050 = vpop.f32.mrb[0].mxu0
    %v6051 = vadd.f32 0.0, %v6050
    %v6052 = vpop.f32.mrb[0].mxu0
    %6053 = vdwg.mxu0
    %6055 = vrot.lane.b32.xlu0 %v5899, 8
    %v6056 = vpop.permute.xlu0 %6055
    %6059 = vrot.lane.b32.xlu0 %v5975, 16
    %v6060 = vpop.permute.xlu0 %6059
    %6063 = vrot.lane.b32.xlu0 %v6051, 24
    %v6064 = vpop.permute.xlu0 %6063
    %v6066 = vsel %vm216, %v5823, %v6056
    %v6067 = vsel %vm884, %v6066, %v6060
    %v6068 = vsel %vm886, %v6067, %v6064
    %6070 = vrot.lane.b32.xlu0 %v5301, 120
    %v6071 = vpop.permute.xlu0 %6070
    %6072 = vrot.lane.b32.xlu0 %v5301, 112
    %v6073 = vpop.permute.xlu0 %6072
    %6074 = vrot.lane.b32.xlu0 %v5301, 104
    %v6075 = vpop.permute.xlu0 %6074
    %6077 = vrot.lane.b32.xlu0 %v5389, 120
    %v6078 = vpop.permute.xlu0 %6077
    %6079 = vrot.lane.b32.xlu0 %v5389, 112
    %v6080 = vpop.permute.xlu0 %6079
    %6081 = vrot.lane.b32.xlu0 %v5389, 104
    %v6082 = vpop.permute.xlu0 %6081
    %v6083 = vsel %vm216, %v5301, 0
    %v6085 = vsel %vm216, %v5389, 0
    %6087 = vmatprep.subr.mxu0 0.0
    %6088 = vmatpush1.xpose.msra.mxu0 %v6085
    %6089 = vmatprep.subr.mxu0 0.0
    %6090 = vmatpush1.xpose.msra.mxu0 0.0
    %6091 = vmatprep.subr.mxu0 0.0
    %6092 = vmatpush1.xpose.msra.mxu0 0.0
    %6093 = vmatprep.subr.mxu0 0.0
    %6094 = vmatpush1.xpose.msra.mxu0 0.0
    %6095 = vmatprep.subr.mxu0 0.0
    %6096 = vmatpush1.xpose.msra.mxu0 0.0
    %6097 = vmatprep.subr.mxu0 0.0
    %6098 = vmatpush1.xpose.msra.mxu0 0.0
    %6099 = vmatprep.subr.mxu0 0.0
    %6100 = vmatpush1.xpose.msra.mxu0 0.0
    %6101 = vmatprep.subr.mxu0 0.0
    %6102 = vmatpush1.xpose.msra.mxu0 0.0
    %6103 = vmatprep.subr.mxu0 0.0
    %6104 = vmatpush1.xpose.msra.mxu0 0.0
    %6105 = vmatprep.subr.mxu0 0.0
    %6106 = vmatpush1.xpose.msra.mxu0 0.0
    %6107 = vmatprep.subr.mxu0 0.0
    %6108 = vmatpush1.xpose.msra.mxu0 0.0
    %6109 = vmatprep.subr.mxu0 0.0
    %6110 = vmatpush1.xpose.msra.mxu0 0.0
    %6111 = vmatprep.subr.mxu0 0.0
    %6112 = vmatpush1.xpose.msra.mxu0 0.0
    %6113 = vmatprep.subr.mxu0 0.0
    %6114 = vmatpush1.xpose.msra.mxu0 0.0
    %6115 = vmatprep.subr.mxu0 0.0
    %6116 = vmatpush1.xpose.msra.mxu0 0.0
    %6117 = vmatprep.subr.mxu0 0.0
    %6118 = vmatpush1.xpose.msra.mxu0 0.0
    %6119 = vmatprep.subr.mxu0 0.0
    %6120 = vmatpush1.xpose.msra.mxu0 0.0
    %6121 = vmatprep.subr.mxu0 0.0
    %6122 = vmatpush1.xpose.msra.mxu0 0.0
    %6123 = vmatprep.subr.mxu0 0.0
    %6124 = vmatpush1.xpose.msra.mxu0 0.0
    %6125 = vmatprep.subr.mxu0 0.0
    %6126 = vmatpush1.xpose.msra.mxu0 0.0
    %6127 = vmatprep.subr.mxu0 0.0
    %6128 = vmatpush1.xpose.msra.mxu0 0.0
    %6129 = vmatprep.subr.mxu0 0.0
    %6130 = vmatpush1.xpose.msra.mxu0 0.0
    %6131 = vmatprep.subr.mxu0 0.0
    %6132 = vmatpush1.xpose.msra.mxu0 0.0
    %6133 = vmatprep.subr.mxu0 0.0
    %6134 = vmatpush1.xpose.msra.mxu0 0.0
    %6135 = vmatprep.subr.mxu0 0.0
    %6136 = vmatpush1.xpose.msra.mxu0 0.0
    %6137 = vmatprep.subr.mxu0 0.0
    %6138 = vmatpush1.xpose.msra.mxu0 0.0
    %6139 = vmatprep.subr.mxu0 0.0
    %6140 = vmatpush1.xpose.msra.mxu0 0.0
    %6141 = vmatprep.subr.mxu0 0.0
    %6142 = vmatpush1.xpose.msra.mxu0 0.0
    %6143 = vmatprep.subr.mxu0 0.0
    %6144 = vmatpush1.xpose.msra.mxu0 0.0
    %6145 = vmatprep.subr.mxu0 0.0
    %6146 = vmatpush1.xpose.msra.mxu0 0.0
    %6147 = vmatprep.subr.mxu0 0.0
    %6148 = vmatpush1.xpose.msra.mxu0 0.0
    %6149 = vmatprep.subr.mxu0 0.0
    %6150 = vmatpush1.xpose.msra.mxu0 0.0
    %6151 = vmatprep.mubr.f32.mxu0 0.0
    %6152 = vmatmul.mubr.f32.gmra.mrb[0].mxu0 %v6083
    %v6153 = vpop.f32.mrb[0].mxu0
    %v6154 = vadd.f32 %v113, %v6153
    %v6155 = vpop.f32.mrb[0].mxu0
    %6156 = vdwg.mxu0
    %v6157 = vsel %vm216, %v6071, 0
    %v6159 = vsel %vm216, %v6078, 0
    %6161 = vmatprep.subr.mxu0 0.0
    %6162 = vmatpush1.xpose.msra.mxu0 %v6159
    %6163 = vmatprep.subr.mxu0 0.0
    %6164 = vmatpush1.xpose.msra.mxu0 0.0
    %6165 = vmatprep.subr.mxu0 0.0
    %6166 = vmatpush1.xpose.msra.mxu0 0.0
    %6167 = vmatprep.subr.mxu0 0.0
    %6168 = vmatpush1.xpose.msra.mxu0 0.0
    %6169 = vmatprep.subr.mxu0 0.0
    %6170 = vmatpush1.xpose.msra.mxu0 0.0
    %6171 = vmatprep.subr.mxu0 0.0
    %6172 = vmatpush1.xpose.msra.mxu0 0.0
    %6173 = vmatprep.subr.mxu0 0.0
    %6174 = vmatpush1.xpose.msra.mxu0 0.0
    %6175 = vmatprep.subr.mxu0 0.0
    %6176 = vmatpush1.xpose.msra.mxu0 0.0
    %6177 = vmatprep.subr.mxu0 0.0
    %6178 = vmatpush1.xpose.msra.mxu0 0.0
    %6179 = vmatprep.subr.mxu0 0.0
    %6180 = vmatpush1.xpose.msra.mxu0 0.0
    %6181 = vmatprep.subr.mxu0 0.0
    %6182 = vmatpush1.xpose.msra.mxu0 0.0
    %6183 = vmatprep.subr.mxu0 0.0
    %6184 = vmatpush1.xpose.msra.mxu0 0.0
    %6185 = vmatprep.subr.mxu0 0.0
    %6186 = vmatpush1.xpose.msra.mxu0 0.0
    %6187 = vmatprep.subr.mxu0 0.0
    %6188 = vmatpush1.xpose.msra.mxu0 0.0
    %6189 = vmatprep.subr.mxu0 0.0
    %6190 = vmatpush1.xpose.msra.mxu0 0.0
    %6191 = vmatprep.subr.mxu0 0.0
    %6192 = vmatpush1.xpose.msra.mxu0 0.0
    %6193 = vmatprep.subr.mxu0 0.0
    %6194 = vmatpush1.xpose.msra.mxu0 0.0
    %6195 = vmatprep.subr.mxu0 0.0
    %6196 = vmatpush1.xpose.msra.mxu0 0.0
    %6197 = vmatprep.subr.mxu0 0.0
    %6198 = vmatpush1.xpose.msra.mxu0 0.0
    %6199 = vmatprep.subr.mxu0 0.0
    %6200 = vmatpush1.xpose.msra.mxu0 0.0
    %6201 = vmatprep.subr.mxu0 0.0
    %6202 = vmatpush1.xpose.msra.mxu0 0.0
    %6203 = vmatprep.subr.mxu0 0.0
    %6204 = vmatpush1.xpose.msra.mxu0 0.0
    %6205 = vmatprep.subr.mxu0 0.0
    %6206 = vmatpush1.xpose.msra.mxu0 0.0
    %6207 = vmatprep.subr.mxu0 0.0
    %6208 = vmatpush1.xpose.msra.mxu0 0.0
    %6209 = vmatprep.subr.mxu0 0.0
    %6210 = vmatpush1.xpose.msra.mxu0 0.0
    %6211 = vmatprep.subr.mxu0 0.0
    %6212 = vmatpush1.xpose.msra.mxu0 0.0
    %6213 = vmatprep.subr.mxu0 0.0
    %6214 = vmatpush1.xpose.msra.mxu0 0.0
    %6215 = vmatprep.subr.mxu0 0.0
    %6216 = vmatpush1.xpose.msra.mxu0 0.0
    %6217 = vmatprep.subr.mxu0 0.0
    %6218 = vmatpush1.xpose.msra.mxu0 0.0
    %6219 = vmatprep.subr.mxu0 0.0
    %6220 = vmatpush1.xpose.msra.mxu0 0.0
    %6221 = vmatprep.subr.mxu0 0.0
    %6222 = vmatpush1.xpose.msra.mxu0 0.0
    %6223 = vmatprep.subr.mxu0 0.0
    %6224 = vmatpush1.xpose.msra.mxu0 0.0
    %6225 = vmatprep.mubr.f32.mxu0 0.0
    %6226 = vmatmul.mubr.f32.gmra.mrb[0].mxu0 %v6157
    %v6227 = vpop.f32.mrb[0].mxu0
    %v6228 = vadd.f32 %v113, %v6227
    %v6229 = vpop.f32.mrb[0].mxu0
    %6230 = vdwg.mxu0
    %v6231 = vsel %vm216, %v6073, 0
    %v6233 = vsel %vm216, %v6080, 0
    %6235 = vmatprep.subr.mxu0 0.0
    %6236 = vmatpush1.xpose.msra.mxu0 %v6233
    %6237 = vmatprep.subr.mxu0 0.0
    %6238 = vmatpush1.xpose.msra.mxu0 0.0
    %6239 = vmatprep.subr.mxu0 0.0
    %6240 = vmatpush1.xpose.msra.mxu0 0.0
    %6241 = vmatprep.subr.mxu0 0.0
    %6242 = vmatpush1.xpose.msra.mxu0 0.0
    %6243 = vmatprep.subr.mxu0 0.0
    %6244 = vmatpush1.xpose.msra.mxu0 0.0
    %6245 = vmatprep.subr.mxu0 0.0
    %6246 = vmatpush1.xpose.msra.mxu0 0.0
    %6247 = vmatprep.subr.mxu0 0.0
    %6248 = vmatpush1.xpose.msra.mxu0 0.0
    %6249 = vmatprep.subr.mxu0 0.0
    %6250 = vmatpush1.xpose.msra.mxu0 0.0
    %6251 = vmatprep.subr.mxu0 0.0
    %6252 = vmatpush1.xpose.msra.mxu0 0.0
    %6253 = vmatprep.subr.mxu0 0.0
    %6254 = vmatpush1.xpose.msra.mxu0 0.0
    %6255 = vmatprep.subr.mxu0 0.0
    %6256 = vmatpush1.xpose.msra.mxu0 0.0
    %6257 = vmatprep.subr.mxu0 0.0
    %6258 = vmatpush1.xpose.msra.mxu0 0.0
    %6259 = vmatprep.subr.mxu0 0.0
    %6260 = vmatpush1.xpose.msra.mxu0 0.0
    %6261 = vmatprep.subr.mxu0 0.0
    %6262 = vmatpush1.xpose.msra.mxu0 0.0
    %6263 = vmatprep.subr.mxu0 0.0
    %6264 = vmatpush1.xpose.msra.mxu0 0.0
    %6265 = vmatprep.subr.mxu0 0.0
    %6266 = vmatpush1.xpose.msra.mxu0 0.0
    %6267 = vmatprep.subr.mxu0 0.0
    %6268 = vmatpush1.xpose.msra.mxu0 0.0
    %6269 = vmatprep.subr.mxu0 0.0
    %6270 = vmatpush1.xpose.msra.mxu0 0.0
    %6271 = vmatprep.subr.mxu0 0.0
    %6272 = vmatpush1.xpose.msra.mxu0 0.0
    %6273 = vmatprep.subr.mxu0 0.0
    %6274 = vmatpush1.xpose.msra.mxu0 0.0
    %6275 = vmatprep.subr.mxu0 0.0
    %6276 = vmatpush1.xpose.msra.mxu0 0.0
    %6277 = vmatprep.subr.mxu0 0.0
    %6278 = vmatpush1.xpose.msra.mxu0 0.0
    %6279 = vmatprep.subr.mxu0 0.0
    %6280 = vmatpush1.xpose.msra.mxu0 0.0
    %6281 = vmatprep.subr.mxu0 0.0
    %6282 = vmatpush1.xpose.msra.mxu0 0.0
    %6283 = vmatprep.subr.mxu0 0.0
    %6284 = vmatpush1.xpose.msra.mxu0 0.0
    %6285 = vmatprep.subr.mxu0 0.0
    %6286 = vmatpush1.xpose.msra.mxu0 0.0
    %6287 = vmatprep.subr.mxu0 0.0
    %6288 = vmatpush1.xpose.msra.mxu0 0.0
    %6289 = vmatprep.subr.mxu0 0.0
    %6290 = vmatpush1.xpose.msra.mxu0 0.0
    %6291 = vmatprep.subr.mxu0 0.0
    %6292 = vmatpush1.xpose.msra.mxu0 0.0
    %6293 = vmatprep.subr.mxu0 0.0
    %6294 = vmatpush1.xpose.msra.mxu0 0.0
    %6295 = vmatprep.subr.mxu0 0.0
    %6296 = vmatpush1.xpose.msra.mxu0 0.0
    %6297 = vmatprep.subr.mxu0 0.0
    %6298 = vmatpush1.xpose.msra.mxu0 0.0
    %6299 = vmatprep.mubr.f32.mxu0 0.0
    %6300 = vmatmul.mubr.f32.gmra.mrb[0].mxu0 %v6231
    %v6301 = vpop.f32.mrb[0].mxu0
    %v6302 = vadd.f32 %v113, %v6301
    %v6303 = vpop.f32.mrb[0].mxu0
    %6304 = vdwg.mxu0
    %v6305 = vsel %vm216, %v6075, 0
    %v6307 = vsel %vm216, %v6082, 0
    %6309 = vmatprep.subr.mxu0 0.0
    %6310 = vmatpush1.xpose.msra.mxu0 %v6307
    %6311 = vmatprep.subr.mxu0 0.0
    %6312 = vmatpush1.xpose.msra.mxu0 0.0
    %6313 = vmatprep.subr.mxu0 0.0
    %6314 = vmatpush1.xpose.msra.mxu0 0.0
    %6315 = vmatprep.subr.mxu0 0.0
    %6316 = vmatpush1.xpose.msra.mxu0 0.0
    %6317 = vmatprep.subr.mxu0 0.0
    %6318 = vmatpush1.xpose.msra.mxu0 0.0
    %6319 = vmatprep.subr.mxu0 0.0
    %6320 = vmatpush1.xpose.msra.mxu0 0.0
    %6321 = vmatprep.subr.mxu0 0.0
    %6322 = vmatpush1.xpose.msra.mxu0 0.0
    %6323 = vmatprep.subr.mxu0 0.0
    %6324 = vmatpush1.xpose.msra.mxu0 0.0
    %6325 = vmatprep.subr.mxu0 0.0
    %6326 = vmatpush1.xpose.msra.mxu0 0.0
    %6327 = vmatprep.subr.mxu0 0.0
    %6328 = vmatpush1.xpose.msra.mxu0 0.0
    %6329 = vmatprep.subr.mxu0 0.0
    %6330 = vmatpush1.xpose.msra.mxu0 0.0
    %6331 = vmatprep.subr.mxu0 0.0
    %6332 = vmatpush1.xpose.msra.mxu0 0.0
    %6333 = vmatprep.subr.mxu0 0.0
    %6334 = vmatpush1.xpose.msra.mxu0 0.0
    %6335 = vmatprep.subr.mxu0 0.0
    %6336 = vmatpush1.xpose.msra.mxu0 0.0
    %6337 = vmatprep.subr.mxu0 0.0
    %6338 = vmatpush1.xpose.msra.mxu0 0.0
    %6339 = vmatprep.subr.mxu0 0.0
    %6340 = vmatpush1.xpose.msra.mxu0 0.0
    %6341 = vmatprep.subr.mxu0 0.0
    %6342 = vmatpush1.xpose.msra.mxu0 0.0
    %6343 = vmatprep.subr.mxu0 0.0
    %6344 = vmatpush1.xpose.msra.mxu0 0.0
    %6345 = vmatprep.subr.mxu0 0.0
    %6346 = vmatpush1.xpose.msra.mxu0 0.0
    %6347 = vmatprep.subr.mxu0 0.0
    %6348 = vmatpush1.xpose.msra.mxu0 0.0
    %6349 = vmatprep.subr.mxu0 0.0
    %6350 = vmatpush1.xpose.msra.mxu0 0.0
    %6351 = vmatprep.subr.mxu0 0.0
    %6352 = vmatpush1.xpose.msra.mxu0 0.0
    %6353 = vmatprep.subr.mxu0 0.0
    %6354 = vmatpush1.xpose.msra.mxu0 0.0
    %6355 = vmatprep.subr.mxu0 0.0
    %6356 = vmatpush1.xpose.msra.mxu0 0.0
    %6357 = vmatprep.subr.mxu0 0.0
    %6358 = vmatpush1.xpose.msra.mxu0 0.0
    %6359 = vmatprep.subr.mxu0 0.0
    %6360 = vmatpush1.xpose.msra.mxu0 0.0
    %6361 = vmatprep.subr.mxu0 0.0
    %6362 = vmatpush1.xpose.msra.mxu0 0.0
    %6363 = vmatprep.subr.mxu0 0.0
    %6364 = vmatpush1.xpose.msra.mxu0 0.0
    %6365 = vmatprep.subr.mxu0 0.0
    %6366 = vmatpush1.xpose.msra.mxu0 0.0
    %6367 = vmatprep.subr.mxu0 0.0
    %6368 = vmatpush1.xpose.msra.mxu0 0.0
    %6369 = vmatprep.subr.mxu0 0.0
    %6370 = vmatpush1.xpose.msra.mxu0 0.0
    %6371 = vmatprep.subr.mxu0 0.0
    %6372 = vmatpush1.xpose.msra.mxu0 0.0
    %6373 = vmatprep.mubr.f32.mxu0 0.0
    %6374 = vmatmul.mubr.f32.gmra.mrb[0].mxu0 %v6305
    %v6375 = vpop.f32.mrb[0].mxu0
    %v6376 = vadd.f32 %v113, %v6375
    %v6377 = vpop.f32.mrb[0].mxu0
    %6378 = vdwg.mxu0
    %v6379 = vmul.f32 %v6154, 0.17677669
    %v6380 = vmul.f32 %v6228, 0.17677669
    %v6381 = vmul.f32 %v6302, 0.17677669
    %v6382 = vmul.f32 %v6376, 0.17677669
    %v6383 = vsel %vm216, %v6379, -inf
    %6384 = vmax.xlane.f32.xlu0 %v6383
    %v6385 = vpop.xlane.xlu0 %6384
    %v6386 = vsel %vm216, %v6380, -inf
    %6387 = vmax.xlane.f32.xlu0 %v6386
    %v6388 = vpop.xlane.xlu0 %6387
    %v6389 = vsel %vm216, %v6381, -inf
    %6390 = vmax.xlane.f32.xlu0 %v6389
    %v6391 = vpop.xlane.xlu0 %6390
    %v6392 = vsel %vm216, %v6382, -inf
    %6393 = vmax.xlane.f32.xlu0 %v6392
    %v6394 = vpop.xlane.xlu0 %6393
    %v6395 = vsub.f32 %v6379, %v6385
    %v6396 = vsub.f32 %v6380, %v6388
    %v6397 = vsub.f32 %v6381, %v6391
    %v6398 = vsub.f32 %v6382, %v6394
    %v6399 = vmul.f32 %v6395, 1.442695
    %v6400 = vpow.pop %v6399
    %v6401 = vmul.f32 %v6396, 1.442695
    %v6402 = vpow.pop %v6401
    %v6403 = vmul.f32 %v6397, 1.442695
    %v6404 = vpow.pop %v6403
    %v6405 = vmul.f32 %v6398, 1.442695
    %v6406 = vpow.pop %v6405
    %v6407 = vsel %vm216, %v6400, 0.0
    %6408 = vadd.xlane.f32.xlu0 %v6407
    %v6409 = vpop.xlane.xlu0 %6408
    %v6410 = vsel %vm216, %v6402, 0.0
    %6411 = vadd.xlane.f32.xlu0 %v6410
    %v6412 = vpop.xlane.xlu0 %6411
    %v6413 = vsel %vm216, %v6404, 0.0
    %6414 = vadd.xlane.f32.xlu0 %v6413
    %v6415 = vpop.xlane.xlu0 %6414
    %v6416 = vsel %vm216, %v6406, 0.0
    %6417 = vadd.xlane.f32.xlu0 %v6416
    %v6418 = vpop.xlane.xlu0 %6417
    %v6419 = vrcp.pop %v6409
    %v6420 = vrcp.pop %v6412
    %v6421 = vrcp.pop %v6415
    %v6422 = vrcp.pop %v6418
    %v6423 = vmul.f32 %v6400, %v6419
    %v6424 = vmul.f32 %v6402, %v6420
    %v6425 = vmul.f32 %v6404, %v6421
    %v6426 = vmul.f32 %v6406, %v6422
    %6427 = vrot.lane.b32.xlu0 %v5389, 96
    %v6428 = vpop.permute.xlu0 %6427
    %v6431 = vsel %vm216, %v6423, 0
    %6433 = vmatprep.subr.mxu0 0.0
    %6434 = vmatpush1.msra.mxu0 %v6428
    %6435 = vmatprep.subr.mxu0 0.0
    %6436 = vmatpush1.msra.mxu0 0.0
    %6437 = vmatprep.subr.mxu0 0.0
    %6438 = vmatpush1.msra.mxu0 0.0
    %6439 = vmatprep.subr.mxu0 0.0
    %6440 = vmatpush1.msra.mxu0 0.0
    %6441 = vmatprep.subr.mxu0 0.0
    %6442 = vmatpush1.msra.mxu0 0.0
    %6443 = vmatprep.subr.mxu0 0.0
    %6444 = vmatpush1.msra.mxu0 0.0
    %6445 = vmatprep.subr.mxu0 0.0
    %6446 = vmatpush1.msra.mxu0 0.0
    %6447 = vmatprep.subr.mxu0 0.0
    %6448 = vmatpush1.msra.mxu0 0.0
    %6449 = vmatprep.subr.mxu0 0.0
    %6450 = vmatpush1.msra.mxu0 0.0
    %6451 = vmatprep.subr.mxu0 0.0
    %6452 = vmatpush1.msra.mxu0 0.0
    %6453 = vmatprep.subr.mxu0 0.0
    %6454 = vmatpush1.msra.mxu0 0.0
    %6455 = vmatprep.subr.mxu0 0.0
    %6456 = vmatpush1.msra.mxu0 0.0
    %6457 = vmatprep.subr.mxu0 0.0
    %6458 = vmatpush1.msra.mxu0 0.0
    %6459 = vmatprep.subr.mxu0 0.0
    %6460 = vmatpush1.msra.mxu0 0.0
    %6461 = vmatprep.subr.mxu0 0.0
    %6462 = vmatpush1.msra.mxu0 0.0
    %6463 = vmatprep.subr.mxu0 0.0
    %6464 = vmatpush1.msra.mxu0 0.0
    %6465 = vmatprep.subr.mxu0 0.0
    %6466 = vmatpush1.msra.mxu0 0.0
    %6467 = vmatprep.subr.mxu0 0.0
    %6468 = vmatpush1.msra.mxu0 0.0
    %6469 = vmatprep.subr.mxu0 0.0
    %6470 = vmatpush1.msra.mxu0 0.0
    %6471 = vmatprep.subr.mxu0 0.0
    %6472 = vmatpush1.msra.mxu0 0.0
    %6473 = vmatprep.subr.mxu0 0.0
    %6474 = vmatpush1.msra.mxu0 0.0
    %6475 = vmatprep.subr.mxu0 0.0
    %6476 = vmatpush1.msra.mxu0 0.0
    %6477 = vmatprep.subr.mxu0 0.0
    %6478 = vmatpush1.msra.mxu0 0.0
    %6479 = vmatprep.subr.mxu0 0.0
    %6480 = vmatpush1.msra.mxu0 0.0
    %6481 = vmatprep.subr.mxu0 0.0
    %6482 = vmatpush1.msra.mxu0 0.0
    %6483 = vmatprep.subr.mxu0 0.0
    %6484 = vmatpush1.msra.mxu0 0.0
    %6485 = vmatprep.subr.mxu0 0.0
    %6486 = vmatpush1.msra.mxu0 0.0
    %6487 = vmatprep.subr.mxu0 0.0
    %6488 = vmatpush1.msra.mxu0 0.0
    %6489 = vmatprep.subr.mxu0 0.0
    %6490 = vmatpush1.msra.mxu0 0.0
    %6491 = vmatprep.subr.mxu0 0.0
    %6492 = vmatpush1.msra.mxu0 0.0
    %6493 = vmatprep.subr.mxu0 0.0
    %6494 = vmatpush1.msra.mxu0 0.0
    %6495 = vmatprep.subr.mxu0 0.0
    %6496 = vmatpush1.msra.mxu0 0.0
    %6497 = vmatprep.mubr.f32.mxu0 0.0
    %6498 = vmatmul.mubr.f32.gmra.mrb[0].mxu0 %v6431
    %v6499 = vpop.f32.mrb[0].mxu0
    %v6500 = vadd.f32 0.0, %v6499
    %v6501 = vpop.f32.mrb[0].mxu0
    %6502 = vdwg.mxu0
    %6503 = vrot.lane.b32.xlu0 %v6078, 96
    %v6504 = vpop.permute.xlu0 %6503
    %v6507 = vsel %vm216, %v6424, 0
    %6509 = vmatprep.subr.mxu0 0.0
    %6510 = vmatpush1.msra.mxu0 %v6504
    %6511 = vmatprep.subr.mxu0 0.0
    %6512 = vmatpush1.msra.mxu0 0.0
    %6513 = vmatprep.subr.mxu0 0.0
    %6514 = vmatpush1.msra.mxu0 0.0
    %6515 = vmatprep.subr.mxu0 0.0
    %6516 = vmatpush1.msra.mxu0 0.0
    %6517 = vmatprep.subr.mxu0 0.0
    %6518 = vmatpush1.msra.mxu0 0.0
    %6519 = vmatprep.subr.mxu0 0.0
    %6520 = vmatpush1.msra.mxu0 0.0
    %6521 = vmatprep.subr.mxu0 0.0
    %6522 = vmatpush1.msra.mxu0 0.0
    %6523 = vmatprep.subr.mxu0 0.0
    %6524 = vmatpush1.msra.mxu0 0.0
    %6525 = vmatprep.subr.mxu0 0.0
    %6526 = vmatpush1.msra.mxu0 0.0
    %6527 = vmatprep.subr.mxu0 0.0
    %6528 = vmatpush1.msra.mxu0 0.0
    %6529 = vmatprep.subr.mxu0 0.0
    %6530 = vmatpush1.msra.mxu0 0.0
    %6531 = vmatprep.subr.mxu0 0.0
    %6532 = vmatpush1.msra.mxu0 0.0
    %6533 = vmatprep.subr.mxu0 0.0
    %6534 = vmatpush1.msra.mxu0 0.0
    %6535 = vmatprep.subr.mxu0 0.0
    %6536 = vmatpush1.msra.mxu0 0.0
    %6537 = vmatprep.subr.mxu0 0.0
    %6538 = vmatpush1.msra.mxu0 0.0
    %6539 = vmatprep.subr.mxu0 0.0
    %6540 = vmatpush1.msra.mxu0 0.0
    %6541 = vmatprep.subr.mxu0 0.0
    %6542 = vmatpush1.msra.mxu0 0.0
    %6543 = vmatprep.subr.mxu0 0.0
    %6544 = vmatpush1.msra.mxu0 0.0
    %6545 = vmatprep.subr.mxu0 0.0
    %6546 = vmatpush1.msra.mxu0 0.0
    %6547 = vmatprep.subr.mxu0 0.0
    %6548 = vmatpush1.msra.mxu0 0.0
    %6549 = vmatprep.subr.mxu0 0.0
    %6550 = vmatpush1.msra.mxu0 0.0
    %6551 = vmatprep.subr.mxu0 0.0
    %6552 = vmatpush1.msra.mxu0 0.0
    %6553 = vmatprep.subr.mxu0 0.0
    %6554 = vmatpush1.msra.mxu0 0.0
    %6555 = vmatprep.subr.mxu0 0.0
    %6556 = vmatpush1.msra.mxu0 0.0
    %6557 = vmatprep.subr.mxu0 0.0
    %6558 = vmatpush1.msra.mxu0 0.0
    %6559 = vmatprep.subr.mxu0 0.0
    %6560 = vmatpush1.msra.mxu0 0.0
    %6561 = vmatprep.subr.mxu0 0.0
    %6562 = vmatpush1.msra.mxu0 0.0
    %6563 = vmatprep.subr.mxu0 0.0
    %6564 = vmatpush1.msra.mxu0 0.0
    %6565 = vmatprep.subr.mxu0 0.0
    %6566 = vmatpush1.msra.mxu0 0.0
    %6567 = vmatprep.subr.mxu0 0.0
    %6568 = vmatpush1.msra.mxu0 0.0
    %6569 = vmatprep.subr.mxu0 0.0
    %6570 = vmatpush1.msra.mxu0 0.0
    %6571 = vmatprep.subr.mxu0 0.0
    %6572 = vmatpush1.msra.mxu0 0.0
    %6573 = vmatprep.mubr.f32.mxu0 0.0
    %6574 = vmatmul.mubr.f32.gmra.mrb[0].mxu0 %v6507
    %v6575 = vpop.f32.mrb[0].mxu0
    %v6576 = vadd.f32 0.0, %v6575
    %v6577 = vpop.f32.mrb[0].mxu0
    %6578 = vdwg.mxu0
    %6579 = vrot.lane.b32.xlu0 %v6080, 96
    %v6580 = vpop.permute.xlu0 %6579
    %v6583 = vsel %vm216, %v6425, 0
    %6585 = vmatprep.subr.mxu0 0.0
    %6586 = vmatpush1.msra.mxu0 %v6580
    %6587 = vmatprep.subr.mxu0 0.0
    %6588 = vmatpush1.msra.mxu0 0.0
    %6589 = vmatprep.subr.mxu0 0.0
    %6590 = vmatpush1.msra.mxu0 0.0
    %6591 = vmatprep.subr.mxu0 0.0
    %6592 = vmatpush1.msra.mxu0 0.0
    %6593 = vmatprep.subr.mxu0 0.0
    %6594 = vmatpush1.msra.mxu0 0.0
    %6595 = vmatprep.subr.mxu0 0.0
    %6596 = vmatpush1.msra.mxu0 0.0
    %6597 = vmatprep.subr.mxu0 0.0
    %6598 = vmatpush1.msra.mxu0 0.0
    %6599 = vmatprep.subr.mxu0 0.0
    %6600 = vmatpush1.msra.mxu0 0.0
    %6601 = vmatprep.subr.mxu0 0.0
    %6602 = vmatpush1.msra.mxu0 0.0
    %6603 = vmatprep.subr.mxu0 0.0
    %6604 = vmatpush1.msra.mxu0 0.0
    %6605 = vmatprep.subr.mxu0 0.0
    %6606 = vmatpush1.msra.mxu0 0.0
    %6607 = vmatprep.subr.mxu0 0.0
    %6608 = vmatpush1.msra.mxu0 0.0
    %6609 = vmatprep.subr.mxu0 0.0
    %6610 = vmatpush1.msra.mxu0 0.0
    %6611 = vmatprep.subr.mxu0 0.0
    %6612 = vmatpush1.msra.mxu0 0.0
    %6613 = vmatprep.subr.mxu0 0.0
    %6614 = vmatpush1.msra.mxu0 0.0
    %6615 = vmatprep.subr.mxu0 0.0
    %6616 = vmatpush1.msra.mxu0 0.0
    %6617 = vmatprep.subr.mxu0 0.0
    %6618 = vmatpush1.msra.mxu0 0.0
    %6619 = vmatprep.subr.mxu0 0.0
    %6620 = vmatpush1.msra.mxu0 0.0
    %6621 = vmatprep.subr.mxu0 0.0
    %6622 = vmatpush1.msra.mxu0 0.0
    %6623 = vmatprep.subr.mxu0 0.0
    %6624 = vmatpush1.msra.mxu0 0.0
    %6625 = vmatprep.subr.mxu0 0.0
    %6626 = vmatpush1.msra.mxu0 0.0
    %6627 = vmatprep.subr.mxu0 0.0
    %6628 = vmatpush1.msra.mxu0 0.0
    %6629 = vmatprep.subr.mxu0 0.0
    %6630 = vmatpush1.msra.mxu0 0.0
    %6631 = vmatprep.subr.mxu0 0.0
    %6632 = vmatpush1.msra.mxu0 0.0
    %6633 = vmatprep.subr.mxu0 0.0
    %6634 = vmatpush1.msra.mxu0 0.0
    %6635 = vmatprep.subr.mxu0 0.0
    %6636 = vmatpush1.msra.mxu0 0.0
    %6637 = vmatprep.subr.mxu0 0.0
    %6638 = vmatpush1.msra.mxu0 0.0
    %6639 = vmatprep.subr.mxu0 0.0
    %6640 = vmatpush1.msra.mxu0 0.0
    %6641 = vmatprep.subr.mxu0 0.0
    %6642 = vmatpush1.msra.mxu0 0.0
    %6643 = vmatprep.subr.mxu0 0.0
    %6644 = vmatpush1.msra.mxu0 0.0
    %6645 = vmatprep.subr.mxu0 0.0
    %6646 = vmatpush1.msra.mxu0 0.0
    %6647 = vmatprep.subr.mxu0 0.0
    %6648 = vmatpush1.msra.mxu0 0.0
    %6649 = vmatprep.mubr.f32.mxu0 0.0
    %6650 = vmatmul.mubr.f32.gmra.mrb[0].mxu0 %v6583
    %v6651 = vpop.f32.mrb[0].mxu0
    %v6652 = vadd.f32 0.0, %v6651
    %v6653 = vpop.f32.mrb[0].mxu0
    %6654 = vdwg.mxu0
    %6655 = vrot.lane.b32.xlu0 %v6082, 96
    %v6656 = vpop.permute.xlu0 %6655
    %v6659 = vsel %vm216, %v6426, 0
    %6661 = vmatprep.subr.mxu0 0.0
    %6662 = vmatpush1.msra.mxu0 %v6656
    %6663 = vmatprep.subr.mxu0 0.0
    %6664 = vmatpush1.msra.mxu0 0.0
    %6665 = vmatprep.subr.mxu0 0.0
    %6666 = vmatpush1.msra.mxu0 0.0
    %6667 = vmatprep.subr.mxu0 0.0
    %6668 = vmatpush1.msra.mxu0 0.0
    %6669 = vmatprep.subr.mxu0 0.0
    %6670 = vmatpush1.msra.mxu0 0.0
    %6671 = vmatprep.subr.mxu0 0.0
    %6672 = vmatpush1.msra.mxu0 0.0
    %6673 = vmatprep.subr.mxu0 0.0
    %6674 = vmatpush1.msra.mxu0 0.0
    %6675 = vmatprep.subr.mxu0 0.0
    %6676 = vmatpush1.msra.mxu0 0.0
    %6677 = vmatprep.subr.mxu0 0.0
    %6678 = vmatpush1.msra.mxu0 0.0
    %6679 = vmatprep.subr.mxu0 0.0
    %6680 = vmatpush1.msra.mxu0 0.0
    %6681 = vmatprep.subr.mxu0 0.0
    %6682 = vmatpush1.msra.mxu0 0.0
    %6683 = vmatprep.subr.mxu0 0.0
    %6684 = vmatpush1.msra.mxu0 0.0
    %6685 = vmatprep.subr.mxu0 0.0
    %6686 = vmatpush1.msra.mxu0 0.0
    %6687 = vmatprep.subr.mxu0 0.0
    %6688 = vmatpush1.msra.mxu0 0.0
    %6689 = vmatprep.subr.mxu0 0.0
    %6690 = vmatpush1.msra.mxu0 0.0
    %6691 = vmatprep.subr.mxu0 0.0
    %6692 = vmatpush1.msra.mxu0 0.0
    %6693 = vmatprep.subr.mxu0 0.0
    %6694 = vmatpush1.msra.mxu0 0.0
    %6695 = vmatprep.subr.mxu0 0.0
    %6696 = vmatpush1.msra.mxu0 0.0
    %6697 = vmatprep.subr.mxu0 0.0
    %6698 = vmatpush1.msra.mxu0 0.0
    %6699 = vmatprep.subr.mxu0 0.0
    %6700 = vmatpush1.msra.mxu0 0.0
    %6701 = vmatprep.subr.mxu0 0.0
    %6702 = vmatpush1.msra.mxu0 0.0
    %6703 = vmatprep.subr.mxu0 0.0
    %6704 = vmatpush1.msra.mxu0 0.0
    %6705 = vmatprep.subr.mxu0 0.0
    %6706 = vmatpush1.msra.mxu0 0.0
    %6707 = vmatprep.subr.mxu0 0.0
    %6708 = vmatpush1.msra.mxu0 0.0
    %6709 = vmatprep.subr.mxu0 0.0
    %6710 = vmatpush1.msra.mxu0 0.0
    %6711 = vmatprep.subr.mxu0 0.0
    %6712 = vmatpush1.msra.mxu0 0.0
    %6713 = vmatprep.subr.mxu0 0.0
    %6714 = vmatpush1.msra.mxu0 0.0
    %6715 = vmatprep.subr.mxu0 0.0
    %6716 = vmatpush1.msra.mxu0 0.0
    %6717 = vmatprep.subr.mxu0 0.0
    %6718 = vmatpush1.msra.mxu0 0.0
    %6719 = vmatprep.subr.mxu0 0.0
    %6720 = vmatpush1.msra.mxu0 0.0
    %6721 = vmatprep.subr.mxu0 0.0
    %6722 = vmatpush1.msra.mxu0 0.0
    %6723 = vmatprep.subr.mxu0 0.0
    %6724 = vmatpush1.msra.mxu0 0.0
    %6725 = vmatprep.mubr.f32.mxu0 0.0
    %6726 = vmatmul.mubr.f32.gmra.mrb[0].mxu0 %v6659
    %v6727 = vpop.f32.mrb[0].mxu0
    %v6728 = vadd.f32 0.0, %v6727
    %v6729 = vpop.f32.mrb[0].mxu0
    %6730 = vdwg.mxu0
    %6732 = vrot.lane.b32.xlu0 %v6576, 8
    %v6733 = vpop.permute.xlu0 %6732
    %6736 = vrot.lane.b32.xlu0 %v6652, 16
    %v6737 = vpop.permute.xlu0 %6736
    %6740 = vrot.lane.b32.xlu0 %v6728, 24
    %v6741 = vpop.permute.xlu0 %6740
    %v6743 = vsel %vm216, %v6500, %v6733
    %v6744 = vsel %vm884, %v6743, %v6737
    %v6745 = vsel %vm886, %v6744, %v6741
    %s6746 = scalar_lea.vmem %s14, 32
    %v6747 = vld [vmem:[%s6746] sm:$0xff]
    %v6748 = vld [vmem:[%s6746 + $0x8] sm:$0xff]
    %v6749 = vld [vmem:[%s6746 + $0x10] sm:$0xff]
    %v6750 = vld [vmem:[%s6746 + $0x18] sm:$0xff]
    %s6751 = scalar_lea.vmem %s15, 1
    %v6752 = vld [vmem:[%s6751] sm:$0x1]
    %v6754 = vlaneseq
    %v6755 = vshrl.u32 %v6754, 7
    %v6756 = vsub.s32 0, %v6755
    %v6757 = vrot.slane %v6752, %v6756
    %v6760 = vsel %vm125, %v6068, 0
    %v6763 = vsel %vm125, %v6745, 0
    %6765 = vmatprep.subr.mxu0 0.0
    %6766 = vmatpush1.msra.mxu0 %v6747
    %6767 = vmatprep.subr.mxu0 0.0
    %6768 = vmatpush1.msra.mxu0 %v6748
    %6769 = vmatprep.subr.mxu0 0.0
    %6770 = vmatpush1.msra.mxu0 %v6749
    %6771 = vmatprep.subr.mxu0 0.0
    %6772 = vmatpush1.msra.mxu0 %v6750
    %6773 = vmatprep.subr.mxu0 0.0
    %6774 = vmatpush1.msra.mxu0 0.0
    %6775 = vmatprep.subr.mxu0 0.0
    %6776 = vmatpush1.msra.mxu0 0.0
    %6777 = vmatprep.subr.mxu0 0.0
    %6778 = vmatpush1.msra.mxu0 0.0
    %6779 = vmatprep.subr.mxu0 0.0
    %6780 = vmatpush1.msra.mxu0 0.0
    %6781 = vmatprep.subr.mxu0 0.0
    %6782 = vmatpush1.msra.mxu0 0.0
    %6783 = vmatprep.subr.mxu0 0.0
    %6784 = vmatpush1.msra.mxu0 0.0
    %6785 = vmatprep.subr.mxu0 0.0
    %6786 = vmatpush1.msra.mxu0 0.0
    %6787 = vmatprep.subr.mxu0 0.0
    %6788 = vmatpush1.msra.mxu0 0.0
    %6789 = vmatprep.subr.mxu0 0.0
    %6790 = vmatpush1.msra.mxu0 0.0
    %6791 = vmatprep.subr.mxu0 0.0
    %6792 = vmatpush1.msra.mxu0 0.0
    %6793 = vmatprep.subr.mxu0 0.0
    %6794 = vmatpush1.msra.mxu0 0.0
    %6795 = vmatprep.subr.mxu0 0.0
    %6796 = vmatpush1.msra.mxu0 0.0
    %6797 = vmatprep.subr.mxu0 0.0
    %6798 = vmatpush1.msra.mxu0 0.0
    %6799 = vmatprep.subr.mxu0 0.0
    %6800 = vmatpush1.msra.mxu0 0.0
    %6801 = vmatprep.subr.mxu0 0.0
    %6802 = vmatpush1.msra.mxu0 0.0
    %6803 = vmatprep.subr.mxu0 0.0
    %6804 = vmatpush1.msra.mxu0 0.0
    %6805 = vmatprep.subr.mxu0 0.0
    %6806 = vmatpush1.msra.mxu0 0.0
    %6807 = vmatprep.subr.mxu0 0.0
    %6808 = vmatpush1.msra.mxu0 0.0
    %6809 = vmatprep.subr.mxu0 0.0
    %6810 = vmatpush1.msra.mxu0 0.0
    %6811 = vmatprep.subr.mxu0 0.0
    %6812 = vmatpush1.msra.mxu0 0.0
    %6813 = vmatprep.subr.mxu0 0.0
    %6814 = vmatpush1.msra.mxu0 0.0
    %6815 = vmatprep.subr.mxu0 0.0
    %6816 = vmatpush1.msra.mxu0 0.0
    %6817 = vmatprep.subr.mxu0 0.0
    %6818 = vmatpush1.msra.mxu0 0.0
    %6819 = vmatprep.subr.mxu0 0.0
    %6820 = vmatpush1.msra.mxu0 0.0
    %6821 = vmatprep.subr.mxu0 0.0
    %6822 = vmatpush1.msra.mxu0 0.0
    %6823 = vmatprep.subr.mxu0 0.0
    %6824 = vmatpush1.msra.mxu0 0.0
    %6825 = vmatprep.subr.mxu0 0.0
    %6826 = vmatpush1.msra.mxu0 0.0
    %6827 = vmatprep.subr.mxu0 0.0
    %6828 = vmatpush1.msra.mxu0 0.0
    %6829 = vmatprep.mubr.f32.mxu0 0.0
    %6830 = vmatmul.mubr.f32.gmra.mrb[0].mxu0 %v6760
    %v6831 = vpop.f32.mrb[0].mxu0
    %v6832 = vadd.f32 %v6757, %v6831
    %v6833 = vpop.f32.mrb[0].mxu0
    %6834 = vmatprep.mubr.f32.mxu0 0.0
    %6835 = vmatmul.mubr.f32.gmra.mrb[0].mxu0 %v6763
    %v6836 = vpop.f32.mrb[0].mxu0
    %v6837 = vadd.f32 %v6757, %v6836
    %v6838 = vpop.f32.mrb[0].mxu0
    %6839 = vdwg.mxu0
    %v6840 = vadd.f32 %v6832, %v5208
    %v6841 = vadd.f32 %v6837, %v5209
    %s6842 = scalar_lea.vmem %s16, 1
    %v6843 = vld [vmem:[%s6842] sm:$0x1]
    %s6844 = scalar_lea.vmem %s17, 1
    %v6845 = vld [vmem:[%s6844] sm:$0x1]
    %v6846 = vsel %vm125, %v6840, 0.0
    %6847 = vadd.xlane.f32.xlu0 %v6846
    %v6848 = vpop.xlane.xlu0 %6847
    %v6849 = vsel %vm125, %v6841, 0.0
    %6850 = vadd.xlane.f32.xlu0 %v6849
    %v6851 = vpop.xlane.xlu0 %6850
    %v6852 = vmul.f32 %v6848, %v1668
    %v6853 = vmul.f32 %v6851, %v1668
    %v6854 = vsub.f32 %v6840, %v6852
    %v6855 = vsub.f32 %v6841, %v6853
    %v6856 = vmul.f32 %v6854, %v6854
    %v6857 = vmul.f32 %v6855, %v6855
    %v6858 = vsel %vm125, %v6856, 0.0
    %6859 = vadd.xlane.f32.xlu0 %v6858
    %v6860 = vpop.xlane.xlu0 %6859
    %v6861 = vsel %vm125, %v6857, 0.0
    %6862 = vadd.xlane.f32.xlu0 %v6861
    %v6863 = vpop.xlane.xlu0 %6862
    %v6864 = vmul.f32 %v6860, %v1668
    %v6865 = vmul.f32 %v6863, %v1668
    %v6866 = vadd.f32 %v6864, 1e-05
    %v6867 = vadd.f32 %v6865, 1e-05
    %v6868 = vrsqrt.pop %v6866
    %v6869 = vrsqrt.pop %v6867
    %v6870 = vmul.f32 %v6854, %v6868
    %v6871 = vmul.f32 %v6855, %v6869
    %v6873 = vlaneseq
    %v6874 = vshrl.u32 %v6873, 7
    %v6875 = vsub.s32 0, %v6874
    %v6876 = vrot.slane %v6843, %v6875
    %v6878 = vmul.f32 %v6870, %v6876
    %v6879 = vmul.f32 %v6871, %v6876
    %v6881 = vlaneseq
    %v6882 = vshrl.u32 %v6881, 7
    %v6883 = vsub.s32 0, %v6882
    %v6884 = vrot.slane %v6845, %v6883
    %v6886 = vadd.f32 %v6878, %v6884
    %v6887 = vadd.f32 %v6879, %v6884
    %s6888 = scalar_lea.vmem %s18, 32
    %v6889 = vld [vmem:[%s6888] sm:$0xff]
    %v6890 = vld [vmem:[%s6888 + $0x8] sm:$0xff]
    %v6891 = vld [vmem:[%s6888 + $0x10] sm:$0xff]
    %v6892 = vld [vmem:[%s6888 + $0x18] sm:$0xff]
    %s6893 = scalar_lea.vmem %s19, 1
    %v6894 = vld [vmem:[%s6893] sm:$0x1]
    %v6896 = vlaneseq
    %v6897 = vshrl.u32 %v6896, 7
    %v6898 = vsub.s32 0, %v6897
    %v6899 = vrot.slane %v6894, %v6898
    %v6902 = vsel %vm125, %v6886, 0
    %v6905 = vsel %vm125, %v6887, 0
    %6907 = vmatprep.subr.mxu0 0.0
    %6908 = vmatpush1.msra.mxu0 %v6889
    %6909 = vmatprep.subr.mxu0 0.0
    %6910 = vmatpush1.msra.mxu0 %v6890
    %6911 = vmatprep.subr.mxu0 0.0
    %6912 = vmatpush1.msra.mxu0 %v6891
    %6913 = vmatprep.subr.mxu0 0.0
    %6914 = vmatpush1.msra.mxu0 %v6892
    %6915 = vmatprep.subr.mxu0 0.0
    %6916 = vmatpush1.msra.mxu0 0.0
    %6917 = vmatprep.subr.mxu0 0.0
    %6918 = vmatpush1.msra.mxu0 0.0
    %6919 = vmatprep.subr.mxu0 0.0
    %6920 = vmatpush1.msra.mxu0 0.0
    %6921 = vmatprep.subr.mxu0 0.0
    %6922 = vmatpush1.msra.mxu0 0.0
    %6923 = vmatprep.subr.mxu0 0.0
    %6924 = vmatpush1.msra.mxu0 0.0
    %6925 = vmatprep.subr.mxu0 0.0
    %6926 = vmatpush1.msra.mxu0 0.0
    %6927 = vmatprep.subr.mxu0 0.0
    %6928 = vmatpush1.msra.mxu0 0.0
    %6929 = vmatprep.subr.mxu0 0.0
    %6930 = vmatpush1.msra.mxu0 0.0
    %6931 = vmatprep.subr.mxu0 0.0
    %6932 = vmatpush1.msra.mxu0 0.0
    %6933 = vmatprep.subr.mxu0 0.0
    %6934 = vmatpush1.msra.mxu0 0.0
    %6935 = vmatprep.subr.mxu0 0.0
    %6936 = vmatpush1.msra.mxu0 0.0
    %6937 = vmatprep.subr.mxu0 0.0
    %6938 = vmatpush1.msra.mxu0 0.0
    %6939 = vmatprep.subr.mxu0 0.0
    %6940 = vmatpush1.msra.mxu0 0.0
    %6941 = vmatprep.subr.mxu0 0.0
    %6942 = vmatpush1.msra.mxu0 0.0
    %6943 = vmatprep.subr.mxu0 0.0
    %6944 = vmatpush1.msra.mxu0 0.0
    %6945 = vmatprep.subr.mxu0 0.0
    %6946 = vmatpush1.msra.mxu0 0.0
    %6947 = vmatprep.subr.mxu0 0.0
    %6948 = vmatpush1.msra.mxu0 0.0
    %6949 = vmatprep.subr.mxu0 0.0
    %6950 = vmatpush1.msra.mxu0 0.0
    %6951 = vmatprep.subr.mxu0 0.0
    %6952 = vmatpush1.msra.mxu0 0.0
    %6953 = vmatprep.subr.mxu0 0.0
    %6954 = vmatpush1.msra.mxu0 0.0
    %6955 = vmatprep.subr.mxu0 0.0
    %6956 = vmatpush1.msra.mxu0 0.0
    %6957 = vmatprep.subr.mxu0 0.0
    %6958 = vmatpush1.msra.mxu0 0.0
    %6959 = vmatprep.subr.mxu0 0.0
    %6960 = vmatpush1.msra.mxu0 0.0
    %6961 = vmatprep.subr.mxu0 0.0
    %6962 = vmatpush1.msra.mxu0 0.0
    %6963 = vmatprep.subr.mxu0 0.0
    %6964 = vmatpush1.msra.mxu0 0.0
    %6965 = vmatprep.subr.mxu0 0.0
    %6966 = vmatpush1.msra.mxu0 0.0
    %6967 = vmatprep.subr.mxu0 0.0
    %6968 = vmatpush1.msra.mxu0 0.0
    %6969 = vmatprep.subr.mxu0 0.0
    %6970 = vmatpush1.msra.mxu0 0.0
    %6971 = vmatprep.mubr.f32.mxu0 0.0
    %6972 = vmatmul.mubr.f32.gmra.mrb[0].mxu0 %v6902
    %v6973 = vpop.f32.mrb[0].mxu0
    %v6974 = vadd.f32 %v6899, %v6973
    %v6975 = vpop.f32.mrb[0].mxu0
    %6976 = vmatprep.mubr.f32.mxu0 0.0
    %6977 = vmatmul.mubr.f32.gmra.mrb[0].mxu0 %v6905
    %v6978 = vpop.f32.mrb[0].mxu0
    %v6979 = vadd.f32 %v6899, %v6978
    %v6980 = vpop.f32.mrb[0].mxu0
    %6981 = vdwg.mxu0
    %v6982 = vmax.f32 %v6974, 0.0
    %v6983 = vmax.f32 %v6979, 0.0
    %s6984 = scalar_lea.vmem %s20, 64
    %v6985 = vld [vmem:[%s6984] sm:$0xff]
    %v6986 = vld [vmem:[%s6984 + $0x8] sm:$0xff]
    %v6987 = vld [vmem:[%s6984 + $0x10] sm:$0xff]
    %v6988 = vld [vmem:[%s6984 + $0x18] sm:$0xff]
    %v6989 = vld [vmem:[%s6984 + $0x20] sm:$0xff]
    %v6990 = vld [vmem:[%s6984 + $0x28] sm:$0xff]
    %v6991 = vld [vmem:[%s6984 + $0x30] sm:$0xff]
    %v6992 = vld [vmem:[%s6984 + $0x38] sm:$0xff]
    %s6993 = scalar_lea.vmem %s21, 1
    %v6994 = vld [vmem:[%s6993] sm:$0x1]
    %v6996 = vlaneseq
    %v6997 = vshrl.u32 %v6996, 7
    %v6998 = vsub.s32 0, %v6997
    %v6999 = vrot.slane %v6994, %v6998
    %v7002 = vsel %vm3490, %v6982, 0
    %v7005 = vsel %vm3490, %v6983, 0
    %7007 = vmatprep.subr.mxu0 0.0
    %7008 = vmatpush1.msra.mxu0 %v6985
    %7009 = vmatprep.subr.mxu0 0.0
    %7010 = vmatpush1.msra.mxu0 %v6986
    %7011 = vmatprep.subr.mxu0 0.0
    %7012 = vmatpush1.msra.mxu0 %v6987
    %7013 = vmatprep.subr.mxu0 0.0
    %7014 = vmatpush1.msra.mxu0 %v6988
    %7015 = vmatprep.subr.mxu0 0.0
    %7016 = vmatpush1.msra.mxu0 %v6989
    %7017 = vmatprep.subr.mxu0 0.0
    %7018 = vmatpush1.msra.mxu0 %v6990
    %7019 = vmatprep.subr.mxu0 0.0
    %7020 = vmatpush1.msra.mxu0 %v6991
    %7021 = vmatprep.subr.mxu0 0.0
    %7022 = vmatpush1.msra.mxu0 %v6992
    %7023 = vmatprep.subr.mxu0 0.0
    %7024 = vmatpush1.msra.mxu0 0.0
    %7025 = vmatprep.subr.mxu0 0.0
    %7026 = vmatpush1.msra.mxu0 0.0
    %7027 = vmatprep.subr.mxu0 0.0
    %7028 = vmatpush1.msra.mxu0 0.0
    %7029 = vmatprep.subr.mxu0 0.0
    %7030 = vmatpush1.msra.mxu0 0.0
    %7031 = vmatprep.subr.mxu0 0.0
    %7032 = vmatpush1.msra.mxu0 0.0
    %7033 = vmatprep.subr.mxu0 0.0
    %7034 = vmatpush1.msra.mxu0 0.0
    %7035 = vmatprep.subr.mxu0 0.0
    %7036 = vmatpush1.msra.mxu0 0.0
    %7037 = vmatprep.subr.mxu0 0.0
    %7038 = vmatpush1.msra.mxu0 0.0
    %7039 = vmatprep.subr.mxu0 0.0
    %7040 = vmatpush1.msra.mxu0 0.0
    %7041 = vmatprep.subr.mxu0 0.0
    %7042 = vmatpush1.msra.mxu0 0.0
    %7043 = vmatprep.subr.mxu0 0.0
    %7044 = vmatpush1.msra.mxu0 0.0
    %7045 = vmatprep.subr.mxu0 0.0
    %7046 = vmatpush1.msra.mxu0 0.0
    %7047 = vmatprep.subr.mxu0 0.0
    %7048 = vmatpush1.msra.mxu0 0.0
    %7049 = vmatprep.subr.mxu0 0.0
    %7050 = vmatpush1.msra.mxu0 0.0
    %7051 = vmatprep.subr.mxu0 0.0
    %7052 = vmatpush1.msra.mxu0 0.0
    %7053 = vmatprep.subr.mxu0 0.0
    %7054 = vmatpush1.msra.mxu0 0.0
    %7055 = vmatprep.subr.mxu0 0.0
    %7056 = vmatpush1.msra.mxu0 0.0
    %7057 = vmatprep.subr.mxu0 0.0
    %7058 = vmatpush1.msra.mxu0 0.0
    %7059 = vmatprep.subr.mxu0 0.0
    %7060 = vmatpush1.msra.mxu0 0.0
    %7061 = vmatprep.subr.mxu0 0.0
    %7062 = vmatpush1.msra.mxu0 0.0
    %7063 = vmatprep.subr.mxu0 0.0
    %7064 = vmatpush1.msra.mxu0 0.0
    %7065 = vmatprep.subr.mxu0 0.0
    %7066 = vmatpush1.msra.mxu0 0.0
    %7067 = vmatprep.subr.mxu0 0.0
    %7068 = vmatpush1.msra.mxu0 0.0
    %7069 = vmatprep.subr.mxu0 0.0
    %7070 = vmatpush1.msra.mxu0 0.0
    %7071 = vmatprep.mubr.f32.mxu0 0.0
    %7072 = vmatmul.mubr.f32.gmra.mrb[0].mxu0 %v7002
    %v7073 = vpop.f32.mrb[0].mxu0
    %v7074 = vadd.f32 %v6999, %v7073
    %v7075 = vpop.f32.mrb[0].mxu0
    %7076 = vmatprep.mubr.f32.mxu0 0.0
    %7077 = vmatmul.mubr.f32.gmra.mrb[0].mxu0 %v7005
    %v7078 = vpop.f32.mrb[0].mxu0
    %v7079 = vadd.f32 %v6999, %v7078
    %v7080 = vpop.f32.mrb[0].mxu0
    %7081 = vdwg.mxu0
    %v7082 = vadd.f32 %v7074, %v6886
    %v7083 = vadd.f32 %v7079, %v6887
    %s7084 = scalar_lea.vmem %s22, 1
    %v7085 = vld [vmem:[%s7084] sm:$0x1]
    %s7086 = scalar_lea.vmem %s23, 1
    %v7087 = vld [vmem:[%s7086] sm:$0x1]
    %v7088 = vsel %vm125, %v7082, 0.0
    %7089 = vadd.xlane.f32.xlu0 %v7088
    %v7090 = vpop.xlane.xlu0 %7089
    %v7091 = vsel %vm125, %v7083, 0.0
    %7092 = vadd.xlane.f32.xlu0 %v7091
    %v7093 = vpop.xlane.xlu0 %7092
    %v7094 = vmul.f32 %v7090, %v1668
    %v7095 = vmul.f32 %v7093, %v1668
    %v7096 = vsub.f32 %v7082, %v7094
    %v7097 = vsub.f32 %v7083, %v7095
    %v7098 = vmul.f32 %v7096, %v7096
    %v7099 = vmul.f32 %v7097, %v7097
    %v7100 = vsel %vm125, %v7098, 0.0
    %7101 = vadd.xlane.f32.xlu0 %v7100
    %v7102 = vpop.xlane.xlu0 %7101
    %v7103 = vsel %vm125, %v7099, 0.0
    %7104 = vadd.xlane.f32.xlu0 %v7103
    %v7105 = vpop.xlane.xlu0 %7104
    %v7106 = vmul.f32 %v7102, %v1668
    %v7107 = vmul.f32 %v7105, %v1668
    %v7108 = vadd.f32 %v7106, 1e-05
    %v7109 = vadd.f32 %v7107, 1e-05
    %v7110 = vrsqrt.pop %v7108
    %v7111 = vrsqrt.pop %v7109
    %v7112 = vmul.f32 %v7096, %v7110
    %v7113 = vmul.f32 %v7097, %v7111
    %v7115 = vlaneseq
    %v7116 = vshrl.u32 %v7115, 7
    %v7117 = vsub.s32 0, %v7116
    %v7118 = vrot.slane %v7085, %v7117
    %v7120 = vmul.f32 %v7112, %v7118
    %v7121 = vmul.f32 %v7113, %v7118
    %v7123 = vlaneseq
    %v7124 = vshrl.u32 %v7123, 7
    %v7125 = vsub.s32 0, %v7124
    %v7126 = vrot.slane %v7087, %v7125
    %v7128 = vadd.f32 %v7120, %v7126
    %v7129 = vadd.f32 %v7121, %v7126
    %v7130 = vld [vmem:[%s24] sm:$0xff]
    %v7131 = vld [vmem:[%s24 + $0x8] sm:$0xff]
    %v7132 = vld [vmem:[%s24 + $0x10] sm:$0xff]
    %v7133 = vld [vmem:[%s24 + $0x18] sm:$0xff]
    %v7134 = vld [vmem:[%s25] sm:$0x1]
    %v7136 = vlaneseq
    %v7137 = vshrl.u32 %v7136, 7
    %v7138 = vsub.s32 0, %v7137
    %v7139 = vrot.slane %v7134, %v7138
    %v7142 = vsel %vm125, %v7128, 0
    %v7145 = vsel %vm125, %v7129, 0
    %7147 = vmatprep.subr.mxu0 0.0
    %7148 = vmatpush1.msra.mxu0 %v7130
    %7149 = vmatprep.subr.mxu0 0.0
    %7150 = vmatpush1.msra.mxu0 %v7131
    %7151 = vmatprep.subr.mxu0 0.0
    %7152 = vmatpush1.msra.mxu0 %v7132
    %7153 = vmatprep.subr.mxu0 0.0
    %7154 = vmatpush1.msra.mxu0 %v7133
    %7155 = vmatprep.subr.mxu0 0.0
    %7156 = vmatpush1.msra.mxu0 0.0
    %7157 = vmatprep.subr.mxu0 0.0
    %7158 = vmatpush1.msra.mxu0 0.0
    %7159 = vmatprep.subr.mxu0 0.0
    %7160 = vmatpush1.msra.mxu0 0.0
    %7161 = vmatprep.subr.mxu0 0.0
    %7162 = vmatpush1.msra.mxu0 0.0
    %7163 = vmatprep.subr.mxu0 0.0
    %7164 = vmatpush1.msra.mxu0 0.0
    %7165 = vmatprep.subr.mxu0 0.0
    %7166 = vmatpush1.msra.mxu0 0.0
    %7167 = vmatprep.subr.mxu0 0.0
    %7168 = vmatpush1.msra.mxu0 0.0
    %7169 = vmatprep.subr.mxu0 0.0
    %7170 = vmatpush1.msra.mxu0 0.0
    %7171 = vmatprep.subr.mxu0 0.0
    %7172 = vmatpush1.msra.mxu0 0.0
    %7173 = vmatprep.subr.mxu0 0.0
    %7174 = vmatpush1.msra.mxu0 0.0
    %7175 = vmatprep.subr.mxu0 0.0
    %7176 = vmatpush1.msra.mxu0 0.0
    %7177 = vmatprep.subr.mxu0 0.0
    %7178 = vmatpush1.msra.mxu0 0.0
    %7179 = vmatprep.subr.mxu0 0.0
    %7180 = vmatpush1.msra.mxu0 0.0
    %7181 = vmatprep.subr.mxu0 0.0
    %7182 = vmatpush1.msra.mxu0 0.0
    %7183 = vmatprep.subr.mxu0 0.0
    %7184 = vmatpush1.msra.mxu0 0.0
    %7185 = vmatprep.subr.mxu0 0.0
    %7186 = vmatpush1.msra.mxu0 0.0
    %7187 = vmatprep.subr.mxu0 0.0
    %7188 = vmatpush1.msra.mxu0 0.0
    %7189 = vmatprep.subr.mxu0 0.0
    %7190 = vmatpush1.msra.mxu0 0.0
    %7191 = vmatprep.subr.mxu0 0.0
    %7192 = vmatpush1.msra.mxu0 0.0
    %7193 = vmatprep.subr.mxu0 0.0
    %7194 = vmatpush1.msra.mxu0 0.0
    %7195 = vmatprep.subr.mxu0 0.0
    %7196 = vmatpush1.msra.mxu0 0.0
    %7197 = vmatprep.subr.mxu0 0.0
    %7198 = vmatpush1.msra.mxu0 0.0
    %7199 = vmatprep.subr.mxu0 0.0
    %7200 = vmatpush1.msra.mxu0 0.0
    %7201 = vmatprep.subr.mxu0 0.0
    %7202 = vmatpush1.msra.mxu0 0.0
    %7203 = vmatprep.subr.mxu0 0.0
    %7204 = vmatpush1.msra.mxu0 0.0
    %7205 = vmatprep.subr.mxu0 0.0
    %7206 = vmatpush1.msra.mxu0 0.0
    %7207 = vmatprep.subr.mxu0 0.0
    %7208 = vmatpush1.msra.mxu0 0.0
    %7209 = vmatprep.subr.mxu0 0.0
    %7210 = vmatpush1.msra.mxu0 0.0
    %7211 = vmatprep.mubr.f32.mxu0 0.0
    %7212 = vmatmul.mubr.f32.gmra.mrb[0].mxu0 %v7142
    %v7213 = vpop.f32.mrb[0].mxu0
    %v7214 = vadd.f32 %v7139, %v7213
    %v7215 = vpop.f32.mrb[0].mxu0
    %7216 = vmatprep.mubr.f32.mxu0 0.0
    %7217 = vmatmul.mubr.f32.gmra.mrb[0].mxu0 %v7145
    %v7218 = vpop.f32.mrb[0].mxu0
    %v7219 = vadd.f32 %v7139, %v7218
    %v7220 = vpop.f32.mrb[0].mxu0
    %7221 = vdwg.mxu0
    %7222 = vst [vmem:[#allocation2] sm:$0xff] %v7214
    %7223 = vst [vmem:[#allocation2 + $0x8] sm:$0xff] %v7219
    // Predicated region
    $region106: #{decoder_forward.1} parent=1 // pred_check
      _
    $region107: #{decoder_forward.1} parent=1 // pred_check_branch
      %7225 = sbr.rel (0) target = $region109
    $region108: #{decoder_forward.1} parent=1 // pred_region
      %s7227 = ssub.s32 256, 256
      %7228 = vsyncadd [#allocation3], %s7227
      %s7229 = sshll.u32 [#allocation2], 4
      %s7230 = int_to_ptr.vmem [resolvable:$true] %s7229
      %7235 = dma.vmem_to_hbm [thread:$0]  %s7230, 256, %s26, [#allocation3], 128, 128, 8
    $region109: #{decoder_forward.1} parent=1 // pred_fallthru
      _
    // Predicated region
    $region110: #{decoder_forward.1} parent=1 // pred_check
      _
    $region111: #{decoder_forward.1} parent=1 // pred_check_branch
      %7237 = sbr.rel (0) target = $region113
    $region112: #{decoder_forward.1} parent=1 // pred_region
      %7238 = dma.done [#allocation3], 256
    $region113: #{decoder_forward.1} parent=1 // pred_fallthru
      _
    %7239 = vsyncpa [#allocation3], 1

</llo_original>
